<compile_context>
chip_gen: v7x
topology: tpu7x:2x2x1
jax: 0.10.0
libtpu: 0.0.40
codegen_flags: <defaults>
</compile_context>

<pallas_src>
import jax
import jax.numpy as jnp
from jax.experimental import pallas as pl
from jax.experimental.pallas import tpu as pltpu

EPS = 1e-5          # nn.InstanceNorm2d default eps
NEG_SLOPE = 0.01    # nn.LeakyReLU default negative_slope


def conv_block_kernel(x_ref, w1_ref, b1_ref, w2_ref, b2_ref, o_ref, pad_ref):
    # x_ref  : (blk, H+2, W+2, C_in)  pre-padded input samples for this grid step
    # w1_ref : (9, C_in, C_out)       3x3 taps flattened, tap t = 3*dh + dw
    # b1_ref : (1, C_out)
    # w2_ref : (9, C_out, C_out)
    # b2_ref : (1, C_out)
    # o_ref  : (blk, C_out, H*W)      lane-dense output (NCHW with flattened spatial)
    # pad_ref: (H+2, W+2, C_out)      VMEM scratch for re-padding the intermediate
    blk, Hp2, Wp2, C_in = x_ref.shape
    _, C_out, HW = o_ref.shape
    H, W = Hp2 - 2, Wp2 - 2

    # Hoisted invariant loads / broadcasts.
    w1 = w1_ref[...]                              # (9, C_in, C_out)
    w2 = w2_ref[...]                              # (9, C_out, C_out)
    b1 = b1_ref[...].astype(jnp.float32)          # (1, C_out)
    b2 = b2_ref[...].astype(jnp.float32)          # (1, C_out)

    # Zero only the 1-pixel border of the re-pad scratch.  The interior is fully
    # overwritten for every sample below, so this is sufficient; doing it every grid
    # step (not under pl.when(program_id == 0)) keeps it correct when the "parallel"
    # batch axis is sharded across TensorCores (each core has its own scratch).
    pad_ref[0:1, :, :] = jnp.zeros((1, Wp2, C_out), jnp.float32)
    pad_ref[H + 1:H + 2, :, :] = jnp.zeros((1, Wp2, C_out), jnp.float32)
    pad_ref[:, 0:1, :] = jnp.zeros((Hp2, 1, C_out), jnp.float32)
    pad_ref[:, W + 1:W + 2, :] = jnp.zeros((Hp2, 1, C_out), jnp.float32)

    def inorm_lrelu(v):
        # InstanceNorm2d (affine=False, biased variance over H*W per channel) + LeakyReLU.
        # v: (H*W, C) f32
        mean = jnp.mean(v, axis=0, keepdims=True)
        var = jnp.mean((v - mean) ** 2, axis=0, keepdims=True)
        vn = (v - mean) * jax.lax.rsqrt(var + EPS)
        return jnp.where(vn >= 0, vn, NEG_SLOPE * vn)

    for s in range(blk):                          # static unroll over samples in the block
        # ---- conv1: 9 taps as MXU matmuls, f32 accumulation ----
        acc = jnp.zeros((HW, C_out), jnp.float32)
        for dh in range(3):
            for dw in range(3):
                patch = x_ref[s, dh:dh + H, dw:dw + W, :]          # (H, W, C_in)
                patch = patch.reshape(HW, C_in)                    # lane dim unchanged
                acc = acc + jnp.dot(patch, w1[3 * dh + dw],
                                    preferred_element_type=jnp.float32)
        y = inorm_lrelu(acc + b1)                                  # (H*W, C_out) f32

        # ---- re-pad intermediate (interior only) into VMEM scratch for conv2 ----
        pad_ref[1:H + 1, 1:W + 1, :] = y.reshape(H, W, C_out)

        # ---- conv2: same MXU tap-matmul structure ----
        acc2 = jnp.zeros((HW, C_out), jnp.float32)
        for dh in range(3):
            for dw in range(3):
                patch = pad_ref[dh:dh + H, dw:dw + W, :].reshape(HW, C_out)
                acc2 = acc2 + jnp.dot(patch, w2[3 * dh + dw],
                                      preferred_element_type=jnp.float32)
        y2 = inorm_lrelu(acc2 + b2)                                # (H*W, C_out) f32

        # Lane-dense store: (C_out, H*W) has a 128-multiple last dim -> unmasked vst,
        # and is already NCHW (flattened spatial) so the wrapper only reshapes.
        o_ref[s, :, :] = y2.T.astype(o_ref.dtype)


def conv_block_forward(x_nchw, params, samples_per_step=None):
    """Pallas implementation of conv_block.forward. x_nchw: (B, C_in, H, W) -> (B, C_out, H, W)."""
    w1, b1, w2, b2 = params                       # w: (3,3,Cin,Cout) HWIO, b: (1,Cout)
    B, C_in, H, W = x_nchw.shape
    C_out = w1.shape[-1]
    HW = H * W
    Hp2, Wp2 = H + 2, W + 2

    # NHWC + "same" zero-pad for the 3x3 conv (input only; intermediate re-padded in-kernel).
    x = jnp.transpose(x_nchw, (0, 2, 3, 1))
    x_pad = jnp.pad(x, ((0, 0), (1, 1), (1, 1), (0, 0)))

    # Flatten the 3x3 taps so the kernel indexes weights as (9, C_in, C_out).
    w1f = w1.reshape(9, C_in, C_out)
    w2f = w2.reshape(9, C_out, C_out)

    # Batch blocking: amortize per-grid-step overhead for large B, but keep grid >= 2
    # whenever possible so both v7x TensorCores get work.
    if samples_per_step is None:
        samples_per_step = 1
        for cand in (4, 2):
            if B % cand == 0 and B // cand >= 2:
                samples_per_step = cand
                break
    blk = samples_per_step
    assert B % blk == 0, (B, blk)
    grid = (B // blk,)

    # TODO(synk): for large H/W/C on v7x (64 MiB VMEM), add a spatial row-band grid axis
    # with a two-pass instance norm and set pltpu.CompilerParams(vmem_limit_bytes=...).
    out = pl.pallas_call(
        conv_block_kernel,
        out_shape=jax.ShapeDtypeStruct((B, C_out, HW), x.dtype),
        grid_spec=pltpu.PrefetchScalarGridSpec(
            num_scalar_prefetch=0,
            grid=grid,                            # instance norm is per-sample
            in_specs=[
                pl.BlockSpec((blk, Hp2, Wp2, C_in), lambda b: (b, 0, 0, 0)),
                pl.BlockSpec((9, C_in, C_out), lambda b: (0, 0, 0)),
                pl.BlockSpec((1, C_out), lambda b: (0, 0)),
                pl.BlockSpec((9, C_out, C_out), lambda b: (0, 0, 0)),
                pl.BlockSpec((1, C_out), lambda b: (0, 0)),
            ],
            out_specs=pl.BlockSpec((blk, C_out, HW), lambda b: (b, 0, 0)),
            scratch_shapes=[pltpu.VMEM((Hp2, Wp2, C_out), jnp.float32)],
        ),
        compiler_params=pltpu.CompilerParams(dimension_semantics=("parallel",)),
    )(x_pad, w1f, b1, w2f, b2)

    return out.reshape(B, C_out, H, W)            # already NCHW, just un-flatten spatial


def reference_forward(x_nchw, params):
    """Pure-JAX reference matching PyTorch semantics (for correctness check)."""
    w1, b1, w2, b2 = params
    x = jnp.transpose(x_nchw, (0, 2, 3, 1))

    def conv(v, w, b):
        y = jax.lax.conv_general_dilated(
            v, w, window_strides=(1, 1), padding=((1, 1), (1, 1)),
            dimension_numbers=("NHWC", "HWIO", "NHWC"))
        return y + b[0]

    def inorm_lrelu(v):
        mean = jnp.mean(v, axis=(1, 2), keepdims=True)
        var = jnp.mean((v - mean) ** 2, axis=(1, 2), keepdims=True)
        vn = (v - mean) * jax.lax.rsqrt(var + EPS)
        return jnp.where(vn >= 0, vn, NEG_SLOPE * vn)

    y = inorm_lrelu(conv(x, w1, b1))
    y = inorm_lrelu(conv(y, w2, b2))
    return jnp.transpose(y, (0, 3, 1, 2))


def init_params(key, ch_in, ch_out):
    """Deterministic synthetic parameters (HWIO conv weights + biases)."""
    k1, k2, k3, k4 = jax.random.split(key, 4)
    w1 = 0.1 * jax.random.normal(k1, (3, 3, ch_in, ch_out), jnp.float32)
    b1 = 0.1 * jax.random.normal(k2, (1, ch_out), jnp.float32)
    w2 = 0.1 * jax.random.normal(k3, (3, 3, ch_out, ch_out), jnp.float32)
    b2 = 0.1 * jax.random.normal(k4, (1, ch_out), jnp.float32)
    return w1, b1, w2, b2


if __name__ == "__main__":
    key = jax.random.PRNGKey(0)
    kx, kp = jax.random.split(key)

    B, CH_IN, CH_OUT, H, W = 2, 4, 8, 16, 16
    x = jax.random.normal(kx, (B, CH_IN, H, W), jnp.float32)   # NCHW like PyTorch
    params = init_params(kp, CH_IN, CH_OUT)

    out = conv_block_forward(x, params)
    out = jax.block_until_ready(out)

    ref = jax.block_until_ready(reference_forward(x, params))
    assert out.shape == (B, CH_OUT, H, W), out.shape
    assert jnp.allclose(out, ref, rtol=1e-4, atol=1e-4), float(jnp.max(jnp.abs(out - ref)))

    print("KERNEL_OK")
</pallas_src>

<mosaic_0001>
module attributes {stable_mosaic.version = 11 : i64} {
  func.func @conv_block_kernel(%arg0: i32, %arg1: memref<1x18x18x4xf32, #tpu.memory_space<vmem>>, %arg2: memref<9x4x8xf32, #tpu.memory_space<vmem>>, %arg3: memref<1x8xf32, #tpu.memory_space<vmem>>, %arg4: memref<9x8x8xf32, #tpu.memory_space<vmem>>, %arg5: memref<1x8xf32, #tpu.memory_space<vmem>>, %arg6: memref<1x8x256xf32, #tpu.memory_space<vmem>>, %arg7: memref<18x18x8xf32, #tpu.memory_space<vmem>>) attributes {dimension_semantics = [#tpu.dimension_semantics<parallel>], iteration_bounds = array<i64: 2>, scalar_prefetch = 0 : i64, scratch_operands = 1 : i64, tpu.core_type = #tpu.core_type<tc>, window_params = [{transform_indices = @transform_0, window_bounds = array<i64: 1, 18, 18, 4>}, {pipeline_mode = #tpu.pipeline_mode<synchronous>, transform_indices = @transform_1, window_bounds = array<i64: 9, 4, 8>}, {pipeline_mode = #tpu.pipeline_mode<synchronous>, transform_indices = @transform_2, window_bounds = array<i64: 1, 8>}, {pipeline_mode = #tpu.pipeline_mode<synchronous>, transform_indices = @transform_3, window_bounds = array<i64: 9, 8, 8>}, {pipeline_mode = #tpu.pipeline_mode<synchronous>, transform_indices = @transform_4, window_bounds = array<i64: 1, 8>}, {transform_indices = @transform_5, window_bounds = array<i64: 1, 8, 256>}]} {
    %c0 = arith.constant 0 : index
    %c0_0 = arith.constant 0 : index
    %c0_1 = arith.constant 0 : index
    %0 = vector.load %arg2[%c0, %c0_0, %c0_1] : memref<9x4x8xf32, #tpu.memory_space<vmem>>, vector<9x4x8xf32>
    %c0_2 = arith.constant 0 : index
    %c0_3 = arith.constant 0 : index
    %c0_4 = arith.constant 0 : index
    %1 = vector.load %arg4[%c0_2, %c0_3, %c0_4] : memref<9x8x8xf32, #tpu.memory_space<vmem>>, vector<9x8x8xf32>
    %c0_5 = arith.constant 0 : index
    %c0_6 = arith.constant 0 : index
    %2 = vector.load %arg3[%c0_5, %c0_6] : memref<1x8xf32, #tpu.memory_space<vmem>>, vector<1x8xf32>
    %c0_7 = arith.constant 0 : index
    %c0_8 = arith.constant 0 : index
    %3 = vector.load %arg5[%c0_7, %c0_8] : memref<1x8xf32, #tpu.memory_space<vmem>>, vector<1x8xf32>
    %cst = arith.constant 0.000000e+00 : f32
    %4 = vector.broadcast %cst : f32 to vector<1x18x8xf32>
    %c0_9 = arith.constant 0 : index
    %c0_10 = arith.constant 0 : index
    %c0_11 = arith.constant 0 : index
    %5 = vector.load %arg7[%c0_9, %c0_10, %c0_11] : memref<18x18x8xf32, #tpu.memory_space<vmem>>, vector<1x18x8xf32>
    tpu.vector_store %arg7[%c0_9, %c0_10, %c0_11], %4 {strides = array<i32>} : memref<18x18x8xf32, #tpu.memory_space<vmem>>, vector<1x18x8xf32>,
    %cst_12 = arith.constant 0.000000e+00 : f32
    %6 = vector.broadcast %cst_12 : f32 to vector<1x18x8xf32>
    %c17 = arith.constant 17 : index
    %c0_13 = arith.constant 0 : index
    %c0_14 = arith.constant 0 : index
    %7 = vector.load %arg7[%c17, %c0_13, %c0_14] : memref<18x18x8xf32, #tpu.memory_space<vmem>>, vector<1x18x8xf32>
    tpu.vector_store %arg7[%c17, %c0_13, %c0_14], %6 {strides = array<i32>} : memref<18x18x8xf32, #tpu.memory_space<vmem>>, vector<1x18x8xf32>,
    %cst_15 = arith.constant 0.000000e+00 : f32
    %8 = vector.broadcast %cst_15 : f32 to vector<18x1x8xf32>
    %c0_16 = arith.constant 0 : index
    %c0_17 = arith.constant 0 : index
    %c0_18 = arith.constant 0 : index
    %9 = vector.load %arg7[%c0_16, %c0_17, %c0_18] : memref<18x18x8xf32, #tpu.memory_space<vmem>>, vector<18x1x8xf32>
    tpu.vector_store %arg7[%c0_16, %c0_17, %c0_18], %8 {strides = array<i32>} : memref<18x18x8xf32, #tpu.memory_space<vmem>>, vector<18x1x8xf32>,
    %cst_19 = arith.constant 0.000000e+00 : f32
    %10 = vector.broadcast %cst_19 : f32 to vector<18x1x8xf32>
    %c0_20 = arith.constant 0 : index
    %c17_21 = arith.constant 17 : index
    %c0_22 = arith.constant 0 : index
    %11 = vector.load %arg7[%c0_20, %c17_21, %c0_22] : memref<18x18x8xf32, #tpu.memory_space<vmem>>, vector<18x1x8xf32>
    tpu.vector_store %arg7[%c0_20, %c17_21, %c0_22], %10 {strides = array<i32>} : memref<18x18x8xf32, #tpu.memory_space<vmem>>, vector<18x1x8xf32>,
    %cst_23 = arith.constant 0.000000e+00 : f32
    %12 = vector.broadcast %cst_23 : f32 to vector<256x8xf32>
    %c0_24 = arith.constant 0 : index
    %c0_25 = arith.constant 0 : index
    %c0_26 = arith.constant 0 : index
    %c0_27 = arith.constant 0 : index
    %13 = vector.load %arg1[%c0_24, %c0_25, %c0_26, %c0_27] : memref<1x18x18x4xf32, #tpu.memory_space<vmem>>, vector<1x16x16x4xf32>
    %14 = vector.shape_cast %13 : vector<1x16x16x4xf32> to vector<16x16x4xf32>
    %15 = vector.shape_cast %14 : vector<16x16x4xf32> to vector<256x4xf32>
    %16 = vector.extract_strided_slice %0 {offsets = [0, 0, 0], sizes = [1, 4, 8], strides = [1, 1, 1]} : vector<9x4x8xf32> to vector<1x4x8xf32>
    %17 = vector.shape_cast %16 : vector<1x4x8xf32> to vector<4x8xf32>
    %cst_28 = arith.constant dense<0.000000e+00> : vector<256x8xf32>
    %18 = tpu.matmul %15, %17, %cst_28 {dimension_numbers = #tpu.dot_dimension_numbers<[1], [0], [0], [1], [0, 0, 1, 1], [], []>} : vector<256x4xf32>, vector<4x8xf32>, vector<256x8xf32> -> vector<256x8xf32>
    %19 = arith.addf %12, %18 : vector<256x8xf32>
    %c0_29 = arith.constant 0 : index
    %c0_30 = arith.constant 0 : index
    %c1 = arith.constant 1 : index
    %c0_31 = arith.constant 0 : index
    %20 = vector.load %arg1[%c0_29, %c0_30, %c1, %c0_31] : memref<1x18x18x4xf32, #tpu.memory_space<vmem>>, vector<1x16x16x4xf32>
    %21 = vector.shape_cast %20 : vector<1x16x16x4xf32> to vector<16x16x4xf32>
    %22 = vector.shape_cast %21 : vector<16x16x4xf32> to vector<256x4xf32>
    %23 = vector.extract_strided_slice %0 {offsets = [1, 0, 0], sizes = [1, 4, 8], strides = [1, 1, 1]} : vector<9x4x8xf32> to vector<1x4x8xf32>
    %24 = vector.shape_cast %23 : vector<1x4x8xf32> to vector<4x8xf32>
    %cst_32 = arith.constant dense<0.000000e+00> : vector<256x8xf32>
    %25 = tpu.matmul %22, %24, %cst_32 {dimension_numbers = #tpu.dot_dimension_numbers<[1], [0], [0], [1], [0, 0, 1, 1], [], []>} : vector<256x4xf32>, vector<4x8xf32>, vector<256x8xf32> -> vector<256x8xf32>
    %26 = arith.addf %19, %25 : vector<256x8xf32>
    %c0_33 = arith.constant 0 : index
    %c0_34 = arith.constant 0 : index
    %c2 = arith.constant 2 : index
    %c0_35 = arith.constant 0 : index
    %27 = vector.load %arg1[%c0_33, %c0_34, %c2, %c0_35] : memref<1x18x18x4xf32, #tpu.memory_space<vmem>>, vector<1x16x16x4xf32>
    %28 = vector.shape_cast %27 : vector<1x16x16x4xf32> to vector<16x16x4xf32>
    %29 = vector.shape_cast %28 : vector<16x16x4xf32> to vector<256x4xf32>
    %30 = vector.extract_strided_slice %0 {offsets = [2, 0, 0], sizes = [1, 4, 8], strides = [1, 1, 1]} : vector<9x4x8xf32> to vector<1x4x8xf32>
    %31 = vector.shape_cast %30 : vector<1x4x8xf32> to vector<4x8xf32>
    %cst_36 = arith.constant dense<0.000000e+00> : vector<256x8xf32>
    %32 = tpu.matmul %29, %31, %cst_36 {dimension_numbers = #tpu.dot_dimension_numbers<[1], [0], [0], [1], [0, 0, 1, 1], [], []>} : vector<256x4xf32>, vector<4x8xf32>, vector<256x8xf32> -> vector<256x8xf32>
    %33 = arith.addf %26, %32 : vector<256x8xf32>
    %c0_37 = arith.constant 0 : index
    %c1_38 = arith.constant 1 : index
    %c0_39 = arith.constant 0 : index
    %c0_40 = arith.constant 0 : index
    %34 = vector.load %arg1[%c0_37, %c1_38, %c0_39, %c0_40] : memref<1x18x18x4xf32, #tpu.memory_space<vmem>>, vector<1x16x16x4xf32>
    %35 = vector.shape_cast %34 : vector<1x16x16x4xf32> to vector<16x16x4xf32>
    %36 = vector.shape_cast %35 : vector<16x16x4xf32> to vector<256x4xf32>
    %37 = vector.extract_strided_slice %0 {offsets = [3, 0, 0], sizes = [1, 4, 8], strides = [1, 1, 1]} : vector<9x4x8xf32> to vector<1x4x8xf32>
    %38 = vector.shape_cast %37 : vector<1x4x8xf32> to vector<4x8xf32>
    %cst_41 = arith.constant dense<0.000000e+00> : vector<256x8xf32>
    %39 = tpu.matmul %36, %38, %cst_41 {dimension_numbers = #tpu.dot_dimension_numbers<[1], [0], [0], [1], [0, 0, 1, 1], [], []>} : vector<256x4xf32>, vector<4x8xf32>, vector<256x8xf32> -> vector<256x8xf32>
    %40 = arith.addf %33, %39 : vector<256x8xf32>
    %c0_42 = arith.constant 0 : index
    %c1_43 = arith.constant 1 : index
    %c1_44 = arith.constant 1 : index
    %c0_45 = arith.constant 0 : index
    %41 = vector.load %arg1[%c0_42, %c1_43, %c1_44, %c0_45] : memref<1x18x18x4xf32, #tpu.memory_space<vmem>>, vector<1x16x16x4xf32>
    %42 = vector.shape_cast %41 : vector<1x16x16x4xf32> to vector<16x16x4xf32>
    %43 = vector.shape_cast %42 : vector<16x16x4xf32> to vector<256x4xf32>
    %44 = vector.extract_strided_slice %0 {offsets = [4, 0, 0], sizes = [1, 4, 8], strides = [1, 1, 1]} : vector<9x4x8xf32> to vector<1x4x8xf32>
    %45 = vector.shape_cast %44 : vector<1x4x8xf32> to vector<4x8xf32>
    %cst_46 = arith.constant dense<0.000000e+00> : vector<256x8xf32>
    %46 = tpu.matmul %43, %45, %cst_46 {dimension_numbers = #tpu.dot_dimension_numbers<[1], [0], [0], [1], [0, 0, 1, 1], [], []>} : vector<256x4xf32>, vector<4x8xf32>, vector<256x8xf32> -> vector<256x8xf32>
    %47 = arith.addf %40, %46 : vector<256x8xf32>
    %c0_47 = arith.constant 0 : index
    %c1_48 = arith.constant 1 : index
    %c2_49 = arith.constant 2 : index
    %c0_50 = arith.constant 0 : index
    %48 = vector.load %arg1[%c0_47, %c1_48, %c2_49, %c0_50] : memref<1x18x18x4xf32, #tpu.memory_space<vmem>>, vector<1x16x16x4xf32>
    %49 = vector.shape_cast %48 : vector<1x16x16x4xf32> to vector<16x16x4xf32>
    %50 = vector.shape_cast %49 : vector<16x16x4xf32> to vector<256x4xf32>
    %51 = vector.extract_strided_slice %0 {offsets = [5, 0, 0], sizes = [1, 4, 8], strides = [1, 1, 1]} : vector<9x4x8xf32> to vector<1x4x8xf32>
    %52 = vector.shape_cast %51 : vector<1x4x8xf32> to vector<4x8xf32>
    %cst_51 = arith.constant dense<0.000000e+00> : vector<256x8xf32>
    %53 = tpu.matmul %50, %52, %cst_51 {dimension_numbers = #tpu.dot_dimension_numbers<[1], [0], [0], [1], [0, 0, 1, 1], [], []>} : vector<256x4xf32>, vector<4x8xf32>, vector<256x8xf32> -> vector<256x8xf32>
    %54 = arith.addf %47, %53 : vector<256x8xf32>
    %c0_52 = arith.constant 0 : index
    %c2_53 = arith.constant 2 : index
    %c0_54 = arith.constant 0 : index
    %c0_55 = arith.constant 0 : index
    %55 = vector.load %arg1[%c0_52, %c2_53, %c0_54, %c0_55] : memref<1x18x18x4xf32, #tpu.memory_space<vmem>>, vector<1x16x16x4xf32>
    %56 = vector.shape_cast %55 : vector<1x16x16x4xf32> to vector<16x16x4xf32>
    %57 = vector.shape_cast %56 : vector<16x16x4xf32> to vector<256x4xf32>
    %58 = vector.extract_strided_slice %0 {offsets = [6, 0, 0], sizes = [1, 4, 8], strides = [1, 1, 1]} : vector<9x4x8xf32> to vector<1x4x8xf32>
    %59 = vector.shape_cast %58 : vector<1x4x8xf32> to vector<4x8xf32>
    %cst_56 = arith.constant dense<0.000000e+00> : vector<256x8xf32>
    %60 = tpu.matmul %57, %59, %cst_56 {dimension_numbers = #tpu.dot_dimension_numbers<[1], [0], [0], [1], [0, 0, 1, 1], [], []>} : vector<256x4xf32>, vector<4x8xf32>, vector<256x8xf32> -> vector<256x8xf32>
    %61 = arith.addf %54, %60 : vector<256x8xf32>
    %c0_57 = arith.constant 0 : index
    %c2_58 = arith.constant 2 : index
    %c1_59 = arith.constant 1 : index
    %c0_60 = arith.constant 0 : index
    %62 = vector.load %arg1[%c0_57, %c2_58, %c1_59, %c0_60] : memref<1x18x18x4xf32, #tpu.memory_space<vmem>>, vector<1x16x16x4xf32>
    %63 = vector.shape_cast %62 : vector<1x16x16x4xf32> to vector<16x16x4xf32>
    %64 = vector.shape_cast %63 : vector<16x16x4xf32> to vector<256x4xf32>
    %65 = vector.extract_strided_slice %0 {offsets = [7, 0, 0], sizes = [1, 4, 8], strides = [1, 1, 1]} : vector<9x4x8xf32> to vector<1x4x8xf32>
    %66 = vector.shape_cast %65 : vector<1x4x8xf32> to vector<4x8xf32>
    %cst_61 = arith.constant dense<0.000000e+00> : vector<256x8xf32>
    %67 = tpu.matmul %64, %66, %cst_61 {dimension_numbers = #tpu.dot_dimension_numbers<[1], [0], [0], [1], [0, 0, 1, 1], [], []>} : vector<256x4xf32>, vector<4x8xf32>, vector<256x8xf32> -> vector<256x8xf32>
    %68 = arith.addf %61, %67 : vector<256x8xf32>
    %c0_62 = arith.constant 0 : index
    %c2_63 = arith.constant 2 : index
    %c2_64 = arith.constant 2 : index
    %c0_65 = arith.constant 0 : index
    %69 = vector.load %arg1[%c0_62, %c2_63, %c2_64, %c0_65] : memref<1x18x18x4xf32, #tpu.memory_space<vmem>>, vector<1x16x16x4xf32>
    %70 = vector.shape_cast %69 : vector<1x16x16x4xf32> to vector<16x16x4xf32>
    %71 = vector.shape_cast %70 : vector<16x16x4xf32> to vector<256x4xf32>
    %72 = vector.extract_strided_slice %0 {offsets = [8, 0, 0], sizes = [1, 4, 8], strides = [1, 1, 1]} : vector<9x4x8xf32> to vector<1x4x8xf32>
    %73 = vector.shape_cast %72 : vector<1x4x8xf32> to vector<4x8xf32>
    %cst_66 = arith.constant dense<0.000000e+00> : vector<256x8xf32>
    %74 = tpu.matmul %71, %73, %cst_66 {dimension_numbers = #tpu.dot_dimension_numbers<[1], [0], [0], [1], [0, 0, 1, 1], [], []>} : vector<256x4xf32>, vector<4x8xf32>, vector<256x8xf32> -> vector<256x8xf32>
    %75 = arith.addf %68, %74 : vector<256x8xf32>
    %76 = vector.broadcast %2 : vector<1x8xf32> to vector<256x8xf32>
    %77 = arith.addf %75, %76 : vector<256x8xf32>
    %cst_67 = arith.constant dense<0.000000e+00> : vector<8xf32>
    %78 = vector.multi_reduction <add>, %77, %cst_67 [0] : vector<256x8xf32> to vector<8xf32>
    %79 = vector.shape_cast %78 : vector<8xf32> to vector<1x8xf32>
    %cst_68 = arith.constant 2.560000e+02 : f32
    %80 = vector.broadcast %cst_68 : f32 to vector<1x8xf32>
    %81 = arith.divf %79, %80 : vector<1x8xf32>
    %82 = vector.broadcast %81 : vector<1x8xf32> to vector<256x8xf32>
    %83 = arith.subf %77, %82 : vector<256x8xf32>
    %84 = arith.mulf %83, %83 : vector<256x8xf32>
    %cst_69 = arith.constant dense<0.000000e+00> : vector<8xf32>
    %85 = vector.multi_reduction <add>, %84, %cst_69 [0] : vector<256x8xf32> to vector<8xf32>
    %86 = vector.shape_cast %85 : vector<8xf32> to vector<1x8xf32>
    %cst_70 = arith.constant 2.560000e+02 : f32
    %87 = vector.broadcast %cst_70 : f32 to vector<1x8xf32>
    %88 = arith.divf %86, %87 : vector<1x8xf32>
    %89 = vector.broadcast %81 : vector<1x8xf32> to vector<256x8xf32>
    %90 = arith.subf %77, %89 : vector<256x8xf32>
    %cst_71 = arith.constant 9.99999974E-6 : f32
    %91 = vector.broadcast %cst_71 : f32 to vector<1x8xf32>
    %92 = arith.addf %88, %91 : vector<1x8xf32>
    %93 = math.rsqrt %92 : vector<1x8xf32>
    %94 = vector.broadcast %93 : vector<1x8xf32> to vector<256x8xf32>
    %95 = arith.mulf %90, %94 : vector<256x8xf32>
    %cst_72 = arith.constant 0.000000e+00 : f32
    %96 = vector.broadcast %cst_72 : f32 to vector<256x8xf32>
    %97 = arith.cmpf oge, %95, %96 : vector<256x8xf32>
    %cst_73 = arith.constant 0.00999999977 : f32
    %98 = vector.broadcast %cst_73 : f32 to vector<256x8xf32>
    %99 = arith.mulf %98, %95 : vector<256x8xf32>
    %100 = arith.select %97, %95, %99 : vector<256x8xi1>, vector<256x8xf32>
    %101 = vector.shape_cast %100 : vector<256x8xf32> to vector<16x16x8xf32>
    %c1_74 = arith.constant 1 : index
    %c1_75 = arith.constant 1 : index
    %c0_76 = arith.constant 0 : index
    %102 = vector.load %arg7[%c1_74, %c1_75, %c0_76] : memref<18x18x8xf32, #tpu.memory_space<vmem>>, vector<16x16x8xf32>
    tpu.vector_store %arg7[%c1_74, %c1_75, %c0_76], %101 {strides = array<i32>} : memref<18x18x8xf32, #tpu.memory_space<vmem>>, vector<16x16x8xf32>,
    %cst_77 = arith.constant 0.000000e+00 : f32
    %103 = vector.broadcast %cst_77 : f32 to vector<256x8xf32>
    %c0_78 = arith.constant 0 : index
    %c0_79 = arith.constant 0 : index
    %c0_80 = arith.constant 0 : index
    %104 = vector.load %arg7[%c0_78, %c0_79, %c0_80] : memref<18x18x8xf32, #tpu.memory_space<vmem>>, vector<16x16x8xf32>
    %105 = vector.shape_cast %104 : vector<16x16x8xf32> to vector<256x8xf32>
    %106 = vector.extract_strided_slice %1 {offsets = [0, 0, 0], sizes = [1, 8, 8], strides = [1, 1, 1]} : vector<9x8x8xf32> to vector<1x8x8xf32>
    %107 = vector.shape_cast %106 : vector<1x8x8xf32> to vector<8x8xf32>
    %cst_81 = arith.constant dense<0.000000e+00> : vector<256x8xf32>
    %108 = tpu.matmul %105, %107, %cst_81 {dimension_numbers = #tpu.dot_dimension_numbers<[1], [0], [0], [1], [0, 0, 1, 1], [], []>} : vector<256x8xf32>, vector<8x8xf32>, vector<256x8xf32> -> vector<256x8xf32>
    %109 = arith.addf %103, %108 : vector<256x8xf32>
    %c0_82 = arith.constant 0 : index
    %c1_83 = arith.constant 1 : index
    %c0_84 = arith.constant 0 : index
    %110 = vector.load %arg7[%c0_82, %c1_83, %c0_84] : memref<18x18x8xf32, #tpu.memory_space<vmem>>, vector<16x16x8xf32>
    %111 = vector.shape_cast %110 : vector<16x16x8xf32> to vector<256x8xf32>
    %112 = vector.extract_strided_slice %1 {offsets = [1, 0, 0], sizes = [1, 8, 8], strides = [1, 1, 1]} : vector<9x8x8xf32> to vector<1x8x8xf32>
    %113 = vector.shape_cast %112 : vector<1x8x8xf32> to vector<8x8xf32>
    %cst_85 = arith.constant dense<0.000000e+00> : vector<256x8xf32>
    %114 = tpu.matmul %111, %113, %cst_85 {dimension_numbers = #tpu.dot_dimension_numbers<[1], [0], [0], [1], [0, 0, 1, 1], [], []>} : vector<256x8xf32>, vector<8x8xf32>, vector<256x8xf32> -> vector<256x8xf32>
    %115 = arith.addf %109, %114 : vector<256x8xf32>
    %c0_86 = arith.constant 0 : index
    %c2_87 = arith.constant 2 : index
    %c0_88 = arith.constant 0 : index
    %116 = vector.load %arg7[%c0_86, %c2_87, %c0_88] : memref<18x18x8xf32, #tpu.memory_space<vmem>>, vector<16x16x8xf32>
    %117 = vector.shape_cast %116 : vector<16x16x8xf32> to vector<256x8xf32>
    %118 = vector.extract_strided_slice %1 {offsets = [2, 0, 0], sizes = [1, 8, 8], strides = [1, 1, 1]} : vector<9x8x8xf32> to vector<1x8x8xf32>
    %119 = vector.shape_cast %118 : vector<1x8x8xf32> to vector<8x8xf32>
    %cst_89 = arith.constant dense<0.000000e+00> : vector<256x8xf32>
    %120 = tpu.matmul %117, %119, %cst_89 {dimension_numbers = #tpu.dot_dimension_numbers<[1], [0], [0], [1], [0, 0, 1, 1], [], []>} : vector<256x8xf32>, vector<8x8xf32>, vector<256x8xf32> -> vector<256x8xf32>
    %121 = arith.addf %115, %120 : vector<256x8xf32>
    %c1_90 = arith.constant 1 : index
    %c0_91 = arith.constant 0 : index
    %c0_92 = arith.constant 0 : index
    %122 = vector.load %arg7[%c1_90, %c0_91, %c0_92] : memref<18x18x8xf32, #tpu.memory_space<vmem>>, vector<16x16x8xf32>
    %123 = vector.shape_cast %122 : vector<16x16x8xf32> to vector<256x8xf32>
    %124 = vector.extract_strided_slice %1 {offsets = [3, 0, 0], sizes = [1, 8, 8], strides = [1, 1, 1]} : vector<9x8x8xf32> to vector<1x8x8xf32>
    %125 = vector.shape_cast %124 : vector<1x8x8xf32> to vector<8x8xf32>
    %cst_93 = arith.constant dense<0.000000e+00> : vector<256x8xf32>
    %126 = tpu.matmul %123, %125, %cst_93 {dimension_numbers = #tpu.dot_dimension_numbers<[1], [0], [0], [1], [0, 0, 1, 1], [], []>} : vector<256x8xf32>, vector<8x8xf32>, vector<256x8xf32> -> vector<256x8xf32>
    %127 = arith.addf %121, %126 : vector<256x8xf32>
    %c1_94 = arith.constant 1 : index
    %c1_95 = arith.constant 1 : index
    %c0_96 = arith.constant 0 : index
    %128 = vector.load %arg7[%c1_94, %c1_95, %c0_96] : memref<18x18x8xf32, #tpu.memory_space<vmem>>, vector<16x16x8xf32>
    %129 = vector.shape_cast %128 : vector<16x16x8xf32> to vector<256x8xf32>
    %130 = vector.extract_strided_slice %1 {offsets = [4, 0, 0], sizes = [1, 8, 8], strides = [1, 1, 1]} : vector<9x8x8xf32> to vector<1x8x8xf32>
    %131 = vector.shape_cast %130 : vector<1x8x8xf32> to vector<8x8xf32>
    %cst_97 = arith.constant dense<0.000000e+00> : vector<256x8xf32>
    %132 = tpu.matmul %129, %131, %cst_97 {dimension_numbers = #tpu.dot_dimension_numbers<[1], [0], [0], [1], [0, 0, 1, 1], [], []>} : vector<256x8xf32>, vector<8x8xf32>, vector<256x8xf32> -> vector<256x8xf32>
    %133 = arith.addf %127, %132 : vector<256x8xf32>
    %c1_98 = arith.constant 1 : index
    %c2_99 = arith.constant 2 : index
    %c0_100 = arith.constant 0 : index
    %134 = vector.load %arg7[%c1_98, %c2_99, %c0_100] : memref<18x18x8xf32, #tpu.memory_space<vmem>>, vector<16x16x8xf32>
    %135 = vector.shape_cast %134 : vector<16x16x8xf32> to vector<256x8xf32>
    %136 = vector.extract_strided_slice %1 {offsets = [5, 0, 0], sizes = [1, 8, 8], strides = [1, 1, 1]} : vector<9x8x8xf32> to vector<1x8x8xf32>
    %137 = vector.shape_cast %136 : vector<1x8x8xf32> to vector<8x8xf32>
    %cst_101 = arith.constant dense<0.000000e+00> : vector<256x8xf32>
    %138 = tpu.matmul %135, %137, %cst_101 {dimension_numbers = #tpu.dot_dimension_numbers<[1], [0], [0], [1], [0, 0, 1, 1], [], []>} : vector<256x8xf32>, vector<8x8xf32>, vector<256x8xf32> -> vector<256x8xf32>
    %139 = arith.addf %133, %138 : vector<256x8xf32>
    %c2_102 = arith.constant 2 : index
    %c0_103 = arith.constant 0 : index
    %c0_104 = arith.constant 0 : index
    %140 = vector.load %arg7[%c2_102, %c0_103, %c0_104] : memref<18x18x8xf32, #tpu.memory_space<vmem>>, vector<16x16x8xf32>
    %141 = vector.shape_cast %140 : vector<16x16x8xf32> to vector<256x8xf32>
    %142 = vector.extract_strided_slice %1 {offsets = [6, 0, 0], sizes = [1, 8, 8], strides = [1, 1, 1]} : vector<9x8x8xf32> to vector<1x8x8xf32>
    %143 = vector.shape_cast %142 : vector<1x8x8xf32> to vector<8x8xf32>
    %cst_105 = arith.constant dense<0.000000e+00> : vector<256x8xf32>
    %144 = tpu.matmul %141, %143, %cst_105 {dimension_numbers = #tpu.dot_dimension_numbers<[1], [0], [0], [1], [0, 0, 1, 1], [], []>} : vector<256x8xf32>, vector<8x8xf32>, vector<256x8xf32> -> vector<256x8xf32>
    %145 = arith.addf %139, %144 : vector<256x8xf32>
    %c2_106 = arith.constant 2 : index
    %c1_107 = arith.constant 1 : index
    %c0_108 = arith.constant 0 : index
    %146 = vector.load %arg7[%c2_106, %c1_107, %c0_108] : memref<18x18x8xf32, #tpu.memory_space<vmem>>, vector<16x16x8xf32>
    %147 = vector.shape_cast %146 : vector<16x16x8xf32> to vector<256x8xf32>
    %148 = vector.extract_strided_slice %1 {offsets = [7, 0, 0], sizes = [1, 8, 8], strides = [1, 1, 1]} : vector<9x8x8xf32> to vector<1x8x8xf32>
    %149 = vector.shape_cast %148 : vector<1x8x8xf32> to vector<8x8xf32>
    %cst_109 = arith.constant dense<0.000000e+00> : vector<256x8xf32>
    %150 = tpu.matmul %147, %149, %cst_109 {dimension_numbers = #tpu.dot_dimension_numbers<[1], [0], [0], [1], [0, 0, 1, 1], [], []>} : vector<256x8xf32>, vector<8x8xf32>, vector<256x8xf32> -> vector<256x8xf32>
    %151 = arith.addf %145, %150 : vector<256x8xf32>
    %c2_110 = arith.constant 2 : index
    %c2_111 = arith.constant 2 : index
    %c0_112 = arith.constant 0 : index
    %152 = vector.load %arg7[%c2_110, %c2_111, %c0_112] : memref<18x18x8xf32, #tpu.memory_space<vmem>>, vector<16x16x8xf32>
    %153 = vector.shape_cast %152 : vector<16x16x8xf32> to vector<256x8xf32>
    %154 = vector.extract_strided_slice %1 {offsets = [8, 0, 0], sizes = [1, 8, 8], strides = [1, 1, 1]} : vector<9x8x8xf32> to vector<1x8x8xf32>
    %155 = vector.shape_cast %154 : vector<1x8x8xf32> to vector<8x8xf32>
    %cst_113 = arith.constant dense<0.000000e+00> : vector<256x8xf32>
    %156 = tpu.matmul %153, %155, %cst_113 {dimension_numbers = #tpu.dot_dimension_numbers<[1], [0], [0], [1], [0, 0, 1, 1], [], []>} : vector<256x8xf32>, vector<8x8xf32>, vector<256x8xf32> -> vector<256x8xf32>
    %157 = arith.addf %151, %156 : vector<256x8xf32>
    %158 = vector.broadcast %3 : vector<1x8xf32> to vector<256x8xf32>
    %159 = arith.addf %157, %158 : vector<256x8xf32>
    %cst_114 = arith.constant dense<0.000000e+00> : vector<8xf32>
    %160 = vector.multi_reduction <add>, %159, %cst_114 [0] : vector<256x8xf32> to vector<8xf32>
    %161 = vector.shape_cast %160 : vector<8xf32> to vector<1x8xf32>
    %cst_115 = arith.constant 2.560000e+02 : f32
    %162 = vector.broadcast %cst_115 : f32 to vector<1x8xf32>
    %163 = arith.divf %161, %162 : vector<1x8xf32>
    %164 = vector.broadcast %163 : vector<1x8xf32> to vector<256x8xf32>
    %165 = arith.subf %159, %164 : vector<256x8xf32>
    %166 = arith.mulf %165, %165 : vector<256x8xf32>
    %cst_116 = arith.constant dense<0.000000e+00> : vector<8xf32>
    %167 = vector.multi_reduction <add>, %166, %cst_116 [0] : vector<256x8xf32> to vector<8xf32>
    %168 = vector.shape_cast %167 : vector<8xf32> to vector<1x8xf32>
    %cst_117 = arith.constant 2.560000e+02 : f32
    %169 = vector.broadcast %cst_117 : f32 to vector<1x8xf32>
    %170 = arith.divf %168, %169 : vector<1x8xf32>
    %171 = vector.broadcast %163 : vector<1x8xf32> to vector<256x8xf32>
    %172 = arith.subf %159, %171 : vector<256x8xf32>
    %cst_118 = arith.constant 9.99999974E-6 : f32
    %173 = vector.broadcast %cst_118 : f32 to vector<1x8xf32>
    %174 = arith.addf %170, %173 : vector<1x8xf32>
    %175 = math.rsqrt %174 : vector<1x8xf32>
    %176 = vector.broadcast %175 : vector<1x8xf32> to vector<256x8xf32>
    %177 = arith.mulf %172, %176 : vector<256x8xf32>
    %cst_119 = arith.constant 0.000000e+00 : f32
    %178 = vector.broadcast %cst_119 : f32 to vector<256x8xf32>
    %179 = arith.cmpf oge, %177, %178 : vector<256x8xf32>
    %cst_120 = arith.constant 0.00999999977 : f32
    %180 = vector.broadcast %cst_120 : f32 to vector<256x8xf32>
    %181 = arith.mulf %180, %177 : vector<256x8xf32>
    %182 = arith.select %179, %177, %181 : vector<256x8xi1>, vector<256x8xf32>
    %183 = tpu.transpose %182, [1, 0] : vector<256x8xf32> -> vector<8x256xf32>
    %c0_121 = arith.constant 0 : index
    %c0_122 = arith.constant 0 : index
    %c0_123 = arith.constant 0 : index
    %184 = vector.load %arg6[%c0_121, %c0_122, %c0_123] : memref<1x8x256xf32, #tpu.memory_space<vmem>>, vector<1x8x256xf32>
    %185 = vector.shape_cast %184 : vector<1x8x256xf32> to vector<8x256xf32>
    %186 = vector.shape_cast %183 : vector<8x256xf32> to vector<1x8x256xf32>
    tpu.vector_store %arg6[%c0_121, %c0_122, %c0_123], %186 {strides = array<i32>} : memref<1x8x256xf32, #tpu.memory_space<vmem>>, vector<1x8x256xf32>,
    return
  }
  func.func @transform_0(%arg0: i32) -> (i32, i32, i32, i32) {
    %c0_i32 = arith.constant 0 : i32
    %c0_i32_0 = arith.constant 0 : i32
    %c0_i32_1 = arith.constant 0 : i32
    %c0_i32_2 = arith.constant 0 : i32
    return %arg0, %c0_i32, %c0_i32_0, %c0_i32_1 : i32, i32, i32, i32
  }
  func.func @transform_1(%arg0: i32) -> (i32, i32, i32) {
    %c0_i32 = arith.constant 0 : i32
    %c0_i32_0 = arith.constant 0 : i32
    %c0_i32_1 = arith.constant 0 : i32
    %c0_i32_2 = arith.constant 0 : i32
    return %c0_i32, %c0_i32_0, %c0_i32_1 : i32, i32, i32
  }
  func.func @transform_2(%arg0: i32) -> (i32, i32) {
    %c0_i32 = arith.constant 0 : i32
    %c0_i32_0 = arith.constant 0 : i32
    %c0_i32_1 = arith.constant 0 : i32
    return %c0_i32, %c0_i32_0 : i32, i32
  }
  func.func @transform_3(%arg0: i32) -> (i32, i32, i32) {
    %c0_i32 = arith.constant 0 : i32
    %c0_i32_0 = arith.constant 0 : i32
    %c0_i32_1 = arith.constant 0 : i32
    %c0_i32_2 = arith.constant 0 : i32
    return %c0_i32, %c0_i32_0, %c0_i32_1 : i32, i32, i32
  }
  func.func @transform_4(%arg0: i32) -> (i32, i32) {
    %c0_i32 = arith.constant 0 : i32
    %c0_i32_0 = arith.constant 0 : i32
    %c0_i32_1 = arith.constant 0 : i32
    return %c0_i32, %c0_i32_0 : i32, i32
  }
  func.func @transform_5(%arg0: i32) -> (i32, i32, i32) {
    %c0_i32 = arith.constant 0 : i32
    %c0_i32_0 = arith.constant 0 : i32
    %c0_i32_1 = arith.constant 0 : i32
    return %arg0, %c0_i32, %c0_i32_0 : i32, i32, i32
  }
}

</mosaic_0001>

<llo_original>
// kernel: tpu_custom_call.1
$region0: #{tpu_custom_call.1}
  #allocation0 [shape = 'u32[]', space=smem, size = 0x4, offset = 0x4, fixed_abs, tag = 'smem constant byte address 0x4 - core index']
  #allocation1 [shape = 'u32[144,128]{1,0:T(1,128)}', space=vmem, size = 0x12000, scoped, tag = 'internal scratch']
  #allocation2 [shape = 'f32[18,18,8]{2,1,0:T(8,128)}', space=vmem, size = 0x36000, scoped, tag = 'scratch operand']
  %s0 = inlined_call_operand.vmem [shape: f32[2,18,18,4], index: 0, kind: input, shape index: {}]
  %s1 = inlined_call_operand.vmem [shape: f32[9,4,8], index: 1, kind: input, shape index: {}]
  %s2 = inlined_call_operand.vmem [shape: f32[1,8], index: 2, kind: input, shape index: {}]
  %s3 = inlined_call_operand.vmem [shape: f32[9,8,8], index: 3, kind: input, shape index: {}]
  %s4 = inlined_call_operand.vmem [shape: f32[1,8], index: 4, kind: input, shape index: {}]
  %s5 = inlined_call_operand.hbm [shape: f32[2,8,256], index: 5, kind: output, shape index: {}]
  %s6 = sld [smem:[#allocation0]]
  $region53: #{tpu_custom_call.1} parent=0
    _
  %s8 = ssub.s32 1, %s6
  %s9 = scalar_select 0, %s8, %s6
  $region1: #{tpu_custom_call.1} parent=0
    #allocation3 [shape = 'u8[16384]{0}', space=vmem, size = 0x4000, scoped, tag = 'output window, operand 0']
    #allocation4 [shape = 's32[2]{0}', space=sflag, size = 0x8, scoped, tag = 'scoped memory for tpu_custom_call.1']
    %10 = vsyncpa [#allocation4], 0
    %s11 = scalar_lea.sflag [#allocation4], 1
    %12 = vsyncpa %s11, 0
    loop: start=0, step=1, limit=4
    $region2: #{tpu_custom_call.1} parent=1 // loop_pre_header
      _
    $region3: #{tpu_custom_call.1} parent=1 // loop_header
      %s14 = sphi 0, %s18
      %p15 = scmp.ge.s32.totalorder %s14, 4
      %s24 = sphi 0, %s26
      %s27 = sphi 0, %s24
      %s28 = sphi 0, %s27
      %s44 = sphi 0, %s28
      %s48 = sphi 0, %s48
      %s50 = sphi 0, %s48
      %s51 = sphi 0, %s50
      %s65 = sphi 0, %s51
      %s69 = sphi 0, %s69
      %s71 = sphi 0, %s69
      %s72 = sphi 0, %s71
      %s86 = sphi 0, %s72
      %s90 = sphi 0, %s90
      %s92 = sphi 0, %s90
      %s93 = sphi 0, %s92
      %s107 = sphi 0, %s93
      %s111 = sphi 0, %s111
      %s113 = sphi 0, %s111
      %s114 = sphi 0, %s113
      %s128 = sphi 0, %s114
      %s134 = sphi 0, %s136
      %s137 = sphi 0, %s134
      %s138 = sphi 0, %s137
      %s154 = sphi 0, %s138
    $region4: #{tpu_custom_call.1} parent=1 // loop_header_branch
      %17 = sbr.rel (%p15) target = $region8
    $region5: #{tpu_custom_call.1} parent=1 // loop_body
      %s19 = ssub.s32 %s14, 1
      %s20 = ssub.s32 %s14, 2
      %s21 = sadd.s32 %s14, 1
      %s22 = ssub.s32 %s14, %s21
      %p23 = scmp.eq.s32.totalorder %s22, 0
      %s25 = sadd.s32 %s24, 1
      %s26 = scalar_select %p23, %s24, %s25
      %p29 = pneg %p23
      %p30 = scmp.eq.s32.totalorder %s14, 1
      %p31 = por %p29, %p30
      %p32 = scmp.ne.s32.totalorder %s24, %s27
      %p33 = scmp.eq.s32.totalorder %s14, 0
      %p34 = por %p32, %p33
      %p35 = scmp.ne.s32.totalorder %s24, %s27
      %p36 = scmp.eq.s32.totalorder %s19, 1
      %p37 = por %p35, %p36
      %p38 = scmp.ne.s32.totalorder %s27, %s28
      %p39 = scmp.eq.s32.totalorder %s19, 0
      %p40 = por %p38, %p39
      %p41 = scmp.ne.s32.totalorder %s27, %s28
      %p42 = scmp.eq.s32.totalorder %s20, 1
      %p43 = por %p41, %p42
      %p45 = scmp.ne.s32.totalorder %s28, %s44
      %p46 = scmp.eq.s32.totalorder %s20, 0
      %p47 = por %p45, %p46
      %s49 = sadd.s32 %s48, 1
      %p52 = scmp.eq.s32.totalorder %s14, 1
      %p53 = scmp.ne.s32.totalorder %s48, %s50
      %p54 = scmp.eq.s32.totalorder %s14, 0
      %p55 = por %p53, %p54
      %p56 = scmp.ne.s32.totalorder %s48, %s50
      %p57 = scmp.eq.s32.totalorder %s19, 1
      %p58 = por %p56, %p57
      %p59 = scmp.ne.s32.totalorder %s50, %s51
      %p60 = scmp.eq.s32.totalorder %s19, 0
      %p61 = por %p59, %p60
      %p62 = scmp.ne.s32.totalorder %s50, %s51
      %p63 = scmp.eq.s32.totalorder %s20, 1
      %p64 = por %p62, %p63
      %p66 = scmp.ne.s32.totalorder %s51, %s65
      %p67 = scmp.eq.s32.totalorder %s20, 0
      %p68 = por %p66, %p67
      %s70 = sadd.s32 %s69, 1
      %p73 = scmp.eq.s32.totalorder %s14, 1
      %p74 = scmp.ne.s32.totalorder %s69, %s71
      %p75 = scmp.eq.s32.totalorder %s14, 0
      %p76 = por %p74, %p75
      %p77 = scmp.ne.s32.totalorder %s69, %s71
      %p78 = scmp.eq.s32.totalorder %s19, 1
      %p79 = por %p77, %p78
      %p80 = scmp.ne.s32.totalorder %s71, %s72
      %p81 = scmp.eq.s32.totalorder %s19, 0
      %p82 = por %p80, %p81
      %p83 = scmp.ne.s32.totalorder %s71, %s72
      %p84 = scmp.eq.s32.totalorder %s20, 1
      %p85 = por %p83, %p84
      %p87 = scmp.ne.s32.totalorder %s72, %s86
      %p88 = scmp.eq.s32.totalorder %s20, 0
      %p89 = por %p87, %p88
      %s91 = sadd.s32 %s90, 1
      %p94 = scmp.eq.s32.totalorder %s14, 1
      %p95 = scmp.ne.s32.totalorder %s90, %s92
      %p96 = scmp.eq.s32.totalorder %s14, 0
      %p97 = por %p95, %p96
      %p98 = scmp.ne.s32.totalorder %s90, %s92
      %p99 = scmp.eq.s32.totalorder %s19, 1
      %p100 = por %p98, %p99
      %p101 = scmp.ne.s32.totalorder %s92, %s93
      %p102 = scmp.eq.s32.totalorder %s19, 0
      %p103 = por %p101, %p102
      %p104 = scmp.ne.s32.totalorder %s92, %s93
      %p105 = scmp.eq.s32.totalorder %s20, 1
      %p106 = por %p104, %p105
      %p108 = scmp.ne.s32.totalorder %s93, %s107
      %p109 = scmp.eq.s32.totalorder %s20, 0
      %p110 = por %p108, %p109
      %s112 = sadd.s32 %s111, 1
      %p115 = scmp.eq.s32.totalorder %s14, 1
      %p116 = scmp.ne.s32.totalorder %s111, %s113
      %p117 = scmp.eq.s32.totalorder %s14, 0
      %p118 = por %p116, %p117
      %p119 = scmp.ne.s32.totalorder %s111, %s113
      %p120 = scmp.eq.s32.totalorder %s19, 1
      %p121 = por %p119, %p120
      %p122 = scmp.ne.s32.totalorder %s113, %s114
      %p123 = scmp.eq.s32.totalorder %s19, 0
      %p124 = por %p122, %p123
      %p125 = scmp.ne.s32.totalorder %s113, %s114
      %p126 = scmp.eq.s32.totalorder %s20, 1
      %p127 = por %p125, %p126
      %p129 = scmp.ne.s32.totalorder %s114, %s128
      %p130 = scmp.eq.s32.totalorder %s20, 0
      %p131 = por %p129, %p130
      %s132 = ssub.s32 %s14, %s21
      %p133 = scmp.eq.s32.totalorder %s132, 0
      %s135 = sadd.s32 %s134, 1
      %s136 = scalar_select %p133, %s134, %s135
      %p139 = pneg %p133
      %p140 = scmp.eq.s32.totalorder %s14, 1
      %p141 = por %p139, %p140
      %p142 = scmp.ne.s32.totalorder %s134, %s137
      %p143 = scmp.eq.s32.totalorder %s14, 0
      %p144 = por %p142, %p143
      %p145 = scmp.ne.s32.totalorder %s134, %s137
      %p146 = scmp.eq.s32.totalorder %s19, 1
      %p147 = por %p145, %p146
      %p148 = scmp.ne.s32.totalorder %s137, %s138
      %p149 = scmp.eq.s32.totalorder %s19, 0
      %p150 = por %p148, %p149
      %p151 = scmp.ne.s32.totalorder %s137, %s138
      %p152 = scmp.eq.s32.totalorder %s20, 1
      %p153 = por %p151, %p152
      %p155 = scmp.ne.s32.totalorder %s138, %s154
      %p156 = scmp.eq.s32.totalorder %s20, 0
      %p157 = por %p155, %p156
      %p158 = scmp.le.s32.totalorder 1, %s14
      %p159 = scmp.lt.s32.totalorder %s14, 3
      %p160 = pnand %p158, %p159
      %p161 = pneg %p160
      // Predicated region
      $region9: #{tpu_custom_call.1} parent=5 // pred_check
        _
      $region10: #{tpu_custom_call.1} parent=5 // pred_check_branch
        %163 = sbr.rel (%p160) target = $region12
      $region11: #{tpu_custom_call.1} parent=5 // pred_region
        %s164 = ssub.s32 %s14, 1
        // Predicated region
        $region13: #{tpu_custom_call.1} parent=11 // pred_check
          %p165 = pneg %p61
        $region14: #{tpu_custom_call.1} parent=11 // pred_check_branch
          %167 = sbr.rel (%p165) target = $region16
        $region15: #{tpu_custom_call.1} parent=11 // pred_region
          _
        $region16: #{tpu_custom_call.1} parent=11 // pred_fallthru
          _
        // Predicated region
        $region17: #{tpu_custom_call.1} parent=11 // pred_check
          %p168 = pneg %p82
        $region18: #{tpu_custom_call.1} parent=11 // pred_check_branch
          %170 = sbr.rel (%p168) target = $region20
        $region19: #{tpu_custom_call.1} parent=11 // pred_region
          _
        $region20: #{tpu_custom_call.1} parent=11 // pred_fallthru
          _
        // Predicated region
        $region21: #{tpu_custom_call.1} parent=11 // pred_check
          %p171 = pneg %p103
        $region22: #{tpu_custom_call.1} parent=11 // pred_check_branch
          %173 = sbr.rel (%p171) target = $region24
        $region23: #{tpu_custom_call.1} parent=11 // pred_region
          _
        $region24: #{tpu_custom_call.1} parent=11 // pred_fallthru
          _
        // Predicated region
        $region25: #{tpu_custom_call.1} parent=11 // pred_check
          %p174 = pneg %p124
        $region26: #{tpu_custom_call.1} parent=11 // pred_check_branch
          %176 = sbr.rel (%p174) target = $region28
        $region27: #{tpu_custom_call.1} parent=11 // pred_region
          _
        $region28: #{tpu_custom_call.1} parent=11 // pred_fallthru
          _
      $region12: #{tpu_custom_call.1} parent=5 // pred_fallthru
        _
      %p177 = scmp.lt.s32.totalorder %s14, 2
      // Predicated region
      $region29: #{tpu_custom_call.1} parent=5 // pred_check
        %p178 = pneg %p177
      $region30: #{tpu_custom_call.1} parent=5 // pred_check_branch
        %180 = sbr.rel (%p178) target = $region32
      $region31: #{tpu_custom_call.1} parent=5 // pred_region
        // Predicated region
        $region33: #{tpu_custom_call.1} parent=31 // pred_check
          %p181 = pneg %p34
        $region34: #{tpu_custom_call.1} parent=31 // pred_check_branch
          %183 = sbr.rel (%p181) target = $region36
        $region35: #{tpu_custom_call.1} parent=31 // pred_region
          %p184 = scmp.lt.s32.totalorder %s14, 1
          %s185 = scalar_select %p184, %s14, 1
          %s186 = smul.addr %s185, 54
          %s187 = smul.addr %s186, 8
          %s188 = scalar_lea.vmem %s0, %s187
        $region36: #{tpu_custom_call.1} parent=31 // pred_fallthru
          _
      $region32: #{tpu_custom_call.1} parent=5 // pred_fallthru
        _
      %p189 = scmp.le.s32.totalorder 1, %s14
      %p190 = scmp.lt.s32.totalorder %s14, 3
      %p191 = pnand %p189, %p190
      %p192 = pneg %p191
      // Predicated region
      $region37: #{tpu_custom_call.1} parent=5 // pred_check
        _
      $region38: #{tpu_custom_call.1} parent=5 // pred_check_branch
        %194 = sbr.rel (%p191) target = $region40
      $region39: #{tpu_custom_call.1} parent=5 // pred_region
        %s195 = ssub.s32 %s14, 1
        %p196 = scmp.lt.s32.totalorder %s19, 1
        %s197 = scalar_select %p196, %s19, 1
        %s198 = smul.addr %s197, 54
        %s199 = smul.addr %s198, 8
        %s200 = scalar_lea.vmem %s0, %s199
        %p201 = pneg %p40
        %p202 = pneg %p37
        %p203 = pneg %p61
        %p204 = pneg %p58
        %p205 = pneg %p82
        %p206 = pneg %p79
        %p207 = pneg %p103
        %p208 = pneg %p100
        %p209 = pneg %p124
        %p210 = pneg %p121
        %p211 = pneg %p150
        %p212 = pneg %p147
        %s213 = sand.u32 %s137, 1
        %s214 = scalar_lea.sflag [#allocation4], %s213
        %s215 = sand.u32 %s137, 1
        %s216 = smul.addr %s215, 16
        %s217 = scalar_lea.vmem [#allocation3], %s216
        %p218 = scmp.lt.s32.totalorder %s19, 1
        %s219 = scalar_select %p218, %s19, 1
        %s220 = smul.addr %s219, 54
        %s221 = smul.addr %s220, 8
        %s222 = scalar_lea.vmem %s0, %s221
        %v223 = vld [vmem:[%s1] sm:$0xf]
        %v224 = vld [vmem:[%s1 + $0x4] sm:$0xf]
        %v225 = vld [vmem:[%s1 + $0x8] sm:$0xf]
        %v226 = vld [vmem:[%s1 + $0xc] sm:$0xf]
        %v227 = vld [vmem:[%s1 + $0x10] sm:$0xf]
        %v228 = vld [vmem:[%s1 + $0x14] sm:$0xf]
        %v229 = vld [vmem:[%s1 + $0x18] sm:$0xf]
        %v230 = vld [vmem:[%s1 + $0x1c] sm:$0xf]
        %v231 = vld [vmem:[%s1 + $0x20] sm:$0xf]
        %v232 = vld [vmem:[%s3] sm:$0xff]
        %v233 = vld [vmem:[%s3 + $0x8] sm:$0xff]
        %v234 = vld [vmem:[%s3 + $0x10] sm:$0xff]
        %v235 = vld [vmem:[%s3 + $0x18] sm:$0xff]
        %v236 = vld [vmem:[%s3 + $0x20] sm:$0xff]
        %v237 = vld [vmem:[%s3 + $0x28] sm:$0xff]
        %v238 = vld [vmem:[%s3 + $0x30] sm:$0xff]
        %v239 = vld [vmem:[%s3 + $0x38] sm:$0xff]
        %v240 = vld [vmem:[%s3 + $0x40] sm:$0xff]
        %v241 = vld [vmem:[%s2] sm:$0x1]
        %v242 = vld [vmem:[%s4] sm:$0x1]
        %vm243 = vcmask 64512
        %244 = vst.msk [vmem:[#allocation2] sm:$0xff] %vm243, 0.0
        %245 = vst.msk [vmem:[#allocation2 + $0x8] sm:$0xff] %vm243, 0.0
        %vm246 = vcmask 58368
        %247 = vst.msk [vmem:[#allocation2 + $0x10] sm:$0x3] %vm246, 0.0
        %s248 = scalar_lea.vmem [#allocation2], 408
        %249 = vst.msk [vmem:[%s248] sm:$0xff] %vm243, 0.0
        %250 = vst.msk [vmem:[%s248 + $0x8] sm:$0xff] %vm243, 0.0
        %251 = vst.msk [vmem:[%s248 + $0x10] sm:$0x3] %vm246, 0.0
        %vm252 = vcmask 57344
        %253 = vst.msk [vmem:[#allocation2] sm:$0x1] %vm252, 0.0
        %254 = vst.msk [vmem:[#allocation2 + $0x18] sm:$0x1] %vm252, 0.0
        %255 = vst.msk [vmem:[#allocation2 + $0x30] sm:$0x1] %vm252, 0.0
        %256 = vst.msk [vmem:[#allocation2 + $0x48] sm:$0x1] %vm252, 0.0
        %257 = vst.msk [vmem:[#allocation2 + $0x60] sm:$0x1] %vm252, 0.0
        %258 = vst.msk [vmem:[#allocation2 + $0x78] sm:$0x1] %vm252, 0.0
        %259 = vst.msk [vmem:[#allocation2 + $0x90] sm:$0x1] %vm252, 0.0
        %260 = vst.msk [vmem:[#allocation2 + $0xa8] sm:$0x1] %vm252, 0.0
        %261 = vst.msk [vmem:[#allocation2 + $0xc0] sm:$0x1] %vm252, 0.0
        %262 = vst.msk [vmem:[#allocation2 + $0xd8] sm:$0x1] %vm252, 0.0
        %263 = vst.msk [vmem:[#allocation2 + $0xf0] sm:$0x1] %vm252, 0.0
        %264 = vst.msk [vmem:[#allocation2 + $0x108] sm:$0x1] %vm252, 0.0
        %265 = vst.msk [vmem:[#allocation2 + $0x120] sm:$0x1] %vm252, 0.0
        %266 = vst.msk [vmem:[#allocation2 + $0x138] sm:$0x1] %vm252, 0.0
        %267 = vst.msk [vmem:[#allocation2 + $0x150] sm:$0x1] %vm252, 0.0
        %268 = vst.msk [vmem:[#allocation2 + $0x168] sm:$0x1] %vm252, 0.0
        %269 = vst.msk [vmem:[#allocation2 + $0x180] sm:$0x1] %vm252, 0.0
        %270 = vst.msk [vmem:[#allocation2 + $0x198] sm:$0x1] %vm252, 0.0
        %271 = vst.msk [vmem:[#allocation2 + $0x11] sm:$0x1] %vm252, 0.0
        %272 = vst.msk [vmem:[#allocation2 + $0x29] sm:$0x1] %vm252, 0.0
        %273 = vst.msk [vmem:[#allocation2 + $0x41] sm:$0x1] %vm252, 0.0
        %274 = vst.msk [vmem:[#allocation2 + $0x59] sm:$0x1] %vm252, 0.0
        %275 = vst.msk [vmem:[#allocation2 + $0x71] sm:$0x1] %vm252, 0.0
        %276 = vst.msk [vmem:[#allocation2 + $0x89] sm:$0x1] %vm252, 0.0
        %277 = vst.msk [vmem:[#allocation2 + $0xa1] sm:$0x1] %vm252, 0.0
        %278 = vst.msk [vmem:[#allocation2 + $0xb9] sm:$0x1] %vm252, 0.0
        %279 = vst.msk [vmem:[#allocation2 + $0xd1] sm:$0x1] %vm252, 0.0
        %280 = vst.msk [vmem:[#allocation2 + $0xe9] sm:$0x1] %vm252, 0.0
        %281 = vst.msk [vmem:[#allocation2 + $0x101] sm:$0x1] %vm252, 0.0
        %282 = vst.msk [vmem:[#allocation2 + $0x119] sm:$0x1] %vm252, 0.0
        %283 = vst.msk [vmem:[#allocation2 + $0x131] sm:$0x1] %vm252, 0.0
        %284 = vst.msk [vmem:[#allocation2 + $0x149] sm:$0x1] %vm252, 0.0
        %285 = vst.msk [vmem:[#allocation2 + $0x161] sm:$0x1] %vm252, 0.0
        %286 = vst.msk [vmem:[#allocation2 + $0x179] sm:$0x1] %vm252, 0.0
        %287 = vst.msk [vmem:[#allocation2 + $0x191] sm:$0x1] %vm252, 0.0
        %288 = vst.msk [vmem:[#allocation2 + $0x1a9] sm:$0x1] %vm252, 0.0
        %v289 = vld [vmem:[%s222] sm:$0xff]
        %v290 = vld [vmem:[%s222 + $0x8] sm:$0xff]
        %v291 = vld [vmem:[%s222 + $0x18] sm:$0xff]
        %v292 = vld [vmem:[%s222 + $0x20] sm:$0xff]
        %v293 = vld [vmem:[%s222 + $0x30] sm:$0xff]
        %v294 = vld [vmem:[%s222 + $0x38] sm:$0xff]
        %v295 = vld [vmem:[%s222 + $0x48] sm:$0xff]
        %v296 = vld [vmem:[%s222 + $0x50] sm:$0xff]
        %v297 = vld [vmem:[%s222 + $0x60] sm:$0xff]
        %v298 = vld [vmem:[%s222 + $0x68] sm:$0xff]
        %v299 = vld [vmem:[%s222 + $0x78] sm:$0xff]
        %v300 = vld [vmem:[%s222 + $0x80] sm:$0xff]
        %v301 = vld [vmem:[%s222 + $0x90] sm:$0xff]
        %v302 = vld [vmem:[%s222 + $0x98] sm:$0xff]
        %v303 = vld [vmem:[%s222 + $0xa8] sm:$0xff]
        %v304 = vld [vmem:[%s222 + $0xb0] sm:$0xff]
        %v305 = vld [vmem:[%s222 + $0xc0] sm:$0xff]
        %v306 = vld [vmem:[%s222 + $0xc8] sm:$0xff]
        %v307 = vld [vmem:[%s222 + $0xd8] sm:$0xff]
        %v308 = vld [vmem:[%s222 + $0xe0] sm:$0xff]
        %v309 = vld [vmem:[%s222 + $0xf0] sm:$0xff]
        %v310 = vld [vmem:[%s222 + $0xf8] sm:$0xff]
        %v311 = vld [vmem:[%s222 + $0x108] sm:$0xff]
        %v312 = vld [vmem:[%s222 + $0x110] sm:$0xff]
        %v313 = vld [vmem:[%s222 + $0x120] sm:$0xff]
        %v314 = vld [vmem:[%s222 + $0x128] sm:$0xff]
        %v315 = vld [vmem:[%s222 + $0x138] sm:$0xff]
        %v316 = vld [vmem:[%s222 + $0x140] sm:$0xff]
        %v317 = vld [vmem:[%s222 + $0x150] sm:$0xff]
        %v318 = vld [vmem:[%s222 + $0x158] sm:$0xff]
        %v319 = vld [vmem:[%s222 + $0x168] sm:$0xff]
        %v320 = vld [vmem:[%s222 + $0x170] sm:$0xff]
        %v321 = vld [vmem:[%s222 + $0x1] sm:$0xff]
        %v322 = vld [vmem:[%s222 + $0x9] sm:$0xff]
        %v323 = vld [vmem:[%s222 + $0x19] sm:$0xff]
        %v324 = vld [vmem:[%s222 + $0x21] sm:$0xff]
        %v325 = vld [vmem:[%s222 + $0x31] sm:$0xff]
        %v326 = vld [vmem:[%s222 + $0x39] sm:$0xff]
        %v327 = vld [vmem:[%s222 + $0x49] sm:$0xff]
        %v328 = vld [vmem:[%s222 + $0x51] sm:$0xff]
        %v329 = vld [vmem:[%s222 + $0x61] sm:$0xff]
        %v330 = vld [vmem:[%s222 + $0x69] sm:$0xff]
        %v331 = vld [vmem:[%s222 + $0x79] sm:$0xff]
        %v332 = vld [vmem:[%s222 + $0x81] sm:$0xff]
        %v333 = vld [vmem:[%s222 + $0x91] sm:$0xff]
        %v334 = vld [vmem:[%s222 + $0x99] sm:$0xff]
        %v335 = vld [vmem:[%s222 + $0xa9] sm:$0xff]
        %v336 = vld [vmem:[%s222 + $0xb1] sm:$0xff]
        %v337 = vld [vmem:[%s222 + $0xc1] sm:$0xff]
        %v338 = vld [vmem:[%s222 + $0xc9] sm:$0xff]
        %v339 = vld [vmem:[%s222 + $0xd9] sm:$0xff]
        %v340 = vld [vmem:[%s222 + $0xe1] sm:$0xff]
        %v341 = vld [vmem:[%s222 + $0xf1] sm:$0xff]
        %v342 = vld [vmem:[%s222 + $0xf9] sm:$0xff]
        %v343 = vld [vmem:[%s222 + $0x109] sm:$0xff]
        %v344 = vld [vmem:[%s222 + $0x111] sm:$0xff]
        %v345 = vld [vmem:[%s222 + $0x121] sm:$0xff]
        %v346 = vld [vmem:[%s222 + $0x129] sm:$0xff]
        %v347 = vld [vmem:[%s222 + $0x139] sm:$0xff]
        %v348 = vld [vmem:[%s222 + $0x141] sm:$0xff]
        %v349 = vld [vmem:[%s222 + $0x151] sm:$0xff]
        %v350 = vld [vmem:[%s222 + $0x159] sm:$0xff]
        %v351 = vld [vmem:[%s222 + $0x169] sm:$0xff]
        %v352 = vld [vmem:[%s222 + $0x171] sm:$0xff]
        %vm353 = vcmask 31744
        %v355 = vsel %vm353, %v321, 0
        %v358 = vsel %vm353, %v322, 0
        %v361 = vsel %vm353, %v323, 0
        %v364 = vsel %vm353, %v324, 0
        %v367 = vsel %vm353, %v325, 0
        %v370 = vsel %vm353, %v326, 0
        %v373 = vsel %vm353, %v327, 0
        %v376 = vsel %vm353, %v328, 0
        %v379 = vsel %vm353, %v329, 0
        %v382 = vsel %vm353, %v330, 0
        %v385 = vsel %vm353, %v331, 0
        %v388 = vsel %vm353, %v332, 0
        %v391 = vsel %vm353, %v333, 0
        %v394 = vsel %vm353, %v334, 0
        %v397 = vsel %vm353, %v335, 0
        %v400 = vsel %vm353, %v336, 0
        %v403 = vsel %vm353, %v337, 0
        %v406 = vsel %vm353, %v338, 0
        %v409 = vsel %vm353, %v339, 0
        %v412 = vsel %vm353, %v340, 0
        %v415 = vsel %vm353, %v341, 0
        %v418 = vsel %vm353, %v342, 0
        %v421 = vsel %vm353, %v343, 0
        %v424 = vsel %vm353, %v344, 0
        %v427 = vsel %vm353, %v345, 0
        %v430 = vsel %vm353, %v346, 0
        %v433 = vsel %vm353, %v347, 0
        %v436 = vsel %vm353, %v348, 0
        %v439 = vsel %vm353, %v349, 0
        %v442 = vsel %vm353, %v350, 0
        %v445 = vsel %vm353, %v351, 0
        %v448 = vsel %vm353, %v352, 0
        %vm450 = vcmask 1043456
        %v452 = vsel %vm450, %v224, 0
        %454 = vmatprep.subr.mxu0 0.0
        %455 = vmatpush1.msra.mxu0 %v452
        %456 = vmatprep.subr.mxu0 0.0
        %457 = vmatpush1.msra.mxu0 0.0
        %458 = vmatprep.subr.mxu0 0.0
        %459 = vmatpush1.msra.mxu0 0.0
        %460 = vmatprep.subr.mxu0 0.0
        %461 = vmatpush1.msra.mxu0 0.0
        %462 = vmatprep.subr.mxu0 0.0
        %463 = vmatpush1.msra.mxu0 0.0
        %464 = vmatprep.subr.mxu0 0.0
        %465 = vmatpush1.msra.mxu0 0.0
        %466 = vmatprep.subr.mxu0 0.0
        %467 = vmatpush1.msra.mxu0 0.0
        %468 = vmatprep.subr.mxu0 0.0
        %469 = vmatpush1.msra.mxu0 0.0
        %470 = vmatprep.subr.mxu0 0.0
        %471 = vmatpush1.msra.mxu0 0.0
        %472 = vmatprep.subr.mxu0 0.0
        %473 = vmatpush1.msra.mxu0 0.0
        %474 = vmatprep.subr.mxu0 0.0
        %475 = vmatpush1.msra.mxu0 0.0
        %476 = vmatprep.subr.mxu0 0.0
        %477 = vmatpush1.msra.mxu0 0.0
        %478 = vmatprep.subr.mxu0 0.0
        %479 = vmatpush1.msra.mxu0 0.0
        %480 = vmatprep.subr.mxu0 0.0
        %481 = vmatpush1.msra.mxu0 0.0
        %482 = vmatprep.subr.mxu0 0.0
        %483 = vmatpush1.msra.mxu0 0.0
        %484 = vmatprep.subr.mxu0 0.0
        %485 = vmatpush1.msra.mxu0 0.0
        %486 = vmatprep.subr.mxu0 0.0
        %487 = vmatpush1.msra.mxu0 0.0
        %488 = vmatprep.subr.mxu0 0.0
        %489 = vmatpush1.msra.mxu0 0.0
        %490 = vmatprep.subr.mxu0 0.0
        %491 = vmatpush1.msra.mxu0 0.0
        %492 = vmatprep.subr.mxu0 0.0
        %493 = vmatpush1.msra.mxu0 0.0
        %494 = vmatprep.subr.mxu0 0.0
        %495 = vmatpush1.msra.mxu0 0.0
        %496 = vmatprep.subr.mxu0 0.0
        %497 = vmatpush1.msra.mxu0 0.0
        %498 = vmatprep.subr.mxu0 0.0
        %499 = vmatpush1.msra.mxu0 0.0
        %500 = vmatprep.subr.mxu0 0.0
        %501 = vmatpush1.msra.mxu0 0.0
        %502 = vmatprep.subr.mxu0 0.0
        %503 = vmatpush1.msra.mxu0 0.0
        %504 = vmatprep.subr.mxu0 0.0
        %505 = vmatpush1.msra.mxu0 0.0
        %506 = vmatprep.subr.mxu0 0.0
        %507 = vmatpush1.msra.mxu0 0.0
        %508 = vmatprep.subr.mxu0 0.0
        %509 = vmatpush1.msra.mxu0 0.0
        %510 = vmatprep.subr.mxu0 0.0
        %511 = vmatpush1.msra.mxu0 0.0
        %512 = vmatprep.subr.mxu0 0.0
        %513 = vmatpush1.msra.mxu0 0.0
        %514 = vmatprep.subr.mxu0 0.0
        %515 = vmatpush1.msra.mxu0 0.0
        %516 = vmatprep.subr.mxu0 0.0
        %517 = vmatpush1.msra.mxu0 0.0
        %518 = vmatprep.mubr.f32.mxu0 0.0
        %519 = vmatmul.mubr.f32.gmra.mrb[0].mxu0 %v355
        %v520 = vpop.f32.mrb[0].mxu0
        %v521 = vadd.f32 0.0, %v520
        %v522 = vpop.f32.mrb[0].mxu0
        %523 = vmatprep.mubr.f32.mxu0 0.0
        %524 = vmatmul.mubr.f32.gmra.mrb[0].mxu0 %v358
        %v525 = vpop.f32.mrb[0].mxu0
        %v526 = vadd.f32 0.0, %v525
        %v527 = vpop.f32.mrb[0].mxu0
        %528 = vmatprep.mubr.f32.mxu0 0.0
        %529 = vmatmul.mubr.f32.gmra.mrb[0].mxu0 %v361
        %v530 = vpop.f32.mrb[0].mxu0
        %v531 = vadd.f32 0.0, %v530
        %v532 = vpop.f32.mrb[0].mxu0
        %533 = vmatprep.mubr.f32.mxu0 0.0
        %534 = vmatmul.mubr.f32.gmra.mrb[0].mxu0 %v364
        %v535 = vpop.f32.mrb[0].mxu0
        %v536 = vadd.f32 0.0, %v535
        %v537 = vpop.f32.mrb[0].mxu0
        %538 = vmatprep.mubr.f32.mxu0 0.0
        %539 = vmatmul.mubr.f32.gmra.mrb[0].mxu0 %v367
        %v540 = vpop.f32.mrb[0].mxu0
        %v541 = vadd.f32 0.0, %v540
        %v542 = vpop.f32.mrb[0].mxu0
        %543 = vmatprep.mubr.f32.mxu0 0.0
        %544 = vmatmul.mubr.f32.gmra.mrb[0].mxu0 %v370
        %v545 = vpop.f32.mrb[0].mxu0
        %v546 = vadd.f32 0.0, %v545
        %v547 = vpop.f32.mrb[0].mxu0
        %548 = vmatprep.mubr.f32.mxu0 0.0
        %549 = vmatmul.mubr.f32.gmra.mrb[0].mxu0 %v373
        %v550 = vpop.f32.mrb[0].mxu0
        %v551 = vadd.f32 0.0, %v550
        %v552 = vpop.f32.mrb[0].mxu0
        %553 = vmatprep.mubr.f32.mxu0 0.0
        %554 = vmatmul.mubr.f32.gmra.mrb[0].mxu0 %v376
        %v555 = vpop.f32.mrb[0].mxu0
        %v556 = vadd.f32 0.0, %v555
        %v557 = vpop.f32.mrb[0].mxu0
        %558 = vmatprep.mubr.f32.mxu0 0.0
        %559 = vmatmul.mubr.f32.gmra.mrb[0].mxu0 %v379
        %v560 = vpop.f32.mrb[0].mxu0
        %v561 = vadd.f32 0.0, %v560
        %v562 = vpop.f32.mrb[0].mxu0
        %563 = vmatprep.mubr.f32.mxu0 0.0
        %564 = vmatmul.mubr.f32.gmra.mrb[0].mxu0 %v382
        %v565 = vpop.f32.mrb[0].mxu0
        %v566 = vadd.f32 0.0, %v565
        %v567 = vpop.f32.mrb[0].mxu0
        %568 = vmatprep.mubr.f32.mxu0 0.0
        %569 = vmatmul.mubr.f32.gmra.mrb[0].mxu0 %v385
        %v570 = vpop.f32.mrb[0].mxu0
        %v571 = vadd.f32 0.0, %v570
        %v572 = vpop.f32.mrb[0].mxu0
        %573 = vmatprep.mubr.f32.mxu0 0.0
        %574 = vmatmul.mubr.f32.gmra.mrb[0].mxu0 %v388
        %v575 = vpop.f32.mrb[0].mxu0
        %v576 = vadd.f32 0.0, %v575
        %v577 = vpop.f32.mrb[0].mxu0
        %578 = vmatprep.mubr.f32.mxu0 0.0
        %579 = vmatmul.mubr.f32.gmra.mrb[0].mxu0 %v391
        %v580 = vpop.f32.mrb[0].mxu0
        %v581 = vadd.f32 0.0, %v580
        %v582 = vpop.f32.mrb[0].mxu0
        %583 = vmatprep.mubr.f32.mxu0 0.0
        %584 = vmatmul.mubr.f32.gmra.mrb[0].mxu0 %v394
        %v585 = vpop.f32.mrb[0].mxu0
        %v586 = vadd.f32 0.0, %v585
        %v587 = vpop.f32.mrb[0].mxu0
        %588 = vmatprep.mubr.f32.mxu0 0.0
        %589 = vmatmul.mubr.f32.gmra.mrb[0].mxu0 %v397
        %v590 = vpop.f32.mrb[0].mxu0
        %v591 = vadd.f32 0.0, %v590
        %v592 = vpop.f32.mrb[0].mxu0
        %593 = vmatprep.mubr.f32.mxu0 0.0
        %594 = vmatmul.mubr.f32.gmra.mrb[0].mxu0 %v400
        %v595 = vpop.f32.mrb[0].mxu0
        %v596 = vadd.f32 0.0, %v595
        %v597 = vpop.f32.mrb[0].mxu0
        %598 = vmatprep.mubr.f32.mxu0 0.0
        %599 = vmatmul.mubr.f32.gmra.mrb[0].mxu0 %v403
        %v600 = vpop.f32.mrb[0].mxu0
        %v601 = vadd.f32 0.0, %v600
        %v602 = vpop.f32.mrb[0].mxu0
        %603 = vmatprep.mubr.f32.mxu0 0.0
        %604 = vmatmul.mubr.f32.gmra.mrb[0].mxu0 %v406
        %v605 = vpop.f32.mrb[0].mxu0
        %v606 = vadd.f32 0.0, %v605
        %v607 = vpop.f32.mrb[0].mxu0
        %608 = vmatprep.mubr.f32.mxu0 0.0
        %609 = vmatmul.mubr.f32.gmra.mrb[0].mxu0 %v409
        %v610 = vpop.f32.mrb[0].mxu0
        %v611 = vadd.f32 0.0, %v610
        %v612 = vpop.f32.mrb[0].mxu0
        %613 = vmatprep.mubr.f32.mxu0 0.0
        %614 = vmatmul.mubr.f32.gmra.mrb[0].mxu0 %v412
        %v615 = vpop.f32.mrb[0].mxu0
        %v616 = vadd.f32 0.0, %v615
        %v617 = vpop.f32.mrb[0].mxu0
        %618 = vmatprep.mubr.f32.mxu0 0.0
        %619 = vmatmul.mubr.f32.gmra.mrb[0].mxu0 %v415
        %v620 = vpop.f32.mrb[0].mxu0
        %v621 = vadd.f32 0.0, %v620
        %v622 = vpop.f32.mrb[0].mxu0
        %623 = vmatprep.mubr.f32.mxu0 0.0
        %624 = vmatmul.mubr.f32.gmra.mrb[0].mxu0 %v418
        %v625 = vpop.f32.mrb[0].mxu0
        %v626 = vadd.f32 0.0, %v625
        %v627 = vpop.f32.mrb[0].mxu0
        %628 = vmatprep.mubr.f32.mxu0 0.0
        %629 = vmatmul.mubr.f32.gmra.mrb[0].mxu0 %v421
        %v630 = vpop.f32.mrb[0].mxu0
        %v631 = vadd.f32 0.0, %v630
        %v632 = vpop.f32.mrb[0].mxu0
        %633 = vmatprep.mubr.f32.mxu0 0.0
        %634 = vmatmul.mubr.f32.gmra.mrb[0].mxu0 %v424
        %v635 = vpop.f32.mrb[0].mxu0
        %v636 = vadd.f32 0.0, %v635
        %v637 = vpop.f32.mrb[0].mxu0
        %638 = vmatprep.mubr.f32.mxu0 0.0
        %639 = vmatmul.mubr.f32.gmra.mrb[0].mxu0 %v427
        %v640 = vpop.f32.mrb[0].mxu0
        %v641 = vadd.f32 0.0, %v640
        %v642 = vpop.f32.mrb[0].mxu0
        %643 = vmatprep.mubr.f32.mxu0 0.0
        %644 = vmatmul.mubr.f32.gmra.mrb[0].mxu0 %v430
        %v645 = vpop.f32.mrb[0].mxu0
        %v646 = vadd.f32 0.0, %v645
        %v647 = vpop.f32.mrb[0].mxu0
        %648 = vmatprep.mubr.f32.mxu0 0.0
        %649 = vmatmul.mubr.f32.gmra.mrb[0].mxu0 %v433
        %v650 = vpop.f32.mrb[0].mxu0
        %v651 = vadd.f32 0.0, %v650
        %v652 = vpop.f32.mrb[0].mxu0
        %653 = vmatprep.mubr.f32.mxu0 0.0
        %654 = vmatmul.mubr.f32.gmra.mrb[0].mxu0 %v436
        %v655 = vpop.f32.mrb[0].mxu0
        %v656 = vadd.f32 0.0, %v655
        %v657 = vpop.f32.mrb[0].mxu0
        %658 = vmatprep.mubr.f32.mxu0 0.0
        %659 = vmatmul.mubr.f32.gmra.mrb[0].mxu0 %v439
        %v660 = vpop.f32.mrb[0].mxu0
        %v661 = vadd.f32 0.0, %v660
        %v662 = vpop.f32.mrb[0].mxu0
        %663 = vmatprep.mubr.f32.mxu0 0.0
        %664 = vmatmul.mubr.f32.gmra.mrb[0].mxu0 %v442
        %v665 = vpop.f32.mrb[0].mxu0
        %v666 = vadd.f32 0.0, %v665
        %v667 = vpop.f32.mrb[0].mxu0
        %668 = vmatprep.mubr.f32.mxu0 0.0
        %669 = vmatmul.mubr.f32.gmra.mrb[0].mxu0 %v445
        %v670 = vpop.f32.mrb[0].mxu0
        %v671 = vadd.f32 0.0, %v670
        %v672 = vpop.f32.mrb[0].mxu0
        %673 = vmatprep.mubr.f32.mxu0 0.0
        %674 = vmatmul.mubr.f32.gmra.mrb[0].mxu0 %v448
        %v675 = vpop.f32.mrb[0].mxu0
        %v676 = vadd.f32 0.0, %v675
        %v677 = vpop.f32.mrb[0].mxu0
        %678 = vdwg.mxu0
        %v680 = vsel %vm353, %v289, 0
        %v683 = vsel %vm353, %v290, 0
        %v686 = vsel %vm353, %v291, 0
        %v689 = vsel %vm353, %v292, 0
        %v692 = vsel %vm353, %v293, 0
        %v695 = vsel %vm353, %v294, 0
        %v698 = vsel %vm353, %v295, 0
        %v701 = vsel %vm353, %v296, 0
        %v704 = vsel %vm353, %v297, 0
        %v707 = vsel %vm353, %v298, 0
        %v710 = vsel %vm353, %v299, 0
        %v713 = vsel %vm353, %v300, 0
        %v716 = vsel %vm353, %v301, 0
        %v719 = vsel %vm353, %v302, 0
        %v722 = vsel %vm353, %v303, 0
        %v725 = vsel %vm353, %v304, 0
        %v728 = vsel %vm353, %v305, 0
        %v731 = vsel %vm353, %v306, 0
        %v734 = vsel %vm353, %v307, 0
        %v737 = vsel %vm353, %v308, 0
        %v740 = vsel %vm353, %v309, 0
        %v743 = vsel %vm353, %v310, 0
        %v746 = vsel %vm353, %v311, 0
        %v749 = vsel %vm353, %v312, 0
        %v752 = vsel %vm353, %v313, 0
        %v755 = vsel %vm353, %v314, 0
        %v758 = vsel %vm353, %v315, 0
        %v761 = vsel %vm353, %v316, 0
        %v764 = vsel %vm353, %v317, 0
        %v767 = vsel %vm353, %v318, 0
        %v770 = vsel %vm353, %v319, 0
        %v773 = vsel %vm353, %v320, 0
        %v776 = vsel %vm450, %v223, 0
        %778 = vmatprep.subr.mxu0 0.0
        %779 = vmatpush1.msra.mxu0 %v776
        %780 = vmatprep.subr.mxu0 0.0
        %781 = vmatpush1.msra.mxu0 0.0
        %782 = vmatprep.subr.mxu0 0.0
        %783 = vmatpush1.msra.mxu0 0.0
        %784 = vmatprep.subr.mxu0 0.0
        %785 = vmatpush1.msra.mxu0 0.0
        %786 = vmatprep.subr.mxu0 0.0
        %787 = vmatpush1.msra.mxu0 0.0
        %788 = vmatprep.subr.mxu0 0.0
        %789 = vmatpush1.msra.mxu0 0.0
        %790 = vmatprep.subr.mxu0 0.0
        %791 = vmatpush1.msra.mxu0 0.0
        %792 = vmatprep.subr.mxu0 0.0
        %793 = vmatpush1.msra.mxu0 0.0
        %794 = vmatprep.subr.mxu0 0.0
        %795 = vmatpush1.msra.mxu0 0.0
        %796 = vmatprep.subr.mxu0 0.0
        %797 = vmatpush1.msra.mxu0 0.0
        %798 = vmatprep.subr.mxu0 0.0
        %799 = vmatpush1.msra.mxu0 0.0
        %800 = vmatprep.subr.mxu0 0.0
        %801 = vmatpush1.msra.mxu0 0.0
        %802 = vmatprep.subr.mxu0 0.0
        %803 = vmatpush1.msra.mxu0 0.0
        %804 = vmatprep.subr.mxu0 0.0
        %805 = vmatpush1.msra.mxu0 0.0
        %806 = vmatprep.subr.mxu0 0.0
        %807 = vmatpush1.msra.mxu0 0.0
        %808 = vmatprep.subr.mxu0 0.0
        %809 = vmatpush1.msra.mxu0 0.0
        %810 = vmatprep.subr.mxu0 0.0
        %811 = vmatpush1.msra.mxu0 0.0
        %812 = vmatprep.subr.mxu0 0.0
        %813 = vmatpush1.msra.mxu0 0.0
        %814 = vmatprep.subr.mxu0 0.0
        %815 = vmatpush1.msra.mxu0 0.0
        %816 = vmatprep.subr.mxu0 0.0
        %817 = vmatpush1.msra.mxu0 0.0
        %818 = vmatprep.subr.mxu0 0.0
        %819 = vmatpush1.msra.mxu0 0.0
        %820 = vmatprep.subr.mxu0 0.0
        %821 = vmatpush1.msra.mxu0 0.0
        %822 = vmatprep.subr.mxu0 0.0
        %823 = vmatpush1.msra.mxu0 0.0
        %824 = vmatprep.subr.mxu0 0.0
        %825 = vmatpush1.msra.mxu0 0.0
        %826 = vmatprep.subr.mxu0 0.0
        %827 = vmatpush1.msra.mxu0 0.0
        %828 = vmatprep.subr.mxu0 0.0
        %829 = vmatpush1.msra.mxu0 0.0
        %830 = vmatprep.subr.mxu0 0.0
        %831 = vmatpush1.msra.mxu0 0.0
        %832 = vmatprep.subr.mxu0 0.0
        %833 = vmatpush1.msra.mxu0 0.0
        %834 = vmatprep.subr.mxu0 0.0
        %835 = vmatpush1.msra.mxu0 0.0
        %836 = vmatprep.subr.mxu0 0.0
        %837 = vmatpush1.msra.mxu0 0.0
        %838 = vmatprep.subr.mxu0 0.0
        %839 = vmatpush1.msra.mxu0 0.0
        %840 = vmatprep.subr.mxu0 0.0
        %841 = vmatpush1.msra.mxu0 0.0
        %842 = vmatprep.mubr.f32.mxu0 0.0
        %843 = vmatmul.mubr.f32.gmra.mrb[0].mxu0 %v680
        %v844 = vpop.f32.mrb[0].mxu0
        %v845 = vadd.f32 %v521, %v844
        %v846 = vpop.f32.mrb[0].mxu0
        %847 = vmatprep.mubr.f32.mxu0 0.0
        %848 = vmatmul.mubr.f32.gmra.mrb[0].mxu0 %v683
        %v849 = vpop.f32.mrb[0].mxu0
        %v850 = vadd.f32 %v526, %v849
        %v851 = vpop.f32.mrb[0].mxu0
        %852 = vmatprep.mubr.f32.mxu0 0.0
        %853 = vmatmul.mubr.f32.gmra.mrb[0].mxu0 %v686
        %v854 = vpop.f32.mrb[0].mxu0
        %v855 = vadd.f32 %v531, %v854
        %v856 = vpop.f32.mrb[0].mxu0
        %857 = vmatprep.mubr.f32.mxu0 0.0
        %858 = vmatmul.mubr.f32.gmra.mrb[0].mxu0 %v689
        %v859 = vpop.f32.mrb[0].mxu0
        %v860 = vadd.f32 %v536, %v859
        %v861 = vpop.f32.mrb[0].mxu0
        %862 = vmatprep.mubr.f32.mxu0 0.0
        %863 = vmatmul.mubr.f32.gmra.mrb[0].mxu0 %v692
        %v864 = vpop.f32.mrb[0].mxu0
        %v865 = vadd.f32 %v541, %v864
        %v866 = vpop.f32.mrb[0].mxu0
        %867 = vmatprep.mubr.f32.mxu0 0.0
        %868 = vmatmul.mubr.f32.gmra.mrb[0].mxu0 %v695
        %v869 = vpop.f32.mrb[0].mxu0
        %v870 = vadd.f32 %v546, %v869
        %v871 = vpop.f32.mrb[0].mxu0
        %872 = vmatprep.mubr.f32.mxu0 0.0
        %873 = vmatmul.mubr.f32.gmra.mrb[0].mxu0 %v698
        %v874 = vpop.f32.mrb[0].mxu0
        %v875 = vadd.f32 %v551, %v874
        %v876 = vpop.f32.mrb[0].mxu0
        %877 = vmatprep.mubr.f32.mxu0 0.0
        %878 = vmatmul.mubr.f32.gmra.mrb[0].mxu0 %v701
        %v879 = vpop.f32.mrb[0].mxu0
        %v880 = vadd.f32 %v556, %v879
        %v881 = vpop.f32.mrb[0].mxu0
        %882 = vmatprep.mubr.f32.mxu0 0.0
        %883 = vmatmul.mubr.f32.gmra.mrb[0].mxu0 %v704
        %v884 = vpop.f32.mrb[0].mxu0
        %v885 = vadd.f32 %v561, %v884
        %v886 = vpop.f32.mrb[0].mxu0
        %887 = vmatprep.mubr.f32.mxu0 0.0
        %888 = vmatmul.mubr.f32.gmra.mrb[0].mxu0 %v707
        %v889 = vpop.f32.mrb[0].mxu0
        %v890 = vadd.f32 %v566, %v889
        %v891 = vpop.f32.mrb[0].mxu0
        %892 = vmatprep.mubr.f32.mxu0 0.0
        %893 = vmatmul.mubr.f32.gmra.mrb[0].mxu0 %v710
        %v894 = vpop.f32.mrb[0].mxu0
        %v895 = vadd.f32 %v571, %v894
        %v896 = vpop.f32.mrb[0].mxu0
        %897 = vmatprep.mubr.f32.mxu0 0.0
        %898 = vmatmul.mubr.f32.gmra.mrb[0].mxu0 %v713
        %v899 = vpop.f32.mrb[0].mxu0
        %v900 = vadd.f32 %v576, %v899
        %v901 = vpop.f32.mrb[0].mxu0
        %902 = vmatprep.mubr.f32.mxu0 0.0
        %903 = vmatmul.mubr.f32.gmra.mrb[0].mxu0 %v716
        %v904 = vpop.f32.mrb[0].mxu0
        %v905 = vadd.f32 %v581, %v904
        %v906 = vpop.f32.mrb[0].mxu0
        %907 = vmatprep.mubr.f32.mxu0 0.0
        %908 = vmatmul.mubr.f32.gmra.mrb[0].mxu0 %v719
        %v909 = vpop.f32.mrb[0].mxu0
        %v910 = vadd.f32 %v586, %v909
        %v911 = vpop.f32.mrb[0].mxu0
        %912 = vmatprep.mubr.f32.mxu0 0.0
        %913 = vmatmul.mubr.f32.gmra.mrb[0].mxu0 %v722
        %v914 = vpop.f32.mrb[0].mxu0
        %v915 = vadd.f32 %v591, %v914
        %v916 = vpop.f32.mrb[0].mxu0
        %917 = vmatprep.mubr.f32.mxu0 0.0
        %918 = vmatmul.mubr.f32.gmra.mrb[0].mxu0 %v725
        %v919 = vpop.f32.mrb[0].mxu0
        %v920 = vadd.f32 %v596, %v919
        %v921 = vpop.f32.mrb[0].mxu0
        %922 = vmatprep.mubr.f32.mxu0 0.0
        %923 = vmatmul.mubr.f32.gmra.mrb[0].mxu0 %v728
        %v924 = vpop.f32.mrb[0].mxu0
        %v925 = vadd.f32 %v601, %v924
        %v926 = vpop.f32.mrb[0].mxu0
        %927 = vmatprep.mubr.f32.mxu0 0.0
        %928 = vmatmul.mubr.f32.gmra.mrb[0].mxu0 %v731
        %v929 = vpop.f32.mrb[0].mxu0
        %v930 = vadd.f32 %v606, %v929
        %v931 = vpop.f32.mrb[0].mxu0
        %932 = vmatprep.mubr.f32.mxu0 0.0
        %933 = vmatmul.mubr.f32.gmra.mrb[0].mxu0 %v734
        %v934 = vpop.f32.mrb[0].mxu0
        %v935 = vadd.f32 %v611, %v934
        %v936 = vpop.f32.mrb[0].mxu0
        %937 = vmatprep.mubr.f32.mxu0 0.0
        %938 = vmatmul.mubr.f32.gmra.mrb[0].mxu0 %v737
        %v939 = vpop.f32.mrb[0].mxu0
        %v940 = vadd.f32 %v616, %v939
        %v941 = vpop.f32.mrb[0].mxu0
        %942 = vmatprep.mubr.f32.mxu0 0.0
        %943 = vmatmul.mubr.f32.gmra.mrb[0].mxu0 %v740
        %v944 = vpop.f32.mrb[0].mxu0
        %v945 = vadd.f32 %v621, %v944
        %v946 = vpop.f32.mrb[0].mxu0
        %947 = vmatprep.mubr.f32.mxu0 0.0
        %948 = vmatmul.mubr.f32.gmra.mrb[0].mxu0 %v743
        %v949 = vpop.f32.mrb[0].mxu0
        %v950 = vadd.f32 %v626, %v949
        %v951 = vpop.f32.mrb[0].mxu0
        %952 = vmatprep.mubr.f32.mxu0 0.0
        %953 = vmatmul.mubr.f32.gmra.mrb[0].mxu0 %v746
        %v954 = vpop.f32.mrb[0].mxu0
        %v955 = vadd.f32 %v631, %v954
        %v956 = vpop.f32.mrb[0].mxu0
        %957 = vmatprep.mubr.f32.mxu0 0.0
        %958 = vmatmul.mubr.f32.gmra.mrb[0].mxu0 %v749
        %v959 = vpop.f32.mrb[0].mxu0
        %v960 = vadd.f32 %v636, %v959
        %v961 = vpop.f32.mrb[0].mxu0
        %962 = vmatprep.mubr.f32.mxu0 0.0
        %963 = vmatmul.mubr.f32.gmra.mrb[0].mxu0 %v752
        %v964 = vpop.f32.mrb[0].mxu0
        %v965 = vadd.f32 %v641, %v964
        %v966 = vpop.f32.mrb[0].mxu0
        %967 = vmatprep.mubr.f32.mxu0 0.0
        %968 = vmatmul.mubr.f32.gmra.mrb[0].mxu0 %v755
        %v969 = vpop.f32.mrb[0].mxu0
        %v970 = vadd.f32 %v646, %v969
        %v971 = vpop.f32.mrb[0].mxu0
        %972 = vmatprep.mubr.f32.mxu0 0.0
        %973 = vmatmul.mubr.f32.gmra.mrb[0].mxu0 %v758
        %v974 = vpop.f32.mrb[0].mxu0
        %v975 = vadd.f32 %v651, %v974
        %v976 = vpop.f32.mrb[0].mxu0
        %977 = vmatprep.mubr.f32.mxu0 0.0
        %978 = vmatmul.mubr.f32.gmra.mrb[0].mxu0 %v761
        %v979 = vpop.f32.mrb[0].mxu0
        %v980 = vadd.f32 %v656, %v979
        %v981 = vpop.f32.mrb[0].mxu0
        %982 = vmatprep.mubr.f32.mxu0 0.0
        %983 = vmatmul.mubr.f32.gmra.mrb[0].mxu0 %v764
        %v984 = vpop.f32.mrb[0].mxu0
        %v985 = vadd.f32 %v661, %v984
        %v986 = vpop.f32.mrb[0].mxu0
        %987 = vmatprep.mubr.f32.mxu0 0.0
        %988 = vmatmul.mubr.f32.gmra.mrb[0].mxu0 %v767
        %v989 = vpop.f32.mrb[0].mxu0
        %v990 = vadd.f32 %v666, %v989
        %v991 = vpop.f32.mrb[0].mxu0
        %992 = vmatprep.mubr.f32.mxu0 0.0
        %993 = vmatmul.mubr.f32.gmra.mrb[0].mxu0 %v770
        %v994 = vpop.f32.mrb[0].mxu0
        %v995 = vadd.f32 %v671, %v994
        %v996 = vpop.f32.mrb[0].mxu0
        %997 = vmatprep.mubr.f32.mxu0 0.0
        %998 = vmatmul.mubr.f32.gmra.mrb[0].mxu0 %v773
        %v999 = vpop.f32.mrb[0].mxu0
        %v1000 = vadd.f32 %v676, %v999
        %v1001 = vpop.f32.mrb[0].mxu0
        %1002 = vdwg.mxu0
        %v1003 = vld [vmem:[%s222 + $0x2] sm:$0xff]
        %v1004 = vld [vmem:[%s222 + $0xa] sm:$0xff]
        %v1005 = vld [vmem:[%s222 + $0x1a] sm:$0xff]
        %v1006 = vld [vmem:[%s222 + $0x22] sm:$0xff]
        %v1007 = vld [vmem:[%s222 + $0x32] sm:$0xff]
        %v1008 = vld [vmem:[%s222 + $0x3a] sm:$0xff]
        %v1009 = vld [vmem:[%s222 + $0x4a] sm:$0xff]
        %v1010 = vld [vmem:[%s222 + $0x52] sm:$0xff]
        %v1011 = vld [vmem:[%s222 + $0x62] sm:$0xff]
        %v1012 = vld [vmem:[%s222 + $0x6a] sm:$0xff]
        %v1013 = vld [vmem:[%s222 + $0x7a] sm:$0xff]
        %v1014 = vld [vmem:[%s222 + $0x82] sm:$0xff]
        %v1015 = vld [vmem:[%s222 + $0x92] sm:$0xff]
        %v1016 = vld [vmem:[%s222 + $0x9a] sm:$0xff]
        %v1017 = vld [vmem:[%s222 + $0xaa] sm:$0xff]
        %v1018 = vld [vmem:[%s222 + $0xb2] sm:$0xff]
        %v1019 = vld [vmem:[%s222 + $0xc2] sm:$0xff]
        %v1020 = vld [vmem:[%s222 + $0xca] sm:$0xff]
        %v1021 = vld [vmem:[%s222 + $0xda] sm:$0xff]
        %v1022 = vld [vmem:[%s222 + $0xe2] sm:$0xff]
        %v1023 = vld [vmem:[%s222 + $0xf2] sm:$0xff]
        %v1024 = vld [vmem:[%s222 + $0xfa] sm:$0xff]
        %v1025 = vld [vmem:[%s222 + $0x10a] sm:$0xff]
        %v1026 = vld [vmem:[%s222 + $0x112] sm:$0xff]
        %v1027 = vld [vmem:[%s222 + $0x122] sm:$0xff]
        %v1028 = vld [vmem:[%s222 + $0x12a] sm:$0xff]
        %v1029 = vld [vmem:[%s222 + $0x13a] sm:$0xff]
        %v1030 = vld [vmem:[%s222 + $0x142] sm:$0xff]
        %v1031 = vld [vmem:[%s222 + $0x152] sm:$0xff]
        %v1032 = vld [vmem:[%s222 + $0x15a] sm:$0xff]
        %v1033 = vld [vmem:[%s222 + $0x16a] sm:$0xff]
        %v1034 = vld [vmem:[%s222 + $0x172] sm:$0xff]
        %v1036 = vsel %vm353, %v1003, 0
        %v1039 = vsel %vm353, %v1004, 0
        %v1042 = vsel %vm353, %v1005, 0
        %v1045 = vsel %vm353, %v1006, 0
        %v1048 = vsel %vm353, %v1007, 0
        %v1051 = vsel %vm353, %v1008, 0
        %v1054 = vsel %vm353, %v1009, 0
        %v1057 = vsel %vm353, %v1010, 0
        %v1060 = vsel %vm353, %v1011, 0
        %v1063 = vsel %vm353, %v1012, 0
        %v1066 = vsel %vm353, %v1013, 0
        %v1069 = vsel %vm353, %v1014, 0
        %v1072 = vsel %vm353, %v1015, 0
        %v1075 = vsel %vm353, %v1016, 0
        %v1078 = vsel %vm353, %v1017, 0
        %v1081 = vsel %vm353, %v1018, 0
        %v1084 = vsel %vm353, %v1019, 0
        %v1087 = vsel %vm353, %v1020, 0
        %v1090 = vsel %vm353, %v1021, 0
        %v1093 = vsel %vm353, %v1022, 0
        %v1096 = vsel %vm353, %v1023, 0
        %v1099 = vsel %vm353, %v1024, 0
        %v1102 = vsel %vm353, %v1025, 0
        %v1105 = vsel %vm353, %v1026, 0
        %v1108 = vsel %vm353, %v1027, 0
        %v1111 = vsel %vm353, %v1028, 0
        %v1114 = vsel %vm353, %v1029, 0
        %v1117 = vsel %vm353, %v1030, 0
        %v1120 = vsel %vm353, %v1031, 0
        %v1123 = vsel %vm353, %v1032, 0
        %v1126 = vsel %vm353, %v1033, 0
        %v1129 = vsel %vm353, %v1034, 0
        %v1132 = vsel %vm450, %v225, 0
        %1134 = vmatprep.subr.mxu0 0.0
        %1135 = vmatpush1.msra.mxu0 %v1132
        %1136 = vmatprep.subr.mxu0 0.0
        %1137 = vmatpush1.msra.mxu0 0.0
        %1138 = vmatprep.subr.mxu0 0.0
        %1139 = vmatpush1.msra.mxu0 0.0
        %1140 = vmatprep.subr.mxu0 0.0
        %1141 = vmatpush1.msra.mxu0 0.0
        %1142 = vmatprep.subr.mxu0 0.0
        %1143 = vmatpush1.msra.mxu0 0.0
        %1144 = vmatprep.subr.mxu0 0.0
        %1145 = vmatpush1.msra.mxu0 0.0
        %1146 = vmatprep.subr.mxu0 0.0
        %1147 = vmatpush1.msra.mxu0 0.0
        %1148 = vmatprep.subr.mxu0 0.0
        %1149 = vmatpush1.msra.mxu0 0.0
        %1150 = vmatprep.subr.mxu0 0.0
        %1151 = vmatpush1.msra.mxu0 0.0
        %1152 = vmatprep.subr.mxu0 0.0
        %1153 = vmatpush1.msra.mxu0 0.0
        %1154 = vmatprep.subr.mxu0 0.0
        %1155 = vmatpush1.msra.mxu0 0.0
        %1156 = vmatprep.subr.mxu0 0.0
        %1157 = vmatpush1.msra.mxu0 0.0
        %1158 = vmatprep.subr.mxu0 0.0
        %1159 = vmatpush1.msra.mxu0 0.0
        %1160 = vmatprep.subr.mxu0 0.0
        %1161 = vmatpush1.msra.mxu0 0.0
        %1162 = vmatprep.subr.mxu0 0.0
        %1163 = vmatpush1.msra.mxu0 0.0
        %1164 = vmatprep.subr.mxu0 0.0
        %1165 = vmatpush1.msra.mxu0 0.0
        %1166 = vmatprep.subr.mxu0 0.0
        %1167 = vmatpush1.msra.mxu0 0.0
        %1168 = vmatprep.subr.mxu0 0.0
        %1169 = vmatpush1.msra.mxu0 0.0
        %1170 = vmatprep.subr.mxu0 0.0
        %1171 = vmatpush1.msra.mxu0 0.0
        %1172 = vmatprep.subr.mxu0 0.0
        %1173 = vmatpush1.msra.mxu0 0.0
        %1174 = vmatprep.subr.mxu0 0.0
        %1175 = vmatpush1.msra.mxu0 0.0
        %1176 = vmatprep.subr.mxu0 0.0
        %1177 = vmatpush1.msra.mxu0 0.0
        %1178 = vmatprep.subr.mxu0 0.0
        %1179 = vmatpush1.msra.mxu0 0.0
        %1180 = vmatprep.subr.mxu0 0.0
        %1181 = vmatpush1.msra.mxu0 0.0
        %1182 = vmatprep.subr.mxu0 0.0
        %1183 = vmatpush1.msra.mxu0 0.0
        %1184 = vmatprep.subr.mxu0 0.0
        %1185 = vmatpush1.msra.mxu0 0.0
        %1186 = vmatprep.subr.mxu0 0.0
        %1187 = vmatpush1.msra.mxu0 0.0
        %1188 = vmatprep.subr.mxu0 0.0
        %1189 = vmatpush1.msra.mxu0 0.0
        %1190 = vmatprep.subr.mxu0 0.0
        %1191 = vmatpush1.msra.mxu0 0.0
        %1192 = vmatprep.subr.mxu0 0.0
        %1193 = vmatpush1.msra.mxu0 0.0
        %1194 = vmatprep.subr.mxu0 0.0
        %1195 = vmatpush1.msra.mxu0 0.0
        %1196 = vmatprep.subr.mxu0 0.0
        %1197 = vmatpush1.msra.mxu0 0.0
        %1198 = vmatprep.mubr.f32.mxu0 0.0
        %1199 = vmatmul.mubr.f32.gmra.mrb[0].mxu0 %v1036
        %v1200 = vpop.f32.mrb[0].mxu0
        %v1201 = vadd.f32 0.0, %v1200
        %v1202 = vpop.f32.mrb[0].mxu0
        %1203 = vmatprep.mubr.f32.mxu0 0.0
        %1204 = vmatmul.mubr.f32.gmra.mrb[0].mxu0 %v1039
        %v1205 = vpop.f32.mrb[0].mxu0
        %v1206 = vadd.f32 0.0, %v1205
        %v1207 = vpop.f32.mrb[0].mxu0
        %1208 = vmatprep.mubr.f32.mxu0 0.0
        %1209 = vmatmul.mubr.f32.gmra.mrb[0].mxu0 %v1042
        %v1210 = vpop.f32.mrb[0].mxu0
        %v1211 = vadd.f32 0.0, %v1210
        %v1212 = vpop.f32.mrb[0].mxu0
        %1213 = vmatprep.mubr.f32.mxu0 0.0
        %1214 = vmatmul.mubr.f32.gmra.mrb[0].mxu0 %v1045
        %v1215 = vpop.f32.mrb[0].mxu0
        %v1216 = vadd.f32 0.0, %v1215
        %v1217 = vpop.f32.mrb[0].mxu0
        %1218 = vmatprep.mubr.f32.mxu0 0.0
        %1219 = vmatmul.mubr.f32.gmra.mrb[0].mxu0 %v1048
        %v1220 = vpop.f32.mrb[0].mxu0
        %v1221 = vadd.f32 0.0, %v1220
        %v1222 = vpop.f32.mrb[0].mxu0
        %1223 = vmatprep.mubr.f32.mxu0 0.0
        %1224 = vmatmul.mubr.f32.gmra.mrb[0].mxu0 %v1051
        %v1225 = vpop.f32.mrb[0].mxu0
        %v1226 = vadd.f32 0.0, %v1225
        %v1227 = vpop.f32.mrb[0].mxu0
        %1228 = vmatprep.mubr.f32.mxu0 0.0
        %1229 = vmatmul.mubr.f32.gmra.mrb[0].mxu0 %v1054
        %v1230 = vpop.f32.mrb[0].mxu0
        %v1231 = vadd.f32 0.0, %v1230
        %v1232 = vpop.f32.mrb[0].mxu0
        %1233 = vmatprep.mubr.f32.mxu0 0.0
        %1234 = vmatmul.mubr.f32.gmra.mrb[0].mxu0 %v1057
        %v1235 = vpop.f32.mrb[0].mxu0
        %v1236 = vadd.f32 0.0, %v1235
        %v1237 = vpop.f32.mrb[0].mxu0
        %1238 = vmatprep.mubr.f32.mxu0 0.0
        %1239 = vmatmul.mubr.f32.gmra.mrb[0].mxu0 %v1060
        %v1240 = vpop.f32.mrb[0].mxu0
        %v1241 = vadd.f32 0.0, %v1240
        %v1242 = vpop.f32.mrb[0].mxu0
        %1243 = vmatprep.mubr.f32.mxu0 0.0
        %1244 = vmatmul.mubr.f32.gmra.mrb[0].mxu0 %v1063
        %v1245 = vpop.f32.mrb[0].mxu0
        %v1246 = vadd.f32 0.0, %v1245
        %v1247 = vpop.f32.mrb[0].mxu0
        %1248 = vmatprep.mubr.f32.mxu0 0.0
        %1249 = vmatmul.mubr.f32.gmra.mrb[0].mxu0 %v1066
        %v1250 = vpop.f32.mrb[0].mxu0
        %v1251 = vadd.f32 0.0, %v1250
        %v1252 = vpop.f32.mrb[0].mxu0
        %1253 = vmatprep.mubr.f32.mxu0 0.0
        %1254 = vmatmul.mubr.f32.gmra.mrb[0].mxu0 %v1069
        %v1255 = vpop.f32.mrb[0].mxu0
        %v1256 = vadd.f32 0.0, %v1255
        %v1257 = vpop.f32.mrb[0].mxu0
        %1258 = vmatprep.mubr.f32.mxu0 0.0
        %1259 = vmatmul.mubr.f32.gmra.mrb[0].mxu0 %v1072
        %v1260 = vpop.f32.mrb[0].mxu0
        %v1261 = vadd.f32 0.0, %v1260
        %v1262 = vpop.f32.mrb[0].mxu0
        %1263 = vmatprep.mubr.f32.mxu0 0.0
        %1264 = vmatmul.mubr.f32.gmra.mrb[0].mxu0 %v1075
        %v1265 = vpop.f32.mrb[0].mxu0
        %v1266 = vadd.f32 0.0, %v1265
        %v1267 = vpop.f32.mrb[0].mxu0
        %1268 = vmatprep.mubr.f32.mxu0 0.0
        %1269 = vmatmul.mubr.f32.gmra.mrb[0].mxu0 %v1078
        %v1270 = vpop.f32.mrb[0].mxu0
        %v1271 = vadd.f32 0.0, %v1270
        %v1272 = vpop.f32.mrb[0].mxu0
        %1273 = vmatprep.mubr.f32.mxu0 0.0
        %1274 = vmatmul.mubr.f32.gmra.mrb[0].mxu0 %v1081
        %v1275 = vpop.f32.mrb[0].mxu0
        %v1276 = vadd.f32 0.0, %v1275
        %v1277 = vpop.f32.mrb[0].mxu0
        %1278 = vmatprep.mubr.f32.mxu0 0.0
        %1279 = vmatmul.mubr.f32.gmra.mrb[0].mxu0 %v1084
        %v1280 = vpop.f32.mrb[0].mxu0
        %v1281 = vadd.f32 0.0, %v1280
        %v1282 = vpop.f32.mrb[0].mxu0
        %1283 = vmatprep.mubr.f32.mxu0 0.0
        %1284 = vmatmul.mubr.f32.gmra.mrb[0].mxu0 %v1087
        %v1285 = vpop.f32.mrb[0].mxu0
        %v1286 = vadd.f32 0.0, %v1285
        %v1287 = vpop.f32.mrb[0].mxu0
        %1288 = vmatprep.mubr.f32.mxu0 0.0
        %1289 = vmatmul.mubr.f32.gmra.mrb[0].mxu0 %v1090
        %v1290 = vpop.f32.mrb[0].mxu0
        %v1291 = vadd.f32 0.0, %v1290
        %v1292 = vpop.f32.mrb[0].mxu0
        %1293 = vmatprep.mubr.f32.mxu0 0.0
        %1294 = vmatmul.mubr.f32.gmra.mrb[0].mxu0 %v1093
        %v1295 = vpop.f32.mrb[0].mxu0
        %v1296 = vadd.f32 0.0, %v1295
        %v1297 = vpop.f32.mrb[0].mxu0
        %1298 = vmatprep.mubr.f32.mxu0 0.0
        %1299 = vmatmul.mubr.f32.gmra.mrb[0].mxu0 %v1096
        %v1300 = vpop.f32.mrb[0].mxu0
        %v1301 = vadd.f32 0.0, %v1300
        %v1302 = vpop.f32.mrb[0].mxu0
        %1303 = vmatprep.mubr.f32.mxu0 0.0
        %1304 = vmatmul.mubr.f32.gmra.mrb[0].mxu0 %v1099
        %v1305 = vpop.f32.mrb[0].mxu0
        %v1306 = vadd.f32 0.0, %v1305
        %v1307 = vpop.f32.mrb[0].mxu0
        %1308 = vmatprep.mubr.f32.mxu0 0.0
        %1309 = vmatmul.mubr.f32.gmra.mrb[0].mxu0 %v1102
        %v1310 = vpop.f32.mrb[0].mxu0
        %v1311 = vadd.f32 0.0, %v1310
        %v1312 = vpop.f32.mrb[0].mxu0
        %1313 = vmatprep.mubr.f32.mxu0 0.0
        %1314 = vmatmul.mubr.f32.gmra.mrb[0].mxu0 %v1105
        %v1315 = vpop.f32.mrb[0].mxu0
        %v1316 = vadd.f32 0.0, %v1315
        %v1317 = vpop.f32.mrb[0].mxu0
        %1318 = vmatprep.mubr.f32.mxu0 0.0
        %1319 = vmatmul.mubr.f32.gmra.mrb[0].mxu0 %v1108
        %v1320 = vpop.f32.mrb[0].mxu0
        %v1321 = vadd.f32 0.0, %v1320
        %v1322 = vpop.f32.mrb[0].mxu0
        %1323 = vmatprep.mubr.f32.mxu0 0.0
        %1324 = vmatmul.mubr.f32.gmra.mrb[0].mxu0 %v1111
        %v1325 = vpop.f32.mrb[0].mxu0
        %v1326 = vadd.f32 0.0, %v1325
        %v1327 = vpop.f32.mrb[0].mxu0
        %1328 = vmatprep.mubr.f32.mxu0 0.0
        %1329 = vmatmul.mubr.f32.gmra.mrb[0].mxu0 %v1114
        %v1330 = vpop.f32.mrb[0].mxu0
        %v1331 = vadd.f32 0.0, %v1330
        %v1332 = vpop.f32.mrb[0].mxu0
        %1333 = vmatprep.mubr.f32.mxu0 0.0
        %1334 = vmatmul.mubr.f32.gmra.mrb[0].mxu0 %v1117
        %v1335 = vpop.f32.mrb[0].mxu0
        %v1336 = vadd.f32 0.0, %v1335
        %v1337 = vpop.f32.mrb[0].mxu0
        %1338 = vmatprep.mubr.f32.mxu0 0.0
        %1339 = vmatmul.mubr.f32.gmra.mrb[0].mxu0 %v1120
        %v1340 = vpop.f32.mrb[0].mxu0
        %v1341 = vadd.f32 0.0, %v1340
        %v1342 = vpop.f32.mrb[0].mxu0
        %1343 = vmatprep.mubr.f32.mxu0 0.0
        %1344 = vmatmul.mubr.f32.gmra.mrb[0].mxu0 %v1123
        %v1345 = vpop.f32.mrb[0].mxu0
        %v1346 = vadd.f32 0.0, %v1345
        %v1347 = vpop.f32.mrb[0].mxu0
        %1348 = vmatprep.mubr.f32.mxu0 0.0
        %1349 = vmatmul.mubr.f32.gmra.mrb[0].mxu0 %v1126
        %v1350 = vpop.f32.mrb[0].mxu0
        %v1351 = vadd.f32 0.0, %v1350
        %v1352 = vpop.f32.mrb[0].mxu0
        %1353 = vmatprep.mubr.f32.mxu0 0.0
        %1354 = vmatmul.mubr.f32.gmra.mrb[0].mxu0 %v1129
        %v1355 = vpop.f32.mrb[0].mxu0
        %v1356 = vadd.f32 0.0, %v1355
        %v1357 = vpop.f32.mrb[0].mxu0
        %1358 = vdwg.mxu0
        %v1359 = vadd.f32 %v845, %v1201
        %v1360 = vadd.f32 %v850, %v1206
        %v1361 = vadd.f32 %v855, %v1211
        %v1362 = vadd.f32 %v860, %v1216
        %v1363 = vadd.f32 %v865, %v1221
        %v1364 = vadd.f32 %v870, %v1226
        %v1365 = vadd.f32 %v875, %v1231
        %v1366 = vadd.f32 %v880, %v1236
        %v1367 = vadd.f32 %v885, %v1241
        %v1368 = vadd.f32 %v890, %v1246
        %v1369 = vadd.f32 %v895, %v1251
        %v1370 = vadd.f32 %v900, %v1256
        %v1371 = vadd.f32 %v905, %v1261
        %v1372 = vadd.f32 %v910, %v1266
        %v1373 = vadd.f32 %v915, %v1271
        %v1374 = vadd.f32 %v920, %v1276
        %v1375 = vadd.f32 %v925, %v1281
        %v1376 = vadd.f32 %v930, %v1286
        %v1377 = vadd.f32 %v935, %v1291
        %v1378 = vadd.f32 %v940, %v1296
        %v1379 = vadd.f32 %v945, %v1301
        %v1380 = vadd.f32 %v950, %v1306
        %v1381 = vadd.f32 %v955, %v1311
        %v1382 = vadd.f32 %v960, %v1316
        %v1383 = vadd.f32 %v965, %v1321
        %v1384 = vadd.f32 %v970, %v1326
        %v1385 = vadd.f32 %v975, %v1331
        %v1386 = vadd.f32 %v980, %v1336
        %v1387 = vadd.f32 %v985, %v1341
        %v1388 = vadd.f32 %v990, %v1346
        %v1389 = vadd.f32 %v995, %v1351
        %v1390 = vadd.f32 %v1000, %v1356
        %s1391 = scalar_lea.vmem %s222, 24
        %v1392 = vld [vmem:[%s1391] sm:$0xff]
        %v1393 = vld [vmem:[%s1391 + $0x8] sm:$0xff]
        %v1394 = vld [vmem:[%s1391 + $0x18] sm:$0xff]
        %v1395 = vld [vmem:[%s1391 + $0x20] sm:$0xff]
        %v1396 = vld [vmem:[%s1391 + $0x30] sm:$0xff]
        %v1397 = vld [vmem:[%s1391 + $0x38] sm:$0xff]
        %v1398 = vld [vmem:[%s1391 + $0x48] sm:$0xff]
        %v1399 = vld [vmem:[%s1391 + $0x50] sm:$0xff]
        %v1400 = vld [vmem:[%s1391 + $0x60] sm:$0xff]
        %v1401 = vld [vmem:[%s1391 + $0x68] sm:$0xff]
        %v1402 = vld [vmem:[%s1391 + $0x78] sm:$0xff]
        %v1403 = vld [vmem:[%s1391 + $0x80] sm:$0xff]
        %v1404 = vld [vmem:[%s1391 + $0x90] sm:$0xff]
        %v1405 = vld [vmem:[%s1391 + $0x98] sm:$0xff]
        %v1406 = vld [vmem:[%s1391 + $0xa8] sm:$0xff]
        %v1407 = vld [vmem:[%s1391 + $0xb0] sm:$0xff]
        %v1408 = vld [vmem:[%s1391 + $0xc0] sm:$0xff]
        %v1409 = vld [vmem:[%s1391 + $0xc8] sm:$0xff]
        %v1410 = vld [vmem:[%s1391 + $0xd8] sm:$0xff]
        %v1411 = vld [vmem:[%s1391 + $0xe0] sm:$0xff]
        %v1412 = vld [vmem:[%s1391 + $0xf0] sm:$0xff]
        %v1413 = vld [vmem:[%s1391 + $0xf8] sm:$0xff]
        %v1414 = vld [vmem:[%s1391 + $0x108] sm:$0xff]
        %v1415 = vld [vmem:[%s1391 + $0x110] sm:$0xff]
        %v1416 = vld [vmem:[%s1391 + $0x120] sm:$0xff]
        %v1417 = vld [vmem:[%s1391 + $0x128] sm:$0xff]
        %v1418 = vld [vmem:[%s1391 + $0x138] sm:$0xff]
        %v1419 = vld [vmem:[%s1391 + $0x140] sm:$0xff]
        %v1420 = vld [vmem:[%s1391 + $0x150] sm:$0xff]
        %v1421 = vld [vmem:[%s1391 + $0x158] sm:$0xff]
        %v1422 = vld [vmem:[%s1391 + $0x168] sm:$0xff]
        %v1423 = vld [vmem:[%s1391 + $0x170] sm:$0xff]
        %v1425 = vsel %vm353, %v1392, 0
        %v1428 = vsel %vm353, %v1393, 0
        %v1431 = vsel %vm353, %v1394, 0
        %v1434 = vsel %vm353, %v1395, 0
        %v1437 = vsel %vm353, %v1396, 0
        %v1440 = vsel %vm353, %v1397, 0
        %v1443 = vsel %vm353, %v1398, 0
        %v1446 = vsel %vm353, %v1399, 0
        %v1449 = vsel %vm353, %v1400, 0
        %v1452 = vsel %vm353, %v1401, 0
        %v1455 = vsel %vm353, %v1402, 0
        %v1458 = vsel %vm353, %v1403, 0
        %v1461 = vsel %vm353, %v1404, 0
        %v1464 = vsel %vm353, %v1405, 0
        %v1467 = vsel %vm353, %v1406, 0
        %v1470 = vsel %vm353, %v1407, 0
        %v1473 = vsel %vm353, %v1408, 0
        %v1476 = vsel %vm353, %v1409, 0
        %v1479 = vsel %vm353, %v1410, 0
        %v1482 = vsel %vm353, %v1411, 0
        %v1485 = vsel %vm353, %v1412, 0
        %v1488 = vsel %vm353, %v1413, 0
        %v1491 = vsel %vm353, %v1414, 0
        %v1494 = vsel %vm353, %v1415, 0
        %v1497 = vsel %vm353, %v1416, 0
        %v1500 = vsel %vm353, %v1417, 0
        %v1503 = vsel %vm353, %v1418, 0
        %v1506 = vsel %vm353, %v1419, 0
        %v1509 = vsel %vm353, %v1420, 0
        %v1512 = vsel %vm353, %v1421, 0
        %v1515 = vsel %vm353, %v1422, 0
        %v1518 = vsel %vm353, %v1423, 0
        %v1521 = vsel %vm450, %v226, 0
        %1523 = vmatprep.subr.mxu0 0.0
        %1524 = vmatpush1.msra.mxu0 %v1521
        %1525 = vmatprep.subr.mxu0 0.0
        %1526 = vmatpush1.msra.mxu0 0.0
        %1527 = vmatprep.subr.mxu0 0.0
        %1528 = vmatpush1.msra.mxu0 0.0
        %1529 = vmatprep.subr.mxu0 0.0
        %1530 = vmatpush1.msra.mxu0 0.0
        %1531 = vmatprep.subr.mxu0 0.0
        %1532 = vmatpush1.msra.mxu0 0.0
        %1533 = vmatprep.subr.mxu0 0.0
        %1534 = vmatpush1.msra.mxu0 0.0
        %1535 = vmatprep.subr.mxu0 0.0
        %1536 = vmatpush1.msra.mxu0 0.0
        %1537 = vmatprep.subr.mxu0 0.0
        %1538 = vmatpush1.msra.mxu0 0.0
        %1539 = vmatprep.subr.mxu0 0.0
        %1540 = vmatpush1.msra.mxu0 0.0
        %1541 = vmatprep.subr.mxu0 0.0
        %1542 = vmatpush1.msra.mxu0 0.0
        %1543 = vmatprep.subr.mxu0 0.0
        %1544 = vmatpush1.msra.mxu0 0.0
        %1545 = vmatprep.subr.mxu0 0.0
        %1546 = vmatpush1.msra.mxu0 0.0
        %1547 = vmatprep.subr.mxu0 0.0
        %1548 = vmatpush1.msra.mxu0 0.0
        %1549 = vmatprep.subr.mxu0 0.0
        %1550 = vmatpush1.msra.mxu0 0.0
        %1551 = vmatprep.subr.mxu0 0.0
        %1552 = vmatpush1.msra.mxu0 0.0
        %1553 = vmatprep.subr.mxu0 0.0
        %1554 = vmatpush1.msra.mxu0 0.0
        %1555 = vmatprep.subr.mxu0 0.0
        %1556 = vmatpush1.msra.mxu0 0.0
        %1557 = vmatprep.subr.mxu0 0.0
        %1558 = vmatpush1.msra.mxu0 0.0
        %1559 = vmatprep.subr.mxu0 0.0
        %1560 = vmatpush1.msra.mxu0 0.0
        %1561 = vmatprep.subr.mxu0 0.0
        %1562 = vmatpush1.msra.mxu0 0.0
        %1563 = vmatprep.subr.mxu0 0.0
        %1564 = vmatpush1.msra.mxu0 0.0
        %1565 = vmatprep.subr.mxu0 0.0
        %1566 = vmatpush1.msra.mxu0 0.0
        %1567 = vmatprep.subr.mxu0 0.0
        %1568 = vmatpush1.msra.mxu0 0.0
        %1569 = vmatprep.subr.mxu0 0.0
        %1570 = vmatpush1.msra.mxu0 0.0
        %1571 = vmatprep.subr.mxu0 0.0
        %1572 = vmatpush1.msra.mxu0 0.0
        %1573 = vmatprep.subr.mxu0 0.0
        %1574 = vmatpush1.msra.mxu0 0.0
        %1575 = vmatprep.subr.mxu0 0.0
        %1576 = vmatpush1.msra.mxu0 0.0
        %1577 = vmatprep.subr.mxu0 0.0
        %1578 = vmatpush1.msra.mxu0 0.0
        %1579 = vmatprep.subr.mxu0 0.0
        %1580 = vmatpush1.msra.mxu0 0.0
        %1581 = vmatprep.subr.mxu0 0.0
        %1582 = vmatpush1.msra.mxu0 0.0
        %1583 = vmatprep.subr.mxu0 0.0
        %1584 = vmatpush1.msra.mxu0 0.0
        %1585 = vmatprep.subr.mxu0 0.0
        %1586 = vmatpush1.msra.mxu0 0.0
        %1587 = vmatprep.mubr.f32.mxu0 0.0
        %1588 = vmatmul.mubr.f32.gmra.mrb[0].mxu0 %v1425
        %v1589 = vpop.f32.mrb[0].mxu0
        %v1590 = vadd.f32 0.0, %v1589
        %v1591 = vpop.f32.mrb[0].mxu0
        %1592 = vmatprep.mubr.f32.mxu0 0.0
        %1593 = vmatmul.mubr.f32.gmra.mrb[0].mxu0 %v1428
        %v1594 = vpop.f32.mrb[0].mxu0
        %v1595 = vadd.f32 0.0, %v1594
        %v1596 = vpop.f32.mrb[0].mxu0
        %1597 = vmatprep.mubr.f32.mxu0 0.0
        %1598 = vmatmul.mubr.f32.gmra.mrb[0].mxu0 %v1431
        %v1599 = vpop.f32.mrb[0].mxu0
        %v1600 = vadd.f32 0.0, %v1599
        %v1601 = vpop.f32.mrb[0].mxu0
        %1602 = vmatprep.mubr.f32.mxu0 0.0
        %1603 = vmatmul.mubr.f32.gmra.mrb[0].mxu0 %v1434
        %v1604 = vpop.f32.mrb[0].mxu0
        %v1605 = vadd.f32 0.0, %v1604
        %v1606 = vpop.f32.mrb[0].mxu0
        %1607 = vmatprep.mubr.f32.mxu0 0.0
        %1608 = vmatmul.mubr.f32.gmra.mrb[0].mxu0 %v1437
        %v1609 = vpop.f32.mrb[0].mxu0
        %v1610 = vadd.f32 0.0, %v1609
        %v1611 = vpop.f32.mrb[0].mxu0
        %1612 = vmatprep.mubr.f32.mxu0 0.0
        %1613 = vmatmul.mubr.f32.gmra.mrb[0].mxu0 %v1440
        %v1614 = vpop.f32.mrb[0].mxu0
        %v1615 = vadd.f32 0.0, %v1614
        %v1616 = vpop.f32.mrb[0].mxu0
        %1617 = vmatprep.mubr.f32.mxu0 0.0
        %1618 = vmatmul.mubr.f32.gmra.mrb[0].mxu0 %v1443
        %v1619 = vpop.f32.mrb[0].mxu0
        %v1620 = vadd.f32 0.0, %v1619
        %v1621 = vpop.f32.mrb[0].mxu0
        %1622 = vmatprep.mubr.f32.mxu0 0.0
        %1623 = vmatmul.mubr.f32.gmra.mrb[0].mxu0 %v1446
        %v1624 = vpop.f32.mrb[0].mxu0
        %v1625 = vadd.f32 0.0, %v1624
        %v1626 = vpop.f32.mrb[0].mxu0
        %1627 = vmatprep.mubr.f32.mxu0 0.0
        %1628 = vmatmul.mubr.f32.gmra.mrb[0].mxu0 %v1449
        %v1629 = vpop.f32.mrb[0].mxu0
        %v1630 = vadd.f32 0.0, %v1629
        %v1631 = vpop.f32.mrb[0].mxu0
        %1632 = vmatprep.mubr.f32.mxu0 0.0
        %1633 = vmatmul.mubr.f32.gmra.mrb[0].mxu0 %v1452
        %v1634 = vpop.f32.mrb[0].mxu0
        %v1635 = vadd.f32 0.0, %v1634
        %v1636 = vpop.f32.mrb[0].mxu0
        %1637 = vmatprep.mubr.f32.mxu0 0.0
        %1638 = vmatmul.mubr.f32.gmra.mrb[0].mxu0 %v1455
        %v1639 = vpop.f32.mrb[0].mxu0
        %v1640 = vadd.f32 0.0, %v1639
        %v1641 = vpop.f32.mrb[0].mxu0
        %1642 = vmatprep.mubr.f32.mxu0 0.0
        %1643 = vmatmul.mubr.f32.gmra.mrb[0].mxu0 %v1458
        %v1644 = vpop.f32.mrb[0].mxu0
        %v1645 = vadd.f32 0.0, %v1644
        %v1646 = vpop.f32.mrb[0].mxu0
        %1647 = vmatprep.mubr.f32.mxu0 0.0
        %1648 = vmatmul.mubr.f32.gmra.mrb[0].mxu0 %v1461
        %v1649 = vpop.f32.mrb[0].mxu0
        %v1650 = vadd.f32 0.0, %v1649
        %v1651 = vpop.f32.mrb[0].mxu0
        %1652 = vmatprep.mubr.f32.mxu0 0.0
        %1653 = vmatmul.mubr.f32.gmra.mrb[0].mxu0 %v1464
        %v1654 = vpop.f32.mrb[0].mxu0
        %v1655 = vadd.f32 0.0, %v1654
        %v1656 = vpop.f32.mrb[0].mxu0
        %1657 = vmatprep.mubr.f32.mxu0 0.0
        %1658 = vmatmul.mubr.f32.gmra.mrb[0].mxu0 %v1467
        %v1659 = vpop.f32.mrb[0].mxu0
        %v1660 = vadd.f32 0.0, %v1659
        %v1661 = vpop.f32.mrb[0].mxu0
        %1662 = vmatprep.mubr.f32.mxu0 0.0
        %1663 = vmatmul.mubr.f32.gmra.mrb[0].mxu0 %v1470
        %v1664 = vpop.f32.mrb[0].mxu0
        %v1665 = vadd.f32 0.0, %v1664
        %v1666 = vpop.f32.mrb[0].mxu0
        %1667 = vmatprep.mubr.f32.mxu0 0.0
        %1668 = vmatmul.mubr.f32.gmra.mrb[0].mxu0 %v1473
        %v1669 = vpop.f32.mrb[0].mxu0
        %v1670 = vadd.f32 0.0, %v1669
        %v1671 = vpop.f32.mrb[0].mxu0
        %1672 = vmatprep.mubr.f32.mxu0 0.0
        %1673 = vmatmul.mubr.f32.gmra.mrb[0].mxu0 %v1476
        %v1674 = vpop.f32.mrb[0].mxu0
        %v1675 = vadd.f32 0.0, %v1674
        %v1676 = vpop.f32.mrb[0].mxu0
        %1677 = vmatprep.mubr.f32.mxu0 0.0
        %1678 = vmatmul.mubr.f32.gmra.mrb[0].mxu0 %v1479
        %v1679 = vpop.f32.mrb[0].mxu0
        %v1680 = vadd.f32 0.0, %v1679
        %v1681 = vpop.f32.mrb[0].mxu0
        %1682 = vmatprep.mubr.f32.mxu0 0.0
        %1683 = vmatmul.mubr.f32.gmra.mrb[0].mxu0 %v1482
        %v1684 = vpop.f32.mrb[0].mxu0
        %v1685 = vadd.f32 0.0, %v1684
        %v1686 = vpop.f32.mrb[0].mxu0
        %1687 = vmatprep.mubr.f32.mxu0 0.0
        %1688 = vmatmul.mubr.f32.gmra.mrb[0].mxu0 %v1485
        %v1689 = vpop.f32.mrb[0].mxu0
        %v1690 = vadd.f32 0.0, %v1689
        %v1691 = vpop.f32.mrb[0].mxu0
        %1692 = vmatprep.mubr.f32.mxu0 0.0
        %1693 = vmatmul.mubr.f32.gmra.mrb[0].mxu0 %v1488
        %v1694 = vpop.f32.mrb[0].mxu0
        %v1695 = vadd.f32 0.0, %v1694
        %v1696 = vpop.f32.mrb[0].mxu0
        %1697 = vmatprep.mubr.f32.mxu0 0.0
        %1698 = vmatmul.mubr.f32.gmra.mrb[0].mxu0 %v1491
        %v1699 = vpop.f32.mrb[0].mxu0
        %v1700 = vadd.f32 0.0, %v1699
        %v1701 = vpop.f32.mrb[0].mxu0
        %1702 = vmatprep.mubr.f32.mxu0 0.0
        %1703 = vmatmul.mubr.f32.gmra.mrb[0].mxu0 %v1494
        %v1704 = vpop.f32.mrb[0].mxu0
        %v1705 = vadd.f32 0.0, %v1704
        %v1706 = vpop.f32.mrb[0].mxu0
        %1707 = vmatprep.mubr.f32.mxu0 0.0
        %1708 = vmatmul.mubr.f32.gmra.mrb[0].mxu0 %v1497
        %v1709 = vpop.f32.mrb[0].mxu0
        %v1710 = vadd.f32 0.0, %v1709
        %v1711 = vpop.f32.mrb[0].mxu0
        %1712 = vmatprep.mubr.f32.mxu0 0.0
        %1713 = vmatmul.mubr.f32.gmra.mrb[0].mxu0 %v1500
        %v1714 = vpop.f32.mrb[0].mxu0
        %v1715 = vadd.f32 0.0, %v1714
        %v1716 = vpop.f32.mrb[0].mxu0
        %1717 = vmatprep.mubr.f32.mxu0 0.0
        %1718 = vmatmul.mubr.f32.gmra.mrb[0].mxu0 %v1503
        %v1719 = vpop.f32.mrb[0].mxu0
        %v1720 = vadd.f32 0.0, %v1719
        %v1721 = vpop.f32.mrb[0].mxu0
        %1722 = vmatprep.mubr.f32.mxu0 0.0
        %1723 = vmatmul.mubr.f32.gmra.mrb[0].mxu0 %v1506
        %v1724 = vpop.f32.mrb[0].mxu0
        %v1725 = vadd.f32 0.0, %v1724
        %v1726 = vpop.f32.mrb[0].mxu0
        %1727 = vmatprep.mubr.f32.mxu0 0.0
        %1728 = vmatmul.mubr.f32.gmra.mrb[0].mxu0 %v1509
        %v1729 = vpop.f32.mrb[0].mxu0
        %v1730 = vadd.f32 0.0, %v1729
        %v1731 = vpop.f32.mrb[0].mxu0
        %1732 = vmatprep.mubr.f32.mxu0 0.0
        %1733 = vmatmul.mubr.f32.gmra.mrb[0].mxu0 %v1512
        %v1734 = vpop.f32.mrb[0].mxu0
        %v1735 = vadd.f32 0.0, %v1734
        %v1736 = vpop.f32.mrb[0].mxu0
        %1737 = vmatprep.mubr.f32.mxu0 0.0
        %1738 = vmatmul.mubr.f32.gmra.mrb[0].mxu0 %v1515
        %v1739 = vpop.f32.mrb[0].mxu0
        %v1740 = vadd.f32 0.0, %v1739
        %v1741 = vpop.f32.mrb[0].mxu0
        %1742 = vmatprep.mubr.f32.mxu0 0.0
        %1743 = vmatmul.mubr.f32.gmra.mrb[0].mxu0 %v1518
        %v1744 = vpop.f32.mrb[0].mxu0
        %v1745 = vadd.f32 0.0, %v1744
        %v1746 = vpop.f32.mrb[0].mxu0
        %1747 = vdwg.mxu0
        %v1748 = vadd.f32 %v1359, %v1590
        %v1749 = vadd.f32 %v1360, %v1595
        %v1750 = vadd.f32 %v1361, %v1600
        %v1751 = vadd.f32 %v1362, %v1605
        %v1752 = vadd.f32 %v1363, %v1610
        %v1753 = vadd.f32 %v1364, %v1615
        %v1754 = vadd.f32 %v1365, %v1620
        %v1755 = vadd.f32 %v1366, %v1625
        %v1756 = vadd.f32 %v1367, %v1630
        %v1757 = vadd.f32 %v1368, %v1635
        %v1758 = vadd.f32 %v1369, %v1640
        %v1759 = vadd.f32 %v1370, %v1645
        %v1760 = vadd.f32 %v1371, %v1650
        %v1761 = vadd.f32 %v1372, %v1655
        %v1762 = vadd.f32 %v1373, %v1660
        %v1763 = vadd.f32 %v1374, %v1665
        %v1764 = vadd.f32 %v1375, %v1670
        %v1765 = vadd.f32 %v1376, %v1675
        %v1766 = vadd.f32 %v1377, %v1680
        %v1767 = vadd.f32 %v1378, %v1685
        %v1768 = vadd.f32 %v1379, %v1690
        %v1769 = vadd.f32 %v1380, %v1695
        %v1770 = vadd.f32 %v1381, %v1700
        %v1771 = vadd.f32 %v1382, %v1705
        %v1772 = vadd.f32 %v1383, %v1710
        %v1773 = vadd.f32 %v1384, %v1715
        %v1774 = vadd.f32 %v1385, %v1720
        %v1775 = vadd.f32 %v1386, %v1725
        %v1776 = vadd.f32 %v1387, %v1730
        %v1777 = vadd.f32 %v1388, %v1735
        %v1778 = vadd.f32 %v1389, %v1740
        %v1779 = vadd.f32 %v1390, %v1745
        %v1780 = vld [vmem:[%s1391 + $0x1] sm:$0xff]
        %v1781 = vld [vmem:[%s1391 + $0x9] sm:$0xff]
        %v1782 = vld [vmem:[%s1391 + $0x19] sm:$0xff]
        %v1783 = vld [vmem:[%s1391 + $0x21] sm:$0xff]
        %v1784 = vld [vmem:[%s1391 + $0x31] sm:$0xff]
        %v1785 = vld [vmem:[%s1391 + $0x39] sm:$0xff]
        %v1786 = vld [vmem:[%s1391 + $0x49] sm:$0xff]
        %v1787 = vld [vmem:[%s1391 + $0x51] sm:$0xff]
        %v1788 = vld [vmem:[%s1391 + $0x61] sm:$0xff]
        %v1789 = vld [vmem:[%s1391 + $0x69] sm:$0xff]
        %v1790 = vld [vmem:[%s1391 + $0x79] sm:$0xff]
        %v1791 = vld [vmem:[%s1391 + $0x81] sm:$0xff]
        %v1792 = vld [vmem:[%s1391 + $0x91] sm:$0xff]
        %v1793 = vld [vmem:[%s1391 + $0x99] sm:$0xff]
        %v1794 = vld [vmem:[%s1391 + $0xa9] sm:$0xff]
        %v1795 = vld [vmem:[%s1391 + $0xb1] sm:$0xff]
        %v1796 = vld [vmem:[%s1391 + $0xc1] sm:$0xff]
        %v1797 = vld [vmem:[%s1391 + $0xc9] sm:$0xff]
        %v1798 = vld [vmem:[%s1391 + $0xd9] sm:$0xff]
        %v1799 = vld [vmem:[%s1391 + $0xe1] sm:$0xff]
        %v1800 = vld [vmem:[%s1391 + $0xf1] sm:$0xff]
        %v1801 = vld [vmem:[%s1391 + $0xf9] sm:$0xff]
        %v1802 = vld [vmem:[%s1391 + $0x109] sm:$0xff]
        %v1803 = vld [vmem:[%s1391 + $0x111] sm:$0xff]
        %v1804 = vld [vmem:[%s1391 + $0x121] sm:$0xff]
        %v1805 = vld [vmem:[%s1391 + $0x129] sm:$0xff]
        %v1806 = vld [vmem:[%s1391 + $0x139] sm:$0xff]
        %v1807 = vld [vmem:[%s1391 + $0x141] sm:$0xff]
        %v1808 = vld [vmem:[%s1391 + $0x151] sm:$0xff]
        %v1809 = vld [vmem:[%s1391 + $0x159] sm:$0xff]
        %v1810 = vld [vmem:[%s1391 + $0x169] sm:$0xff]
        %v1811 = vld [vmem:[%s1391 + $0x171] sm:$0xff]
        %v1813 = vsel %vm353, %v1780, 0
        %v1816 = vsel %vm353, %v1781, 0
        %v1819 = vsel %vm353, %v1782, 0
        %v1822 = vsel %vm353, %v1783, 0
        %v1825 = vsel %vm353, %v1784, 0
        %v1828 = vsel %vm353, %v1785, 0
        %v1831 = vsel %vm353, %v1786, 0
        %v1834 = vsel %vm353, %v1787, 0
        %v1837 = vsel %vm353, %v1788, 0
        %v1840 = vsel %vm353, %v1789, 0
        %v1843 = vsel %vm353, %v1790, 0
        %v1846 = vsel %vm353, %v1791, 0
        %v1849 = vsel %vm353, %v1792, 0
        %v1852 = vsel %vm353, %v1793, 0
        %v1855 = vsel %vm353, %v1794, 0
        %v1858 = vsel %vm353, %v1795, 0
        %v1861 = vsel %vm353, %v1796, 0
        %v1864 = vsel %vm353, %v1797, 0
        %v1867 = vsel %vm353, %v1798, 0
        %v1870 = vsel %vm353, %v1799, 0
        %v1873 = vsel %vm353, %v1800, 0
        %v1876 = vsel %vm353, %v1801, 0
        %v1879 = vsel %vm353, %v1802, 0
        %v1882 = vsel %vm353, %v1803, 0
        %v1885 = vsel %vm353, %v1804, 0
        %v1888 = vsel %vm353, %v1805, 0
        %v1891 = vsel %vm353, %v1806, 0
        %v1894 = vsel %vm353, %v1807, 0
        %v1897 = vsel %vm353, %v1808, 0
        %v1900 = vsel %vm353, %v1809, 0
        %v1903 = vsel %vm353, %v1810, 0
        %v1906 = vsel %vm353, %v1811, 0
        %v1909 = vsel %vm450, %v227, 0
        %1911 = vmatprep.subr.mxu0 0.0
        %1912 = vmatpush1.msra.mxu0 %v1909
        %1913 = vmatprep.subr.mxu0 0.0
        %1914 = vmatpush1.msra.mxu0 0.0
        %1915 = vmatprep.subr.mxu0 0.0
        %1916 = vmatpush1.msra.mxu0 0.0
        %1917 = vmatprep.subr.mxu0 0.0
        %1918 = vmatpush1.msra.mxu0 0.0
        %1919 = vmatprep.subr.mxu0 0.0
        %1920 = vmatpush1.msra.mxu0 0.0
        %1921 = vmatprep.subr.mxu0 0.0
        %1922 = vmatpush1.msra.mxu0 0.0
        %1923 = vmatprep.subr.mxu0 0.0
        %1924 = vmatpush1.msra.mxu0 0.0
        %1925 = vmatprep.subr.mxu0 0.0
        %1926 = vmatpush1.msra.mxu0 0.0
        %1927 = vmatprep.subr.mxu0 0.0
        %1928 = vmatpush1.msra.mxu0 0.0
        %1929 = vmatprep.subr.mxu0 0.0
        %1930 = vmatpush1.msra.mxu0 0.0
        %1931 = vmatprep.subr.mxu0 0.0
        %1932 = vmatpush1.msra.mxu0 0.0
        %1933 = vmatprep.subr.mxu0 0.0
        %1934 = vmatpush1.msra.mxu0 0.0
        %1935 = vmatprep.subr.mxu0 0.0
        %1936 = vmatpush1.msra.mxu0 0.0
        %1937 = vmatprep.subr.mxu0 0.0
        %1938 = vmatpush1.msra.mxu0 0.0
        %1939 = vmatprep.subr.mxu0 0.0
        %1940 = vmatpush1.msra.mxu0 0.0
        %1941 = vmatprep.subr.mxu0 0.0
        %1942 = vmatpush1.msra.mxu0 0.0
        %1943 = vmatprep.subr.mxu0 0.0
        %1944 = vmatpush1.msra.mxu0 0.0
        %1945 = vmatprep.subr.mxu0 0.0
        %1946 = vmatpush1.msra.mxu0 0.0
        %1947 = vmatprep.subr.mxu0 0.0
        %1948 = vmatpush1.msra.mxu0 0.0
        %1949 = vmatprep.subr.mxu0 0.0
        %1950 = vmatpush1.msra.mxu0 0.0
        %1951 = vmatprep.subr.mxu0 0.0
        %1952 = vmatpush1.msra.mxu0 0.0
        %1953 = vmatprep.subr.mxu0 0.0
        %1954 = vmatpush1.msra.mxu0 0.0
        %1955 = vmatprep.subr.mxu0 0.0
        %1956 = vmatpush1.msra.mxu0 0.0
        %1957 = vmatprep.subr.mxu0 0.0
        %1958 = vmatpush1.msra.mxu0 0.0
        %1959 = vmatprep.subr.mxu0 0.0
        %1960 = vmatpush1.msra.mxu0 0.0
        %1961 = vmatprep.subr.mxu0 0.0
        %1962 = vmatpush1.msra.mxu0 0.0
        %1963 = vmatprep.subr.mxu0 0.0
        %1964 = vmatpush1.msra.mxu0 0.0
        %1965 = vmatprep.subr.mxu0 0.0
        %1966 = vmatpush1.msra.mxu0 0.0
        %1967 = vmatprep.subr.mxu0 0.0
        %1968 = vmatpush1.msra.mxu0 0.0
        %1969 = vmatprep.subr.mxu0 0.0
        %1970 = vmatpush1.msra.mxu0 0.0
        %1971 = vmatprep.subr.mxu0 0.0
        %1972 = vmatpush1.msra.mxu0 0.0
        %1973 = vmatprep.subr.mxu0 0.0
        %1974 = vmatpush1.msra.mxu0 0.0
        %1975 = vmatprep.mubr.f32.mxu0 0.0
        %1976 = vmatmul.mubr.f32.gmra.mrb[0].mxu0 %v1813
        %v1977 = vpop.f32.mrb[0].mxu0
        %v1978 = vadd.f32 0.0, %v1977
        %v1979 = vpop.f32.mrb[0].mxu0
        %1980 = vmatprep.mubr.f32.mxu0 0.0
        %1981 = vmatmul.mubr.f32.gmra.mrb[0].mxu0 %v1816
        %v1982 = vpop.f32.mrb[0].mxu0
        %v1983 = vadd.f32 0.0, %v1982
        %v1984 = vpop.f32.mrb[0].mxu0
        %1985 = vmatprep.mubr.f32.mxu0 0.0
        %1986 = vmatmul.mubr.f32.gmra.mrb[0].mxu0 %v1819
        %v1987 = vpop.f32.mrb[0].mxu0
        %v1988 = vadd.f32 0.0, %v1987
        %v1989 = vpop.f32.mrb[0].mxu0
        %1990 = vmatprep.mubr.f32.mxu0 0.0
        %1991 = vmatmul.mubr.f32.gmra.mrb[0].mxu0 %v1822
        %v1992 = vpop.f32.mrb[0].mxu0
        %v1993 = vadd.f32 0.0, %v1992
        %v1994 = vpop.f32.mrb[0].mxu0
        %1995 = vmatprep.mubr.f32.mxu0 0.0
        %1996 = vmatmul.mubr.f32.gmra.mrb[0].mxu0 %v1825
        %v1997 = vpop.f32.mrb[0].mxu0
        %v1998 = vadd.f32 0.0, %v1997
        %v1999 = vpop.f32.mrb[0].mxu0
        %2000 = vmatprep.mubr.f32.mxu0 0.0
        %2001 = vmatmul.mubr.f32.gmra.mrb[0].mxu0 %v1828
        %v2002 = vpop.f32.mrb[0].mxu0
        %v2003 = vadd.f32 0.0, %v2002
        %v2004 = vpop.f32.mrb[0].mxu0
        %2005 = vmatprep.mubr.f32.mxu0 0.0
        %2006 = vmatmul.mubr.f32.gmra.mrb[0].mxu0 %v1831
        %v2007 = vpop.f32.mrb[0].mxu0
        %v2008 = vadd.f32 0.0, %v2007
        %v2009 = vpop.f32.mrb[0].mxu0
        %2010 = vmatprep.mubr.f32.mxu0 0.0
        %2011 = vmatmul.mubr.f32.gmra.mrb[0].mxu0 %v1834
        %v2012 = vpop.f32.mrb[0].mxu0
        %v2013 = vadd.f32 0.0, %v2012
        %v2014 = vpop.f32.mrb[0].mxu0
        %2015 = vmatprep.mubr.f32.mxu0 0.0
        %2016 = vmatmul.mubr.f32.gmra.mrb[0].mxu0 %v1837
        %v2017 = vpop.f32.mrb[0].mxu0
        %v2018 = vadd.f32 0.0, %v2017
        %v2019 = vpop.f32.mrb[0].mxu0
        %2020 = vmatprep.mubr.f32.mxu0 0.0
        %2021 = vmatmul.mubr.f32.gmra.mrb[0].mxu0 %v1840
        %v2022 = vpop.f32.mrb[0].mxu0
        %v2023 = vadd.f32 0.0, %v2022
        %v2024 = vpop.f32.mrb[0].mxu0
        %2025 = vmatprep.mubr.f32.mxu0 0.0
        %2026 = vmatmul.mubr.f32.gmra.mrb[0].mxu0 %v1843
        %v2027 = vpop.f32.mrb[0].mxu0
        %v2028 = vadd.f32 0.0, %v2027
        %v2029 = vpop.f32.mrb[0].mxu0
        %2030 = vmatprep.mubr.f32.mxu0 0.0
        %2031 = vmatmul.mubr.f32.gmra.mrb[0].mxu0 %v1846
        %v2032 = vpop.f32.mrb[0].mxu0
        %v2033 = vadd.f32 0.0, %v2032
        %v2034 = vpop.f32.mrb[0].mxu0
        %2035 = vmatprep.mubr.f32.mxu0 0.0
        %2036 = vmatmul.mubr.f32.gmra.mrb[0].mxu0 %v1849
        %v2037 = vpop.f32.mrb[0].mxu0
        %v2038 = vadd.f32 0.0, %v2037
        %v2039 = vpop.f32.mrb[0].mxu0
        %2040 = vmatprep.mubr.f32.mxu0 0.0
        %2041 = vmatmul.mubr.f32.gmra.mrb[0].mxu0 %v1852
        %v2042 = vpop.f32.mrb[0].mxu0
        %v2043 = vadd.f32 0.0, %v2042
        %v2044 = vpop.f32.mrb[0].mxu0
        %2045 = vmatprep.mubr.f32.mxu0 0.0
        %2046 = vmatmul.mubr.f32.gmra.mrb[0].mxu0 %v1855
        %v2047 = vpop.f32.mrb[0].mxu0
        %v2048 = vadd.f32 0.0, %v2047
        %v2049 = vpop.f32.mrb[0].mxu0
        %2050 = vmatprep.mubr.f32.mxu0 0.0
        %2051 = vmatmul.mubr.f32.gmra.mrb[0].mxu0 %v1858
        %v2052 = vpop.f32.mrb[0].mxu0
        %v2053 = vadd.f32 0.0, %v2052
        %v2054 = vpop.f32.mrb[0].mxu0
        %2055 = vmatprep.mubr.f32.mxu0 0.0
        %2056 = vmatmul.mubr.f32.gmra.mrb[0].mxu0 %v1861
        %v2057 = vpop.f32.mrb[0].mxu0
        %v2058 = vadd.f32 0.0, %v2057
        %v2059 = vpop.f32.mrb[0].mxu0
        %2060 = vmatprep.mubr.f32.mxu0 0.0
        %2061 = vmatmul.mubr.f32.gmra.mrb[0].mxu0 %v1864
        %v2062 = vpop.f32.mrb[0].mxu0
        %v2063 = vadd.f32 0.0, %v2062
        %v2064 = vpop.f32.mrb[0].mxu0
        %2065 = vmatprep.mubr.f32.mxu0 0.0
        %2066 = vmatmul.mubr.f32.gmra.mrb[0].mxu0 %v1867
        %v2067 = vpop.f32.mrb[0].mxu0
        %v2068 = vadd.f32 0.0, %v2067
        %v2069 = vpop.f32.mrb[0].mxu0
        %2070 = vmatprep.mubr.f32.mxu0 0.0
        %2071 = vmatmul.mubr.f32.gmra.mrb[0].mxu0 %v1870
        %v2072 = vpop.f32.mrb[0].mxu0
        %v2073 = vadd.f32 0.0, %v2072
        %v2074 = vpop.f32.mrb[0].mxu0
        %2075 = vmatprep.mubr.f32.mxu0 0.0
        %2076 = vmatmul.mubr.f32.gmra.mrb[0].mxu0 %v1873
        %v2077 = vpop.f32.mrb[0].mxu0
        %v2078 = vadd.f32 0.0, %v2077
        %v2079 = vpop.f32.mrb[0].mxu0
        %2080 = vmatprep.mubr.f32.mxu0 0.0
        %2081 = vmatmul.mubr.f32.gmra.mrb[0].mxu0 %v1876
        %v2082 = vpop.f32.mrb[0].mxu0
        %v2083 = vadd.f32 0.0, %v2082
        %v2084 = vpop.f32.mrb[0].mxu0
        %2085 = vmatprep.mubr.f32.mxu0 0.0
        %2086 = vmatmul.mubr.f32.gmra.mrb[0].mxu0 %v1879
        %v2087 = vpop.f32.mrb[0].mxu0
        %v2088 = vadd.f32 0.0, %v2087
        %v2089 = vpop.f32.mrb[0].mxu0
        %2090 = vmatprep.mubr.f32.mxu0 0.0
        %2091 = vmatmul.mubr.f32.gmra.mrb[0].mxu0 %v1882
        %v2092 = vpop.f32.mrb[0].mxu0
        %v2093 = vadd.f32 0.0, %v2092
        %v2094 = vpop.f32.mrb[0].mxu0
        %2095 = vmatprep.mubr.f32.mxu0 0.0
        %2096 = vmatmul.mubr.f32.gmra.mrb[0].mxu0 %v1885
        %v2097 = vpop.f32.mrb[0].mxu0
        %v2098 = vadd.f32 0.0, %v2097
        %v2099 = vpop.f32.mrb[0].mxu0
        %2100 = vmatprep.mubr.f32.mxu0 0.0
        %2101 = vmatmul.mubr.f32.gmra.mrb[0].mxu0 %v1888
        %v2102 = vpop.f32.mrb[0].mxu0
        %v2103 = vadd.f32 0.0, %v2102
        %v2104 = vpop.f32.mrb[0].mxu0
        %2105 = vmatprep.mubr.f32.mxu0 0.0
        %2106 = vmatmul.mubr.f32.gmra.mrb[0].mxu0 %v1891
        %v2107 = vpop.f32.mrb[0].mxu0
        %v2108 = vadd.f32 0.0, %v2107
        %v2109 = vpop.f32.mrb[0].mxu0
        %2110 = vmatprep.mubr.f32.mxu0 0.0
        %2111 = vmatmul.mubr.f32.gmra.mrb[0].mxu0 %v1894
        %v2112 = vpop.f32.mrb[0].mxu0
        %v2113 = vadd.f32 0.0, %v2112
        %v2114 = vpop.f32.mrb[0].mxu0
        %2115 = vmatprep.mubr.f32.mxu0 0.0
        %2116 = vmatmul.mubr.f32.gmra.mrb[0].mxu0 %v1897
        %v2117 = vpop.f32.mrb[0].mxu0
        %v2118 = vadd.f32 0.0, %v2117
        %v2119 = vpop.f32.mrb[0].mxu0
        %2120 = vmatprep.mubr.f32.mxu0 0.0
        %2121 = vmatmul.mubr.f32.gmra.mrb[0].mxu0 %v1900
        %v2122 = vpop.f32.mrb[0].mxu0
        %v2123 = vadd.f32 0.0, %v2122
        %v2124 = vpop.f32.mrb[0].mxu0
        %2125 = vmatprep.mubr.f32.mxu0 0.0
        %2126 = vmatmul.mubr.f32.gmra.mrb[0].mxu0 %v1903
        %v2127 = vpop.f32.mrb[0].mxu0
        %v2128 = vadd.f32 0.0, %v2127
        %v2129 = vpop.f32.mrb[0].mxu0
        %2130 = vmatprep.mubr.f32.mxu0 0.0
        %2131 = vmatmul.mubr.f32.gmra.mrb[0].mxu0 %v1906
        %v2132 = vpop.f32.mrb[0].mxu0
        %v2133 = vadd.f32 0.0, %v2132
        %v2134 = vpop.f32.mrb[0].mxu0
        %2135 = vdwg.mxu0
        %v2136 = vadd.f32 %v1748, %v1978
        %v2137 = vadd.f32 %v1749, %v1983
        %v2138 = vadd.f32 %v1750, %v1988
        %v2139 = vadd.f32 %v1751, %v1993
        %v2140 = vadd.f32 %v1752, %v1998
        %v2141 = vadd.f32 %v1753, %v2003
        %v2142 = vadd.f32 %v1754, %v2008
        %v2143 = vadd.f32 %v1755, %v2013
        %v2144 = vadd.f32 %v1756, %v2018
        %v2145 = vadd.f32 %v1757, %v2023
        %v2146 = vadd.f32 %v1758, %v2028
        %v2147 = vadd.f32 %v1759, %v2033
        %v2148 = vadd.f32 %v1760, %v2038
        %v2149 = vadd.f32 %v1761, %v2043
        %v2150 = vadd.f32 %v1762, %v2048
        %v2151 = vadd.f32 %v1763, %v2053
        %v2152 = vadd.f32 %v1764, %v2058
        %v2153 = vadd.f32 %v1765, %v2063
        %v2154 = vadd.f32 %v1766, %v2068
        %v2155 = vadd.f32 %v1767, %v2073
        %v2156 = vadd.f32 %v1768, %v2078
        %v2157 = vadd.f32 %v1769, %v2083
        %v2158 = vadd.f32 %v1770, %v2088
        %v2159 = vadd.f32 %v1771, %v2093
        %v2160 = vadd.f32 %v1772, %v2098
        %v2161 = vadd.f32 %v1773, %v2103
        %v2162 = vadd.f32 %v1774, %v2108
        %v2163 = vadd.f32 %v1775, %v2113
        %v2164 = vadd.f32 %v1776, %v2118
        %v2165 = vadd.f32 %v1777, %v2123
        %v2166 = vadd.f32 %v1778, %v2128
        %v2167 = vadd.f32 %v1779, %v2133
        %v2168 = vld [vmem:[%s1391 + $0x2] sm:$0xff]
        %v2169 = vld [vmem:[%s1391 + $0xa] sm:$0xff]
        %v2170 = vld [vmem:[%s1391 + $0x1a] sm:$0xff]
        %v2171 = vld [vmem:[%s1391 + $0x22] sm:$0xff]
        %v2172 = vld [vmem:[%s1391 + $0x32] sm:$0xff]
        %v2173 = vld [vmem:[%s1391 + $0x3a] sm:$0xff]
        %v2174 = vld [vmem:[%s1391 + $0x4a] sm:$0xff]
        %v2175 = vld [vmem:[%s1391 + $0x52] sm:$0xff]
        %v2176 = vld [vmem:[%s1391 + $0x62] sm:$0xff]
        %v2177 = vld [vmem:[%s1391 + $0x6a] sm:$0xff]
        %v2178 = vld [vmem:[%s1391 + $0x7a] sm:$0xff]
        %v2179 = vld [vmem:[%s1391 + $0x82] sm:$0xff]
        %v2180 = vld [vmem:[%s1391 + $0x92] sm:$0xff]
        %v2181 = vld [vmem:[%s1391 + $0x9a] sm:$0xff]
        %v2182 = vld [vmem:[%s1391 + $0xaa] sm:$0xff]
        %v2183 = vld [vmem:[%s1391 + $0xb2] sm:$0xff]
        %v2184 = vld [vmem:[%s1391 + $0xc2] sm:$0xff]
        %v2185 = vld [vmem:[%s1391 + $0xca] sm:$0xff]
        %v2186 = vld [vmem:[%s1391 + $0xda] sm:$0xff]
        %v2187 = vld [vmem:[%s1391 + $0xe2] sm:$0xff]
        %v2188 = vld [vmem:[%s1391 + $0xf2] sm:$0xff]
        %v2189 = vld [vmem:[%s1391 + $0xfa] sm:$0xff]
        %v2190 = vld [vmem:[%s1391 + $0x10a] sm:$0xff]
        %v2191 = vld [vmem:[%s1391 + $0x112] sm:$0xff]
        %v2192 = vld [vmem:[%s1391 + $0x122] sm:$0xff]
        %v2193 = vld [vmem:[%s1391 + $0x12a] sm:$0xff]
        %v2194 = vld [vmem:[%s1391 + $0x13a] sm:$0xff]
        %v2195 = vld [vmem:[%s1391 + $0x142] sm:$0xff]
        %v2196 = vld [vmem:[%s1391 + $0x152] sm:$0xff]
        %v2197 = vld [vmem:[%s1391 + $0x15a] sm:$0xff]
        %v2198 = vld [vmem:[%s1391 + $0x16a] sm:$0xff]
        %v2199 = vld [vmem:[%s1391 + $0x172] sm:$0xff]
        %v2201 = vsel %vm353, %v2168, 0
        %v2204 = vsel %vm353, %v2169, 0
        %v2207 = vsel %vm353, %v2170, 0
        %v2210 = vsel %vm353, %v2171, 0
        %v2213 = vsel %vm353, %v2172, 0
        %v2216 = vsel %vm353, %v2173, 0
        %v2219 = vsel %vm353, %v2174, 0
        %v2222 = vsel %vm353, %v2175, 0
        %v2225 = vsel %vm353, %v2176, 0
        %v2228 = vsel %vm353, %v2177, 0
        %v2231 = vsel %vm353, %v2178, 0
        %v2234 = vsel %vm353, %v2179, 0
        %v2237 = vsel %vm353, %v2180, 0
        %v2240 = vsel %vm353, %v2181, 0
        %v2243 = vsel %vm353, %v2182, 0
        %v2246 = vsel %vm353, %v2183, 0
        %v2249 = vsel %vm353, %v2184, 0
        %v2252 = vsel %vm353, %v2185, 0
        %v2255 = vsel %vm353, %v2186, 0
        %v2258 = vsel %vm353, %v2187, 0
        %v2261 = vsel %vm353, %v2188, 0
        %v2264 = vsel %vm353, %v2189, 0
        %v2267 = vsel %vm353, %v2190, 0
        %v2270 = vsel %vm353, %v2191, 0
        %v2273 = vsel %vm353, %v2192, 0
        %v2276 = vsel %vm353, %v2193, 0
        %v2279 = vsel %vm353, %v2194, 0
        %v2282 = vsel %vm353, %v2195, 0
        %v2285 = vsel %vm353, %v2196, 0
        %v2288 = vsel %vm353, %v2197, 0
        %v2291 = vsel %vm353, %v2198, 0
        %v2294 = vsel %vm353, %v2199, 0
        %v2297 = vsel %vm450, %v228, 0
        %2299 = vmatprep.subr.mxu0 0.0
        %2300 = vmatpush1.msra.mxu0 %v2297
        %2301 = vmatprep.subr.mxu0 0.0
        %2302 = vmatpush1.msra.mxu0 0.0
        %2303 = vmatprep.subr.mxu0 0.0
        %2304 = vmatpush1.msra.mxu0 0.0
        %2305 = vmatprep.subr.mxu0 0.0
        %2306 = vmatpush1.msra.mxu0 0.0
        %2307 = vmatprep.subr.mxu0 0.0
        %2308 = vmatpush1.msra.mxu0 0.0
        %2309 = vmatprep.subr.mxu0 0.0
        %2310 = vmatpush1.msra.mxu0 0.0
        %2311 = vmatprep.subr.mxu0 0.0
        %2312 = vmatpush1.msra.mxu0 0.0
        %2313 = vmatprep.subr.mxu0 0.0
        %2314 = vmatpush1.msra.mxu0 0.0
        %2315 = vmatprep.subr.mxu0 0.0
        %2316 = vmatpush1.msra.mxu0 0.0
        %2317 = vmatprep.subr.mxu0 0.0
        %2318 = vmatpush1.msra.mxu0 0.0
        %2319 = vmatprep.subr.mxu0 0.0
        %2320 = vmatpush1.msra.mxu0 0.0
        %2321 = vmatprep.subr.mxu0 0.0
        %2322 = vmatpush1.msra.mxu0 0.0
        %2323 = vmatprep.subr.mxu0 0.0
        %2324 = vmatpush1.msra.mxu0 0.0
        %2325 = vmatprep.subr.mxu0 0.0
        %2326 = vmatpush1.msra.mxu0 0.0
        %2327 = vmatprep.subr.mxu0 0.0
        %2328 = vmatpush1.msra.mxu0 0.0
        %2329 = vmatprep.subr.mxu0 0.0
        %2330 = vmatpush1.msra.mxu0 0.0
        %2331 = vmatprep.subr.mxu0 0.0
        %2332 = vmatpush1.msra.mxu0 0.0
        %2333 = vmatprep.subr.mxu0 0.0
        %2334 = vmatpush1.msra.mxu0 0.0
        %2335 = vmatprep.subr.mxu0 0.0
        %2336 = vmatpush1.msra.mxu0 0.0
        %2337 = vmatprep.subr.mxu0 0.0
        %2338 = vmatpush1.msra.mxu0 0.0
        %2339 = vmatprep.subr.mxu0 0.0
        %2340 = vmatpush1.msra.mxu0 0.0
        %2341 = vmatprep.subr.mxu0 0.0
        %2342 = vmatpush1.msra.mxu0 0.0
        %2343 = vmatprep.subr.mxu0 0.0
        %2344 = vmatpush1.msra.mxu0 0.0
        %2345 = vmatprep.subr.mxu0 0.0
        %2346 = vmatpush1.msra.mxu0 0.0
        %2347 = vmatprep.subr.mxu0 0.0
        %2348 = vmatpush1.msra.mxu0 0.0
        %2349 = vmatprep.subr.mxu0 0.0
        %2350 = vmatpush1.msra.mxu0 0.0
        %2351 = vmatprep.subr.mxu0 0.0
        %2352 = vmatpush1.msra.mxu0 0.0
        %2353 = vmatprep.subr.mxu0 0.0
        %2354 = vmatpush1.msra.mxu0 0.0
        %2355 = vmatprep.subr.mxu0 0.0
        %2356 = vmatpush1.msra.mxu0 0.0
        %2357 = vmatprep.subr.mxu0 0.0
        %2358 = vmatpush1.msra.mxu0 0.0
        %2359 = vmatprep.subr.mxu0 0.0
        %2360 = vmatpush1.msra.mxu0 0.0
        %2361 = vmatprep.subr.mxu0 0.0
        %2362 = vmatpush1.msra.mxu0 0.0
        %2363 = vmatprep.mubr.f32.mxu0 0.0
        %2364 = vmatmul.mubr.f32.gmra.mrb[0].mxu0 %v2201
        %v2365 = vpop.f32.mrb[0].mxu0
        %v2366 = vadd.f32 0.0, %v2365
        %v2367 = vpop.f32.mrb[0].mxu0
        %2368 = vmatprep.mubr.f32.mxu0 0.0
        %2369 = vmatmul.mubr.f32.gmra.mrb[0].mxu0 %v2204
        %v2370 = vpop.f32.mrb[0].mxu0
        %v2371 = vadd.f32 0.0, %v2370
        %v2372 = vpop.f32.mrb[0].mxu0
        %2373 = vmatprep.mubr.f32.mxu0 0.0
        %2374 = vmatmul.mubr.f32.gmra.mrb[0].mxu0 %v2207
        %v2375 = vpop.f32.mrb[0].mxu0
        %v2376 = vadd.f32 0.0, %v2375
        %v2377 = vpop.f32.mrb[0].mxu0
        %2378 = vmatprep.mubr.f32.mxu0 0.0
        %2379 = vmatmul.mubr.f32.gmra.mrb[0].mxu0 %v2210
        %v2380 = vpop.f32.mrb[0].mxu0
        %v2381 = vadd.f32 0.0, %v2380
        %v2382 = vpop.f32.mrb[0].mxu0
        %2383 = vmatprep.mubr.f32.mxu0 0.0
        %2384 = vmatmul.mubr.f32.gmra.mrb[0].mxu0 %v2213
        %v2385 = vpop.f32.mrb[0].mxu0
        %v2386 = vadd.f32 0.0, %v2385
        %v2387 = vpop.f32.mrb[0].mxu0
        %2388 = vmatprep.mubr.f32.mxu0 0.0
        %2389 = vmatmul.mubr.f32.gmra.mrb[0].mxu0 %v2216
        %v2390 = vpop.f32.mrb[0].mxu0
        %v2391 = vadd.f32 0.0, %v2390
        %v2392 = vpop.f32.mrb[0].mxu0
        %2393 = vmatprep.mubr.f32.mxu0 0.0
        %2394 = vmatmul.mubr.f32.gmra.mrb[0].mxu0 %v2219
        %v2395 = vpop.f32.mrb[0].mxu0
        %v2396 = vadd.f32 0.0, %v2395
        %v2397 = vpop.f32.mrb[0].mxu0
        %2398 = vmatprep.mubr.f32.mxu0 0.0
        %2399 = vmatmul.mubr.f32.gmra.mrb[0].mxu0 %v2222
        %v2400 = vpop.f32.mrb[0].mxu0
        %v2401 = vadd.f32 0.0, %v2400
        %v2402 = vpop.f32.mrb[0].mxu0
        %2403 = vmatprep.mubr.f32.mxu0 0.0
        %2404 = vmatmul.mubr.f32.gmra.mrb[0].mxu0 %v2225
        %v2405 = vpop.f32.mrb[0].mxu0
        %v2406 = vadd.f32 0.0, %v2405
        %v2407 = vpop.f32.mrb[0].mxu0
        %2408 = vmatprep.mubr.f32.mxu0 0.0
        %2409 = vmatmul.mubr.f32.gmra.mrb[0].mxu0 %v2228
        %v2410 = vpop.f32.mrb[0].mxu0
        %v2411 = vadd.f32 0.0, %v2410
        %v2412 = vpop.f32.mrb[0].mxu0
        %2413 = vmatprep.mubr.f32.mxu0 0.0
        %2414 = vmatmul.mubr.f32.gmra.mrb[0].mxu0 %v2231
        %v2415 = vpop.f32.mrb[0].mxu0
        %v2416 = vadd.f32 0.0, %v2415
        %v2417 = vpop.f32.mrb[0].mxu0
        %2418 = vmatprep.mubr.f32.mxu0 0.0
        %2419 = vmatmul.mubr.f32.gmra.mrb[0].mxu0 %v2234
        %v2420 = vpop.f32.mrb[0].mxu0
        %v2421 = vadd.f32 0.0, %v2420
        %v2422 = vpop.f32.mrb[0].mxu0
        %2423 = vmatprep.mubr.f32.mxu0 0.0
        %2424 = vmatmul.mubr.f32.gmra.mrb[0].mxu0 %v2237
        %v2425 = vpop.f32.mrb[0].mxu0
        %v2426 = vadd.f32 0.0, %v2425
        %v2427 = vpop.f32.mrb[0].mxu0
        %2428 = vmatprep.mubr.f32.mxu0 0.0
        %2429 = vmatmul.mubr.f32.gmra.mrb[0].mxu0 %v2240
        %v2430 = vpop.f32.mrb[0].mxu0
        %v2431 = vadd.f32 0.0, %v2430
        %v2432 = vpop.f32.mrb[0].mxu0
        %2433 = vmatprep.mubr.f32.mxu0 0.0
        %2434 = vmatmul.mubr.f32.gmra.mrb[0].mxu0 %v2243
        %v2435 = vpop.f32.mrb[0].mxu0
        %v2436 = vadd.f32 0.0, %v2435
        %v2437 = vpop.f32.mrb[0].mxu0
        %2438 = vmatprep.mubr.f32.mxu0 0.0
        %2439 = vmatmul.mubr.f32.gmra.mrb[0].mxu0 %v2246
        %v2440 = vpop.f32.mrb[0].mxu0
        %v2441 = vadd.f32 0.0, %v2440
        %v2442 = vpop.f32.mrb[0].mxu0
        %2443 = vmatprep.mubr.f32.mxu0 0.0
        %2444 = vmatmul.mubr.f32.gmra.mrb[0].mxu0 %v2249
        %v2445 = vpop.f32.mrb[0].mxu0
        %v2446 = vadd.f32 0.0, %v2445
        %v2447 = vpop.f32.mrb[0].mxu0
        %2448 = vmatprep.mubr.f32.mxu0 0.0
        %2449 = vmatmul.mubr.f32.gmra.mrb[0].mxu0 %v2252
        %v2450 = vpop.f32.mrb[0].mxu0
        %v2451 = vadd.f32 0.0, %v2450
        %v2452 = vpop.f32.mrb[0].mxu0
        %2453 = vmatprep.mubr.f32.mxu0 0.0
        %2454 = vmatmul.mubr.f32.gmra.mrb[0].mxu0 %v2255
        %v2455 = vpop.f32.mrb[0].mxu0
        %v2456 = vadd.f32 0.0, %v2455
        %v2457 = vpop.f32.mrb[0].mxu0
        %2458 = vmatprep.mubr.f32.mxu0 0.0
        %2459 = vmatmul.mubr.f32.gmra.mrb[0].mxu0 %v2258
        %v2460 = vpop.f32.mrb[0].mxu0
        %v2461 = vadd.f32 0.0, %v2460
        %v2462 = vpop.f32.mrb[0].mxu0
        %2463 = vmatprep.mubr.f32.mxu0 0.0
        %2464 = vmatmul.mubr.f32.gmra.mrb[0].mxu0 %v2261
        %v2465 = vpop.f32.mrb[0].mxu0
        %v2466 = vadd.f32 0.0, %v2465
        %v2467 = vpop.f32.mrb[0].mxu0
        %2468 = vmatprep.mubr.f32.mxu0 0.0
        %2469 = vmatmul.mubr.f32.gmra.mrb[0].mxu0 %v2264
        %v2470 = vpop.f32.mrb[0].mxu0
        %v2471 = vadd.f32 0.0, %v2470
        %v2472 = vpop.f32.mrb[0].mxu0
        %2473 = vmatprep.mubr.f32.mxu0 0.0
        %2474 = vmatmul.mubr.f32.gmra.mrb[0].mxu0 %v2267
        %v2475 = vpop.f32.mrb[0].mxu0
        %v2476 = vadd.f32 0.0, %v2475
        %v2477 = vpop.f32.mrb[0].mxu0
        %2478 = vmatprep.mubr.f32.mxu0 0.0
        %2479 = vmatmul.mubr.f32.gmra.mrb[0].mxu0 %v2270
        %v2480 = vpop.f32.mrb[0].mxu0
        %v2481 = vadd.f32 0.0, %v2480
        %v2482 = vpop.f32.mrb[0].mxu0
        %2483 = vmatprep.mubr.f32.mxu0 0.0
        %2484 = vmatmul.mubr.f32.gmra.mrb[0].mxu0 %v2273
        %v2485 = vpop.f32.mrb[0].mxu0
        %v2486 = vadd.f32 0.0, %v2485
        %v2487 = vpop.f32.mrb[0].mxu0
        %2488 = vmatprep.mubr.f32.mxu0 0.0
        %2489 = vmatmul.mubr.f32.gmra.mrb[0].mxu0 %v2276
        %v2490 = vpop.f32.mrb[0].mxu0
        %v2491 = vadd.f32 0.0, %v2490
        %v2492 = vpop.f32.mrb[0].mxu0
        %2493 = vmatprep.mubr.f32.mxu0 0.0
        %2494 = vmatmul.mubr.f32.gmra.mrb[0].mxu0 %v2279
        %v2495 = vpop.f32.mrb[0].mxu0
        %v2496 = vadd.f32 0.0, %v2495
        %v2497 = vpop.f32.mrb[0].mxu0
        %2498 = vmatprep.mubr.f32.mxu0 0.0
        %2499 = vmatmul.mubr.f32.gmra.mrb[0].mxu0 %v2282
        %v2500 = vpop.f32.mrb[0].mxu0
        %v2501 = vadd.f32 0.0, %v2500
        %v2502 = vpop.f32.mrb[0].mxu0
        %2503 = vmatprep.mubr.f32.mxu0 0.0
        %2504 = vmatmul.mubr.f32.gmra.mrb[0].mxu0 %v2285
        %v2505 = vpop.f32.mrb[0].mxu0
        %v2506 = vadd.f32 0.0, %v2505
        %v2507 = vpop.f32.mrb[0].mxu0
        %2508 = vmatprep.mubr.f32.mxu0 0.0
        %2509 = vmatmul.mubr.f32.gmra.mrb[0].mxu0 %v2288
        %v2510 = vpop.f32.mrb[0].mxu0
        %v2511 = vadd.f32 0.0, %v2510
        %v2512 = vpop.f32.mrb[0].mxu0
        %2513 = vmatprep.mubr.f32.mxu0 0.0
        %2514 = vmatmul.mubr.f32.gmra.mrb[0].mxu0 %v2291
        %v2515 = vpop.f32.mrb[0].mxu0
        %v2516 = vadd.f32 0.0, %v2515
        %v2517 = vpop.f32.mrb[0].mxu0
        %2518 = vmatprep.mubr.f32.mxu0 0.0
        %2519 = vmatmul.mubr.f32.gmra.mrb[0].mxu0 %v2294
        %v2520 = vpop.f32.mrb[0].mxu0
        %v2521 = vadd.f32 0.0, %v2520
        %v2522 = vpop.f32.mrb[0].mxu0
        %2523 = vdwg.mxu0
        %v2524 = vadd.f32 %v2136, %v2366
        %v2525 = vadd.f32 %v2137, %v2371
        %v2526 = vadd.f32 %v2138, %v2376
        %v2527 = vadd.f32 %v2139, %v2381
        %v2528 = vadd.f32 %v2140, %v2386
        %v2529 = vadd.f32 %v2141, %v2391
        %v2530 = vadd.f32 %v2142, %v2396
        %v2531 = vadd.f32 %v2143, %v2401
        %v2532 = vadd.f32 %v2144, %v2406
        %v2533 = vadd.f32 %v2145, %v2411
        %v2534 = vadd.f32 %v2146, %v2416
        %v2535 = vadd.f32 %v2147, %v2421
        %v2536 = vadd.f32 %v2148, %v2426
        %v2537 = vadd.f32 %v2149, %v2431
        %v2538 = vadd.f32 %v2150, %v2436
        %v2539 = vadd.f32 %v2151, %v2441
        %v2540 = vadd.f32 %v2152, %v2446
        %v2541 = vadd.f32 %v2153, %v2451
        %v2542 = vadd.f32 %v2154, %v2456
        %v2543 = vadd.f32 %v2155, %v2461
        %v2544 = vadd.f32 %v2156, %v2466
        %v2545 = vadd.f32 %v2157, %v2471
        %v2546 = vadd.f32 %v2158, %v2476
        %v2547 = vadd.f32 %v2159, %v2481
        %v2548 = vadd.f32 %v2160, %v2486
        %v2549 = vadd.f32 %v2161, %v2491
        %v2550 = vadd.f32 %v2162, %v2496
        %v2551 = vadd.f32 %v2163, %v2501
        %v2552 = vadd.f32 %v2164, %v2506
        %v2553 = vadd.f32 %v2165, %v2511
        %v2554 = vadd.f32 %v2166, %v2516
        %v2555 = vadd.f32 %v2167, %v2521
        %s2556 = scalar_lea.vmem %s222, 48
        %v2557 = vld [vmem:[%s2556] sm:$0xff]
        %v2558 = vld [vmem:[%s2556 + $0x8] sm:$0xff]
        %v2559 = vld [vmem:[%s2556 + $0x18] sm:$0xff]
        %v2560 = vld [vmem:[%s2556 + $0x20] sm:$0xff]
        %v2561 = vld [vmem:[%s2556 + $0x30] sm:$0xff]
        %v2562 = vld [vmem:[%s2556 + $0x38] sm:$0xff]
        %v2563 = vld [vmem:[%s2556 + $0x48] sm:$0xff]
        %v2564 = vld [vmem:[%s2556 + $0x50] sm:$0xff]
        %v2565 = vld [vmem:[%s2556 + $0x60] sm:$0xff]
        %v2566 = vld [vmem:[%s2556 + $0x68] sm:$0xff]
        %v2567 = vld [vmem:[%s2556 + $0x78] sm:$0xff]
        %v2568 = vld [vmem:[%s2556 + $0x80] sm:$0xff]
        %v2569 = vld [vmem:[%s2556 + $0x90] sm:$0xff]
        %v2570 = vld [vmem:[%s2556 + $0x98] sm:$0xff]
        %v2571 = vld [vmem:[%s2556 + $0xa8] sm:$0xff]
        %v2572 = vld [vmem:[%s2556 + $0xb0] sm:$0xff]
        %v2573 = vld [vmem:[%s2556 + $0xc0] sm:$0xff]
        %v2574 = vld [vmem:[%s2556 + $0xc8] sm:$0xff]
        %v2575 = vld [vmem:[%s2556 + $0xd8] sm:$0xff]
        %v2576 = vld [vmem:[%s2556 + $0xe0] sm:$0xff]
        %v2577 = vld [vmem:[%s2556 + $0xf0] sm:$0xff]
        %v2578 = vld [vmem:[%s2556 + $0xf8] sm:$0xff]
        %v2579 = vld [vmem:[%s2556 + $0x108] sm:$0xff]
        %v2580 = vld [vmem:[%s2556 + $0x110] sm:$0xff]
        %v2581 = vld [vmem:[%s2556 + $0x120] sm:$0xff]
        %v2582 = vld [vmem:[%s2556 + $0x128] sm:$0xff]
        %v2583 = vld [vmem:[%s2556 + $0x138] sm:$0xff]
        %v2584 = vld [vmem:[%s2556 + $0x140] sm:$0xff]
        %v2585 = vld [vmem:[%s2556 + $0x150] sm:$0xff]
        %v2586 = vld [vmem:[%s2556 + $0x158] sm:$0xff]
        %v2587 = vld [vmem:[%s2556 + $0x168] sm:$0xff]
        %v2588 = vld [vmem:[%s2556 + $0x170] sm:$0xff]
        %v2590 = vsel %vm353, %v2557, 0
        %v2593 = vsel %vm353, %v2558, 0
        %v2596 = vsel %vm353, %v2559, 0
        %v2599 = vsel %vm353, %v2560, 0
        %v2602 = vsel %vm353, %v2561, 0
        %v2605 = vsel %vm353, %v2562, 0
        %v2608 = vsel %vm353, %v2563, 0
        %v2611 = vsel %vm353, %v2564, 0
        %v2614 = vsel %vm353, %v2565, 0
        %v2617 = vsel %vm353, %v2566, 0
        %v2620 = vsel %vm353, %v2567, 0
        %v2623 = vsel %vm353, %v2568, 0
        %v2626 = vsel %vm353, %v2569, 0
        %v2629 = vsel %vm353, %v2570, 0
        %v2632 = vsel %vm353, %v2571, 0
        %v2635 = vsel %vm353, %v2572, 0
        %v2638 = vsel %vm353, %v2573, 0
        %v2641 = vsel %vm353, %v2574, 0
        %v2644 = vsel %vm353, %v2575, 0
        %v2647 = vsel %vm353, %v2576, 0
        %v2650 = vsel %vm353, %v2577, 0
        %v2653 = vsel %vm353, %v2578, 0
        %v2656 = vsel %vm353, %v2579, 0
        %v2659 = vsel %vm353, %v2580, 0
        %v2662 = vsel %vm353, %v2581, 0
        %v2665 = vsel %vm353, %v2582, 0
        %v2668 = vsel %vm353, %v2583, 0
        %v2671 = vsel %vm353, %v2584, 0
        %v2674 = vsel %vm353, %v2585, 0
        %v2677 = vsel %vm353, %v2586, 0
        %v2680 = vsel %vm353, %v2587, 0
        %v2683 = vsel %vm353, %v2588, 0
        %v2686 = vsel %vm450, %v229, 0
        %2688 = vmatprep.subr.mxu0 0.0
        %2689 = vmatpush1.msra.mxu0 %v2686
        %2690 = vmatprep.subr.mxu0 0.0
        %2691 = vmatpush1.msra.mxu0 0.0
        %2692 = vmatprep.subr.mxu0 0.0
        %2693 = vmatpush1.msra.mxu0 0.0
        %2694 = vmatprep.subr.mxu0 0.0
        %2695 = vmatpush1.msra.mxu0 0.0
        %2696 = vmatprep.subr.mxu0 0.0
        %2697 = vmatpush1.msra.mxu0 0.0
        %2698 = vmatprep.subr.mxu0 0.0
        %2699 = vmatpush1.msra.mxu0 0.0
        %2700 = vmatprep.subr.mxu0 0.0
        %2701 = vmatpush1.msra.mxu0 0.0
        %2702 = vmatprep.subr.mxu0 0.0
        %2703 = vmatpush1.msra.mxu0 0.0
        %2704 = vmatprep.subr.mxu0 0.0
        %2705 = vmatpush1.msra.mxu0 0.0
        %2706 = vmatprep.subr.mxu0 0.0
        %2707 = vmatpush1.msra.mxu0 0.0
        %2708 = vmatprep.subr.mxu0 0.0
        %2709 = vmatpush1.msra.mxu0 0.0
        %2710 = vmatprep.subr.mxu0 0.0
        %2711 = vmatpush1.msra.mxu0 0.0
        %2712 = vmatprep.subr.mxu0 0.0
        %2713 = vmatpush1.msra.mxu0 0.0
        %2714 = vmatprep.subr.mxu0 0.0
        %2715 = vmatpush1.msra.mxu0 0.0
        %2716 = vmatprep.subr.mxu0 0.0
        %2717 = vmatpush1.msra.mxu0 0.0
        %2718 = vmatprep.subr.mxu0 0.0
        %2719 = vmatpush1.msra.mxu0 0.0
        %2720 = vmatprep.subr.mxu0 0.0
        %2721 = vmatpush1.msra.mxu0 0.0
        %2722 = vmatprep.subr.mxu0 0.0
        %2723 = vmatpush1.msra.mxu0 0.0
        %2724 = vmatprep.subr.mxu0 0.0
        %2725 = vmatpush1.msra.mxu0 0.0
        %2726 = vmatprep.subr.mxu0 0.0
        %2727 = vmatpush1.msra.mxu0 0.0
        %2728 = vmatprep.subr.mxu0 0.0
        %2729 = vmatpush1.msra.mxu0 0.0
        %2730 = vmatprep.subr.mxu0 0.0
        %2731 = vmatpush1.msra.mxu0 0.0
        %2732 = vmatprep.subr.mxu0 0.0
        %2733 = vmatpush1.msra.mxu0 0.0
        %2734 = vmatprep.subr.mxu0 0.0
        %2735 = vmatpush1.msra.mxu0 0.0
        %2736 = vmatprep.subr.mxu0 0.0
        %2737 = vmatpush1.msra.mxu0 0.0
        %2738 = vmatprep.subr.mxu0 0.0
        %2739 = vmatpush1.msra.mxu0 0.0
        %2740 = vmatprep.subr.mxu0 0.0
        %2741 = vmatpush1.msra.mxu0 0.0
        %2742 = vmatprep.subr.mxu0 0.0
        %2743 = vmatpush1.msra.mxu0 0.0
        %2744 = vmatprep.subr.mxu0 0.0
        %2745 = vmatpush1.msra.mxu0 0.0
        %2746 = vmatprep.subr.mxu0 0.0
        %2747 = vmatpush1.msra.mxu0 0.0
        %2748 = vmatprep.subr.mxu0 0.0
        %2749 = vmatpush1.msra.mxu0 0.0
        %2750 = vmatprep.subr.mxu0 0.0
        %2751 = vmatpush1.msra.mxu0 0.0
        %2752 = vmatprep.mubr.f32.mxu0 0.0
        %2753 = vmatmul.mubr.f32.gmra.mrb[0].mxu0 %v2590
        %v2754 = vpop.f32.mrb[0].mxu0
        %v2755 = vadd.f32 0.0, %v2754
        %v2756 = vpop.f32.mrb[0].mxu0
        %2757 = vmatprep.mubr.f32.mxu0 0.0
        %2758 = vmatmul.mubr.f32.gmra.mrb[0].mxu0 %v2593
        %v2759 = vpop.f32.mrb[0].mxu0
        %v2760 = vadd.f32 0.0, %v2759
        %v2761 = vpop.f32.mrb[0].mxu0
        %2762 = vmatprep.mubr.f32.mxu0 0.0
        %2763 = vmatmul.mubr.f32.gmra.mrb[0].mxu0 %v2596
        %v2764 = vpop.f32.mrb[0].mxu0
        %v2765 = vadd.f32 0.0, %v2764
        %v2766 = vpop.f32.mrb[0].mxu0
        %2767 = vmatprep.mubr.f32.mxu0 0.0
        %2768 = vmatmul.mubr.f32.gmra.mrb[0].mxu0 %v2599
        %v2769 = vpop.f32.mrb[0].mxu0
        %v2770 = vadd.f32 0.0, %v2769
        %v2771 = vpop.f32.mrb[0].mxu0
        %2772 = vmatprep.mubr.f32.mxu0 0.0
        %2773 = vmatmul.mubr.f32.gmra.mrb[0].mxu0 %v2602
        %v2774 = vpop.f32.mrb[0].mxu0
        %v2775 = vadd.f32 0.0, %v2774
        %v2776 = vpop.f32.mrb[0].mxu0
        %2777 = vmatprep.mubr.f32.mxu0 0.0
        %2778 = vmatmul.mubr.f32.gmra.mrb[0].mxu0 %v2605
        %v2779 = vpop.f32.mrb[0].mxu0
        %v2780 = vadd.f32 0.0, %v2779
        %v2781 = vpop.f32.mrb[0].mxu0
        %2782 = vmatprep.mubr.f32.mxu0 0.0
        %2783 = vmatmul.mubr.f32.gmra.mrb[0].mxu0 %v2608
        %v2784 = vpop.f32.mrb[0].mxu0
        %v2785 = vadd.f32 0.0, %v2784
        %v2786 = vpop.f32.mrb[0].mxu0
        %2787 = vmatprep.mubr.f32.mxu0 0.0
        %2788 = vmatmul.mubr.f32.gmra.mrb[0].mxu0 %v2611
        %v2789 = vpop.f32.mrb[0].mxu0
        %v2790 = vadd.f32 0.0, %v2789
        %v2791 = vpop.f32.mrb[0].mxu0
        %2792 = vmatprep.mubr.f32.mxu0 0.0
        %2793 = vmatmul.mubr.f32.gmra.mrb[0].mxu0 %v2614
        %v2794 = vpop.f32.mrb[0].mxu0
        %v2795 = vadd.f32 0.0, %v2794
        %v2796 = vpop.f32.mrb[0].mxu0
        %2797 = vmatprep.mubr.f32.mxu0 0.0
        %2798 = vmatmul.mubr.f32.gmra.mrb[0].mxu0 %v2617
        %v2799 = vpop.f32.mrb[0].mxu0
        %v2800 = vadd.f32 0.0, %v2799
        %v2801 = vpop.f32.mrb[0].mxu0
        %2802 = vmatprep.mubr.f32.mxu0 0.0
        %2803 = vmatmul.mubr.f32.gmra.mrb[0].mxu0 %v2620
        %v2804 = vpop.f32.mrb[0].mxu0
        %v2805 = vadd.f32 0.0, %v2804
        %v2806 = vpop.f32.mrb[0].mxu0
        %2807 = vmatprep.mubr.f32.mxu0 0.0
        %2808 = vmatmul.mubr.f32.gmra.mrb[0].mxu0 %v2623
        %v2809 = vpop.f32.mrb[0].mxu0
        %v2810 = vadd.f32 0.0, %v2809
        %v2811 = vpop.f32.mrb[0].mxu0
        %2812 = vmatprep.mubr.f32.mxu0 0.0
        %2813 = vmatmul.mubr.f32.gmra.mrb[0].mxu0 %v2626
        %v2814 = vpop.f32.mrb[0].mxu0
        %v2815 = vadd.f32 0.0, %v2814
        %v2816 = vpop.f32.mrb[0].mxu0
        %2817 = vmatprep.mubr.f32.mxu0 0.0
        %2818 = vmatmul.mubr.f32.gmra.mrb[0].mxu0 %v2629
        %v2819 = vpop.f32.mrb[0].mxu0
        %v2820 = vadd.f32 0.0, %v2819
        %v2821 = vpop.f32.mrb[0].mxu0
        %2822 = vmatprep.mubr.f32.mxu0 0.0
        %2823 = vmatmul.mubr.f32.gmra.mrb[0].mxu0 %v2632
        %v2824 = vpop.f32.mrb[0].mxu0
        %v2825 = vadd.f32 0.0, %v2824
        %v2826 = vpop.f32.mrb[0].mxu0
        %2827 = vmatprep.mubr.f32.mxu0 0.0
        %2828 = vmatmul.mubr.f32.gmra.mrb[0].mxu0 %v2635
        %v2829 = vpop.f32.mrb[0].mxu0
        %v2830 = vadd.f32 0.0, %v2829
        %v2831 = vpop.f32.mrb[0].mxu0
        %2832 = vmatprep.mubr.f32.mxu0 0.0
        %2833 = vmatmul.mubr.f32.gmra.mrb[0].mxu0 %v2638
        %v2834 = vpop.f32.mrb[0].mxu0
        %v2835 = vadd.f32 0.0, %v2834
        %v2836 = vpop.f32.mrb[0].mxu0
        %2837 = vmatprep.mubr.f32.mxu0 0.0
        %2838 = vmatmul.mubr.f32.gmra.mrb[0].mxu0 %v2641
        %v2839 = vpop.f32.mrb[0].mxu0
        %v2840 = vadd.f32 0.0, %v2839
        %v2841 = vpop.f32.mrb[0].mxu0
        %2842 = vmatprep.mubr.f32.mxu0 0.0
        %2843 = vmatmul.mubr.f32.gmra.mrb[0].mxu0 %v2644
        %v2844 = vpop.f32.mrb[0].mxu0
        %v2845 = vadd.f32 0.0, %v2844
        %v2846 = vpop.f32.mrb[0].mxu0
        %2847 = vmatprep.mubr.f32.mxu0 0.0
        %2848 = vmatmul.mubr.f32.gmra.mrb[0].mxu0 %v2647
        %v2849 = vpop.f32.mrb[0].mxu0
        %v2850 = vadd.f32 0.0, %v2849
        %v2851 = vpop.f32.mrb[0].mxu0
        %2852 = vmatprep.mubr.f32.mxu0 0.0
        %2853 = vmatmul.mubr.f32.gmra.mrb[0].mxu0 %v2650
        %v2854 = vpop.f32.mrb[0].mxu0
        %v2855 = vadd.f32 0.0, %v2854
        %v2856 = vpop.f32.mrb[0].mxu0
        %2857 = vmatprep.mubr.f32.mxu0 0.0
        %2858 = vmatmul.mubr.f32.gmra.mrb[0].mxu0 %v2653
        %v2859 = vpop.f32.mrb[0].mxu0
        %v2860 = vadd.f32 0.0, %v2859
        %v2861 = vpop.f32.mrb[0].mxu0
        %2862 = vmatprep.mubr.f32.mxu0 0.0
        %2863 = vmatmul.mubr.f32.gmra.mrb[0].mxu0 %v2656
        %v2864 = vpop.f32.mrb[0].mxu0
        %v2865 = vadd.f32 0.0, %v2864
        %v2866 = vpop.f32.mrb[0].mxu0
        %2867 = vmatprep.mubr.f32.mxu0 0.0
        %2868 = vmatmul.mubr.f32.gmra.mrb[0].mxu0 %v2659
        %v2869 = vpop.f32.mrb[0].mxu0
        %v2870 = vadd.f32 0.0, %v2869
        %v2871 = vpop.f32.mrb[0].mxu0
        %2872 = vmatprep.mubr.f32.mxu0 0.0
        %2873 = vmatmul.mubr.f32.gmra.mrb[0].mxu0 %v2662
        %v2874 = vpop.f32.mrb[0].mxu0
        %v2875 = vadd.f32 0.0, %v2874
        %v2876 = vpop.f32.mrb[0].mxu0
        %2877 = vmatprep.mubr.f32.mxu0 0.0
        %2878 = vmatmul.mubr.f32.gmra.mrb[0].mxu0 %v2665
        %v2879 = vpop.f32.mrb[0].mxu0
        %v2880 = vadd.f32 0.0, %v2879
        %v2881 = vpop.f32.mrb[0].mxu0
        %2882 = vmatprep.mubr.f32.mxu0 0.0
        %2883 = vmatmul.mubr.f32.gmra.mrb[0].mxu0 %v2668
        %v2884 = vpop.f32.mrb[0].mxu0
        %v2885 = vadd.f32 0.0, %v2884
        %v2886 = vpop.f32.mrb[0].mxu0
        %2887 = vmatprep.mubr.f32.mxu0 0.0
        %2888 = vmatmul.mubr.f32.gmra.mrb[0].mxu0 %v2671
        %v2889 = vpop.f32.mrb[0].mxu0
        %v2890 = vadd.f32 0.0, %v2889
        %v2891 = vpop.f32.mrb[0].mxu0
        %2892 = vmatprep.mubr.f32.mxu0 0.0
        %2893 = vmatmul.mubr.f32.gmra.mrb[0].mxu0 %v2674
        %v2894 = vpop.f32.mrb[0].mxu0
        %v2895 = vadd.f32 0.0, %v2894
        %v2896 = vpop.f32.mrb[0].mxu0
        %2897 = vmatprep.mubr.f32.mxu0 0.0
        %2898 = vmatmul.mubr.f32.gmra.mrb[0].mxu0 %v2677
        %v2899 = vpop.f32.mrb[0].mxu0
        %v2900 = vadd.f32 0.0, %v2899
        %v2901 = vpop.f32.mrb[0].mxu0
        %2902 = vmatprep.mubr.f32.mxu0 0.0
        %2903 = vmatmul.mubr.f32.gmra.mrb[0].mxu0 %v2680
        %v2904 = vpop.f32.mrb[0].mxu0
        %v2905 = vadd.f32 0.0, %v2904
        %v2906 = vpop.f32.mrb[0].mxu0
        %2907 = vmatprep.mubr.f32.mxu0 0.0
        %2908 = vmatmul.mubr.f32.gmra.mrb[0].mxu0 %v2683
        %v2909 = vpop.f32.mrb[0].mxu0
        %v2910 = vadd.f32 0.0, %v2909
        %v2911 = vpop.f32.mrb[0].mxu0
        %2912 = vdwg.mxu0
        %v2913 = vadd.f32 %v2524, %v2755
        %v2914 = vadd.f32 %v2525, %v2760
        %v2915 = vadd.f32 %v2526, %v2765
        %v2916 = vadd.f32 %v2527, %v2770
        %v2917 = vadd.f32 %v2528, %v2775
        %v2918 = vadd.f32 %v2529, %v2780
        %v2919 = vadd.f32 %v2530, %v2785
        %v2920 = vadd.f32 %v2531, %v2790
        %v2921 = vadd.f32 %v2532, %v2795
        %v2922 = vadd.f32 %v2533, %v2800
        %v2923 = vadd.f32 %v2534, %v2805
        %v2924 = vadd.f32 %v2535, %v2810
        %v2925 = vadd.f32 %v2536, %v2815
        %v2926 = vadd.f32 %v2537, %v2820
        %v2927 = vadd.f32 %v2538, %v2825
        %v2928 = vadd.f32 %v2539, %v2830
        %v2929 = vadd.f32 %v2540, %v2835
        %v2930 = vadd.f32 %v2541, %v2840
        %v2931 = vadd.f32 %v2542, %v2845
        %v2932 = vadd.f32 %v2543, %v2850
        %v2933 = vadd.f32 %v2544, %v2855
        %v2934 = vadd.f32 %v2545, %v2860
        %v2935 = vadd.f32 %v2546, %v2865
        %v2936 = vadd.f32 %v2547, %v2870
        %v2937 = vadd.f32 %v2548, %v2875
        %v2938 = vadd.f32 %v2549, %v2880
        %v2939 = vadd.f32 %v2550, %v2885
        %v2940 = vadd.f32 %v2551, %v2890
        %v2941 = vadd.f32 %v2552, %v2895
        %v2942 = vadd.f32 %v2553, %v2900
        %v2943 = vadd.f32 %v2554, %v2905
        %v2944 = vadd.f32 %v2555, %v2910
        %v2945 = vld [vmem:[%s2556 + $0x1] sm:$0xff]
        %v2946 = vld [vmem:[%s2556 + $0x9] sm:$0xff]
        %v2947 = vld [vmem:[%s2556 + $0x19] sm:$0xff]
        %v2948 = vld [vmem:[%s2556 + $0x21] sm:$0xff]
        %v2949 = vld [vmem:[%s2556 + $0x31] sm:$0xff]
        %v2950 = vld [vmem:[%s2556 + $0x39] sm:$0xff]
        %v2951 = vld [vmem:[%s2556 + $0x49] sm:$0xff]
        %v2952 = vld [vmem:[%s2556 + $0x51] sm:$0xff]
        %v2953 = vld [vmem:[%s2556 + $0x61] sm:$0xff]
        %v2954 = vld [vmem:[%s2556 + $0x69] sm:$0xff]
        %v2955 = vld [vmem:[%s2556 + $0x79] sm:$0xff]
        %v2956 = vld [vmem:[%s2556 + $0x81] sm:$0xff]
        %v2957 = vld [vmem:[%s2556 + $0x91] sm:$0xff]
        %v2958 = vld [vmem:[%s2556 + $0x99] sm:$0xff]
        %v2959 = vld [vmem:[%s2556 + $0xa9] sm:$0xff]
        %v2960 = vld [vmem:[%s2556 + $0xb1] sm:$0xff]
        %v2961 = vld [vmem:[%s2556 + $0xc1] sm:$0xff]
        %v2962 = vld [vmem:[%s2556 + $0xc9] sm:$0xff]
        %v2963 = vld [vmem:[%s2556 + $0xd9] sm:$0xff]
        %v2964 = vld [vmem:[%s2556 + $0xe1] sm:$0xff]
        %v2965 = vld [vmem:[%s2556 + $0xf1] sm:$0xff]
        %v2966 = vld [vmem:[%s2556 + $0xf9] sm:$0xff]
        %v2967 = vld [vmem:[%s2556 + $0x109] sm:$0xff]
        %v2968 = vld [vmem:[%s2556 + $0x111] sm:$0xff]
        %v2969 = vld [vmem:[%s2556 + $0x121] sm:$0xff]
        %v2970 = vld [vmem:[%s2556 + $0x129] sm:$0xff]
        %v2971 = vld [vmem:[%s2556 + $0x139] sm:$0xff]
        %v2972 = vld [vmem:[%s2556 + $0x141] sm:$0xff]
        %v2973 = vld [vmem:[%s2556 + $0x151] sm:$0xff]
        %v2974 = vld [vmem:[%s2556 + $0x159] sm:$0xff]
        %v2975 = vld [vmem:[%s2556 + $0x169] sm:$0xff]
        %v2976 = vld [vmem:[%s2556 + $0x171] sm:$0xff]
        %v2978 = vsel %vm353, %v2945, 0
        %v2981 = vsel %vm353, %v2946, 0
        %v2984 = vsel %vm353, %v2947, 0
        %v2987 = vsel %vm353, %v2948, 0
        %v2990 = vsel %vm353, %v2949, 0
        %v2993 = vsel %vm353, %v2950, 0
        %v2996 = vsel %vm353, %v2951, 0
        %v2999 = vsel %vm353, %v2952, 0
        %v3002 = vsel %vm353, %v2953, 0
        %v3005 = vsel %vm353, %v2954, 0
        %v3008 = vsel %vm353, %v2955, 0
        %v3011 = vsel %vm353, %v2956, 0
        %v3014 = vsel %vm353, %v2957, 0
        %v3017 = vsel %vm353, %v2958, 0
        %v3020 = vsel %vm353, %v2959, 0
        %v3023 = vsel %vm353, %v2960, 0
        %v3026 = vsel %vm353, %v2961, 0
        %v3029 = vsel %vm353, %v2962, 0
        %v3032 = vsel %vm353, %v2963, 0
        %v3035 = vsel %vm353, %v2964, 0
        %v3038 = vsel %vm353, %v2965, 0
        %v3041 = vsel %vm353, %v2966, 0
        %v3044 = vsel %vm353, %v2967, 0
        %v3047 = vsel %vm353, %v2968, 0
        %v3050 = vsel %vm353, %v2969, 0
        %v3053 = vsel %vm353, %v2970, 0
        %v3056 = vsel %vm353, %v2971, 0
        %v3059 = vsel %vm353, %v2972, 0
        %v3062 = vsel %vm353, %v2973, 0
        %v3065 = vsel %vm353, %v2974, 0
        %v3068 = vsel %vm353, %v2975, 0
        %v3071 = vsel %vm353, %v2976, 0
        %v3074 = vsel %vm450, %v230, 0
        %3076 = vmatprep.subr.mxu0 0.0
        %3077 = vmatpush1.msra.mxu0 %v3074
        %3078 = vmatprep.subr.mxu0 0.0
        %3079 = vmatpush1.msra.mxu0 0.0
        %3080 = vmatprep.subr.mxu0 0.0
        %3081 = vmatpush1.msra.mxu0 0.0
        %3082 = vmatprep.subr.mxu0 0.0
        %3083 = vmatpush1.msra.mxu0 0.0
        %3084 = vmatprep.subr.mxu0 0.0
        %3085 = vmatpush1.msra.mxu0 0.0
        %3086 = vmatprep.subr.mxu0 0.0
        %3087 = vmatpush1.msra.mxu0 0.0
        %3088 = vmatprep.subr.mxu0 0.0
        %3089 = vmatpush1.msra.mxu0 0.0
        %3090 = vmatprep.subr.mxu0 0.0
        %3091 = vmatpush1.msra.mxu0 0.0
        %3092 = vmatprep.subr.mxu0 0.0
        %3093 = vmatpush1.msra.mxu0 0.0
        %3094 = vmatprep.subr.mxu0 0.0
        %3095 = vmatpush1.msra.mxu0 0.0
        %3096 = vmatprep.subr.mxu0 0.0
        %3097 = vmatpush1.msra.mxu0 0.0
        %3098 = vmatprep.subr.mxu0 0.0
        %3099 = vmatpush1.msra.mxu0 0.0
        %3100 = vmatprep.subr.mxu0 0.0
        %3101 = vmatpush1.msra.mxu0 0.0
        %3102 = vmatprep.subr.mxu0 0.0
        %3103 = vmatpush1.msra.mxu0 0.0
        %3104 = vmatprep.subr.mxu0 0.0
        %3105 = vmatpush1.msra.mxu0 0.0
        %3106 = vmatprep.subr.mxu0 0.0
        %3107 = vmatpush1.msra.mxu0 0.0
        %3108 = vmatprep.subr.mxu0 0.0
        %3109 = vmatpush1.msra.mxu0 0.0
        %3110 = vmatprep.subr.mxu0 0.0
        %3111 = vmatpush1.msra.mxu0 0.0
        %3112 = vmatprep.subr.mxu0 0.0
        %3113 = vmatpush1.msra.mxu0 0.0
        %3114 = vmatprep.subr.mxu0 0.0
        %3115 = vmatpush1.msra.mxu0 0.0
        %3116 = vmatprep.subr.mxu0 0.0
        %3117 = vmatpush1.msra.mxu0 0.0
        %3118 = vmatprep.subr.mxu0 0.0
        %3119 = vmatpush1.msra.mxu0 0.0
        %3120 = vmatprep.subr.mxu0 0.0
        %3121 = vmatpush1.msra.mxu0 0.0
        %3122 = vmatprep.subr.mxu0 0.0
        %3123 = vmatpush1.msra.mxu0 0.0
        %3124 = vmatprep.subr.mxu0 0.0
        %3125 = vmatpush1.msra.mxu0 0.0
        %3126 = vmatprep.subr.mxu0 0.0
        %3127 = vmatpush1.msra.mxu0 0.0
        %3128 = vmatprep.subr.mxu0 0.0
        %3129 = vmatpush1.msra.mxu0 0.0
        %3130 = vmatprep.subr.mxu0 0.0
        %3131 = vmatpush1.msra.mxu0 0.0
        %3132 = vmatprep.subr.mxu0 0.0
        %3133 = vmatpush1.msra.mxu0 0.0
        %3134 = vmatprep.subr.mxu0 0.0
        %3135 = vmatpush1.msra.mxu0 0.0
        %3136 = vmatprep.subr.mxu0 0.0
        %3137 = vmatpush1.msra.mxu0 0.0
        %3138 = vmatprep.subr.mxu0 0.0
        %3139 = vmatpush1.msra.mxu0 0.0
        %3140 = vmatprep.mubr.f32.mxu0 0.0
        %3141 = vmatmul.mubr.f32.gmra.mrb[0].mxu0 %v2978
        %v3142 = vpop.f32.mrb[0].mxu0
        %v3143 = vadd.f32 0.0, %v3142
        %v3144 = vpop.f32.mrb[0].mxu0
        %3145 = vmatprep.mubr.f32.mxu0 0.0
        %3146 = vmatmul.mubr.f32.gmra.mrb[0].mxu0 %v2981
        %v3147 = vpop.f32.mrb[0].mxu0
        %v3148 = vadd.f32 0.0, %v3147
        %v3149 = vpop.f32.mrb[0].mxu0
        %3150 = vmatprep.mubr.f32.mxu0 0.0
        %3151 = vmatmul.mubr.f32.gmra.mrb[0].mxu0 %v2984
        %v3152 = vpop.f32.mrb[0].mxu0
        %v3153 = vadd.f32 0.0, %v3152
        %v3154 = vpop.f32.mrb[0].mxu0
        %3155 = vmatprep.mubr.f32.mxu0 0.0
        %3156 = vmatmul.mubr.f32.gmra.mrb[0].mxu0 %v2987
        %v3157 = vpop.f32.mrb[0].mxu0
        %v3158 = vadd.f32 0.0, %v3157
        %v3159 = vpop.f32.mrb[0].mxu0
        %3160 = vmatprep.mubr.f32.mxu0 0.0
        %3161 = vmatmul.mubr.f32.gmra.mrb[0].mxu0 %v2990
        %v3162 = vpop.f32.mrb[0].mxu0
        %v3163 = vadd.f32 0.0, %v3162
        %v3164 = vpop.f32.mrb[0].mxu0
        %3165 = vmatprep.mubr.f32.mxu0 0.0
        %3166 = vmatmul.mubr.f32.gmra.mrb[0].mxu0 %v2993
        %v3167 = vpop.f32.mrb[0].mxu0
        %v3168 = vadd.f32 0.0, %v3167
        %v3169 = vpop.f32.mrb[0].mxu0
        %3170 = vmatprep.mubr.f32.mxu0 0.0
        %3171 = vmatmul.mubr.f32.gmra.mrb[0].mxu0 %v2996
        %v3172 = vpop.f32.mrb[0].mxu0
        %v3173 = vadd.f32 0.0, %v3172
        %v3174 = vpop.f32.mrb[0].mxu0
        %3175 = vmatprep.mubr.f32.mxu0 0.0
        %3176 = vmatmul.mubr.f32.gmra.mrb[0].mxu0 %v2999
        %v3177 = vpop.f32.mrb[0].mxu0
        %v3178 = vadd.f32 0.0, %v3177
        %v3179 = vpop.f32.mrb[0].mxu0
        %3180 = vmatprep.mubr.f32.mxu0 0.0
        %3181 = vmatmul.mubr.f32.gmra.mrb[0].mxu0 %v3002
        %v3182 = vpop.f32.mrb[0].mxu0
        %v3183 = vadd.f32 0.0, %v3182
        %v3184 = vpop.f32.mrb[0].mxu0
        %3185 = vmatprep.mubr.f32.mxu0 0.0
        %3186 = vmatmul.mubr.f32.gmra.mrb[0].mxu0 %v3005
        %v3187 = vpop.f32.mrb[0].mxu0
        %v3188 = vadd.f32 0.0, %v3187
        %v3189 = vpop.f32.mrb[0].mxu0
        %3190 = vmatprep.mubr.f32.mxu0 0.0
        %3191 = vmatmul.mubr.f32.gmra.mrb[0].mxu0 %v3008
        %v3192 = vpop.f32.mrb[0].mxu0
        %v3193 = vadd.f32 0.0, %v3192
        %v3194 = vpop.f32.mrb[0].mxu0
        %3195 = vmatprep.mubr.f32.mxu0 0.0
        %3196 = vmatmul.mubr.f32.gmra.mrb[0].mxu0 %v3011
        %v3197 = vpop.f32.mrb[0].mxu0
        %v3198 = vadd.f32 0.0, %v3197
        %v3199 = vpop.f32.mrb[0].mxu0
        %3200 = vmatprep.mubr.f32.mxu0 0.0
        %3201 = vmatmul.mubr.f32.gmra.mrb[0].mxu0 %v3014
        %v3202 = vpop.f32.mrb[0].mxu0
        %v3203 = vadd.f32 0.0, %v3202
        %v3204 = vpop.f32.mrb[0].mxu0
        %3205 = vmatprep.mubr.f32.mxu0 0.0
        %3206 = vmatmul.mubr.f32.gmra.mrb[0].mxu0 %v3017
        %v3207 = vpop.f32.mrb[0].mxu0
        %v3208 = vadd.f32 0.0, %v3207
        %v3209 = vpop.f32.mrb[0].mxu0
        %3210 = vmatprep.mubr.f32.mxu0 0.0
        %3211 = vmatmul.mubr.f32.gmra.mrb[0].mxu0 %v3020
        %v3212 = vpop.f32.mrb[0].mxu0
        %v3213 = vadd.f32 0.0, %v3212
        %v3214 = vpop.f32.mrb[0].mxu0
        %3215 = vmatprep.mubr.f32.mxu0 0.0
        %3216 = vmatmul.mubr.f32.gmra.mrb[0].mxu0 %v3023
        %v3217 = vpop.f32.mrb[0].mxu0
        %v3218 = vadd.f32 0.0, %v3217
        %v3219 = vpop.f32.mrb[0].mxu0
        %3220 = vmatprep.mubr.f32.mxu0 0.0
        %3221 = vmatmul.mubr.f32.gmra.mrb[0].mxu0 %v3026
        %v3222 = vpop.f32.mrb[0].mxu0
        %v3223 = vadd.f32 0.0, %v3222
        %v3224 = vpop.f32.mrb[0].mxu0
        %3225 = vmatprep.mubr.f32.mxu0 0.0
        %3226 = vmatmul.mubr.f32.gmra.mrb[0].mxu0 %v3029
        %v3227 = vpop.f32.mrb[0].mxu0
        %v3228 = vadd.f32 0.0, %v3227
        %v3229 = vpop.f32.mrb[0].mxu0
        %3230 = vmatprep.mubr.f32.mxu0 0.0
        %3231 = vmatmul.mubr.f32.gmra.mrb[0].mxu0 %v3032
        %v3232 = vpop.f32.mrb[0].mxu0
        %v3233 = vadd.f32 0.0, %v3232
        %v3234 = vpop.f32.mrb[0].mxu0
        %3235 = vmatprep.mubr.f32.mxu0 0.0
        %3236 = vmatmul.mubr.f32.gmra.mrb[0].mxu0 %v3035
        %v3237 = vpop.f32.mrb[0].mxu0
        %v3238 = vadd.f32 0.0, %v3237
        %v3239 = vpop.f32.mrb[0].mxu0
        %3240 = vmatprep.mubr.f32.mxu0 0.0
        %3241 = vmatmul.mubr.f32.gmra.mrb[0].mxu0 %v3038
        %v3242 = vpop.f32.mrb[0].mxu0
        %v3243 = vadd.f32 0.0, %v3242
        %v3244 = vpop.f32.mrb[0].mxu0
        %3245 = vmatprep.mubr.f32.mxu0 0.0
        %3246 = vmatmul.mubr.f32.gmra.mrb[0].mxu0 %v3041
        %v3247 = vpop.f32.mrb[0].mxu0
        %v3248 = vadd.f32 0.0, %v3247
        %v3249 = vpop.f32.mrb[0].mxu0
        %3250 = vmatprep.mubr.f32.mxu0 0.0
        %3251 = vmatmul.mubr.f32.gmra.mrb[0].mxu0 %v3044
        %v3252 = vpop.f32.mrb[0].mxu0
        %v3253 = vadd.f32 0.0, %v3252
        %v3254 = vpop.f32.mrb[0].mxu0
        %3255 = vmatprep.mubr.f32.mxu0 0.0
        %3256 = vmatmul.mubr.f32.gmra.mrb[0].mxu0 %v3047
        %v3257 = vpop.f32.mrb[0].mxu0
        %v3258 = vadd.f32 0.0, %v3257
        %v3259 = vpop.f32.mrb[0].mxu0
        %3260 = vmatprep.mubr.f32.mxu0 0.0
        %3261 = vmatmul.mubr.f32.gmra.mrb[0].mxu0 %v3050
        %v3262 = vpop.f32.mrb[0].mxu0
        %v3263 = vadd.f32 0.0, %v3262
        %v3264 = vpop.f32.mrb[0].mxu0
        %3265 = vmatprep.mubr.f32.mxu0 0.0
        %3266 = vmatmul.mubr.f32.gmra.mrb[0].mxu0 %v3053
        %v3267 = vpop.f32.mrb[0].mxu0
        %v3268 = vadd.f32 0.0, %v3267
        %v3269 = vpop.f32.mrb[0].mxu0
        %3270 = vmatprep.mubr.f32.mxu0 0.0
        %3271 = vmatmul.mubr.f32.gmra.mrb[0].mxu0 %v3056
        %v3272 = vpop.f32.mrb[0].mxu0
        %v3273 = vadd.f32 0.0, %v3272
        %v3274 = vpop.f32.mrb[0].mxu0
        %3275 = vmatprep.mubr.f32.mxu0 0.0
        %3276 = vmatmul.mubr.f32.gmra.mrb[0].mxu0 %v3059
        %v3277 = vpop.f32.mrb[0].mxu0
        %v3278 = vadd.f32 0.0, %v3277
        %v3279 = vpop.f32.mrb[0].mxu0
        %3280 = vmatprep.mubr.f32.mxu0 0.0
        %3281 = vmatmul.mubr.f32.gmra.mrb[0].mxu0 %v3062
        %v3282 = vpop.f32.mrb[0].mxu0
        %v3283 = vadd.f32 0.0, %v3282
        %v3284 = vpop.f32.mrb[0].mxu0
        %3285 = vmatprep.mubr.f32.mxu0 0.0
        %3286 = vmatmul.mubr.f32.gmra.mrb[0].mxu0 %v3065
        %v3287 = vpop.f32.mrb[0].mxu0
        %v3288 = vadd.f32 0.0, %v3287
        %v3289 = vpop.f32.mrb[0].mxu0
        %3290 = vmatprep.mubr.f32.mxu0 0.0
        %3291 = vmatmul.mubr.f32.gmra.mrb[0].mxu0 %v3068
        %v3292 = vpop.f32.mrb[0].mxu0
        %v3293 = vadd.f32 0.0, %v3292
        %v3294 = vpop.f32.mrb[0].mxu0
        %3295 = vmatprep.mubr.f32.mxu0 0.0
        %3296 = vmatmul.mubr.f32.gmra.mrb[0].mxu0 %v3071
        %v3297 = vpop.f32.mrb[0].mxu0
        %v3298 = vadd.f32 0.0, %v3297
        %v3299 = vpop.f32.mrb[0].mxu0
        %3300 = vdwg.mxu0
        %v3301 = vadd.f32 %v2913, %v3143
        %v3302 = vadd.f32 %v2914, %v3148
        %v3303 = vadd.f32 %v2915, %v3153
        %v3304 = vadd.f32 %v2916, %v3158
        %v3305 = vadd.f32 %v2917, %v3163
        %v3306 = vadd.f32 %v2918, %v3168
        %v3307 = vadd.f32 %v2919, %v3173
        %v3308 = vadd.f32 %v2920, %v3178
        %v3309 = vadd.f32 %v2921, %v3183
        %v3310 = vadd.f32 %v2922, %v3188
        %v3311 = vadd.f32 %v2923, %v3193
        %v3312 = vadd.f32 %v2924, %v3198
        %v3313 = vadd.f32 %v2925, %v3203
        %v3314 = vadd.f32 %v2926, %v3208
        %v3315 = vadd.f32 %v2927, %v3213
        %v3316 = vadd.f32 %v2928, %v3218
        %v3317 = vadd.f32 %v2929, %v3223
        %v3318 = vadd.f32 %v2930, %v3228
        %v3319 = vadd.f32 %v2931, %v3233
        %v3320 = vadd.f32 %v2932, %v3238
        %v3321 = vadd.f32 %v2933, %v3243
        %v3322 = vadd.f32 %v2934, %v3248
        %v3323 = vadd.f32 %v2935, %v3253
        %v3324 = vadd.f32 %v2936, %v3258
        %v3325 = vadd.f32 %v2937, %v3263
        %v3326 = vadd.f32 %v2938, %v3268
        %v3327 = vadd.f32 %v2939, %v3273
        %v3328 = vadd.f32 %v2940, %v3278
        %v3329 = vadd.f32 %v2941, %v3283
        %v3330 = vadd.f32 %v2942, %v3288
        %v3331 = vadd.f32 %v2943, %v3293
        %v3332 = vadd.f32 %v2944, %v3298
        %v3333 = vld [vmem:[%s2556 + $0x2] sm:$0xff]
        %v3334 = vld [vmem:[%s2556 + $0xa] sm:$0xff]
        %v3335 = vld [vmem:[%s2556 + $0x1a] sm:$0xff]
        %v3336 = vld [vmem:[%s2556 + $0x22] sm:$0xff]
        %v3337 = vld [vmem:[%s2556 + $0x32] sm:$0xff]
        %v3338 = vld [vmem:[%s2556 + $0x3a] sm:$0xff]
        %v3339 = vld [vmem:[%s2556 + $0x4a] sm:$0xff]
        %v3340 = vld [vmem:[%s2556 + $0x52] sm:$0xff]
        %v3341 = vld [vmem:[%s2556 + $0x62] sm:$0xff]
        %v3342 = vld [vmem:[%s2556 + $0x6a] sm:$0xff]
        %v3343 = vld [vmem:[%s2556 + $0x7a] sm:$0xff]
        %v3344 = vld [vmem:[%s2556 + $0x82] sm:$0xff]
        %v3345 = vld [vmem:[%s2556 + $0x92] sm:$0xff]
        %v3346 = vld [vmem:[%s2556 + $0x9a] sm:$0xff]
        %v3347 = vld [vmem:[%s2556 + $0xaa] sm:$0xff]
        %v3348 = vld [vmem:[%s2556 + $0xb2] sm:$0xff]
        %v3349 = vld [vmem:[%s2556 + $0xc2] sm:$0xff]
        %v3350 = vld [vmem:[%s2556 + $0xca] sm:$0xff]
        %v3351 = vld [vmem:[%s2556 + $0xda] sm:$0xff]
        %v3352 = vld [vmem:[%s2556 + $0xe2] sm:$0xff]
        %v3353 = vld [vmem:[%s2556 + $0xf2] sm:$0xff]
        %v3354 = vld [vmem:[%s2556 + $0xfa] sm:$0xff]
        %v3355 = vld [vmem:[%s2556 + $0x10a] sm:$0xff]
        %v3356 = vld [vmem:[%s2556 + $0x112] sm:$0xff]
        %v3357 = vld [vmem:[%s2556 + $0x122] sm:$0xff]
        %v3358 = vld [vmem:[%s2556 + $0x12a] sm:$0xff]
        %v3359 = vld [vmem:[%s2556 + $0x13a] sm:$0xff]
        %v3360 = vld [vmem:[%s2556 + $0x142] sm:$0xff]
        %v3361 = vld [vmem:[%s2556 + $0x152] sm:$0xff]
        %v3362 = vld [vmem:[%s2556 + $0x15a] sm:$0xff]
        %v3363 = vld [vmem:[%s2556 + $0x16a] sm:$0xff]
        %v3364 = vld [vmem:[%s2556 + $0x172] sm:$0xff]
        %v3366 = vsel %vm353, %v3333, 0
        %v3369 = vsel %vm353, %v3334, 0
        %v3372 = vsel %vm353, %v3335, 0
        %v3375 = vsel %vm353, %v3336, 0
        %v3378 = vsel %vm353, %v3337, 0
        %v3381 = vsel %vm353, %v3338, 0
        %v3384 = vsel %vm353, %v3339, 0
        %v3387 = vsel %vm353, %v3340, 0
        %v3390 = vsel %vm353, %v3341, 0
        %v3393 = vsel %vm353, %v3342, 0
        %v3396 = vsel %vm353, %v3343, 0
        %v3399 = vsel %vm353, %v3344, 0
        %v3402 = vsel %vm353, %v3345, 0
        %v3405 = vsel %vm353, %v3346, 0
        %v3408 = vsel %vm353, %v3347, 0
        %v3411 = vsel %vm353, %v3348, 0
        %v3414 = vsel %vm353, %v3349, 0
        %v3417 = vsel %vm353, %v3350, 0
        %v3420 = vsel %vm353, %v3351, 0
        %v3423 = vsel %vm353, %v3352, 0
        %v3426 = vsel %vm353, %v3353, 0
        %v3429 = vsel %vm353, %v3354, 0
        %v3432 = vsel %vm353, %v3355, 0
        %v3435 = vsel %vm353, %v3356, 0
        %v3438 = vsel %vm353, %v3357, 0
        %v3441 = vsel %vm353, %v3358, 0
        %v3444 = vsel %vm353, %v3359, 0
        %v3447 = vsel %vm353, %v3360, 0
        %v3450 = vsel %vm353, %v3361, 0
        %v3453 = vsel %vm353, %v3362, 0
        %v3456 = vsel %vm353, %v3363, 0
        %v3459 = vsel %vm353, %v3364, 0
        %v3462 = vsel %vm450, %v231, 0
        %3464 = vmatprep.subr.mxu0 0.0
        %3465 = vmatpush1.msra.mxu0 %v3462
        %3466 = vmatprep.subr.mxu0 0.0
        %3467 = vmatpush1.msra.mxu0 0.0
        %3468 = vmatprep.subr.mxu0 0.0
        %3469 = vmatpush1.msra.mxu0 0.0
        %3470 = vmatprep.subr.mxu0 0.0
        %3471 = vmatpush1.msra.mxu0 0.0
        %3472 = vmatprep.subr.mxu0 0.0
        %3473 = vmatpush1.msra.mxu0 0.0
        %3474 = vmatprep.subr.mxu0 0.0
        %3475 = vmatpush1.msra.mxu0 0.0
        %3476 = vmatprep.subr.mxu0 0.0
        %3477 = vmatpush1.msra.mxu0 0.0
        %3478 = vmatprep.subr.mxu0 0.0
        %3479 = vmatpush1.msra.mxu0 0.0
        %3480 = vmatprep.subr.mxu0 0.0
        %3481 = vmatpush1.msra.mxu0 0.0
        %3482 = vmatprep.subr.mxu0 0.0
        %3483 = vmatpush1.msra.mxu0 0.0
        %3484 = vmatprep.subr.mxu0 0.0
        %3485 = vmatpush1.msra.mxu0 0.0
        %3486 = vmatprep.subr.mxu0 0.0
        %3487 = vmatpush1.msra.mxu0 0.0
        %3488 = vmatprep.subr.mxu0 0.0
        %3489 = vmatpush1.msra.mxu0 0.0
        %3490 = vmatprep.subr.mxu0 0.0
        %3491 = vmatpush1.msra.mxu0 0.0
        %3492 = vmatprep.subr.mxu0 0.0
        %3493 = vmatpush1.msra.mxu0 0.0
        %3494 = vmatprep.subr.mxu0 0.0
        %3495 = vmatpush1.msra.mxu0 0.0
        %3496 = vmatprep.subr.mxu0 0.0
        %3497 = vmatpush1.msra.mxu0 0.0
        %3498 = vmatprep.subr.mxu0 0.0
        %3499 = vmatpush1.msra.mxu0 0.0
        %3500 = vmatprep.subr.mxu0 0.0
        %3501 = vmatpush1.msra.mxu0 0.0
        %3502 = vmatprep.subr.mxu0 0.0
        %3503 = vmatpush1.msra.mxu0 0.0
        %3504 = vmatprep.subr.mxu0 0.0
        %3505 = vmatpush1.msra.mxu0 0.0
        %3506 = vmatprep.subr.mxu0 0.0
        %3507 = vmatpush1.msra.mxu0 0.0
        %3508 = vmatprep.subr.mxu0 0.0
        %3509 = vmatpush1.msra.mxu0 0.0
        %3510 = vmatprep.subr.mxu0 0.0
        %3511 = vmatpush1.msra.mxu0 0.0
        %3512 = vmatprep.subr.mxu0 0.0
        %3513 = vmatpush1.msra.mxu0 0.0
        %3514 = vmatprep.subr.mxu0 0.0
        %3515 = vmatpush1.msra.mxu0 0.0
        %3516 = vmatprep.subr.mxu0 0.0
        %3517 = vmatpush1.msra.mxu0 0.0
        %3518 = vmatprep.subr.mxu0 0.0
        %3519 = vmatpush1.msra.mxu0 0.0
        %3520 = vmatprep.subr.mxu0 0.0
        %3521 = vmatpush1.msra.mxu0 0.0
        %3522 = vmatprep.subr.mxu0 0.0
        %3523 = vmatpush1.msra.mxu0 0.0
        %3524 = vmatprep.subr.mxu0 0.0
        %3525 = vmatpush1.msra.mxu0 0.0
        %3526 = vmatprep.subr.mxu0 0.0
        %3527 = vmatpush1.msra.mxu0 0.0
        %3528 = vmatprep.mubr.f32.mxu0 0.0
        %3529 = vmatmul.mubr.f32.gmra.mrb[0].mxu0 %v3366
        %v3530 = vpop.f32.mrb[0].mxu0
        %v3531 = vadd.f32 0.0, %v3530
        %v3532 = vpop.f32.mrb[0].mxu0
        %3533 = vmatprep.mubr.f32.mxu0 0.0
        %3534 = vmatmul.mubr.f32.gmra.mrb[0].mxu0 %v3369
        %v3535 = vpop.f32.mrb[0].mxu0
        %v3536 = vadd.f32 0.0, %v3535
        %v3537 = vpop.f32.mrb[0].mxu0
        %3538 = vmatprep.mubr.f32.mxu0 0.0
        %3539 = vmatmul.mubr.f32.gmra.mrb[0].mxu0 %v3372
        %v3540 = vpop.f32.mrb[0].mxu0
        %v3541 = vadd.f32 0.0, %v3540
        %v3542 = vpop.f32.mrb[0].mxu0
        %3543 = vmatprep.mubr.f32.mxu0 0.0
        %3544 = vmatmul.mubr.f32.gmra.mrb[0].mxu0 %v3375
        %v3545 = vpop.f32.mrb[0].mxu0
        %v3546 = vadd.f32 0.0, %v3545
        %v3547 = vpop.f32.mrb[0].mxu0
        %3548 = vmatprep.mubr.f32.mxu0 0.0
        %3549 = vmatmul.mubr.f32.gmra.mrb[0].mxu0 %v3378
        %v3550 = vpop.f32.mrb[0].mxu0
        %v3551 = vadd.f32 0.0, %v3550
        %v3552 = vpop.f32.mrb[0].mxu0
        %3553 = vmatprep.mubr.f32.mxu0 0.0
        %3554 = vmatmul.mubr.f32.gmra.mrb[0].mxu0 %v3381
        %v3555 = vpop.f32.mrb[0].mxu0
        %v3556 = vadd.f32 0.0, %v3555
        %v3557 = vpop.f32.mrb[0].mxu0
        %3558 = vmatprep.mubr.f32.mxu0 0.0
        %3559 = vmatmul.mubr.f32.gmra.mrb[0].mxu0 %v3384
        %v3560 = vpop.f32.mrb[0].mxu0
        %v3561 = vadd.f32 0.0, %v3560
        %v3562 = vpop.f32.mrb[0].mxu0
        %3563 = vmatprep.mubr.f32.mxu0 0.0
        %3564 = vmatmul.mubr.f32.gmra.mrb[0].mxu0 %v3387
        %v3565 = vpop.f32.mrb[0].mxu0
        %v3566 = vadd.f32 0.0, %v3565
        %v3567 = vpop.f32.mrb[0].mxu0
        %3568 = vmatprep.mubr.f32.mxu0 0.0
        %3569 = vmatmul.mubr.f32.gmra.mrb[0].mxu0 %v3390
        %v3570 = vpop.f32.mrb[0].mxu0
        %v3571 = vadd.f32 0.0, %v3570
        %v3572 = vpop.f32.mrb[0].mxu0
        %3573 = vmatprep.mubr.f32.mxu0 0.0
        %3574 = vmatmul.mubr.f32.gmra.mrb[0].mxu0 %v3393
        %v3575 = vpop.f32.mrb[0].mxu0
        %v3576 = vadd.f32 0.0, %v3575
        %v3577 = vpop.f32.mrb[0].mxu0
        %3578 = vmatprep.mubr.f32.mxu0 0.0
        %3579 = vmatmul.mubr.f32.gmra.mrb[0].mxu0 %v3396
        %v3580 = vpop.f32.mrb[0].mxu0
        %v3581 = vadd.f32 0.0, %v3580
        %v3582 = vpop.f32.mrb[0].mxu0
        %3583 = vmatprep.mubr.f32.mxu0 0.0
        %3584 = vmatmul.mubr.f32.gmra.mrb[0].mxu0 %v3399
        %v3585 = vpop.f32.mrb[0].mxu0
        %v3586 = vadd.f32 0.0, %v3585
        %v3587 = vpop.f32.mrb[0].mxu0
        %3588 = vmatprep.mubr.f32.mxu0 0.0
        %3589 = vmatmul.mubr.f32.gmra.mrb[0].mxu0 %v3402
        %v3590 = vpop.f32.mrb[0].mxu0
        %v3591 = vadd.f32 0.0, %v3590
        %v3592 = vpop.f32.mrb[0].mxu0
        %3593 = vmatprep.mubr.f32.mxu0 0.0
        %3594 = vmatmul.mubr.f32.gmra.mrb[0].mxu0 %v3405
        %v3595 = vpop.f32.mrb[0].mxu0
        %v3596 = vadd.f32 0.0, %v3595
        %v3597 = vpop.f32.mrb[0].mxu0
        %3598 = vmatprep.mubr.f32.mxu0 0.0
        %3599 = vmatmul.mubr.f32.gmra.mrb[0].mxu0 %v3408
        %v3600 = vpop.f32.mrb[0].mxu0
        %v3601 = vadd.f32 0.0, %v3600
        %v3602 = vpop.f32.mrb[0].mxu0
        %3603 = vmatprep.mubr.f32.mxu0 0.0
        %3604 = vmatmul.mubr.f32.gmra.mrb[0].mxu0 %v3411
        %v3605 = vpop.f32.mrb[0].mxu0
        %v3606 = vadd.f32 0.0, %v3605
        %v3607 = vpop.f32.mrb[0].mxu0
        %3608 = vmatprep.mubr.f32.mxu0 0.0
        %3609 = vmatmul.mubr.f32.gmra.mrb[0].mxu0 %v3414
        %v3610 = vpop.f32.mrb[0].mxu0
        %v3611 = vadd.f32 0.0, %v3610
        %v3612 = vpop.f32.mrb[0].mxu0
        %3613 = vmatprep.mubr.f32.mxu0 0.0
        %3614 = vmatmul.mubr.f32.gmra.mrb[0].mxu0 %v3417
        %v3615 = vpop.f32.mrb[0].mxu0
        %v3616 = vadd.f32 0.0, %v3615
        %v3617 = vpop.f32.mrb[0].mxu0
        %3618 = vmatprep.mubr.f32.mxu0 0.0
        %3619 = vmatmul.mubr.f32.gmra.mrb[0].mxu0 %v3420
        %v3620 = vpop.f32.mrb[0].mxu0
        %v3621 = vadd.f32 0.0, %v3620
        %v3622 = vpop.f32.mrb[0].mxu0
        %3623 = vmatprep.mubr.f32.mxu0 0.0
        %3624 = vmatmul.mubr.f32.gmra.mrb[0].mxu0 %v3423
        %v3625 = vpop.f32.mrb[0].mxu0
        %v3626 = vadd.f32 0.0, %v3625
        %v3627 = vpop.f32.mrb[0].mxu0
        %3628 = vmatprep.mubr.f32.mxu0 0.0
        %3629 = vmatmul.mubr.f32.gmra.mrb[0].mxu0 %v3426
        %v3630 = vpop.f32.mrb[0].mxu0
        %v3631 = vadd.f32 0.0, %v3630
        %v3632 = vpop.f32.mrb[0].mxu0
        %3633 = vmatprep.mubr.f32.mxu0 0.0
        %3634 = vmatmul.mubr.f32.gmra.mrb[0].mxu0 %v3429
        %v3635 = vpop.f32.mrb[0].mxu0
        %v3636 = vadd.f32 0.0, %v3635
        %v3637 = vpop.f32.mrb[0].mxu0
        %3638 = vmatprep.mubr.f32.mxu0 0.0
        %3639 = vmatmul.mubr.f32.gmra.mrb[0].mxu0 %v3432
        %v3640 = vpop.f32.mrb[0].mxu0
        %v3641 = vadd.f32 0.0, %v3640
        %v3642 = vpop.f32.mrb[0].mxu0
        %3643 = vmatprep.mubr.f32.mxu0 0.0
        %3644 = vmatmul.mubr.f32.gmra.mrb[0].mxu0 %v3435
        %v3645 = vpop.f32.mrb[0].mxu0
        %v3646 = vadd.f32 0.0, %v3645
        %v3647 = vpop.f32.mrb[0].mxu0
        %3648 = vmatprep.mubr.f32.mxu0 0.0
        %3649 = vmatmul.mubr.f32.gmra.mrb[0].mxu0 %v3438
        %v3650 = vpop.f32.mrb[0].mxu0
        %v3651 = vadd.f32 0.0, %v3650
        %v3652 = vpop.f32.mrb[0].mxu0
        %3653 = vmatprep.mubr.f32.mxu0 0.0
        %3654 = vmatmul.mubr.f32.gmra.mrb[0].mxu0 %v3441
        %v3655 = vpop.f32.mrb[0].mxu0
        %v3656 = vadd.f32 0.0, %v3655
        %v3657 = vpop.f32.mrb[0].mxu0
        %3658 = vmatprep.mubr.f32.mxu0 0.0
        %3659 = vmatmul.mubr.f32.gmra.mrb[0].mxu0 %v3444
        %v3660 = vpop.f32.mrb[0].mxu0
        %v3661 = vadd.f32 0.0, %v3660
        %v3662 = vpop.f32.mrb[0].mxu0
        %3663 = vmatprep.mubr.f32.mxu0 0.0
        %3664 = vmatmul.mubr.f32.gmra.mrb[0].mxu0 %v3447
        %v3665 = vpop.f32.mrb[0].mxu0
        %v3666 = vadd.f32 0.0, %v3665
        %v3667 = vpop.f32.mrb[0].mxu0
        %3668 = vmatprep.mubr.f32.mxu0 0.0
        %3669 = vmatmul.mubr.f32.gmra.mrb[0].mxu0 %v3450
        %v3670 = vpop.f32.mrb[0].mxu0
        %v3671 = vadd.f32 0.0, %v3670
        %v3672 = vpop.f32.mrb[0].mxu0
        %3673 = vmatprep.mubr.f32.mxu0 0.0
        %3674 = vmatmul.mubr.f32.gmra.mrb[0].mxu0 %v3453
        %v3675 = vpop.f32.mrb[0].mxu0
        %v3676 = vadd.f32 0.0, %v3675
        %v3677 = vpop.f32.mrb[0].mxu0
        %3678 = vmatprep.mubr.f32.mxu0 0.0
        %3679 = vmatmul.mubr.f32.gmra.mrb[0].mxu0 %v3456
        %v3680 = vpop.f32.mrb[0].mxu0
        %v3681 = vadd.f32 0.0, %v3680
        %v3682 = vpop.f32.mrb[0].mxu0
        %3683 = vmatprep.mubr.f32.mxu0 0.0
        %3684 = vmatmul.mubr.f32.gmra.mrb[0].mxu0 %v3459
        %v3685 = vpop.f32.mrb[0].mxu0
        %v3686 = vadd.f32 0.0, %v3685
        %v3687 = vpop.f32.mrb[0].mxu0
        %3688 = vdwg.mxu0
        %v3689 = vadd.f32 %v3301, %v3531
        %v3690 = vadd.f32 %v3302, %v3536
        %v3691 = vadd.f32 %v3303, %v3541
        %v3692 = vadd.f32 %v3304, %v3546
        %v3693 = vadd.f32 %v3305, %v3551
        %v3694 = vadd.f32 %v3306, %v3556
        %v3695 = vadd.f32 %v3307, %v3561
        %v3696 = vadd.f32 %v3308, %v3566
        %v3697 = vadd.f32 %v3309, %v3571
        %v3698 = vadd.f32 %v3310, %v3576
        %v3699 = vadd.f32 %v3311, %v3581
        %v3700 = vadd.f32 %v3312, %v3586
        %v3701 = vadd.f32 %v3313, %v3591
        %v3702 = vadd.f32 %v3314, %v3596
        %v3703 = vadd.f32 %v3315, %v3601
        %v3704 = vadd.f32 %v3316, %v3606
        %v3705 = vadd.f32 %v3317, %v3611
        %v3706 = vadd.f32 %v3318, %v3616
        %v3707 = vadd.f32 %v3319, %v3621
        %v3708 = vadd.f32 %v3320, %v3626
        %v3709 = vadd.f32 %v3321, %v3631
        %v3710 = vadd.f32 %v3322, %v3636
        %v3711 = vadd.f32 %v3323, %v3641
        %v3712 = vadd.f32 %v3324, %v3646
        %v3713 = vadd.f32 %v3325, %v3651
        %v3714 = vadd.f32 %v3326, %v3656
        %v3715 = vadd.f32 %v3327, %v3661
        %v3716 = vadd.f32 %v3328, %v3666
        %v3717 = vadd.f32 %v3329, %v3671
        %v3718 = vadd.f32 %v3330, %v3676
        %v3719 = vadd.f32 %v3331, %v3681
        %v3720 = vadd.f32 %v3332, %v3686
        %v3722 = vlaneseq
        %v3723 = vshrl.u32 %v3722, 7
        %v3724 = vsub.s32 0, %v3723
        %v3725 = vrot.slane %v241, %v3724
        %v3727 = vadd.f32 %v3689, %v3725
        %v3728 = vadd.f32 %v3690, %v3725
        %v3729 = vadd.f32 %v3691, %v3725
        %v3730 = vadd.f32 %v3692, %v3725
        %v3731 = vadd.f32 %v3693, %v3725
        %v3732 = vadd.f32 %v3694, %v3725
        %v3733 = vadd.f32 %v3695, %v3725
        %v3734 = vadd.f32 %v3696, %v3725
        %v3735 = vadd.f32 %v3697, %v3725
        %v3736 = vadd.f32 %v3698, %v3725
        %v3737 = vadd.f32 %v3699, %v3725
        %v3738 = vadd.f32 %v3700, %v3725
        %v3739 = vadd.f32 %v3701, %v3725
        %v3740 = vadd.f32 %v3702, %v3725
        %v3741 = vadd.f32 %v3703, %v3725
        %v3742 = vadd.f32 %v3704, %v3725
        %v3743 = vadd.f32 %v3705, %v3725
        %v3744 = vadd.f32 %v3706, %v3725
        %v3745 = vadd.f32 %v3707, %v3725
        %v3746 = vadd.f32 %v3708, %v3725
        %v3747 = vadd.f32 %v3709, %v3725
        %v3748 = vadd.f32 %v3710, %v3725
        %v3749 = vadd.f32 %v3711, %v3725
        %v3750 = vadd.f32 %v3712, %v3725
        %v3751 = vadd.f32 %v3713, %v3725
        %v3752 = vadd.f32 %v3714, %v3725
        %v3753 = vadd.f32 %v3715, %v3725
        %v3754 = vadd.f32 %v3716, %v3725
        %v3755 = vadd.f32 %v3717, %v3725
        %v3756 = vadd.f32 %v3718, %v3725
        %v3757 = vadd.f32 %v3719, %v3725
        %v3758 = vadd.f32 %v3720, %v3725
        %v3759 = vsel %vm243, %v3727, 0.0
        %v3760 = vsel %vm243, %v3728, 0.0
        %v3761 = vadd.f32 %v3759, %v3760
        %v3762 = vsel %vm243, %v3729, 0.0
        %v3763 = vadd.f32 %v3761, %v3762
        %v3764 = vsel %vm243, %v3730, 0.0
        %v3765 = vadd.f32 %v3763, %v3764
        %v3766 = vsel %vm243, %v3731, 0.0
        %v3767 = vadd.f32 %v3765, %v3766
        %v3768 = vsel %vm243, %v3732, 0.0
        %v3769 = vadd.f32 %v3767, %v3768
        %v3770 = vsel %vm243, %v3733, 0.0
        %v3771 = vadd.f32 %v3769, %v3770
        %v3772 = vsel %vm243, %v3734, 0.0
        %v3773 = vadd.f32 %v3771, %v3772
        %v3774 = vsel %vm243, %v3735, 0.0
        %v3775 = vadd.f32 %v3773, %v3774
        %v3776 = vsel %vm243, %v3736, 0.0
        %v3777 = vadd.f32 %v3775, %v3776
        %v3778 = vsel %vm243, %v3737, 0.0
        %v3779 = vadd.f32 %v3777, %v3778
        %v3780 = vsel %vm243, %v3738, 0.0
        %v3781 = vadd.f32 %v3779, %v3780
        %v3782 = vsel %vm243, %v3739, 0.0
        %v3783 = vadd.f32 %v3781, %v3782
        %v3784 = vsel %vm243, %v3740, 0.0
        %v3785 = vadd.f32 %v3783, %v3784
        %v3786 = vsel %vm243, %v3741, 0.0
        %v3787 = vadd.f32 %v3785, %v3786
        %v3788 = vsel %vm243, %v3742, 0.0
        %v3789 = vadd.f32 %v3787, %v3788
        %v3790 = vsel %vm243, %v3743, 0.0
        %v3791 = vadd.f32 %v3789, %v3790
        %v3792 = vsel %vm243, %v3744, 0.0
        %v3793 = vadd.f32 %v3791, %v3792
        %v3794 = vsel %vm243, %v3745, 0.0
        %v3795 = vadd.f32 %v3793, %v3794
        %v3796 = vsel %vm243, %v3746, 0.0
        %v3797 = vadd.f32 %v3795, %v3796
        %v3798 = vsel %vm243, %v3747, 0.0
        %v3799 = vadd.f32 %v3797, %v3798
        %v3800 = vsel %vm243, %v3748, 0.0
        %v3801 = vadd.f32 %v3799, %v3800
        %v3802 = vsel %vm243, %v3749, 0.0
        %v3803 = vadd.f32 %v3801, %v3802
        %v3804 = vsel %vm243, %v3750, 0.0
        %v3805 = vadd.f32 %v3803, %v3804
        %v3806 = vsel %vm243, %v3751, 0.0
        %v3807 = vadd.f32 %v3805, %v3806
        %v3808 = vsel %vm243, %v3752, 0.0
        %v3809 = vadd.f32 %v3807, %v3808
        %v3810 = vsel %vm243, %v3753, 0.0
        %v3811 = vadd.f32 %v3809, %v3810
        %v3812 = vsel %vm243, %v3754, 0.0
        %v3813 = vadd.f32 %v3811, %v3812
        %v3814 = vsel %vm243, %v3755, 0.0
        %v3815 = vadd.f32 %v3813, %v3814
        %v3816 = vsel %vm243, %v3756, 0.0
        %v3817 = vadd.f32 %v3815, %v3816
        %v3818 = vsel %vm243, %v3757, 0.0
        %v3819 = vadd.f32 %v3817, %v3818
        %v3820 = vsel %vm243, %v3758, 0.0
        %v3821 = vadd.f32 %v3819, %v3820
        %v3822 = vrot.slane %v3821, 4
        %v3823 = vadd.f32 %v3821, %v3822
        %v3824 = vrot.slane %v3823, 2
        %v3825 = vadd.f32 %v3823, %v3824
        %v3826 = vrot.slane %v3825, 1
        %v3827 = vadd.f32 %v3825, %v3826
        %v3828 = vrcp.pop 256.0
        %v3829 = vmul.f32 %v3827, %v3828
        %v3830 = vsub.f32 %v3727, %v3829
        %v3831 = vsub.f32 %v3728, %v3829
        %v3832 = vsub.f32 %v3729, %v3829
        %v3833 = vsub.f32 %v3730, %v3829
        %v3834 = vsub.f32 %v3731, %v3829
        %v3835 = vsub.f32 %v3732, %v3829
        %v3836 = vsub.f32 %v3733, %v3829
        %v3837 = vsub.f32 %v3734, %v3829
        %v3838 = vsub.f32 %v3735, %v3829
        %v3839 = vsub.f32 %v3736, %v3829
        %v3840 = vsub.f32 %v3737, %v3829
        %v3841 = vsub.f32 %v3738, %v3829
        %v3842 = vsub.f32 %v3739, %v3829
        %v3843 = vsub.f32 %v3740, %v3829
        %v3844 = vsub.f32 %v3741, %v3829
        %v3845 = vsub.f32 %v3742, %v3829
        %v3846 = vsub.f32 %v3743, %v3829
        %v3847 = vsub.f32 %v3744, %v3829
        %v3848 = vsub.f32 %v3745, %v3829
        %v3849 = vsub.f32 %v3746, %v3829
        %v3850 = vsub.f32 %v3747, %v3829
        %v3851 = vsub.f32 %v3748, %v3829
        %v3852 = vsub.f32 %v3749, %v3829
        %v3853 = vsub.f32 %v3750, %v3829
        %v3854 = vsub.f32 %v3751, %v3829
        %v3855 = vsub.f32 %v3752, %v3829
        %v3856 = vsub.f32 %v3753, %v3829
        %v3857 = vsub.f32 %v3754, %v3829
        %v3858 = vsub.f32 %v3755, %v3829
        %v3859 = vsub.f32 %v3756, %v3829
        %v3860 = vsub.f32 %v3757, %v3829
        %v3861 = vsub.f32 %v3758, %v3829
        %v3862 = vmul.f32 %v3830, %v3830
        %v3863 = vmul.f32 %v3831, %v3831
        %v3864 = vmul.f32 %v3832, %v3832
        %v3865 = vmul.f32 %v3833, %v3833
        %v3866 = vmul.f32 %v3834, %v3834
        %v3867 = vmul.f32 %v3835, %v3835
        %v3868 = vmul.f32 %v3836, %v3836
        %v3869 = vmul.f32 %v3837, %v3837
        %v3870 = vmul.f32 %v3838, %v3838
        %v3871 = vmul.f32 %v3839, %v3839
        %v3872 = vmul.f32 %v3840, %v3840
        %v3873 = vmul.f32 %v3841, %v3841
        %v3874 = vmul.f32 %v3842, %v3842
        %v3875 = vmul.f32 %v3843, %v3843
        %v3876 = vmul.f32 %v3844, %v3844
        %v3877 = vmul.f32 %v3845, %v3845
        %v3878 = vmul.f32 %v3846, %v3846
        %v3879 = vmul.f32 %v3847, %v3847
        %v3880 = vmul.f32 %v3848, %v3848
        %v3881 = vmul.f32 %v3849, %v3849
        %v3882 = vmul.f32 %v3850, %v3850
        %v3883 = vmul.f32 %v3851, %v3851
        %v3884 = vmul.f32 %v3852, %v3852
        %v3885 = vmul.f32 %v3853, %v3853
        %v3886 = vmul.f32 %v3854, %v3854
        %v3887 = vmul.f32 %v3855, %v3855
        %v3888 = vmul.f32 %v3856, %v3856
        %v3889 = vmul.f32 %v3857, %v3857
        %v3890 = vmul.f32 %v3858, %v3858
        %v3891 = vmul.f32 %v3859, %v3859
        %v3892 = vmul.f32 %v3860, %v3860
        %v3893 = vmul.f32 %v3861, %v3861
        %v3894 = vsel %vm243, %v3862, 0.0
        %v3895 = vsel %vm243, %v3863, 0.0
        %v3896 = vadd.f32 %v3894, %v3895
        %v3897 = vsel %vm243, %v3864, 0.0
        %v3898 = vadd.f32 %v3896, %v3897
        %v3899 = vsel %vm243, %v3865, 0.0
        %v3900 = vadd.f32 %v3898, %v3899
        %v3901 = vsel %vm243, %v3866, 0.0
        %v3902 = vadd.f32 %v3900, %v3901
        %v3903 = vsel %vm243, %v3867, 0.0
        %v3904 = vadd.f32 %v3902, %v3903
        %v3905 = vsel %vm243, %v3868, 0.0
        %v3906 = vadd.f32 %v3904, %v3905
        %v3907 = vsel %vm243, %v3869, 0.0
        %v3908 = vadd.f32 %v3906, %v3907
        %v3909 = vsel %vm243, %v3870, 0.0
        %v3910 = vadd.f32 %v3908, %v3909
        %v3911 = vsel %vm243, %v3871, 0.0
        %v3912 = vadd.f32 %v3910, %v3911
        %v3913 = vsel %vm243, %v3872, 0.0
        %v3914 = vadd.f32 %v3912, %v3913
        %v3915 = vsel %vm243, %v3873, 0.0
        %v3916 = vadd.f32 %v3914, %v3915
        %v3917 = vsel %vm243, %v3874, 0.0
        %v3918 = vadd.f32 %v3916, %v3917
        %v3919 = vsel %vm243, %v3875, 0.0
        %v3920 = vadd.f32 %v3918, %v3919
        %v3921 = vsel %vm243, %v3876, 0.0
        %v3922 = vadd.f32 %v3920, %v3921
        %v3923 = vsel %vm243, %v3877, 0.0
        %v3924 = vadd.f32 %v3922, %v3923
        %v3925 = vsel %vm243, %v3878, 0.0
        %v3926 = vadd.f32 %v3924, %v3925
        %v3927 = vsel %vm243, %v3879, 0.0
        %v3928 = vadd.f32 %v3926, %v3927
        %v3929 = vsel %vm243, %v3880, 0.0
        %v3930 = vadd.f32 %v3928, %v3929
        %v3931 = vsel %vm243, %v3881, 0.0
        %v3932 = vadd.f32 %v3930, %v3931
        %v3933 = vsel %vm243, %v3882, 0.0
        %v3934 = vadd.f32 %v3932, %v3933
        %v3935 = vsel %vm243, %v3883, 0.0
        %v3936 = vadd.f32 %v3934, %v3935
        %v3937 = vsel %vm243, %v3884, 0.0
        %v3938 = vadd.f32 %v3936, %v3937
        %v3939 = vsel %vm243, %v3885, 0.0
        %v3940 = vadd.f32 %v3938, %v3939
        %v3941 = vsel %vm243, %v3886, 0.0
        %v3942 = vadd.f32 %v3940, %v3941
        %v3943 = vsel %vm243, %v3887, 0.0
        %v3944 = vadd.f32 %v3942, %v3943
        %v3945 = vsel %vm243, %v3888, 0.0
        %v3946 = vadd.f32 %v3944, %v3945
        %v3947 = vsel %vm243, %v3889, 0.0
        %v3948 = vadd.f32 %v3946, %v3947
        %v3949 = vsel %vm243, %v3890, 0.0
        %v3950 = vadd.f32 %v3948, %v3949
        %v3951 = vsel %vm243, %v3891, 0.0
        %v3952 = vadd.f32 %v3950, %v3951
        %v3953 = vsel %vm243, %v3892, 0.0
        %v3954 = vadd.f32 %v3952, %v3953
        %v3955 = vsel %vm243, %v3893, 0.0
        %v3956 = vadd.f32 %v3954, %v3955
        %v3957 = vrot.slane %v3956, 4
        %v3958 = vadd.f32 %v3956, %v3957
        %v3959 = vrot.slane %v3958, 2
        %v3960 = vadd.f32 %v3958, %v3959
        %v3961 = vrot.slane %v3960, 1
        %v3962 = vadd.f32 %v3960, %v3961
        %v3963 = vmul.f32 %v3962, %v3828
        %v3964 = vadd.f32 %v3963, 1e-05
        %v3965 = vrsqrt.pop %v3964
        %v3966 = vmul.f32 %v3830, %v3965
        %v3967 = vmul.f32 %v3831, %v3965
        %v3968 = vmul.f32 %v3832, %v3965
        %v3969 = vmul.f32 %v3833, %v3965
        %v3970 = vmul.f32 %v3834, %v3965
        %v3971 = vmul.f32 %v3835, %v3965
        %v3972 = vmul.f32 %v3836, %v3965
        %v3973 = vmul.f32 %v3837, %v3965
        %v3974 = vmul.f32 %v3838, %v3965
        %v3975 = vmul.f32 %v3839, %v3965
        %v3976 = vmul.f32 %v3840, %v3965
        %v3977 = vmul.f32 %v3841, %v3965
        %v3978 = vmul.f32 %v3842, %v3965
        %v3979 = vmul.f32 %v3843, %v3965
        %v3980 = vmul.f32 %v3844, %v3965
        %v3981 = vmul.f32 %v3845, %v3965
        %v3982 = vmul.f32 %v3846, %v3965
        %v3983 = vmul.f32 %v3847, %v3965
        %v3984 = vmul.f32 %v3848, %v3965
        %v3985 = vmul.f32 %v3849, %v3965
        %v3986 = vmul.f32 %v3850, %v3965
        %v3987 = vmul.f32 %v3851, %v3965
        %v3988 = vmul.f32 %v3852, %v3965
        %v3989 = vmul.f32 %v3853, %v3965
        %v3990 = vmul.f32 %v3854, %v3965
        %v3991 = vmul.f32 %v3855, %v3965
        %v3992 = vmul.f32 %v3856, %v3965
        %v3993 = vmul.f32 %v3857, %v3965
        %v3994 = vmul.f32 %v3858, %v3965
        %v3995 = vmul.f32 %v3859, %v3965
        %v3996 = vmul.f32 %v3860, %v3965
        %v3997 = vmul.f32 %v3861, %v3965
        %vm3998 = vcmp.ge.f32.partialorder %v3966, 0.0
        %vm3999 = vcmp.ge.f32.partialorder %v3967, 0.0
        %vm4000 = vcmp.ge.f32.partialorder %v3968, 0.0
        %vm4001 = vcmp.ge.f32.partialorder %v3969, 0.0
        %vm4002 = vcmp.ge.f32.partialorder %v3970, 0.0
        %vm4003 = vcmp.ge.f32.partialorder %v3971, 0.0
        %vm4004 = vcmp.ge.f32.partialorder %v3972, 0.0
        %vm4005 = vcmp.ge.f32.partialorder %v3973, 0.0
        %vm4006 = vcmp.ge.f32.partialorder %v3974, 0.0
        %vm4007 = vcmp.ge.f32.partialorder %v3975, 0.0
        %vm4008 = vcmp.ge.f32.partialorder %v3976, 0.0
        %vm4009 = vcmp.ge.f32.partialorder %v3977, 0.0
        %vm4010 = vcmp.ge.f32.partialorder %v3978, 0.0
        %vm4011 = vcmp.ge.f32.partialorder %v3979, 0.0
        %vm4012 = vcmp.ge.f32.partialorder %v3980, 0.0
        %vm4013 = vcmp.ge.f32.partialorder %v3981, 0.0
        %vm4014 = vcmp.ge.f32.partialorder %v3982, 0.0
        %vm4015 = vcmp.ge.f32.partialorder %v3983, 0.0
        %vm4016 = vcmp.ge.f32.partialorder %v3984, 0.0
        %vm4017 = vcmp.ge.f32.partialorder %v3985, 0.0
        %vm4018 = vcmp.ge.f32.partialorder %v3986, 0.0
        %vm4019 = vcmp.ge.f32.partialorder %v3987, 0.0
        %vm4020 = vcmp.ge.f32.partialorder %v3988, 0.0
        %vm4021 = vcmp.ge.f32.partialorder %v3989, 0.0
        %vm4022 = vcmp.ge.f32.partialorder %v3990, 0.0
        %vm4023 = vcmp.ge.f32.partialorder %v3991, 0.0
        %vm4024 = vcmp.ge.f32.partialorder %v3992, 0.0
        %vm4025 = vcmp.ge.f32.partialorder %v3993, 0.0
        %vm4026 = vcmp.ge.f32.partialorder %v3994, 0.0
        %vm4027 = vcmp.ge.f32.partialorder %v3995, 0.0
        %vm4028 = vcmp.ge.f32.partialorder %v3996, 0.0
        %vm4029 = vcmp.ge.f32.partialorder %v3997, 0.0
        %v4030 = vmul.f32 %v3966, 0.01
        %v4031 = vmul.f32 %v3967, 0.01
        %v4032 = vmul.f32 %v3968, 0.01
        %v4033 = vmul.f32 %v3969, 0.01
        %v4034 = vmul.f32 %v3970, 0.01
        %v4035 = vmul.f32 %v3971, 0.01
        %v4036 = vmul.f32 %v3972, 0.01
        %v4037 = vmul.f32 %v3973, 0.01
        %v4038 = vmul.f32 %v3974, 0.01
        %v4039 = vmul.f32 %v3975, 0.01
        %v4040 = vmul.f32 %v3976, 0.01
        %v4041 = vmul.f32 %v3977, 0.01
        %v4042 = vmul.f32 %v3978, 0.01
        %v4043 = vmul.f32 %v3979, 0.01
        %v4044 = vmul.f32 %v3980, 0.01
        %v4045 = vmul.f32 %v3981, 0.01
        %v4046 = vmul.f32 %v3982, 0.01
        %v4047 = vmul.f32 %v3983, 0.01
        %v4048 = vmul.f32 %v3984, 0.01
        %v4049 = vmul.f32 %v3985, 0.01
        %v4050 = vmul.f32 %v3986, 0.01
        %v4051 = vmul.f32 %v3987, 0.01
        %v4052 = vmul.f32 %v3988, 0.01
        %v4053 = vmul.f32 %v3989, 0.01
        %v4054 = vmul.f32 %v3990, 0.01
        %v4055 = vmul.f32 %v3991, 0.01
        %v4056 = vmul.f32 %v3992, 0.01
        %v4057 = vmul.f32 %v3993, 0.01
        %v4058 = vmul.f32 %v3994, 0.01
        %v4059 = vmul.f32 %v3995, 0.01
        %v4060 = vmul.f32 %v3996, 0.01
        %v4061 = vmul.f32 %v3997, 0.01
        %v4062 = vsel %vm3998, %v3966, %v4030
        %v4063 = vsel %vm3999, %v3967, %v4031
        %v4064 = vsel %vm4000, %v3968, %v4032
        %v4065 = vsel %vm4001, %v3969, %v4033
        %v4066 = vsel %vm4002, %v3970, %v4034
        %v4067 = vsel %vm4003, %v3971, %v4035
        %v4068 = vsel %vm4004, %v3972, %v4036
        %v4069 = vsel %vm4005, %v3973, %v4037
        %v4070 = vsel %vm4006, %v3974, %v4038
        %v4071 = vsel %vm4007, %v3975, %v4039
        %v4072 = vsel %vm4008, %v3976, %v4040
        %v4073 = vsel %vm4009, %v3977, %v4041
        %v4074 = vsel %vm4010, %v3978, %v4042
        %v4075 = vsel %vm4011, %v3979, %v4043
        %v4076 = vsel %vm4012, %v3980, %v4044
        %v4077 = vsel %vm4013, %v3981, %v4045
        %v4078 = vsel %vm4014, %v3982, %v4046
        %v4079 = vsel %vm4015, %v3983, %v4047
        %v4080 = vsel %vm4016, %v3984, %v4048
        %v4081 = vsel %vm4017, %v3985, %v4049
        %v4082 = vsel %vm4018, %v3986, %v4050
        %v4083 = vsel %vm4019, %v3987, %v4051
        %v4084 = vsel %vm4020, %v3988, %v4052
        %v4085 = vsel %vm4021, %v3989, %v4053
        %v4086 = vsel %vm4022, %v3990, %v4054
        %v4087 = vsel %vm4023, %v3991, %v4055
        %v4088 = vsel %vm4024, %v3992, %v4056
        %v4089 = vsel %vm4025, %v3993, %v4057
        %v4090 = vsel %vm4026, %v3994, %v4058
        %v4091 = vsel %vm4027, %v3995, %v4059
        %v4092 = vsel %vm4028, %v3996, %v4060
        %v4093 = vsel %vm4029, %v3997, %v4061
        %s4094 = scalar_lea.vmem [#allocation2], 24
        %4095 = vst.msk [vmem:[%s4094 + $0x1] sm:$0xff] %vm243, %v4062
        %4096 = vst.msk [vmem:[%s4094 + $0x9] sm:$0xff] %vm243, %v4063
        %4097 = vst.msk [vmem:[%s4094 + $0x19] sm:$0xff] %vm243, %v4064
        %4098 = vst.msk [vmem:[%s4094 + $0x21] sm:$0xff] %vm243, %v4065
        %4099 = vst.msk [vmem:[%s4094 + $0x31] sm:$0xff] %vm243, %v4066
        %4100 = vst.msk [vmem:[%s4094 + $0x39] sm:$0xff] %vm243, %v4067
        %4101 = vst.msk [vmem:[%s4094 + $0x49] sm:$0xff] %vm243, %v4068
        %4102 = vst.msk [vmem:[%s4094 + $0x51] sm:$0xff] %vm243, %v4069
        %4103 = vst.msk [vmem:[%s4094 + $0x61] sm:$0xff] %vm243, %v4070
        %4104 = vst.msk [vmem:[%s4094 + $0x69] sm:$0xff] %vm243, %v4071
        %4105 = vst.msk [vmem:[%s4094 + $0x79] sm:$0xff] %vm243, %v4072
        %4106 = vst.msk [vmem:[%s4094 + $0x81] sm:$0xff] %vm243, %v4073
        %4107 = vst.msk [vmem:[%s4094 + $0x91] sm:$0xff] %vm243, %v4074
        %4108 = vst.msk [vmem:[%s4094 + $0x99] sm:$0xff] %vm243, %v4075
        %4109 = vst.msk [vmem:[%s4094 + $0xa9] sm:$0xff] %vm243, %v4076
        %4110 = vst.msk [vmem:[%s4094 + $0xb1] sm:$0xff] %vm243, %v4077
        %4111 = vst.msk [vmem:[%s4094 + $0xc1] sm:$0xff] %vm243, %v4078
        %4112 = vst.msk [vmem:[%s4094 + $0xc9] sm:$0xff] %vm243, %v4079
        %4113 = vst.msk [vmem:[%s4094 + $0xd9] sm:$0xff] %vm243, %v4080
        %4114 = vst.msk [vmem:[%s4094 + $0xe1] sm:$0xff] %vm243, %v4081
        %4115 = vst.msk [vmem:[%s4094 + $0xf1] sm:$0xff] %vm243, %v4082
        %4116 = vst.msk [vmem:[%s4094 + $0xf9] sm:$0xff] %vm243, %v4083
        %4117 = vst.msk [vmem:[%s4094 + $0x109] sm:$0xff] %vm243, %v4084
        %4118 = vst.msk [vmem:[%s4094 + $0x111] sm:$0xff] %vm243, %v4085
        %4119 = vst.msk [vmem:[%s4094 + $0x121] sm:$0xff] %vm243, %v4086
        %4120 = vst.msk [vmem:[%s4094 + $0x129] sm:$0xff] %vm243, %v4087
        %4121 = vst.msk [vmem:[%s4094 + $0x139] sm:$0xff] %vm243, %v4088
        %4122 = vst.msk [vmem:[%s4094 + $0x141] sm:$0xff] %vm243, %v4089
        %4123 = vst.msk [vmem:[%s4094 + $0x151] sm:$0xff] %vm243, %v4090
        %4124 = vst.msk [vmem:[%s4094 + $0x159] sm:$0xff] %vm243, %v4091
        %4125 = vst.msk [vmem:[%s4094 + $0x169] sm:$0xff] %vm243, %v4092
        %4126 = vst.msk [vmem:[%s4094 + $0x171] sm:$0xff] %vm243, %v4093
        %v4127 = vld [vmem:[#allocation2] sm:$0xff]
        %v4128 = vld [vmem:[#allocation2 + $0x8] sm:$0xff]
        %v4129 = vld [vmem:[#allocation2 + $0x18] sm:$0xff]
        %v4130 = vld [vmem:[#allocation2 + $0x20] sm:$0xff]
        %v4131 = vld [vmem:[#allocation2 + $0x30] sm:$0xff]
        %v4132 = vld [vmem:[#allocation2 + $0x38] sm:$0xff]
        %v4133 = vld [vmem:[#allocation2 + $0x48] sm:$0xff]
        %v4134 = vld [vmem:[#allocation2 + $0x50] sm:$0xff]
        %v4135 = vld [vmem:[#allocation2 + $0x60] sm:$0xff]
        %v4136 = vld [vmem:[#allocation2 + $0x68] sm:$0xff]
        %v4137 = vld [vmem:[#allocation2 + $0x78] sm:$0xff]
        %v4138 = vld [vmem:[#allocation2 + $0x80] sm:$0xff]
        %v4139 = vld [vmem:[#allocation2 + $0x90] sm:$0xff]
        %v4140 = vld [vmem:[#allocation2 + $0x98] sm:$0xff]
        %v4141 = vld [vmem:[#allocation2 + $0xa8] sm:$0xff]
        %v4142 = vld [vmem:[#allocation2 + $0xb0] sm:$0xff]
        %v4143 = vld [vmem:[#allocation2 + $0xc0] sm:$0xff]
        %v4144 = vld [vmem:[#allocation2 + $0xc8] sm:$0xff]
        %v4145 = vld [vmem:[#allocation2 + $0xd8] sm:$0xff]
        %v4146 = vld [vmem:[#allocation2 + $0xe0] sm:$0xff]
        %v4147 = vld [vmem:[#allocation2 + $0xf0] sm:$0xff]
        %v4148 = vld [vmem:[#allocation2 + $0xf8] sm:$0xff]
        %v4149 = vld [vmem:[#allocation2 + $0x108] sm:$0xff]
        %v4150 = vld [vmem:[#allocation2 + $0x110] sm:$0xff]
        %v4151 = vld [vmem:[#allocation2 + $0x120] sm:$0xff]
        %v4152 = vld [vmem:[#allocation2 + $0x128] sm:$0xff]
        %v4153 = vld [vmem:[#allocation2 + $0x138] sm:$0xff]
        %v4154 = vld [vmem:[#allocation2 + $0x140] sm:$0xff]
        %v4155 = vld [vmem:[#allocation2 + $0x150] sm:$0xff]
        %v4156 = vld [vmem:[#allocation2 + $0x158] sm:$0xff]
        %v4157 = vld [vmem:[#allocation2 + $0x168] sm:$0xff]
        %v4158 = vld [vmem:[#allocation2 + $0x170] sm:$0xff]
        %v4159 = vld [vmem:[#allocation2 + $0x1] sm:$0xff]
        %v4160 = vld [vmem:[#allocation2 + $0x9] sm:$0xff]
        %v4161 = vld [vmem:[#allocation2 + $0x19] sm:$0xff]
        %v4162 = vld [vmem:[#allocation2 + $0x21] sm:$0xff]
        %v4163 = vld [vmem:[#allocation2 + $0x31] sm:$0xff]
        %v4164 = vld [vmem:[#allocation2 + $0x39] sm:$0xff]
        %v4165 = vld [vmem:[#allocation2 + $0x49] sm:$0xff]
        %v4166 = vld [vmem:[#allocation2 + $0x51] sm:$0xff]
        %v4167 = vld [vmem:[#allocation2 + $0x61] sm:$0xff]
        %v4168 = vld [vmem:[#allocation2 + $0x69] sm:$0xff]
        %v4169 = vld [vmem:[#allocation2 + $0x79] sm:$0xff]
        %v4170 = vld [vmem:[#allocation2 + $0x81] sm:$0xff]
        %v4171 = vld [vmem:[#allocation2 + $0x91] sm:$0xff]
        %v4172 = vld [vmem:[#allocation2 + $0x99] sm:$0xff]
        %v4173 = vld [vmem:[#allocation2 + $0xa9] sm:$0xff]
        %v4174 = vld [vmem:[#allocation2 + $0xb1] sm:$0xff]
        %v4175 = vld [vmem:[#allocation2 + $0xc1] sm:$0xff]
        %v4176 = vld [vmem:[#allocation2 + $0xc9] sm:$0xff]
        %v4177 = vld [vmem:[#allocation2 + $0xd9] sm:$0xff]
        %v4178 = vld [vmem:[#allocation2 + $0xe1] sm:$0xff]
        %v4179 = vld [vmem:[#allocation2 + $0xf1] sm:$0xff]
        %v4180 = vld [vmem:[#allocation2 + $0xf9] sm:$0xff]
        %v4181 = vld [vmem:[#allocation2 + $0x109] sm:$0xff]
        %v4182 = vld [vmem:[#allocation2 + $0x111] sm:$0xff]
        %v4183 = vld [vmem:[#allocation2 + $0x121] sm:$0xff]
        %v4184 = vld [vmem:[#allocation2 + $0x129] sm:$0xff]
        %v4185 = vld [vmem:[#allocation2 + $0x139] sm:$0xff]
        %v4186 = vld [vmem:[#allocation2 + $0x141] sm:$0xff]
        %v4187 = vld [vmem:[#allocation2 + $0x151] sm:$0xff]
        %v4188 = vld [vmem:[#allocation2 + $0x159] sm:$0xff]
        %v4189 = vld [vmem:[#allocation2 + $0x169] sm:$0xff]
        %v4190 = vld [vmem:[#allocation2 + $0x171] sm:$0xff]
        %v4192 = vsel %vm243, %v4159, 0
        %v4195 = vsel %vm243, %v4160, 0
        %v4198 = vsel %vm243, %v4161, 0
        %v4201 = vsel %vm243, %v4162, 0
        %v4204 = vsel %vm243, %v4163, 0
        %v4207 = vsel %vm243, %v4164, 0
        %v4210 = vsel %vm243, %v4165, 0
        %v4213 = vsel %vm243, %v4166, 0
        %v4216 = vsel %vm243, %v4167, 0
        %v4219 = vsel %vm243, %v4168, 0
        %v4222 = vsel %vm243, %v4169, 0
        %v4225 = vsel %vm243, %v4170, 0
        %v4228 = vsel %vm243, %v4171, 0
        %v4231 = vsel %vm243, %v4172, 0
        %v4234 = vsel %vm243, %v4173, 0
        %v4237 = vsel %vm243, %v4174, 0
        %v4240 = vsel %vm243, %v4175, 0
        %v4243 = vsel %vm243, %v4176, 0
        %v4246 = vsel %vm243, %v4177, 0
        %v4249 = vsel %vm243, %v4178, 0
        %v4252 = vsel %vm243, %v4179, 0
        %v4255 = vsel %vm243, %v4180, 0
        %v4258 = vsel %vm243, %v4181, 0
        %v4261 = vsel %vm243, %v4182, 0
        %v4264 = vsel %vm243, %v4183, 0
        %v4267 = vsel %vm243, %v4184, 0
        %v4270 = vsel %vm243, %v4185, 0
        %v4273 = vsel %vm243, %v4186, 0
        %v4276 = vsel %vm243, %v4187, 0
        %v4279 = vsel %vm243, %v4188, 0
        %v4282 = vsel %vm243, %v4189, 0
        %v4285 = vsel %vm243, %v4190, 0
        %4287 = vmatprep.subr.mxu0 0.0
        %4288 = vmatpush1.msra.mxu0 %v233
        %4289 = vmatprep.subr.mxu0 0.0
        %4290 = vmatpush1.msra.mxu0 0.0
        %4291 = vmatprep.subr.mxu0 0.0
        %4292 = vmatpush1.msra.mxu0 0.0
        %4293 = vmatprep.subr.mxu0 0.0
        %4294 = vmatpush1.msra.mxu0 0.0
        %4295 = vmatprep.subr.mxu0 0.0
        %4296 = vmatpush1.msra.mxu0 0.0
        %4297 = vmatprep.subr.mxu0 0.0
        %4298 = vmatpush1.msra.mxu0 0.0
        %4299 = vmatprep.subr.mxu0 0.0
        %4300 = vmatpush1.msra.mxu0 0.0
        %4301 = vmatprep.subr.mxu0 0.0
        %4302 = vmatpush1.msra.mxu0 0.0
        %4303 = vmatprep.subr.mxu0 0.0
        %4304 = vmatpush1.msra.mxu0 0.0
        %4305 = vmatprep.subr.mxu0 0.0
        %4306 = vmatpush1.msra.mxu0 0.0
        %4307 = vmatprep.subr.mxu0 0.0
        %4308 = vmatpush1.msra.mxu0 0.0
        %4309 = vmatprep.subr.mxu0 0.0
        %4310 = vmatpush1.msra.mxu0 0.0
        %4311 = vmatprep.subr.mxu0 0.0
        %4312 = vmatpush1.msra.mxu0 0.0
        %4313 = vmatprep.subr.mxu0 0.0
        %4314 = vmatpush1.msra.mxu0 0.0
        %4315 = vmatprep.subr.mxu0 0.0
        %4316 = vmatpush1.msra.mxu0 0.0
        %4317 = vmatprep.subr.mxu0 0.0
        %4318 = vmatpush1.msra.mxu0 0.0
        %4319 = vmatprep.subr.mxu0 0.0
        %4320 = vmatpush1.msra.mxu0 0.0
        %4321 = vmatprep.subr.mxu0 0.0
        %4322 = vmatpush1.msra.mxu0 0.0
        %4323 = vmatprep.subr.mxu0 0.0
        %4324 = vmatpush1.msra.mxu0 0.0
        %4325 = vmatprep.subr.mxu0 0.0
        %4326 = vmatpush1.msra.mxu0 0.0
        %4327 = vmatprep.subr.mxu0 0.0
        %4328 = vmatpush1.msra.mxu0 0.0
        %4329 = vmatprep.subr.mxu0 0.0
        %4330 = vmatpush1.msra.mxu0 0.0
        %4331 = vmatprep.subr.mxu0 0.0
        %4332 = vmatpush1.msra.mxu0 0.0
        %4333 = vmatprep.subr.mxu0 0.0
        %4334 = vmatpush1.msra.mxu0 0.0
        %4335 = vmatprep.subr.mxu0 0.0
        %4336 = vmatpush1.msra.mxu0 0.0
        %4337 = vmatprep.subr.mxu0 0.0
        %4338 = vmatpush1.msra.mxu0 0.0
        %4339 = vmatprep.subr.mxu0 0.0
        %4340 = vmatpush1.msra.mxu0 0.0
        %4341 = vmatprep.subr.mxu0 0.0
        %4342 = vmatpush1.msra.mxu0 0.0
        %4343 = vmatprep.subr.mxu0 0.0
        %4344 = vmatpush1.msra.mxu0 0.0
        %4345 = vmatprep.subr.mxu0 0.0
        %4346 = vmatpush1.msra.mxu0 0.0
        %4347 = vmatprep.subr.mxu0 0.0
        %4348 = vmatpush1.msra.mxu0 0.0
        %4349 = vmatprep.subr.mxu0 0.0
        %4350 = vmatpush1.msra.mxu0 0.0
        %4351 = vmatprep.mubr.f32.mxu0 0.0
        %4352 = vmatmul.mubr.f32.gmra.mrb[0].mxu0 %v4192
        %v4353 = vpop.f32.mrb[0].mxu0
        %v4354 = vadd.f32 0.0, %v4353
        %v4355 = vpop.f32.mrb[0].mxu0
        %4356 = vmatprep.mubr.f32.mxu0 0.0
        %4357 = vmatmul.mubr.f32.gmra.mrb[0].mxu0 %v4195
        %v4358 = vpop.f32.mrb[0].mxu0
        %v4359 = vadd.f32 0.0, %v4358
        %v4360 = vpop.f32.mrb[0].mxu0
        %4361 = vmatprep.mubr.f32.mxu0 0.0
        %4362 = vmatmul.mubr.f32.gmra.mrb[0].mxu0 %v4198
        %v4363 = vpop.f32.mrb[0].mxu0
        %v4364 = vadd.f32 0.0, %v4363
        %v4365 = vpop.f32.mrb[0].mxu0
        %4366 = vmatprep.mubr.f32.mxu0 0.0
        %4367 = vmatmul.mubr.f32.gmra.mrb[0].mxu0 %v4201
        %v4368 = vpop.f32.mrb[0].mxu0
        %v4369 = vadd.f32 0.0, %v4368
        %v4370 = vpop.f32.mrb[0].mxu0
        %4371 = vmatprep.mubr.f32.mxu0 0.0
        %4372 = vmatmul.mubr.f32.gmra.mrb[0].mxu0 %v4204
        %v4373 = vpop.f32.mrb[0].mxu0
        %v4374 = vadd.f32 0.0, %v4373
        %v4375 = vpop.f32.mrb[0].mxu0
        %4376 = vmatprep.mubr.f32.mxu0 0.0
        %4377 = vmatmul.mubr.f32.gmra.mrb[0].mxu0 %v4207
        %v4378 = vpop.f32.mrb[0].mxu0
        %v4379 = vadd.f32 0.0, %v4378
        %v4380 = vpop.f32.mrb[0].mxu0
        %4381 = vmatprep.mubr.f32.mxu0 0.0
        %4382 = vmatmul.mubr.f32.gmra.mrb[0].mxu0 %v4210
        %v4383 = vpop.f32.mrb[0].mxu0
        %v4384 = vadd.f32 0.0, %v4383
        %v4385 = vpop.f32.mrb[0].mxu0
        %4386 = vmatprep.mubr.f32.mxu0 0.0
        %4387 = vmatmul.mubr.f32.gmra.mrb[0].mxu0 %v4213
        %v4388 = vpop.f32.mrb[0].mxu0
        %v4389 = vadd.f32 0.0, %v4388
        %v4390 = vpop.f32.mrb[0].mxu0
        %4391 = vmatprep.mubr.f32.mxu0 0.0
        %4392 = vmatmul.mubr.f32.gmra.mrb[0].mxu0 %v4216
        %v4393 = vpop.f32.mrb[0].mxu0
        %v4394 = vadd.f32 0.0, %v4393
        %v4395 = vpop.f32.mrb[0].mxu0
        %4396 = vmatprep.mubr.f32.mxu0 0.0
        %4397 = vmatmul.mubr.f32.gmra.mrb[0].mxu0 %v4219
        %v4398 = vpop.f32.mrb[0].mxu0
        %v4399 = vadd.f32 0.0, %v4398
        %v4400 = vpop.f32.mrb[0].mxu0
        %4401 = vmatprep.mubr.f32.mxu0 0.0
        %4402 = vmatmul.mubr.f32.gmra.mrb[0].mxu0 %v4222
        %v4403 = vpop.f32.mrb[0].mxu0
        %v4404 = vadd.f32 0.0, %v4403
        %v4405 = vpop.f32.mrb[0].mxu0
        %4406 = vmatprep.mubr.f32.mxu0 0.0
        %4407 = vmatmul.mubr.f32.gmra.mrb[0].mxu0 %v4225
        %v4408 = vpop.f32.mrb[0].mxu0
        %v4409 = vadd.f32 0.0, %v4408
        %v4410 = vpop.f32.mrb[0].mxu0
        %4411 = vmatprep.mubr.f32.mxu0 0.0
        %4412 = vmatmul.mubr.f32.gmra.mrb[0].mxu0 %v4228
        %v4413 = vpop.f32.mrb[0].mxu0
        %v4414 = vadd.f32 0.0, %v4413
        %v4415 = vpop.f32.mrb[0].mxu0
        %4416 = vmatprep.mubr.f32.mxu0 0.0
        %4417 = vmatmul.mubr.f32.gmra.mrb[0].mxu0 %v4231
        %v4418 = vpop.f32.mrb[0].mxu0
        %v4419 = vadd.f32 0.0, %v4418
        %v4420 = vpop.f32.mrb[0].mxu0
        %4421 = vmatprep.mubr.f32.mxu0 0.0
        %4422 = vmatmul.mubr.f32.gmra.mrb[0].mxu0 %v4234
        %v4423 = vpop.f32.mrb[0].mxu0
        %v4424 = vadd.f32 0.0, %v4423
        %v4425 = vpop.f32.mrb[0].mxu0
        %4426 = vmatprep.mubr.f32.mxu0 0.0
        %4427 = vmatmul.mubr.f32.gmra.mrb[0].mxu0 %v4237
        %v4428 = vpop.f32.mrb[0].mxu0
        %v4429 = vadd.f32 0.0, %v4428
        %v4430 = vpop.f32.mrb[0].mxu0
        %4431 = vmatprep.mubr.f32.mxu0 0.0
        %4432 = vmatmul.mubr.f32.gmra.mrb[0].mxu0 %v4240
        %v4433 = vpop.f32.mrb[0].mxu0
        %v4434 = vadd.f32 0.0, %v4433
        %v4435 = vpop.f32.mrb[0].mxu0
        %4436 = vmatprep.mubr.f32.mxu0 0.0
        %4437 = vmatmul.mubr.f32.gmra.mrb[0].mxu0 %v4243
        %v4438 = vpop.f32.mrb[0].mxu0
        %v4439 = vadd.f32 0.0, %v4438
        %v4440 = vpop.f32.mrb[0].mxu0
        %4441 = vmatprep.mubr.f32.mxu0 0.0
        %4442 = vmatmul.mubr.f32.gmra.mrb[0].mxu0 %v4246
        %v4443 = vpop.f32.mrb[0].mxu0
        %v4444 = vadd.f32 0.0, %v4443
        %v4445 = vpop.f32.mrb[0].mxu0
        %4446 = vmatprep.mubr.f32.mxu0 0.0
        %4447 = vmatmul.mubr.f32.gmra.mrb[0].mxu0 %v4249
        %v4448 = vpop.f32.mrb[0].mxu0
        %v4449 = vadd.f32 0.0, %v4448
        %v4450 = vpop.f32.mrb[0].mxu0
        %4451 = vmatprep.mubr.f32.mxu0 0.0
        %4452 = vmatmul.mubr.f32.gmra.mrb[0].mxu0 %v4252
        %v4453 = vpop.f32.mrb[0].mxu0
        %v4454 = vadd.f32 0.0, %v4453
        %v4455 = vpop.f32.mrb[0].mxu0
        %4456 = vmatprep.mubr.f32.mxu0 0.0
        %4457 = vmatmul.mubr.f32.gmra.mrb[0].mxu0 %v4255
        %v4458 = vpop.f32.mrb[0].mxu0
        %v4459 = vadd.f32 0.0, %v4458
        %v4460 = vpop.f32.mrb[0].mxu0
        %4461 = vmatprep.mubr.f32.mxu0 0.0
        %4462 = vmatmul.mubr.f32.gmra.mrb[0].mxu0 %v4258
        %v4463 = vpop.f32.mrb[0].mxu0
        %v4464 = vadd.f32 0.0, %v4463
        %v4465 = vpop.f32.mrb[0].mxu0
        %4466 = vmatprep.mubr.f32.mxu0 0.0
        %4467 = vmatmul.mubr.f32.gmra.mrb[0].mxu0 %v4261
        %v4468 = vpop.f32.mrb[0].mxu0
        %v4469 = vadd.f32 0.0, %v4468
        %v4470 = vpop.f32.mrb[0].mxu0
        %4471 = vmatprep.mubr.f32.mxu0 0.0
        %4472 = vmatmul.mubr.f32.gmra.mrb[0].mxu0 %v4264
        %v4473 = vpop.f32.mrb[0].mxu0
        %v4474 = vadd.f32 0.0, %v4473
        %v4475 = vpop.f32.mrb[0].mxu0
        %4476 = vmatprep.mubr.f32.mxu0 0.0
        %4477 = vmatmul.mubr.f32.gmra.mrb[0].mxu0 %v4267
        %v4478 = vpop.f32.mrb[0].mxu0
        %v4479 = vadd.f32 0.0, %v4478
        %v4480 = vpop.f32.mrb[0].mxu0
        %4481 = vmatprep.mubr.f32.mxu0 0.0
        %4482 = vmatmul.mubr.f32.gmra.mrb[0].mxu0 %v4270
        %v4483 = vpop.f32.mrb[0].mxu0
        %v4484 = vadd.f32 0.0, %v4483
        %v4485 = vpop.f32.mrb[0].mxu0
        %4486 = vmatprep.mubr.f32.mxu0 0.0
        %4487 = vmatmul.mubr.f32.gmra.mrb[0].mxu0 %v4273
        %v4488 = vpop.f32.mrb[0].mxu0
        %v4489 = vadd.f32 0.0, %v4488
        %v4490 = vpop.f32.mrb[0].mxu0
        %4491 = vmatprep.mubr.f32.mxu0 0.0
        %4492 = vmatmul.mubr.f32.gmra.mrb[0].mxu0 %v4276
        %v4493 = vpop.f32.mrb[0].mxu0
        %v4494 = vadd.f32 0.0, %v4493
        %v4495 = vpop.f32.mrb[0].mxu0
        %4496 = vmatprep.mubr.f32.mxu0 0.0
        %4497 = vmatmul.mubr.f32.gmra.mrb[0].mxu0 %v4279
        %v4498 = vpop.f32.mrb[0].mxu0
        %v4499 = vadd.f32 0.0, %v4498
        %v4500 = vpop.f32.mrb[0].mxu0
        %4501 = vmatprep.mubr.f32.mxu0 0.0
        %4502 = vmatmul.mubr.f32.gmra.mrb[0].mxu0 %v4282
        %v4503 = vpop.f32.mrb[0].mxu0
        %v4504 = vadd.f32 0.0, %v4503
        %v4505 = vpop.f32.mrb[0].mxu0
        %4506 = vmatprep.mubr.f32.mxu0 0.0
        %4507 = vmatmul.mubr.f32.gmra.mrb[0].mxu0 %v4285
        %v4508 = vpop.f32.mrb[0].mxu0
        %v4509 = vadd.f32 0.0, %v4508
        %v4510 = vpop.f32.mrb[0].mxu0
        %4511 = vdwg.mxu0
        %v4513 = vsel %vm243, %v4127, 0
        %v4516 = vsel %vm243, %v4128, 0
        %v4519 = vsel %vm243, %v4129, 0
        %v4522 = vsel %vm243, %v4130, 0
        %v4525 = vsel %vm243, %v4131, 0
        %v4528 = vsel %vm243, %v4132, 0
        %v4531 = vsel %vm243, %v4133, 0
        %v4534 = vsel %vm243, %v4134, 0
        %v4537 = vsel %vm243, %v4135, 0
        %v4540 = vsel %vm243, %v4136, 0
        %v4543 = vsel %vm243, %v4137, 0
        %v4546 = vsel %vm243, %v4138, 0
        %v4549 = vsel %vm243, %v4139, 0
        %v4552 = vsel %vm243, %v4140, 0
        %v4555 = vsel %vm243, %v4141, 0
        %v4558 = vsel %vm243, %v4142, 0
        %v4561 = vsel %vm243, %v4143, 0
        %v4564 = vsel %vm243, %v4144, 0
        %v4567 = vsel %vm243, %v4145, 0
        %v4570 = vsel %vm243, %v4146, 0
        %v4573 = vsel %vm243, %v4147, 0
        %v4576 = vsel %vm243, %v4148, 0
        %v4579 = vsel %vm243, %v4149, 0
        %v4582 = vsel %vm243, %v4150, 0
        %v4585 = vsel %vm243, %v4151, 0
        %v4588 = vsel %vm243, %v4152, 0
        %v4591 = vsel %vm243, %v4153, 0
        %v4594 = vsel %vm243, %v4154, 0
        %v4597 = vsel %vm243, %v4155, 0
        %v4600 = vsel %vm243, %v4156, 0
        %v4603 = vsel %vm243, %v4157, 0
        %v4606 = vsel %vm243, %v4158, 0
        %4608 = vmatprep.subr.mxu0 0.0
        %4609 = vmatpush1.msra.mxu0 %v232
        %4610 = vmatprep.subr.mxu0 0.0
        %4611 = vmatpush1.msra.mxu0 0.0
        %4612 = vmatprep.subr.mxu0 0.0
        %4613 = vmatpush1.msra.mxu0 0.0
        %4614 = vmatprep.subr.mxu0 0.0
        %4615 = vmatpush1.msra.mxu0 0.0
        %4616 = vmatprep.subr.mxu0 0.0
        %4617 = vmatpush1.msra.mxu0 0.0
        %4618 = vmatprep.subr.mxu0 0.0
        %4619 = vmatpush1.msra.mxu0 0.0
        %4620 = vmatprep.subr.mxu0 0.0
        %4621 = vmatpush1.msra.mxu0 0.0
        %4622 = vmatprep.subr.mxu0 0.0
        %4623 = vmatpush1.msra.mxu0 0.0
        %4624 = vmatprep.subr.mxu0 0.0
        %4625 = vmatpush1.msra.mxu0 0.0
        %4626 = vmatprep.subr.mxu0 0.0
        %4627 = vmatpush1.msra.mxu0 0.0
        %4628 = vmatprep.subr.mxu0 0.0
        %4629 = vmatpush1.msra.mxu0 0.0
        %4630 = vmatprep.subr.mxu0 0.0
        %4631 = vmatpush1.msra.mxu0 0.0
        %4632 = vmatprep.subr.mxu0 0.0
        %4633 = vmatpush1.msra.mxu0 0.0
        %4634 = vmatprep.subr.mxu0 0.0
        %4635 = vmatpush1.msra.mxu0 0.0
        %4636 = vmatprep.subr.mxu0 0.0
        %4637 = vmatpush1.msra.mxu0 0.0
        %4638 = vmatprep.subr.mxu0 0.0
        %4639 = vmatpush1.msra.mxu0 0.0
        %4640 = vmatprep.subr.mxu0 0.0
        %4641 = vmatpush1.msra.mxu0 0.0
        %4642 = vmatprep.subr.mxu0 0.0
        %4643 = vmatpush1.msra.mxu0 0.0
        %4644 = vmatprep.subr.mxu0 0.0
        %4645 = vmatpush1.msra.mxu0 0.0
        %4646 = vmatprep.subr.mxu0 0.0
        %4647 = vmatpush1.msra.mxu0 0.0
        %4648 = vmatprep.subr.mxu0 0.0
        %4649 = vmatpush1.msra.mxu0 0.0
        %4650 = vmatprep.subr.mxu0 0.0
        %4651 = vmatpush1.msra.mxu0 0.0
        %4652 = vmatprep.subr.mxu0 0.0
        %4653 = vmatpush1.msra.mxu0 0.0
        %4654 = vmatprep.subr.mxu0 0.0
        %4655 = vmatpush1.msra.mxu0 0.0
        %4656 = vmatprep.subr.mxu0 0.0
        %4657 = vmatpush1.msra.mxu0 0.0
        %4658 = vmatprep.subr.mxu0 0.0
        %4659 = vmatpush1.msra.mxu0 0.0
        %4660 = vmatprep.subr.mxu0 0.0
        %4661 = vmatpush1.msra.mxu0 0.0
        %4662 = vmatprep.subr.mxu0 0.0
        %4663 = vmatpush1.msra.mxu0 0.0
        %4664 = vmatprep.subr.mxu0 0.0
        %4665 = vmatpush1.msra.mxu0 0.0
        %4666 = vmatprep.subr.mxu0 0.0
        %4667 = vmatpush1.msra.mxu0 0.0
        %4668 = vmatprep.subr.mxu0 0.0
        %4669 = vmatpush1.msra.mxu0 0.0
        %4670 = vmatprep.subr.mxu0 0.0
        %4671 = vmatpush1.msra.mxu0 0.0
        %4672 = vmatprep.mubr.f32.mxu0 0.0
        %4673 = vmatmul.mubr.f32.gmra.mrb[0].mxu0 %v4513
        %v4674 = vpop.f32.mrb[0].mxu0
        %v4675 = vadd.f32 %v4354, %v4674
        %v4676 = vpop.f32.mrb[0].mxu0
        %4677 = vmatprep.mubr.f32.mxu0 0.0
        %4678 = vmatmul.mubr.f32.gmra.mrb[0].mxu0 %v4516
        %v4679 = vpop.f32.mrb[0].mxu0
        %v4680 = vadd.f32 %v4359, %v4679
        %v4681 = vpop.f32.mrb[0].mxu0
        %4682 = vmatprep.mubr.f32.mxu0 0.0
        %4683 = vmatmul.mubr.f32.gmra.mrb[0].mxu0 %v4519
        %v4684 = vpop.f32.mrb[0].mxu0
        %v4685 = vadd.f32 %v4364, %v4684
        %v4686 = vpop.f32.mrb[0].mxu0
        %4687 = vmatprep.mubr.f32.mxu0 0.0
        %4688 = vmatmul.mubr.f32.gmra.mrb[0].mxu0 %v4522
        %v4689 = vpop.f32.mrb[0].mxu0
        %v4690 = vadd.f32 %v4369, %v4689
        %v4691 = vpop.f32.mrb[0].mxu0
        %4692 = vmatprep.mubr.f32.mxu0 0.0
        %4693 = vmatmul.mubr.f32.gmra.mrb[0].mxu0 %v4525
        %v4694 = vpop.f32.mrb[0].mxu0
        %v4695 = vadd.f32 %v4374, %v4694
        %v4696 = vpop.f32.mrb[0].mxu0
        %4697 = vmatprep.mubr.f32.mxu0 0.0
        %4698 = vmatmul.mubr.f32.gmra.mrb[0].mxu0 %v4528
        %v4699 = vpop.f32.mrb[0].mxu0
        %v4700 = vadd.f32 %v4379, %v4699
        %v4701 = vpop.f32.mrb[0].mxu0
        %4702 = vmatprep.mubr.f32.mxu0 0.0
        %4703 = vmatmul.mubr.f32.gmra.mrb[0].mxu0 %v4531
        %v4704 = vpop.f32.mrb[0].mxu0
        %v4705 = vadd.f32 %v4384, %v4704
        %v4706 = vpop.f32.mrb[0].mxu0
        %4707 = vmatprep.mubr.f32.mxu0 0.0
        %4708 = vmatmul.mubr.f32.gmra.mrb[0].mxu0 %v4534
        %v4709 = vpop.f32.mrb[0].mxu0
        %v4710 = vadd.f32 %v4389, %v4709
        %v4711 = vpop.f32.mrb[0].mxu0
        %4712 = vmatprep.mubr.f32.mxu0 0.0
        %4713 = vmatmul.mubr.f32.gmra.mrb[0].mxu0 %v4537
        %v4714 = vpop.f32.mrb[0].mxu0
        %v4715 = vadd.f32 %v4394, %v4714
        %v4716 = vpop.f32.mrb[0].mxu0
        %4717 = vmatprep.mubr.f32.mxu0 0.0
        %4718 = vmatmul.mubr.f32.gmra.mrb[0].mxu0 %v4540
        %v4719 = vpop.f32.mrb[0].mxu0
        %v4720 = vadd.f32 %v4399, %v4719
        %v4721 = vpop.f32.mrb[0].mxu0
        %4722 = vmatprep.mubr.f32.mxu0 0.0
        %4723 = vmatmul.mubr.f32.gmra.mrb[0].mxu0 %v4543
        %v4724 = vpop.f32.mrb[0].mxu0
        %v4725 = vadd.f32 %v4404, %v4724
        %v4726 = vpop.f32.mrb[0].mxu0
        %4727 = vmatprep.mubr.f32.mxu0 0.0
        %4728 = vmatmul.mubr.f32.gmra.mrb[0].mxu0 %v4546
        %v4729 = vpop.f32.mrb[0].mxu0
        %v4730 = vadd.f32 %v4409, %v4729
        %v4731 = vpop.f32.mrb[0].mxu0
        %4732 = vmatprep.mubr.f32.mxu0 0.0
        %4733 = vmatmul.mubr.f32.gmra.mrb[0].mxu0 %v4549
        %v4734 = vpop.f32.mrb[0].mxu0
        %v4735 = vadd.f32 %v4414, %v4734
        %v4736 = vpop.f32.mrb[0].mxu0
        %4737 = vmatprep.mubr.f32.mxu0 0.0
        %4738 = vmatmul.mubr.f32.gmra.mrb[0].mxu0 %v4552
        %v4739 = vpop.f32.mrb[0].mxu0
        %v4740 = vadd.f32 %v4419, %v4739
        %v4741 = vpop.f32.mrb[0].mxu0
        %4742 = vmatprep.mubr.f32.mxu0 0.0
        %4743 = vmatmul.mubr.f32.gmra.mrb[0].mxu0 %v4555
        %v4744 = vpop.f32.mrb[0].mxu0
        %v4745 = vadd.f32 %v4424, %v4744
        %v4746 = vpop.f32.mrb[0].mxu0
        %4747 = vmatprep.mubr.f32.mxu0 0.0
        %4748 = vmatmul.mubr.f32.gmra.mrb[0].mxu0 %v4558
        %v4749 = vpop.f32.mrb[0].mxu0
        %v4750 = vadd.f32 %v4429, %v4749
        %v4751 = vpop.f32.mrb[0].mxu0
        %4752 = vmatprep.mubr.f32.mxu0 0.0
        %4753 = vmatmul.mubr.f32.gmra.mrb[0].mxu0 %v4561
        %v4754 = vpop.f32.mrb[0].mxu0
        %v4755 = vadd.f32 %v4434, %v4754
        %v4756 = vpop.f32.mrb[0].mxu0
        %4757 = vmatprep.mubr.f32.mxu0 0.0
        %4758 = vmatmul.mubr.f32.gmra.mrb[0].mxu0 %v4564
        %v4759 = vpop.f32.mrb[0].mxu0
        %v4760 = vadd.f32 %v4439, %v4759
        %v4761 = vpop.f32.mrb[0].mxu0
        %4762 = vmatprep.mubr.f32.mxu0 0.0
        %4763 = vmatmul.mubr.f32.gmra.mrb[0].mxu0 %v4567
        %v4764 = vpop.f32.mrb[0].mxu0
        %v4765 = vadd.f32 %v4444, %v4764
        %v4766 = vpop.f32.mrb[0].mxu0
        %4767 = vmatprep.mubr.f32.mxu0 0.0
        %4768 = vmatmul.mubr.f32.gmra.mrb[0].mxu0 %v4570
        %v4769 = vpop.f32.mrb[0].mxu0
        %v4770 = vadd.f32 %v4449, %v4769
        %v4771 = vpop.f32.mrb[0].mxu0
        %4772 = vmatprep.mubr.f32.mxu0 0.0
        %4773 = vmatmul.mubr.f32.gmra.mrb[0].mxu0 %v4573
        %v4774 = vpop.f32.mrb[0].mxu0
        %v4775 = vadd.f32 %v4454, %v4774
        %v4776 = vpop.f32.mrb[0].mxu0
        %4777 = vmatprep.mubr.f32.mxu0 0.0
        %4778 = vmatmul.mubr.f32.gmra.mrb[0].mxu0 %v4576
        %v4779 = vpop.f32.mrb[0].mxu0
        %v4780 = vadd.f32 %v4459, %v4779
        %v4781 = vpop.f32.mrb[0].mxu0
        %4782 = vmatprep.mubr.f32.mxu0 0.0
        %4783 = vmatmul.mubr.f32.gmra.mrb[0].mxu0 %v4579
        %v4784 = vpop.f32.mrb[0].mxu0
        %v4785 = vadd.f32 %v4464, %v4784
        %v4786 = vpop.f32.mrb[0].mxu0
        %4787 = vmatprep.mubr.f32.mxu0 0.0
        %4788 = vmatmul.mubr.f32.gmra.mrb[0].mxu0 %v4582
        %v4789 = vpop.f32.mrb[0].mxu0
        %v4790 = vadd.f32 %v4469, %v4789
        %v4791 = vpop.f32.mrb[0].mxu0
        %4792 = vmatprep.mubr.f32.mxu0 0.0
        %4793 = vmatmul.mubr.f32.gmra.mrb[0].mxu0 %v4585
        %v4794 = vpop.f32.mrb[0].mxu0
        %v4795 = vadd.f32 %v4474, %v4794
        %v4796 = vpop.f32.mrb[0].mxu0
        %4797 = vmatprep.mubr.f32.mxu0 0.0
        %4798 = vmatmul.mubr.f32.gmra.mrb[0].mxu0 %v4588
        %v4799 = vpop.f32.mrb[0].mxu0
        %v4800 = vadd.f32 %v4479, %v4799
        %v4801 = vpop.f32.mrb[0].mxu0
        %4802 = vmatprep.mubr.f32.mxu0 0.0
        %4803 = vmatmul.mubr.f32.gmra.mrb[0].mxu0 %v4591
        %v4804 = vpop.f32.mrb[0].mxu0
        %v4805 = vadd.f32 %v4484, %v4804
        %v4806 = vpop.f32.mrb[0].mxu0
        %4807 = vmatprep.mubr.f32.mxu0 0.0
        %4808 = vmatmul.mubr.f32.gmra.mrb[0].mxu0 %v4594
        %v4809 = vpop.f32.mrb[0].mxu0
        %v4810 = vadd.f32 %v4489, %v4809
        %v4811 = vpop.f32.mrb[0].mxu0
        %4812 = vmatprep.mubr.f32.mxu0 0.0
        %4813 = vmatmul.mubr.f32.gmra.mrb[0].mxu0 %v4597
        %v4814 = vpop.f32.mrb[0].mxu0
        %v4815 = vadd.f32 %v4494, %v4814
        %v4816 = vpop.f32.mrb[0].mxu0
        %4817 = vmatprep.mubr.f32.mxu0 0.0
        %4818 = vmatmul.mubr.f32.gmra.mrb[0].mxu0 %v4600
        %v4819 = vpop.f32.mrb[0].mxu0
        %v4820 = vadd.f32 %v4499, %v4819
        %v4821 = vpop.f32.mrb[0].mxu0
        %4822 = vmatprep.mubr.f32.mxu0 0.0
        %4823 = vmatmul.mubr.f32.gmra.mrb[0].mxu0 %v4603
        %v4824 = vpop.f32.mrb[0].mxu0
        %v4825 = vadd.f32 %v4504, %v4824
        %v4826 = vpop.f32.mrb[0].mxu0
        %4827 = vmatprep.mubr.f32.mxu0 0.0
        %4828 = vmatmul.mubr.f32.gmra.mrb[0].mxu0 %v4606
        %v4829 = vpop.f32.mrb[0].mxu0
        %v4830 = vadd.f32 %v4509, %v4829
        %v4831 = vpop.f32.mrb[0].mxu0
        %4832 = vdwg.mxu0
        %v4833 = vld [vmem:[#allocation2 + $0x2] sm:$0xff]
        %v4834 = vld [vmem:[#allocation2 + $0xa] sm:$0xff]
        %v4835 = vld [vmem:[#allocation2 + $0x1a] sm:$0xff]
        %v4836 = vld [vmem:[#allocation2 + $0x22] sm:$0xff]
        %v4837 = vld [vmem:[#allocation2 + $0x32] sm:$0xff]
        %v4838 = vld [vmem:[#allocation2 + $0x3a] sm:$0xff]
        %v4839 = vld [vmem:[#allocation2 + $0x4a] sm:$0xff]
        %v4840 = vld [vmem:[#allocation2 + $0x52] sm:$0xff]
        %v4841 = vld [vmem:[#allocation2 + $0x62] sm:$0xff]
        %v4842 = vld [vmem:[#allocation2 + $0x6a] sm:$0xff]
        %v4843 = vld [vmem:[#allocation2 + $0x7a] sm:$0xff]
        %v4844 = vld [vmem:[#allocation2 + $0x82] sm:$0xff]
        %v4845 = vld [vmem:[#allocation2 + $0x92] sm:$0xff]
        %v4846 = vld [vmem:[#allocation2 + $0x9a] sm:$0xff]
        %v4847 = vld [vmem:[#allocation2 + $0xaa] sm:$0xff]
        %v4848 = vld [vmem:[#allocation2 + $0xb2] sm:$0xff]
        %v4849 = vld [vmem:[#allocation2 + $0xc2] sm:$0xff]
        %v4850 = vld [vmem:[#allocation2 + $0xca] sm:$0xff]
        %v4851 = vld [vmem:[#allocation2 + $0xda] sm:$0xff]
        %v4852 = vld [vmem:[#allocation2 + $0xe2] sm:$0xff]
        %v4853 = vld [vmem:[#allocation2 + $0xf2] sm:$0xff]
        %v4854 = vld [vmem:[#allocation2 + $0xfa] sm:$0xff]
        %v4855 = vld [vmem:[#allocation2 + $0x10a] sm:$0xff]
        %v4856 = vld [vmem:[#allocation2 + $0x112] sm:$0xff]
        %v4857 = vld [vmem:[#allocation2 + $0x122] sm:$0xff]
        %v4858 = vld [vmem:[#allocation2 + $0x12a] sm:$0xff]
        %v4859 = vld [vmem:[#allocation2 + $0x13a] sm:$0xff]
        %v4860 = vld [vmem:[#allocation2 + $0x142] sm:$0xff]
        %v4861 = vld [vmem:[#allocation2 + $0x152] sm:$0xff]
        %v4862 = vld [vmem:[#allocation2 + $0x15a] sm:$0xff]
        %v4863 = vld [vmem:[#allocation2 + $0x16a] sm:$0xff]
        %v4864 = vld [vmem:[#allocation2 + $0x172] sm:$0xff]
        %v4866 = vsel %vm243, %v4833, 0
        %v4869 = vsel %vm243, %v4834, 0
        %v4872 = vsel %vm243, %v4835, 0
        %v4875 = vsel %vm243, %v4836, 0
        %v4878 = vsel %vm243, %v4837, 0
        %v4881 = vsel %vm243, %v4838, 0
        %v4884 = vsel %vm243, %v4839, 0
        %v4887 = vsel %vm243, %v4840, 0
        %v4890 = vsel %vm243, %v4841, 0
        %v4893 = vsel %vm243, %v4842, 0
        %v4896 = vsel %vm243, %v4843, 0
        %v4899 = vsel %vm243, %v4844, 0
        %v4902 = vsel %vm243, %v4845, 0
        %v4905 = vsel %vm243, %v4846, 0
        %v4908 = vsel %vm243, %v4847, 0
        %v4911 = vsel %vm243, %v4848, 0
        %v4914 = vsel %vm243, %v4849, 0
        %v4917 = vsel %vm243, %v4850, 0
        %v4920 = vsel %vm243, %v4851, 0
        %v4923 = vsel %vm243, %v4852, 0
        %v4926 = vsel %vm243, %v4853, 0
        %v4929 = vsel %vm243, %v4854, 0
        %v4932 = vsel %vm243, %v4855, 0
        %v4935 = vsel %vm243, %v4856, 0
        %v4938 = vsel %vm243, %v4857, 0
        %v4941 = vsel %vm243, %v4858, 0
        %v4944 = vsel %vm243, %v4859, 0
        %v4947 = vsel %vm243, %v4860, 0
        %v4950 = vsel %vm243, %v4861, 0
        %v4953 = vsel %vm243, %v4862, 0
        %v4956 = vsel %vm243, %v4863, 0
        %v4959 = vsel %vm243, %v4864, 0
        %4961 = vmatprep.subr.mxu0 0.0
        %4962 = vmatpush1.msra.mxu0 %v234
        %4963 = vmatprep.subr.mxu0 0.0
        %4964 = vmatpush1.msra.mxu0 0.0
        %4965 = vmatprep.subr.mxu0 0.0
        %4966 = vmatpush1.msra.mxu0 0.0
        %4967 = vmatprep.subr.mxu0 0.0
        %4968 = vmatpush1.msra.mxu0 0.0
        %4969 = vmatprep.subr.mxu0 0.0
        %4970 = vmatpush1.msra.mxu0 0.0
        %4971 = vmatprep.subr.mxu0 0.0
        %4972 = vmatpush1.msra.mxu0 0.0
        %4973 = vmatprep.subr.mxu0 0.0
        %4974 = vmatpush1.msra.mxu0 0.0
        %4975 = vmatprep.subr.mxu0 0.0
        %4976 = vmatpush1.msra.mxu0 0.0
        %4977 = vmatprep.subr.mxu0 0.0
        %4978 = vmatpush1.msra.mxu0 0.0
        %4979 = vmatprep.subr.mxu0 0.0
        %4980 = vmatpush1.msra.mxu0 0.0
        %4981 = vmatprep.subr.mxu0 0.0
        %4982 = vmatpush1.msra.mxu0 0.0
        %4983 = vmatprep.subr.mxu0 0.0
        %4984 = vmatpush1.msra.mxu0 0.0
        %4985 = vmatprep.subr.mxu0 0.0
        %4986 = vmatpush1.msra.mxu0 0.0
        %4987 = vmatprep.subr.mxu0 0.0
        %4988 = vmatpush1.msra.mxu0 0.0
        %4989 = vmatprep.subr.mxu0 0.0
        %4990 = vmatpush1.msra.mxu0 0.0
        %4991 = vmatprep.subr.mxu0 0.0
        %4992 = vmatpush1.msra.mxu0 0.0
        %4993 = vmatprep.subr.mxu0 0.0
        %4994 = vmatpush1.msra.mxu0 0.0
        %4995 = vmatprep.subr.mxu0 0.0
        %4996 = vmatpush1.msra.mxu0 0.0
        %4997 = vmatprep.subr.mxu0 0.0
        %4998 = vmatpush1.msra.mxu0 0.0
        %4999 = vmatprep.subr.mxu0 0.0
        %5000 = vmatpush1.msra.mxu0 0.0
        %5001 = vmatprep.subr.mxu0 0.0
        %5002 = vmatpush1.msra.mxu0 0.0
        %5003 = vmatprep.subr.mxu0 0.0
        %5004 = vmatpush1.msra.mxu0 0.0
        %5005 = vmatprep.subr.mxu0 0.0
        %5006 = vmatpush1.msra.mxu0 0.0
        %5007 = vmatprep.subr.mxu0 0.0
        %5008 = vmatpush1.msra.mxu0 0.0
        %5009 = vmatprep.subr.mxu0 0.0
        %5010 = vmatpush1.msra.mxu0 0.0
        %5011 = vmatprep.subr.mxu0 0.0
        %5012 = vmatpush1.msra.mxu0 0.0
        %5013 = vmatprep.subr.mxu0 0.0
        %5014 = vmatpush1.msra.mxu0 0.0
        %5015 = vmatprep.subr.mxu0 0.0
        %5016 = vmatpush1.msra.mxu0 0.0
        %5017 = vmatprep.subr.mxu0 0.0
        %5018 = vmatpush1.msra.mxu0 0.0
        %5019 = vmatprep.subr.mxu0 0.0
        %5020 = vmatpush1.msra.mxu0 0.0
        %5021 = vmatprep.subr.mxu0 0.0
        %5022 = vmatpush1.msra.mxu0 0.0
        %5023 = vmatprep.subr.mxu0 0.0
        %5024 = vmatpush1.msra.mxu0 0.0
        %5025 = vmatprep.mubr.f32.mxu0 0.0
        %5026 = vmatmul.mubr.f32.gmra.mrb[0].mxu0 %v4866
        %v5027 = vpop.f32.mrb[0].mxu0
        %v5028 = vadd.f32 0.0, %v5027
        %v5029 = vpop.f32.mrb[0].mxu0
        %5030 = vmatprep.mubr.f32.mxu0 0.0
        %5031 = vmatmul.mubr.f32.gmra.mrb[0].mxu0 %v4869
        %v5032 = vpop.f32.mrb[0].mxu0
        %v5033 = vadd.f32 0.0, %v5032
        %v5034 = vpop.f32.mrb[0].mxu0
        %5035 = vmatprep.mubr.f32.mxu0 0.0
        %5036 = vmatmul.mubr.f32.gmra.mrb[0].mxu0 %v4872
        %v5037 = vpop.f32.mrb[0].mxu0
        %v5038 = vadd.f32 0.0, %v5037
        %v5039 = vpop.f32.mrb[0].mxu0
        %5040 = vmatprep.mubr.f32.mxu0 0.0
        %5041 = vmatmul.mubr.f32.gmra.mrb[0].mxu0 %v4875
        %v5042 = vpop.f32.mrb[0].mxu0
        %v5043 = vadd.f32 0.0, %v5042
        %v5044 = vpop.f32.mrb[0].mxu0
        %5045 = vmatprep.mubr.f32.mxu0 0.0
        %5046 = vmatmul.mubr.f32.gmra.mrb[0].mxu0 %v4878
        %v5047 = vpop.f32.mrb[0].mxu0
        %v5048 = vadd.f32 0.0, %v5047
        %v5049 = vpop.f32.mrb[0].mxu0
        %5050 = vmatprep.mubr.f32.mxu0 0.0
        %5051 = vmatmul.mubr.f32.gmra.mrb[0].mxu0 %v4881
        %v5052 = vpop.f32.mrb[0].mxu0
        %v5053 = vadd.f32 0.0, %v5052
        %v5054 = vpop.f32.mrb[0].mxu0
        %5055 = vmatprep.mubr.f32.mxu0 0.0
        %5056 = vmatmul.mubr.f32.gmra.mrb[0].mxu0 %v4884
        %v5057 = vpop.f32.mrb[0].mxu0
        %v5058 = vadd.f32 0.0, %v5057
        %v5059 = vpop.f32.mrb[0].mxu0
        %5060 = vmatprep.mubr.f32.mxu0 0.0
        %5061 = vmatmul.mubr.f32.gmra.mrb[0].mxu0 %v4887
        %v5062 = vpop.f32.mrb[0].mxu0
        %v5063 = vadd.f32 0.0, %v5062
        %v5064 = vpop.f32.mrb[0].mxu0
        %5065 = vmatprep.mubr.f32.mxu0 0.0
        %5066 = vmatmul.mubr.f32.gmra.mrb[0].mxu0 %v4890
        %v5067 = vpop.f32.mrb[0].mxu0
        %v5068 = vadd.f32 0.0, %v5067
        %v5069 = vpop.f32.mrb[0].mxu0
        %5070 = vmatprep.mubr.f32.mxu0 0.0
        %5071 = vmatmul.mubr.f32.gmra.mrb[0].mxu0 %v4893
        %v5072 = vpop.f32.mrb[0].mxu0
        %v5073 = vadd.f32 0.0, %v5072
        %v5074 = vpop.f32.mrb[0].mxu0
        %5075 = vmatprep.mubr.f32.mxu0 0.0
        %5076 = vmatmul.mubr.f32.gmra.mrb[0].mxu0 %v4896
        %v5077 = vpop.f32.mrb[0].mxu0
        %v5078 = vadd.f32 0.0, %v5077
        %v5079 = vpop.f32.mrb[0].mxu0
        %5080 = vmatprep.mubr.f32.mxu0 0.0
        %5081 = vmatmul.mubr.f32.gmra.mrb[0].mxu0 %v4899
        %v5082 = vpop.f32.mrb[0].mxu0
        %v5083 = vadd.f32 0.0, %v5082
        %v5084 = vpop.f32.mrb[0].mxu0
        %5085 = vmatprep.mubr.f32.mxu0 0.0
        %5086 = vmatmul.mubr.f32.gmra.mrb[0].mxu0 %v4902
        %v5087 = vpop.f32.mrb[0].mxu0
        %v5088 = vadd.f32 0.0, %v5087
        %v5089 = vpop.f32.mrb[0].mxu0
        %5090 = vmatprep.mubr.f32.mxu0 0.0
        %5091 = vmatmul.mubr.f32.gmra.mrb[0].mxu0 %v4905
        %v5092 = vpop.f32.mrb[0].mxu0
        %v5093 = vadd.f32 0.0, %v5092
        %v5094 = vpop.f32.mrb[0].mxu0
        %5095 = vmatprep.mubr.f32.mxu0 0.0
        %5096 = vmatmul.mubr.f32.gmra.mrb[0].mxu0 %v4908
        %v5097 = vpop.f32.mrb[0].mxu0
        %v5098 = vadd.f32 0.0, %v5097
        %v5099 = vpop.f32.mrb[0].mxu0
        %5100 = vmatprep.mubr.f32.mxu0 0.0
        %5101 = vmatmul.mubr.f32.gmra.mrb[0].mxu0 %v4911
        %v5102 = vpop.f32.mrb[0].mxu0
        %v5103 = vadd.f32 0.0, %v5102
        %v5104 = vpop.f32.mrb[0].mxu0
        %5105 = vmatprep.mubr.f32.mxu0 0.0
        %5106 = vmatmul.mubr.f32.gmra.mrb[0].mxu0 %v4914
        %v5107 = vpop.f32.mrb[0].mxu0
        %v5108 = vadd.f32 0.0, %v5107
        %v5109 = vpop.f32.mrb[0].mxu0
        %5110 = vmatprep.mubr.f32.mxu0 0.0
        %5111 = vmatmul.mubr.f32.gmra.mrb[0].mxu0 %v4917
        %v5112 = vpop.f32.mrb[0].mxu0
        %v5113 = vadd.f32 0.0, %v5112
        %v5114 = vpop.f32.mrb[0].mxu0
        %5115 = vmatprep.mubr.f32.mxu0 0.0
        %5116 = vmatmul.mubr.f32.gmra.mrb[0].mxu0 %v4920
        %v5117 = vpop.f32.mrb[0].mxu0
        %v5118 = vadd.f32 0.0, %v5117
        %v5119 = vpop.f32.mrb[0].mxu0
        %5120 = vmatprep.mubr.f32.mxu0 0.0
        %5121 = vmatmul.mubr.f32.gmra.mrb[0].mxu0 %v4923
        %v5122 = vpop.f32.mrb[0].mxu0
        %v5123 = vadd.f32 0.0, %v5122
        %v5124 = vpop.f32.mrb[0].mxu0
        %5125 = vmatprep.mubr.f32.mxu0 0.0
        %5126 = vmatmul.mubr.f32.gmra.mrb[0].mxu0 %v4926
        %v5127 = vpop.f32.mrb[0].mxu0
        %v5128 = vadd.f32 0.0, %v5127
        %v5129 = vpop.f32.mrb[0].mxu0
        %5130 = vmatprep.mubr.f32.mxu0 0.0
        %5131 = vmatmul.mubr.f32.gmra.mrb[0].mxu0 %v4929
        %v5132 = vpop.f32.mrb[0].mxu0
        %v5133 = vadd.f32 0.0, %v5132
        %v5134 = vpop.f32.mrb[0].mxu0
        %5135 = vmatprep.mubr.f32.mxu0 0.0
        %5136 = vmatmul.mubr.f32.gmra.mrb[0].mxu0 %v4932
        %v5137 = vpop.f32.mrb[0].mxu0
        %v5138 = vadd.f32 0.0, %v5137
        %v5139 = vpop.f32.mrb[0].mxu0
        %5140 = vmatprep.mubr.f32.mxu0 0.0
        %5141 = vmatmul.mubr.f32.gmra.mrb[0].mxu0 %v4935
        %v5142 = vpop.f32.mrb[0].mxu0
        %v5143 = vadd.f32 0.0, %v5142
        %v5144 = vpop.f32.mrb[0].mxu0
        %5145 = vmatprep.mubr.f32.mxu0 0.0
        %5146 = vmatmul.mubr.f32.gmra.mrb[0].mxu0 %v4938
        %v5147 = vpop.f32.mrb[0].mxu0
        %v5148 = vadd.f32 0.0, %v5147
        %v5149 = vpop.f32.mrb[0].mxu0
        %5150 = vmatprep.mubr.f32.mxu0 0.0
        %5151 = vmatmul.mubr.f32.gmra.mrb[0].mxu0 %v4941
        %v5152 = vpop.f32.mrb[0].mxu0
        %v5153 = vadd.f32 0.0, %v5152
        %v5154 = vpop.f32.mrb[0].mxu0
        %5155 = vmatprep.mubr.f32.mxu0 0.0
        %5156 = vmatmul.mubr.f32.gmra.mrb[0].mxu0 %v4944
        %v5157 = vpop.f32.mrb[0].mxu0
        %v5158 = vadd.f32 0.0, %v5157
        %v5159 = vpop.f32.mrb[0].mxu0
        %5160 = vmatprep.mubr.f32.mxu0 0.0
        %5161 = vmatmul.mubr.f32.gmra.mrb[0].mxu0 %v4947
        %v5162 = vpop.f32.mrb[0].mxu0
        %v5163 = vadd.f32 0.0, %v5162
        %v5164 = vpop.f32.mrb[0].mxu0
        %5165 = vmatprep.mubr.f32.mxu0 0.0
        %5166 = vmatmul.mubr.f32.gmra.mrb[0].mxu0 %v4950
        %v5167 = vpop.f32.mrb[0].mxu0
        %v5168 = vadd.f32 0.0, %v5167
        %v5169 = vpop.f32.mrb[0].mxu0
        %5170 = vmatprep.mubr.f32.mxu0 0.0
        %5171 = vmatmul.mubr.f32.gmra.mrb[0].mxu0 %v4953
        %v5172 = vpop.f32.mrb[0].mxu0
        %v5173 = vadd.f32 0.0, %v5172
        %v5174 = vpop.f32.mrb[0].mxu0
        %5175 = vmatprep.mubr.f32.mxu0 0.0
        %5176 = vmatmul.mubr.f32.gmra.mrb[0].mxu0 %v4956
        %v5177 = vpop.f32.mrb[0].mxu0
        %v5178 = vadd.f32 0.0, %v5177
        %v5179 = vpop.f32.mrb[0].mxu0
        %5180 = vmatprep.mubr.f32.mxu0 0.0
        %5181 = vmatmul.mubr.f32.gmra.mrb[0].mxu0 %v4959
        %v5182 = vpop.f32.mrb[0].mxu0
        %v5183 = vadd.f32 0.0, %v5182
        %v5184 = vpop.f32.mrb[0].mxu0
        %5185 = vdwg.mxu0
        %v5186 = vadd.f32 %v4675, %v5028
        %v5187 = vadd.f32 %v4680, %v5033
        %v5188 = vadd.f32 %v4685, %v5038
        %v5189 = vadd.f32 %v4690, %v5043
        %v5190 = vadd.f32 %v4695, %v5048
        %v5191 = vadd.f32 %v4700, %v5053
        %v5192 = vadd.f32 %v4705, %v5058
        %v5193 = vadd.f32 %v4710, %v5063
        %v5194 = vadd.f32 %v4715, %v5068
        %v5195 = vadd.f32 %v4720, %v5073
        %v5196 = vadd.f32 %v4725, %v5078
        %v5197 = vadd.f32 %v4730, %v5083
        %v5198 = vadd.f32 %v4735, %v5088
        %v5199 = vadd.f32 %v4740, %v5093
        %v5200 = vadd.f32 %v4745, %v5098
        %v5201 = vadd.f32 %v4750, %v5103
        %v5202 = vadd.f32 %v4755, %v5108
        %v5203 = vadd.f32 %v4760, %v5113
        %v5204 = vadd.f32 %v4765, %v5118
        %v5205 = vadd.f32 %v4770, %v5123
        %v5206 = vadd.f32 %v4775, %v5128
        %v5207 = vadd.f32 %v4780, %v5133
        %v5208 = vadd.f32 %v4785, %v5138
        %v5209 = vadd.f32 %v4790, %v5143
        %v5210 = vadd.f32 %v4795, %v5148
        %v5211 = vadd.f32 %v4800, %v5153
        %v5212 = vadd.f32 %v4805, %v5158
        %v5213 = vadd.f32 %v4810, %v5163
        %v5214 = vadd.f32 %v4815, %v5168
        %v5215 = vadd.f32 %v4820, %v5173
        %v5216 = vadd.f32 %v4825, %v5178
        %v5217 = vadd.f32 %v4830, %v5183
        %v5218 = vld [vmem:[%s4094] sm:$0xff]
        %v5219 = vld [vmem:[%s4094 + $0x8] sm:$0xff]
        %v5220 = vld [vmem:[%s4094 + $0x18] sm:$0xff]
        %v5221 = vld [vmem:[%s4094 + $0x20] sm:$0xff]
        %v5222 = vld [vmem:[%s4094 + $0x30] sm:$0xff]
        %v5223 = vld [vmem:[%s4094 + $0x38] sm:$0xff]
        %v5224 = vld [vmem:[%s4094 + $0x48] sm:$0xff]
        %v5225 = vld [vmem:[%s4094 + $0x50] sm:$0xff]
        %v5226 = vld [vmem:[%s4094 + $0x60] sm:$0xff]
        %v5227 = vld [vmem:[%s4094 + $0x68] sm:$0xff]
        %v5228 = vld [vmem:[%s4094 + $0x78] sm:$0xff]
        %v5229 = vld [vmem:[%s4094 + $0x80] sm:$0xff]
        %v5230 = vld [vmem:[%s4094 + $0x90] sm:$0xff]
        %v5231 = vld [vmem:[%s4094 + $0x98] sm:$0xff]
        %v5232 = vld [vmem:[%s4094 + $0xa8] sm:$0xff]
        %v5233 = vld [vmem:[%s4094 + $0xb0] sm:$0xff]
        %v5234 = vld [vmem:[%s4094 + $0xc0] sm:$0xff]
        %v5235 = vld [vmem:[%s4094 + $0xc8] sm:$0xff]
        %v5236 = vld [vmem:[%s4094 + $0xd8] sm:$0xff]
        %v5237 = vld [vmem:[%s4094 + $0xe0] sm:$0xff]
        %v5238 = vld [vmem:[%s4094 + $0xf0] sm:$0xff]
        %v5239 = vld [vmem:[%s4094 + $0xf8] sm:$0xff]
        %v5240 = vld [vmem:[%s4094 + $0x108] sm:$0xff]
        %v5241 = vld [vmem:[%s4094 + $0x110] sm:$0xff]
        %v5242 = vld [vmem:[%s4094 + $0x120] sm:$0xff]
        %v5243 = vld [vmem:[%s4094 + $0x128] sm:$0xff]
        %v5244 = vld [vmem:[%s4094 + $0x138] sm:$0xff]
        %v5245 = vld [vmem:[%s4094 + $0x140] sm:$0xff]
        %v5246 = vld [vmem:[%s4094 + $0x150] sm:$0xff]
        %v5247 = vld [vmem:[%s4094 + $0x158] sm:$0xff]
        %v5248 = vld [vmem:[%s4094 + $0x168] sm:$0xff]
        %v5249 = vld [vmem:[%s4094 + $0x170] sm:$0xff]
        %v5251 = vsel %vm243, %v5218, 0
        %v5254 = vsel %vm243, %v5219, 0
        %v5257 = vsel %vm243, %v5220, 0
        %v5260 = vsel %vm243, %v5221, 0
        %v5263 = vsel %vm243, %v5222, 0
        %v5266 = vsel %vm243, %v5223, 0
        %v5269 = vsel %vm243, %v5224, 0
        %v5272 = vsel %vm243, %v5225, 0
        %v5275 = vsel %vm243, %v5226, 0
        %v5278 = vsel %vm243, %v5227, 0
        %v5281 = vsel %vm243, %v5228, 0
        %v5284 = vsel %vm243, %v5229, 0
        %v5287 = vsel %vm243, %v5230, 0
        %v5290 = vsel %vm243, %v5231, 0
        %v5293 = vsel %vm243, %v5232, 0
        %v5296 = vsel %vm243, %v5233, 0
        %v5299 = vsel %vm243, %v5234, 0
        %v5302 = vsel %vm243, %v5235, 0
        %v5305 = vsel %vm243, %v5236, 0
        %v5308 = vsel %vm243, %v5237, 0
        %v5311 = vsel %vm243, %v5238, 0
        %v5314 = vsel %vm243, %v5239, 0
        %v5317 = vsel %vm243, %v5240, 0
        %v5320 = vsel %vm243, %v5241, 0
        %v5323 = vsel %vm243, %v5242, 0
        %v5326 = vsel %vm243, %v5243, 0
        %v5329 = vsel %vm243, %v5244, 0
        %v5332 = vsel %vm243, %v5245, 0
        %v5335 = vsel %vm243, %v5246, 0
        %v5338 = vsel %vm243, %v5247, 0
        %v5341 = vsel %vm243, %v5248, 0
        %v5344 = vsel %vm243, %v5249, 0
        %5346 = vmatprep.subr.mxu0 0.0
        %5347 = vmatpush1.msra.mxu0 %v235
        %5348 = vmatprep.subr.mxu0 0.0
        %5349 = vmatpush1.msra.mxu0 0.0
        %5350 = vmatprep.subr.mxu0 0.0
        %5351 = vmatpush1.msra.mxu0 0.0
        %5352 = vmatprep.subr.mxu0 0.0
        %5353 = vmatpush1.msra.mxu0 0.0
        %5354 = vmatprep.subr.mxu0 0.0
        %5355 = vmatpush1.msra.mxu0 0.0
        %5356 = vmatprep.subr.mxu0 0.0
        %5357 = vmatpush1.msra.mxu0 0.0
        %5358 = vmatprep.subr.mxu0 0.0
        %5359 = vmatpush1.msra.mxu0 0.0
        %5360 = vmatprep.subr.mxu0 0.0
        %5361 = vmatpush1.msra.mxu0 0.0
        %5362 = vmatprep.subr.mxu0 0.0
        %5363 = vmatpush1.msra.mxu0 0.0
        %5364 = vmatprep.subr.mxu0 0.0
        %5365 = vmatpush1.msra.mxu0 0.0
        %5366 = vmatprep.subr.mxu0 0.0
        %5367 = vmatpush1.msra.mxu0 0.0
        %5368 = vmatprep.subr.mxu0 0.0
        %5369 = vmatpush1.msra.mxu0 0.0
        %5370 = vmatprep.subr.mxu0 0.0
        %5371 = vmatpush1.msra.mxu0 0.0
        %5372 = vmatprep.subr.mxu0 0.0
        %5373 = vmatpush1.msra.mxu0 0.0
        %5374 = vmatprep.subr.mxu0 0.0
        %5375 = vmatpush1.msra.mxu0 0.0
        %5376 = vmatprep.subr.mxu0 0.0
        %5377 = vmatpush1.msra.mxu0 0.0
        %5378 = vmatprep.subr.mxu0 0.0
        %5379 = vmatpush1.msra.mxu0 0.0
        %5380 = vmatprep.subr.mxu0 0.0
        %5381 = vmatpush1.msra.mxu0 0.0
        %5382 = vmatprep.subr.mxu0 0.0
        %5383 = vmatpush1.msra.mxu0 0.0
        %5384 = vmatprep.subr.mxu0 0.0
        %5385 = vmatpush1.msra.mxu0 0.0
        %5386 = vmatprep.subr.mxu0 0.0
        %5387 = vmatpush1.msra.mxu0 0.0
        %5388 = vmatprep.subr.mxu0 0.0
        %5389 = vmatpush1.msra.mxu0 0.0
        %5390 = vmatprep.subr.mxu0 0.0
        %5391 = vmatpush1.msra.mxu0 0.0
        %5392 = vmatprep.subr.mxu0 0.0
        %5393 = vmatpush1.msra.mxu0 0.0
        %5394 = vmatprep.subr.mxu0 0.0
        %5395 = vmatpush1.msra.mxu0 0.0
        %5396 = vmatprep.subr.mxu0 0.0
        %5397 = vmatpush1.msra.mxu0 0.0
        %5398 = vmatprep.subr.mxu0 0.0
        %5399 = vmatpush1.msra.mxu0 0.0
        %5400 = vmatprep.subr.mxu0 0.0
        %5401 = vmatpush1.msra.mxu0 0.0
        %5402 = vmatprep.subr.mxu0 0.0
        %5403 = vmatpush1.msra.mxu0 0.0
        %5404 = vmatprep.subr.mxu0 0.0
        %5405 = vmatpush1.msra.mxu0 0.0
        %5406 = vmatprep.subr.mxu0 0.0
        %5407 = vmatpush1.msra.mxu0 0.0
        %5408 = vmatprep.subr.mxu0 0.0
        %5409 = vmatpush1.msra.mxu0 0.0
        %5410 = vmatprep.mubr.f32.mxu0 0.0
        %5411 = vmatmul.mubr.f32.gmra.mrb[0].mxu0 %v5251
        %v5412 = vpop.f32.mrb[0].mxu0
        %v5413 = vadd.f32 0.0, %v5412
        %v5414 = vpop.f32.mrb[0].mxu0
        %5415 = vmatprep.mubr.f32.mxu0 0.0
        %5416 = vmatmul.mubr.f32.gmra.mrb[0].mxu0 %v5254
        %v5417 = vpop.f32.mrb[0].mxu0
        %v5418 = vadd.f32 0.0, %v5417
        %v5419 = vpop.f32.mrb[0].mxu0
        %5420 = vmatprep.mubr.f32.mxu0 0.0
        %5421 = vmatmul.mubr.f32.gmra.mrb[0].mxu0 %v5257
        %v5422 = vpop.f32.mrb[0].mxu0
        %v5423 = vadd.f32 0.0, %v5422
        %v5424 = vpop.f32.mrb[0].mxu0
        %5425 = vmatprep.mubr.f32.mxu0 0.0
        %5426 = vmatmul.mubr.f32.gmra.mrb[0].mxu0 %v5260
        %v5427 = vpop.f32.mrb[0].mxu0
        %v5428 = vadd.f32 0.0, %v5427
        %v5429 = vpop.f32.mrb[0].mxu0
        %5430 = vmatprep.mubr.f32.mxu0 0.0
        %5431 = vmatmul.mubr.f32.gmra.mrb[0].mxu0 %v5263
        %v5432 = vpop.f32.mrb[0].mxu0
        %v5433 = vadd.f32 0.0, %v5432
        %v5434 = vpop.f32.mrb[0].mxu0
        %5435 = vmatprep.mubr.f32.mxu0 0.0
        %5436 = vmatmul.mubr.f32.gmra.mrb[0].mxu0 %v5266
        %v5437 = vpop.f32.mrb[0].mxu0
        %v5438 = vadd.f32 0.0, %v5437
        %v5439 = vpop.f32.mrb[0].mxu0
        %5440 = vmatprep.mubr.f32.mxu0 0.0
        %5441 = vmatmul.mubr.f32.gmra.mrb[0].mxu0 %v5269
        %v5442 = vpop.f32.mrb[0].mxu0
        %v5443 = vadd.f32 0.0, %v5442
        %v5444 = vpop.f32.mrb[0].mxu0
        %5445 = vmatprep.mubr.f32.mxu0 0.0
        %5446 = vmatmul.mubr.f32.gmra.mrb[0].mxu0 %v5272
        %v5447 = vpop.f32.mrb[0].mxu0
        %v5448 = vadd.f32 0.0, %v5447
        %v5449 = vpop.f32.mrb[0].mxu0
        %5450 = vmatprep.mubr.f32.mxu0 0.0
        %5451 = vmatmul.mubr.f32.gmra.mrb[0].mxu0 %v5275
        %v5452 = vpop.f32.mrb[0].mxu0
        %v5453 = vadd.f32 0.0, %v5452
        %v5454 = vpop.f32.mrb[0].mxu0
        %5455 = vmatprep.mubr.f32.mxu0 0.0
        %5456 = vmatmul.mubr.f32.gmra.mrb[0].mxu0 %v5278
        %v5457 = vpop.f32.mrb[0].mxu0
        %v5458 = vadd.f32 0.0, %v5457
        %v5459 = vpop.f32.mrb[0].mxu0
        %5460 = vmatprep.mubr.f32.mxu0 0.0
        %5461 = vmatmul.mubr.f32.gmra.mrb[0].mxu0 %v5281
        %v5462 = vpop.f32.mrb[0].mxu0
        %v5463 = vadd.f32 0.0, %v5462
        %v5464 = vpop.f32.mrb[0].mxu0
        %5465 = vmatprep.mubr.f32.mxu0 0.0
        %5466 = vmatmul.mubr.f32.gmra.mrb[0].mxu0 %v5284
        %v5467 = vpop.f32.mrb[0].mxu0
        %v5468 = vadd.f32 0.0, %v5467
        %v5469 = vpop.f32.mrb[0].mxu0
        %5470 = vmatprep.mubr.f32.mxu0 0.0
        %5471 = vmatmul.mubr.f32.gmra.mrb[0].mxu0 %v5287
        %v5472 = vpop.f32.mrb[0].mxu0
        %v5473 = vadd.f32 0.0, %v5472
        %v5474 = vpop.f32.mrb[0].mxu0
        %5475 = vmatprep.mubr.f32.mxu0 0.0
        %5476 = vmatmul.mubr.f32.gmra.mrb[0].mxu0 %v5290
        %v5477 = vpop.f32.mrb[0].mxu0
        %v5478 = vadd.f32 0.0, %v5477
        %v5479 = vpop.f32.mrb[0].mxu0
        %5480 = vmatprep.mubr.f32.mxu0 0.0
        %5481 = vmatmul.mubr.f32.gmra.mrb[0].mxu0 %v5293
        %v5482 = vpop.f32.mrb[0].mxu0
        %v5483 = vadd.f32 0.0, %v5482
        %v5484 = vpop.f32.mrb[0].mxu0
        %5485 = vmatprep.mubr.f32.mxu0 0.0
        %5486 = vmatmul.mubr.f32.gmra.mrb[0].mxu0 %v5296
        %v5487 = vpop.f32.mrb[0].mxu0
        %v5488 = vadd.f32 0.0, %v5487
        %v5489 = vpop.f32.mrb[0].mxu0
        %5490 = vmatprep.mubr.f32.mxu0 0.0
        %5491 = vmatmul.mubr.f32.gmra.mrb[0].mxu0 %v5299
        %v5492 = vpop.f32.mrb[0].mxu0
        %v5493 = vadd.f32 0.0, %v5492
        %v5494 = vpop.f32.mrb[0].mxu0
        %5495 = vmatprep.mubr.f32.mxu0 0.0
        %5496 = vmatmul.mubr.f32.gmra.mrb[0].mxu0 %v5302
        %v5497 = vpop.f32.mrb[0].mxu0
        %v5498 = vadd.f32 0.0, %v5497
        %v5499 = vpop.f32.mrb[0].mxu0
        %5500 = vmatprep.mubr.f32.mxu0 0.0
        %5501 = vmatmul.mubr.f32.gmra.mrb[0].mxu0 %v5305
        %v5502 = vpop.f32.mrb[0].mxu0
        %v5503 = vadd.f32 0.0, %v5502
        %v5504 = vpop.f32.mrb[0].mxu0
        %5505 = vmatprep.mubr.f32.mxu0 0.0
        %5506 = vmatmul.mubr.f32.gmra.mrb[0].mxu0 %v5308
        %v5507 = vpop.f32.mrb[0].mxu0
        %v5508 = vadd.f32 0.0, %v5507
        %v5509 = vpop.f32.mrb[0].mxu0
        %5510 = vmatprep.mubr.f32.mxu0 0.0
        %5511 = vmatmul.mubr.f32.gmra.mrb[0].mxu0 %v5311
        %v5512 = vpop.f32.mrb[0].mxu0
        %v5513 = vadd.f32 0.0, %v5512
        %v5514 = vpop.f32.mrb[0].mxu0
        %5515 = vmatprep.mubr.f32.mxu0 0.0
        %5516 = vmatmul.mubr.f32.gmra.mrb[0].mxu0 %v5314
        %v5517 = vpop.f32.mrb[0].mxu0
        %v5518 = vadd.f32 0.0, %v5517
        %v5519 = vpop.f32.mrb[0].mxu0
        %5520 = vmatprep.mubr.f32.mxu0 0.0
        %5521 = vmatmul.mubr.f32.gmra.mrb[0].mxu0 %v5317
        %v5522 = vpop.f32.mrb[0].mxu0
        %v5523 = vadd.f32 0.0, %v5522
        %v5524 = vpop.f32.mrb[0].mxu0
        %5525 = vmatprep.mubr.f32.mxu0 0.0
        %5526 = vmatmul.mubr.f32.gmra.mrb[0].mxu0 %v5320
        %v5527 = vpop.f32.mrb[0].mxu0
        %v5528 = vadd.f32 0.0, %v5527
        %v5529 = vpop.f32.mrb[0].mxu0
        %5530 = vmatprep.mubr.f32.mxu0 0.0
        %5531 = vmatmul.mubr.f32.gmra.mrb[0].mxu0 %v5323
        %v5532 = vpop.f32.mrb[0].mxu0
        %v5533 = vadd.f32 0.0, %v5532
        %v5534 = vpop.f32.mrb[0].mxu0
        %5535 = vmatprep.mubr.f32.mxu0 0.0
        %5536 = vmatmul.mubr.f32.gmra.mrb[0].mxu0 %v5326
        %v5537 = vpop.f32.mrb[0].mxu0
        %v5538 = vadd.f32 0.0, %v5537
        %v5539 = vpop.f32.mrb[0].mxu0
        %5540 = vmatprep.mubr.f32.mxu0 0.0
        %5541 = vmatmul.mubr.f32.gmra.mrb[0].mxu0 %v5329
        %v5542 = vpop.f32.mrb[0].mxu0
        %v5543 = vadd.f32 0.0, %v5542
        %v5544 = vpop.f32.mrb[0].mxu0
        %5545 = vmatprep.mubr.f32.mxu0 0.0
        %5546 = vmatmul.mubr.f32.gmra.mrb[0].mxu0 %v5332
        %v5547 = vpop.f32.mrb[0].mxu0
        %v5548 = vadd.f32 0.0, %v5547
        %v5549 = vpop.f32.mrb[0].mxu0
        %5550 = vmatprep.mubr.f32.mxu0 0.0
        %5551 = vmatmul.mubr.f32.gmra.mrb[0].mxu0 %v5335
        %v5552 = vpop.f32.mrb[0].mxu0
        %v5553 = vadd.f32 0.0, %v5552
        %v5554 = vpop.f32.mrb[0].mxu0
        %5555 = vmatprep.mubr.f32.mxu0 0.0
        %5556 = vmatmul.mubr.f32.gmra.mrb[0].mxu0 %v5338
        %v5557 = vpop.f32.mrb[0].mxu0
        %v5558 = vadd.f32 0.0, %v5557
        %v5559 = vpop.f32.mrb[0].mxu0
        %5560 = vmatprep.mubr.f32.mxu0 0.0
        %5561 = vmatmul.mubr.f32.gmra.mrb[0].mxu0 %v5341
        %v5562 = vpop.f32.mrb[0].mxu0
        %v5563 = vadd.f32 0.0, %v5562
        %v5564 = vpop.f32.mrb[0].mxu0
        %5565 = vmatprep.mubr.f32.mxu0 0.0
        %5566 = vmatmul.mubr.f32.gmra.mrb[0].mxu0 %v5344
        %v5567 = vpop.f32.mrb[0].mxu0
        %v5568 = vadd.f32 0.0, %v5567
        %v5569 = vpop.f32.mrb[0].mxu0
        %5570 = vdwg.mxu0
        %v5571 = vadd.f32 %v5186, %v5413
        %v5572 = vadd.f32 %v5187, %v5418
        %v5573 = vadd.f32 %v5188, %v5423
        %v5574 = vadd.f32 %v5189, %v5428
        %v5575 = vadd.f32 %v5190, %v5433
        %v5576 = vadd.f32 %v5191, %v5438
        %v5577 = vadd.f32 %v5192, %v5443
        %v5578 = vadd.f32 %v5193, %v5448
        %v5579 = vadd.f32 %v5194, %v5453
        %v5580 = vadd.f32 %v5195, %v5458
        %v5581 = vadd.f32 %v5196, %v5463
        %v5582 = vadd.f32 %v5197, %v5468
        %v5583 = vadd.f32 %v5198, %v5473
        %v5584 = vadd.f32 %v5199, %v5478
        %v5585 = vadd.f32 %v5200, %v5483
        %v5586 = vadd.f32 %v5201, %v5488
        %v5587 = vadd.f32 %v5202, %v5493
        %v5588 = vadd.f32 %v5203, %v5498
        %v5589 = vadd.f32 %v5204, %v5503
        %v5590 = vadd.f32 %v5205, %v5508
        %v5591 = vadd.f32 %v5206, %v5513
        %v5592 = vadd.f32 %v5207, %v5518
        %v5593 = vadd.f32 %v5208, %v5523
        %v5594 = vadd.f32 %v5209, %v5528
        %v5595 = vadd.f32 %v5210, %v5533
        %v5596 = vadd.f32 %v5211, %v5538
        %v5597 = vadd.f32 %v5212, %v5543
        %v5598 = vadd.f32 %v5213, %v5548
        %v5599 = vadd.f32 %v5214, %v5553
        %v5600 = vadd.f32 %v5215, %v5558
        %v5601 = vadd.f32 %v5216, %v5563
        %v5602 = vadd.f32 %v5217, %v5568
        %v5603 = vld [vmem:[%s4094 + $0x1] sm:$0xff]
        %v5604 = vld [vmem:[%s4094 + $0x9] sm:$0xff]
        %v5605 = vld [vmem:[%s4094 + $0x19] sm:$0xff]
        %v5606 = vld [vmem:[%s4094 + $0x21] sm:$0xff]
        %v5607 = vld [vmem:[%s4094 + $0x31] sm:$0xff]
        %v5608 = vld [vmem:[%s4094 + $0x39] sm:$0xff]
        %v5609 = vld [vmem:[%s4094 + $0x49] sm:$0xff]
        %v5610 = vld [vmem:[%s4094 + $0x51] sm:$0xff]
        %v5611 = vld [vmem:[%s4094 + $0x61] sm:$0xff]
        %v5612 = vld [vmem:[%s4094 + $0x69] sm:$0xff]
        %v5613 = vld [vmem:[%s4094 + $0x79] sm:$0xff]
        %v5614 = vld [vmem:[%s4094 + $0x81] sm:$0xff]
        %v5615 = vld [vmem:[%s4094 + $0x91] sm:$0xff]
        %v5616 = vld [vmem:[%s4094 + $0x99] sm:$0xff]
        %v5617 = vld [vmem:[%s4094 + $0xa9] sm:$0xff]
        %v5618 = vld [vmem:[%s4094 + $0xb1] sm:$0xff]
        %v5619 = vld [vmem:[%s4094 + $0xc1] sm:$0xff]
        %v5620 = vld [vmem:[%s4094 + $0xc9] sm:$0xff]
        %v5621 = vld [vmem:[%s4094 + $0xd9] sm:$0xff]
        %v5622 = vld [vmem:[%s4094 + $0xe1] sm:$0xff]
        %v5623 = vld [vmem:[%s4094 + $0xf1] sm:$0xff]
        %v5624 = vld [vmem:[%s4094 + $0xf9] sm:$0xff]
        %v5625 = vld [vmem:[%s4094 + $0x109] sm:$0xff]
        %v5626 = vld [vmem:[%s4094 + $0x111] sm:$0xff]
        %v5627 = vld [vmem:[%s4094 + $0x121] sm:$0xff]
        %v5628 = vld [vmem:[%s4094 + $0x129] sm:$0xff]
        %v5629 = vld [vmem:[%s4094 + $0x139] sm:$0xff]
        %v5630 = vld [vmem:[%s4094 + $0x141] sm:$0xff]
        %v5631 = vld [vmem:[%s4094 + $0x151] sm:$0xff]
        %v5632 = vld [vmem:[%s4094 + $0x159] sm:$0xff]
        %v5633 = vld [vmem:[%s4094 + $0x169] sm:$0xff]
        %v5634 = vld [vmem:[%s4094 + $0x171] sm:$0xff]
        %v5636 = vsel %vm243, %v5603, 0
        %v5639 = vsel %vm243, %v5604, 0
        %v5642 = vsel %vm243, %v5605, 0
        %v5645 = vsel %vm243, %v5606, 0
        %v5648 = vsel %vm243, %v5607, 0
        %v5651 = vsel %vm243, %v5608, 0
        %v5654 = vsel %vm243, %v5609, 0
        %v5657 = vsel %vm243, %v5610, 0
        %v5660 = vsel %vm243, %v5611, 0
        %v5663 = vsel %vm243, %v5612, 0
        %v5666 = vsel %vm243, %v5613, 0
        %v5669 = vsel %vm243, %v5614, 0
        %v5672 = vsel %vm243, %v5615, 0
        %v5675 = vsel %vm243, %v5616, 0
        %v5678 = vsel %vm243, %v5617, 0
        %v5681 = vsel %vm243, %v5618, 0
        %v5684 = vsel %vm243, %v5619, 0
        %v5687 = vsel %vm243, %v5620, 0
        %v5690 = vsel %vm243, %v5621, 0
        %v5693 = vsel %vm243, %v5622, 0
        %v5696 = vsel %vm243, %v5623, 0
        %v5699 = vsel %vm243, %v5624, 0
        %v5702 = vsel %vm243, %v5625, 0
        %v5705 = vsel %vm243, %v5626, 0
        %v5708 = vsel %vm243, %v5627, 0
        %v5711 = vsel %vm243, %v5628, 0
        %v5714 = vsel %vm243, %v5629, 0
        %v5717 = vsel %vm243, %v5630, 0
        %v5720 = vsel %vm243, %v5631, 0
        %v5723 = vsel %vm243, %v5632, 0
        %v5726 = vsel %vm243, %v5633, 0
        %v5729 = vsel %vm243, %v5634, 0
        %5731 = vmatprep.subr.mxu0 0.0
        %5732 = vmatpush1.msra.mxu0 %v236
        %5733 = vmatprep.subr.mxu0 0.0
        %5734 = vmatpush1.msra.mxu0 0.0
        %5735 = vmatprep.subr.mxu0 0.0
        %5736 = vmatpush1.msra.mxu0 0.0
        %5737 = vmatprep.subr.mxu0 0.0
        %5738 = vmatpush1.msra.mxu0 0.0
        %5739 = vmatprep.subr.mxu0 0.0
        %5740 = vmatpush1.msra.mxu0 0.0
        %5741 = vmatprep.subr.mxu0 0.0
        %5742 = vmatpush1.msra.mxu0 0.0
        %5743 = vmatprep.subr.mxu0 0.0
        %5744 = vmatpush1.msra.mxu0 0.0
        %5745 = vmatprep.subr.mxu0 0.0
        %5746 = vmatpush1.msra.mxu0 0.0
        %5747 = vmatprep.subr.mxu0 0.0
        %5748 = vmatpush1.msra.mxu0 0.0
        %5749 = vmatprep.subr.mxu0 0.0
        %5750 = vmatpush1.msra.mxu0 0.0
        %5751 = vmatprep.subr.mxu0 0.0
        %5752 = vmatpush1.msra.mxu0 0.0
        %5753 = vmatprep.subr.mxu0 0.0
        %5754 = vmatpush1.msra.mxu0 0.0
        %5755 = vmatprep.subr.mxu0 0.0
        %5756 = vmatpush1.msra.mxu0 0.0
        %5757 = vmatprep.subr.mxu0 0.0
        %5758 = vmatpush1.msra.mxu0 0.0
        %5759 = vmatprep.subr.mxu0 0.0
        %5760 = vmatpush1.msra.mxu0 0.0
        %5761 = vmatprep.subr.mxu0 0.0
        %5762 = vmatpush1.msra.mxu0 0.0
        %5763 = vmatprep.subr.mxu0 0.0
        %5764 = vmatpush1.msra.mxu0 0.0
        %5765 = vmatprep.subr.mxu0 0.0
        %5766 = vmatpush1.msra.mxu0 0.0
        %5767 = vmatprep.subr.mxu0 0.0
        %5768 = vmatpush1.msra.mxu0 0.0
        %5769 = vmatprep.subr.mxu0 0.0
        %5770 = vmatpush1.msra.mxu0 0.0
        %5771 = vmatprep.subr.mxu0 0.0
        %5772 = vmatpush1.msra.mxu0 0.0
        %5773 = vmatprep.subr.mxu0 0.0
        %5774 = vmatpush1.msra.mxu0 0.0
        %5775 = vmatprep.subr.mxu0 0.0
        %5776 = vmatpush1.msra.mxu0 0.0
        %5777 = vmatprep.subr.mxu0 0.0
        %5778 = vmatpush1.msra.mxu0 0.0
        %5779 = vmatprep.subr.mxu0 0.0
        %5780 = vmatpush1.msra.mxu0 0.0
        %5781 = vmatprep.subr.mxu0 0.0
        %5782 = vmatpush1.msra.mxu0 0.0
        %5783 = vmatprep.subr.mxu0 0.0
        %5784 = vmatpush1.msra.mxu0 0.0
        %5785 = vmatprep.subr.mxu0 0.0
        %5786 = vmatpush1.msra.mxu0 0.0
        %5787 = vmatprep.subr.mxu0 0.0
        %5788 = vmatpush1.msra.mxu0 0.0
        %5789 = vmatprep.subr.mxu0 0.0
        %5790 = vmatpush1.msra.mxu0 0.0
        %5791 = vmatprep.subr.mxu0 0.0
        %5792 = vmatpush1.msra.mxu0 0.0
        %5793 = vmatprep.subr.mxu0 0.0
        %5794 = vmatpush1.msra.mxu0 0.0
        %5795 = vmatprep.mubr.f32.mxu0 0.0
        %5796 = vmatmul.mubr.f32.gmra.mrb[0].mxu0 %v5636
        %v5797 = vpop.f32.mrb[0].mxu0
        %v5798 = vadd.f32 0.0, %v5797
        %v5799 = vpop.f32.mrb[0].mxu0
        %5800 = vmatprep.mubr.f32.mxu0 0.0
        %5801 = vmatmul.mubr.f32.gmra.mrb[0].mxu0 %v5639
        %v5802 = vpop.f32.mrb[0].mxu0
        %v5803 = vadd.f32 0.0, %v5802
        %v5804 = vpop.f32.mrb[0].mxu0
        %5805 = vmatprep.mubr.f32.mxu0 0.0
        %5806 = vmatmul.mubr.f32.gmra.mrb[0].mxu0 %v5642
        %v5807 = vpop.f32.mrb[0].mxu0
        %v5808 = vadd.f32 0.0, %v5807
        %v5809 = vpop.f32.mrb[0].mxu0
        %5810 = vmatprep.mubr.f32.mxu0 0.0
        %5811 = vmatmul.mubr.f32.gmra.mrb[0].mxu0 %v5645
        %v5812 = vpop.f32.mrb[0].mxu0
        %v5813 = vadd.f32 0.0, %v5812
        %v5814 = vpop.f32.mrb[0].mxu0
        %5815 = vmatprep.mubr.f32.mxu0 0.0
        %5816 = vmatmul.mubr.f32.gmra.mrb[0].mxu0 %v5648
        %v5817 = vpop.f32.mrb[0].mxu0
        %v5818 = vadd.f32 0.0, %v5817
        %v5819 = vpop.f32.mrb[0].mxu0
        %5820 = vmatprep.mubr.f32.mxu0 0.0
        %5821 = vmatmul.mubr.f32.gmra.mrb[0].mxu0 %v5651
        %v5822 = vpop.f32.mrb[0].mxu0
        %v5823 = vadd.f32 0.0, %v5822
        %v5824 = vpop.f32.mrb[0].mxu0
        %5825 = vmatprep.mubr.f32.mxu0 0.0
        %5826 = vmatmul.mubr.f32.gmra.mrb[0].mxu0 %v5654
        %v5827 = vpop.f32.mrb[0].mxu0
        %v5828 = vadd.f32 0.0, %v5827
        %v5829 = vpop.f32.mrb[0].mxu0
        %5830 = vmatprep.mubr.f32.mxu0 0.0
        %5831 = vmatmul.mubr.f32.gmra.mrb[0].mxu0 %v5657
        %v5832 = vpop.f32.mrb[0].mxu0
        %v5833 = vadd.f32 0.0, %v5832
        %v5834 = vpop.f32.mrb[0].mxu0
        %5835 = vmatprep.mubr.f32.mxu0 0.0
        %5836 = vmatmul.mubr.f32.gmra.mrb[0].mxu0 %v5660
        %v5837 = vpop.f32.mrb[0].mxu0
        %v5838 = vadd.f32 0.0, %v5837
        %v5839 = vpop.f32.mrb[0].mxu0
        %5840 = vmatprep.mubr.f32.mxu0 0.0
        %5841 = vmatmul.mubr.f32.gmra.mrb[0].mxu0 %v5663
        %v5842 = vpop.f32.mrb[0].mxu0
        %v5843 = vadd.f32 0.0, %v5842
        %v5844 = vpop.f32.mrb[0].mxu0
        %5845 = vmatprep.mubr.f32.mxu0 0.0
        %5846 = vmatmul.mubr.f32.gmra.mrb[0].mxu0 %v5666
        %v5847 = vpop.f32.mrb[0].mxu0
        %v5848 = vadd.f32 0.0, %v5847
        %v5849 = vpop.f32.mrb[0].mxu0
        %5850 = vmatprep.mubr.f32.mxu0 0.0
        %5851 = vmatmul.mubr.f32.gmra.mrb[0].mxu0 %v5669
        %v5852 = vpop.f32.mrb[0].mxu0
        %v5853 = vadd.f32 0.0, %v5852
        %v5854 = vpop.f32.mrb[0].mxu0
        %5855 = vmatprep.mubr.f32.mxu0 0.0
        %5856 = vmatmul.mubr.f32.gmra.mrb[0].mxu0 %v5672
        %v5857 = vpop.f32.mrb[0].mxu0
        %v5858 = vadd.f32 0.0, %v5857
        %v5859 = vpop.f32.mrb[0].mxu0
        %5860 = vmatprep.mubr.f32.mxu0 0.0
        %5861 = vmatmul.mubr.f32.gmra.mrb[0].mxu0 %v5675
        %v5862 = vpop.f32.mrb[0].mxu0
        %v5863 = vadd.f32 0.0, %v5862
        %v5864 = vpop.f32.mrb[0].mxu0
        %5865 = vmatprep.mubr.f32.mxu0 0.0
        %5866 = vmatmul.mubr.f32.gmra.mrb[0].mxu0 %v5678
        %v5867 = vpop.f32.mrb[0].mxu0
        %v5868 = vadd.f32 0.0, %v5867
        %v5869 = vpop.f32.mrb[0].mxu0
        %5870 = vmatprep.mubr.f32.mxu0 0.0
        %5871 = vmatmul.mubr.f32.gmra.mrb[0].mxu0 %v5681
        %v5872 = vpop.f32.mrb[0].mxu0
        %v5873 = vadd.f32 0.0, %v5872
        %v5874 = vpop.f32.mrb[0].mxu0
        %5875 = vmatprep.mubr.f32.mxu0 0.0
        %5876 = vmatmul.mubr.f32.gmra.mrb[0].mxu0 %v5684
        %v5877 = vpop.f32.mrb[0].mxu0
        %v5878 = vadd.f32 0.0, %v5877
        %v5879 = vpop.f32.mrb[0].mxu0
        %5880 = vmatprep.mubr.f32.mxu0 0.0
        %5881 = vmatmul.mubr.f32.gmra.mrb[0].mxu0 %v5687
        %v5882 = vpop.f32.mrb[0].mxu0
        %v5883 = vadd.f32 0.0, %v5882
        %v5884 = vpop.f32.mrb[0].mxu0
        %5885 = vmatprep.mubr.f32.mxu0 0.0
        %5886 = vmatmul.mubr.f32.gmra.mrb[0].mxu0 %v5690
        %v5887 = vpop.f32.mrb[0].mxu0
        %v5888 = vadd.f32 0.0, %v5887
        %v5889 = vpop.f32.mrb[0].mxu0
        %5890 = vmatprep.mubr.f32.mxu0 0.0
        %5891 = vmatmul.mubr.f32.gmra.mrb[0].mxu0 %v5693
        %v5892 = vpop.f32.mrb[0].mxu0
        %v5893 = vadd.f32 0.0, %v5892
        %v5894 = vpop.f32.mrb[0].mxu0
        %5895 = vmatprep.mubr.f32.mxu0 0.0
        %5896 = vmatmul.mubr.f32.gmra.mrb[0].mxu0 %v5696
        %v5897 = vpop.f32.mrb[0].mxu0
        %v5898 = vadd.f32 0.0, %v5897
        %v5899 = vpop.f32.mrb[0].mxu0
        %5900 = vmatprep.mubr.f32.mxu0 0.0
        %5901 = vmatmul.mubr.f32.gmra.mrb[0].mxu0 %v5699
        %v5902 = vpop.f32.mrb[0].mxu0
        %v5903 = vadd.f32 0.0, %v5902
        %v5904 = vpop.f32.mrb[0].mxu0
        %5905 = vmatprep.mubr.f32.mxu0 0.0
        %5906 = vmatmul.mubr.f32.gmra.mrb[0].mxu0 %v5702
        %v5907 = vpop.f32.mrb[0].mxu0
        %v5908 = vadd.f32 0.0, %v5907
        %v5909 = vpop.f32.mrb[0].mxu0
        %5910 = vmatprep.mubr.f32.mxu0 0.0
        %5911 = vmatmul.mubr.f32.gmra.mrb[0].mxu0 %v5705
        %v5912 = vpop.f32.mrb[0].mxu0
        %v5913 = vadd.f32 0.0, %v5912
        %v5914 = vpop.f32.mrb[0].mxu0
        %5915 = vmatprep.mubr.f32.mxu0 0.0
        %5916 = vmatmul.mubr.f32.gmra.mrb[0].mxu0 %v5708
        %v5917 = vpop.f32.mrb[0].mxu0
        %v5918 = vadd.f32 0.0, %v5917
        %v5919 = vpop.f32.mrb[0].mxu0
        %5920 = vmatprep.mubr.f32.mxu0 0.0
        %5921 = vmatmul.mubr.f32.gmra.mrb[0].mxu0 %v5711
        %v5922 = vpop.f32.mrb[0].mxu0
        %v5923 = vadd.f32 0.0, %v5922
        %v5924 = vpop.f32.mrb[0].mxu0
        %5925 = vmatprep.mubr.f32.mxu0 0.0
        %5926 = vmatmul.mubr.f32.gmra.mrb[0].mxu0 %v5714
        %v5927 = vpop.f32.mrb[0].mxu0
        %v5928 = vadd.f32 0.0, %v5927
        %v5929 = vpop.f32.mrb[0].mxu0
        %5930 = vmatprep.mubr.f32.mxu0 0.0
        %5931 = vmatmul.mubr.f32.gmra.mrb[0].mxu0 %v5717
        %v5932 = vpop.f32.mrb[0].mxu0
        %v5933 = vadd.f32 0.0, %v5932
        %v5934 = vpop.f32.mrb[0].mxu0
        %5935 = vmatprep.mubr.f32.mxu0 0.0
        %5936 = vmatmul.mubr.f32.gmra.mrb[0].mxu0 %v5720
        %v5937 = vpop.f32.mrb[0].mxu0
        %v5938 = vadd.f32 0.0, %v5937
        %v5939 = vpop.f32.mrb[0].mxu0
        %5940 = vmatprep.mubr.f32.mxu0 0.0
        %5941 = vmatmul.mubr.f32.gmra.mrb[0].mxu0 %v5723
        %v5942 = vpop.f32.mrb[0].mxu0
        %v5943 = vadd.f32 0.0, %v5942
        %v5944 = vpop.f32.mrb[0].mxu0
        %5945 = vmatprep.mubr.f32.mxu0 0.0
        %5946 = vmatmul.mubr.f32.gmra.mrb[0].mxu0 %v5726
        %v5947 = vpop.f32.mrb[0].mxu0
        %v5948 = vadd.f32 0.0, %v5947
        %v5949 = vpop.f32.mrb[0].mxu0
        %5950 = vmatprep.mubr.f32.mxu0 0.0
        %5951 = vmatmul.mubr.f32.gmra.mrb[0].mxu0 %v5729
        %v5952 = vpop.f32.mrb[0].mxu0
        %v5953 = vadd.f32 0.0, %v5952
        %v5954 = vpop.f32.mrb[0].mxu0
        %5955 = vdwg.mxu0
        %v5956 = vadd.f32 %v5571, %v5798
        %v5957 = vadd.f32 %v5572, %v5803
        %v5958 = vadd.f32 %v5573, %v5808
        %v5959 = vadd.f32 %v5574, %v5813
        %v5960 = vadd.f32 %v5575, %v5818
        %v5961 = vadd.f32 %v5576, %v5823
        %v5962 = vadd.f32 %v5577, %v5828
        %v5963 = vadd.f32 %v5578, %v5833
        %v5964 = vadd.f32 %v5579, %v5838
        %v5965 = vadd.f32 %v5580, %v5843
        %v5966 = vadd.f32 %v5581, %v5848
        %v5967 = vadd.f32 %v5582, %v5853
        %v5968 = vadd.f32 %v5583, %v5858
        %v5969 = vadd.f32 %v5584, %v5863
        %v5970 = vadd.f32 %v5585, %v5868
        %v5971 = vadd.f32 %v5586, %v5873
        %v5972 = vadd.f32 %v5587, %v5878
        %v5973 = vadd.f32 %v5588, %v5883
        %v5974 = vadd.f32 %v5589, %v5888
        %v5975 = vadd.f32 %v5590, %v5893
        %v5976 = vadd.f32 %v5591, %v5898
        %v5977 = vadd.f32 %v5592, %v5903
        %v5978 = vadd.f32 %v5593, %v5908
        %v5979 = vadd.f32 %v5594, %v5913
        %v5980 = vadd.f32 %v5595, %v5918
        %v5981 = vadd.f32 %v5596, %v5923
        %v5982 = vadd.f32 %v5597, %v5928
        %v5983 = vadd.f32 %v5598, %v5933
        %v5984 = vadd.f32 %v5599, %v5938
        %v5985 = vadd.f32 %v5600, %v5943
        %v5986 = vadd.f32 %v5601, %v5948
        %v5987 = vadd.f32 %v5602, %v5953
        %v5988 = vld [vmem:[%s4094 + $0x2] sm:$0xff]
        %v5989 = vld [vmem:[%s4094 + $0xa] sm:$0xff]
        %v5990 = vld [vmem:[%s4094 + $0x1a] sm:$0xff]
        %v5991 = vld [vmem:[%s4094 + $0x22] sm:$0xff]
        %v5992 = vld [vmem:[%s4094 + $0x32] sm:$0xff]
        %v5993 = vld [vmem:[%s4094 + $0x3a] sm:$0xff]
        %v5994 = vld [vmem:[%s4094 + $0x4a] sm:$0xff]
        %v5995 = vld [vmem:[%s4094 + $0x52] sm:$0xff]
        %v5996 = vld [vmem:[%s4094 + $0x62] sm:$0xff]
        %v5997 = vld [vmem:[%s4094 + $0x6a] sm:$0xff]
        %v5998 = vld [vmem:[%s4094 + $0x7a] sm:$0xff]
        %v5999 = vld [vmem:[%s4094 + $0x82] sm:$0xff]
        %v6000 = vld [vmem:[%s4094 + $0x92] sm:$0xff]
        %v6001 = vld [vmem:[%s4094 + $0x9a] sm:$0xff]
        %v6002 = vld [vmem:[%s4094 + $0xaa] sm:$0xff]
        %v6003 = vld [vmem:[%s4094 + $0xb2] sm:$0xff]
        %v6004 = vld [vmem:[%s4094 + $0xc2] sm:$0xff]
        %v6005 = vld [vmem:[%s4094 + $0xca] sm:$0xff]
        %v6006 = vld [vmem:[%s4094 + $0xda] sm:$0xff]
        %v6007 = vld [vmem:[%s4094 + $0xe2] sm:$0xff]
        %v6008 = vld [vmem:[%s4094 + $0xf2] sm:$0xff]
        %v6009 = vld [vmem:[%s4094 + $0xfa] sm:$0xff]
        %v6010 = vld [vmem:[%s4094 + $0x10a] sm:$0xff]
        %v6011 = vld [vmem:[%s4094 + $0x112] sm:$0xff]
        %v6012 = vld [vmem:[%s4094 + $0x122] sm:$0xff]
        %v6013 = vld [vmem:[%s4094 + $0x12a] sm:$0xff]
        %v6014 = vld [vmem:[%s4094 + $0x13a] sm:$0xff]
        %v6015 = vld [vmem:[%s4094 + $0x142] sm:$0xff]
        %v6016 = vld [vmem:[%s4094 + $0x152] sm:$0xff]
        %v6017 = vld [vmem:[%s4094 + $0x15a] sm:$0xff]
        %v6018 = vld [vmem:[%s4094 + $0x16a] sm:$0xff]
        %v6019 = vld [vmem:[%s4094 + $0x172] sm:$0xff]
        %v6021 = vsel %vm243, %v5988, 0
        %v6024 = vsel %vm243, %v5989, 0
        %v6027 = vsel %vm243, %v5990, 0
        %v6030 = vsel %vm243, %v5991, 0
        %v6033 = vsel %vm243, %v5992, 0
        %v6036 = vsel %vm243, %v5993, 0
        %v6039 = vsel %vm243, %v5994, 0
        %v6042 = vsel %vm243, %v5995, 0
        %v6045 = vsel %vm243, %v5996, 0
        %v6048 = vsel %vm243, %v5997, 0
        %v6051 = vsel %vm243, %v5998, 0
        %v6054 = vsel %vm243, %v5999, 0
        %v6057 = vsel %vm243, %v6000, 0
        %v6060 = vsel %vm243, %v6001, 0
        %v6063 = vsel %vm243, %v6002, 0
        %v6066 = vsel %vm243, %v6003, 0
        %v6069 = vsel %vm243, %v6004, 0
        %v6072 = vsel %vm243, %v6005, 0
        %v6075 = vsel %vm243, %v6006, 0
        %v6078 = vsel %vm243, %v6007, 0
        %v6081 = vsel %vm243, %v6008, 0
        %v6084 = vsel %vm243, %v6009, 0
        %v6087 = vsel %vm243, %v6010, 0
        %v6090 = vsel %vm243, %v6011, 0
        %v6093 = vsel %vm243, %v6012, 0
        %v6096 = vsel %vm243, %v6013, 0
        %v6099 = vsel %vm243, %v6014, 0
        %v6102 = vsel %vm243, %v6015, 0
        %v6105 = vsel %vm243, %v6016, 0
        %v6108 = vsel %vm243, %v6017, 0
        %v6111 = vsel %vm243, %v6018, 0
        %v6114 = vsel %vm243, %v6019, 0
        %6116 = vmatprep.subr.mxu0 0.0
        %6117 = vmatpush1.msra.mxu0 %v237
        %6118 = vmatprep.subr.mxu0 0.0
        %6119 = vmatpush1.msra.mxu0 0.0
        %6120 = vmatprep.subr.mxu0 0.0
        %6121 = vmatpush1.msra.mxu0 0.0
        %6122 = vmatprep.subr.mxu0 0.0
        %6123 = vmatpush1.msra.mxu0 0.0
        %6124 = vmatprep.subr.mxu0 0.0
        %6125 = vmatpush1.msra.mxu0 0.0
        %6126 = vmatprep.subr.mxu0 0.0
        %6127 = vmatpush1.msra.mxu0 0.0
        %6128 = vmatprep.subr.mxu0 0.0
        %6129 = vmatpush1.msra.mxu0 0.0
        %6130 = vmatprep.subr.mxu0 0.0
        %6131 = vmatpush1.msra.mxu0 0.0
        %6132 = vmatprep.subr.mxu0 0.0
        %6133 = vmatpush1.msra.mxu0 0.0
        %6134 = vmatprep.subr.mxu0 0.0
        %6135 = vmatpush1.msra.mxu0 0.0
        %6136 = vmatprep.subr.mxu0 0.0
        %6137 = vmatpush1.msra.mxu0 0.0
        %6138 = vmatprep.subr.mxu0 0.0
        %6139 = vmatpush1.msra.mxu0 0.0
        %6140 = vmatprep.subr.mxu0 0.0
        %6141 = vmatpush1.msra.mxu0 0.0
        %6142 = vmatprep.subr.mxu0 0.0
        %6143 = vmatpush1.msra.mxu0 0.0
        %6144 = vmatprep.subr.mxu0 0.0
        %6145 = vmatpush1.msra.mxu0 0.0
        %6146 = vmatprep.subr.mxu0 0.0
        %6147 = vmatpush1.msra.mxu0 0.0
        %6148 = vmatprep.subr.mxu0 0.0
        %6149 = vmatpush1.msra.mxu0 0.0
        %6150 = vmatprep.subr.mxu0 0.0
        %6151 = vmatpush1.msra.mxu0 0.0
        %6152 = vmatprep.subr.mxu0 0.0
        %6153 = vmatpush1.msra.mxu0 0.0
        %6154 = vmatprep.subr.mxu0 0.0
        %6155 = vmatpush1.msra.mxu0 0.0
        %6156 = vmatprep.subr.mxu0 0.0
        %6157 = vmatpush1.msra.mxu0 0.0
        %6158 = vmatprep.subr.mxu0 0.0
        %6159 = vmatpush1.msra.mxu0 0.0
        %6160 = vmatprep.subr.mxu0 0.0
        %6161 = vmatpush1.msra.mxu0 0.0
        %6162 = vmatprep.subr.mxu0 0.0
        %6163 = vmatpush1.msra.mxu0 0.0
        %6164 = vmatprep.subr.mxu0 0.0
        %6165 = vmatpush1.msra.mxu0 0.0
        %6166 = vmatprep.subr.mxu0 0.0
        %6167 = vmatpush1.msra.mxu0 0.0
        %6168 = vmatprep.subr.mxu0 0.0
        %6169 = vmatpush1.msra.mxu0 0.0
        %6170 = vmatprep.subr.mxu0 0.0
        %6171 = vmatpush1.msra.mxu0 0.0
        %6172 = vmatprep.subr.mxu0 0.0
        %6173 = vmatpush1.msra.mxu0 0.0
        %6174 = vmatprep.subr.mxu0 0.0
        %6175 = vmatpush1.msra.mxu0 0.0
        %6176 = vmatprep.subr.mxu0 0.0
        %6177 = vmatpush1.msra.mxu0 0.0
        %6178 = vmatprep.subr.mxu0 0.0
        %6179 = vmatpush1.msra.mxu0 0.0
        %6180 = vmatprep.mubr.f32.mxu0 0.0
        %6181 = vmatmul.mubr.f32.gmra.mrb[0].mxu0 %v6021
        %v6182 = vpop.f32.mrb[0].mxu0
        %v6183 = vadd.f32 0.0, %v6182
        %v6184 = vpop.f32.mrb[0].mxu0
        %6185 = vmatprep.mubr.f32.mxu0 0.0
        %6186 = vmatmul.mubr.f32.gmra.mrb[0].mxu0 %v6024
        %v6187 = vpop.f32.mrb[0].mxu0
        %v6188 = vadd.f32 0.0, %v6187
        %v6189 = vpop.f32.mrb[0].mxu0
        %6190 = vmatprep.mubr.f32.mxu0 0.0
        %6191 = vmatmul.mubr.f32.gmra.mrb[0].mxu0 %v6027
        %v6192 = vpop.f32.mrb[0].mxu0
        %v6193 = vadd.f32 0.0, %v6192
        %v6194 = vpop.f32.mrb[0].mxu0
        %6195 = vmatprep.mubr.f32.mxu0 0.0
        %6196 = vmatmul.mubr.f32.gmra.mrb[0].mxu0 %v6030
        %v6197 = vpop.f32.mrb[0].mxu0
        %v6198 = vadd.f32 0.0, %v6197
        %v6199 = vpop.f32.mrb[0].mxu0
        %6200 = vmatprep.mubr.f32.mxu0 0.0
        %6201 = vmatmul.mubr.f32.gmra.mrb[0].mxu0 %v6033
        %v6202 = vpop.f32.mrb[0].mxu0
        %v6203 = vadd.f32 0.0, %v6202
        %v6204 = vpop.f32.mrb[0].mxu0
        %6205 = vmatprep.mubr.f32.mxu0 0.0
        %6206 = vmatmul.mubr.f32.gmra.mrb[0].mxu0 %v6036
        %v6207 = vpop.f32.mrb[0].mxu0
        %v6208 = vadd.f32 0.0, %v6207
        %v6209 = vpop.f32.mrb[0].mxu0
        %6210 = vmatprep.mubr.f32.mxu0 0.0
        %6211 = vmatmul.mubr.f32.gmra.mrb[0].mxu0 %v6039
        %v6212 = vpop.f32.mrb[0].mxu0
        %v6213 = vadd.f32 0.0, %v6212
        %v6214 = vpop.f32.mrb[0].mxu0
        %6215 = vmatprep.mubr.f32.mxu0 0.0
        %6216 = vmatmul.mubr.f32.gmra.mrb[0].mxu0 %v6042
        %v6217 = vpop.f32.mrb[0].mxu0
        %v6218 = vadd.f32 0.0, %v6217
        %v6219 = vpop.f32.mrb[0].mxu0
        %6220 = vmatprep.mubr.f32.mxu0 0.0
        %6221 = vmatmul.mubr.f32.gmra.mrb[0].mxu0 %v6045
        %v6222 = vpop.f32.mrb[0].mxu0
        %v6223 = vadd.f32 0.0, %v6222
        %v6224 = vpop.f32.mrb[0].mxu0
        %6225 = vmatprep.mubr.f32.mxu0 0.0
        %6226 = vmatmul.mubr.f32.gmra.mrb[0].mxu0 %v6048
        %v6227 = vpop.f32.mrb[0].mxu0
        %v6228 = vadd.f32 0.0, %v6227
        %v6229 = vpop.f32.mrb[0].mxu0
        %6230 = vmatprep.mubr.f32.mxu0 0.0
        %6231 = vmatmul.mubr.f32.gmra.mrb[0].mxu0 %v6051
        %v6232 = vpop.f32.mrb[0].mxu0
        %v6233 = vadd.f32 0.0, %v6232
        %v6234 = vpop.f32.mrb[0].mxu0
        %6235 = vmatprep.mubr.f32.mxu0 0.0
        %6236 = vmatmul.mubr.f32.gmra.mrb[0].mxu0 %v6054
        %v6237 = vpop.f32.mrb[0].mxu0
        %v6238 = vadd.f32 0.0, %v6237
        %v6239 = vpop.f32.mrb[0].mxu0
        %6240 = vmatprep.mubr.f32.mxu0 0.0
        %6241 = vmatmul.mubr.f32.gmra.mrb[0].mxu0 %v6057
        %v6242 = vpop.f32.mrb[0].mxu0
        %v6243 = vadd.f32 0.0, %v6242
        %v6244 = vpop.f32.mrb[0].mxu0
        %6245 = vmatprep.mubr.f32.mxu0 0.0
        %6246 = vmatmul.mubr.f32.gmra.mrb[0].mxu0 %v6060
        %v6247 = vpop.f32.mrb[0].mxu0
        %v6248 = vadd.f32 0.0, %v6247
        %v6249 = vpop.f32.mrb[0].mxu0
        %6250 = vmatprep.mubr.f32.mxu0 0.0
        %6251 = vmatmul.mubr.f32.gmra.mrb[0].mxu0 %v6063
        %v6252 = vpop.f32.mrb[0].mxu0
        %v6253 = vadd.f32 0.0, %v6252
        %v6254 = vpop.f32.mrb[0].mxu0
        %6255 = vmatprep.mubr.f32.mxu0 0.0
        %6256 = vmatmul.mubr.f32.gmra.mrb[0].mxu0 %v6066
        %v6257 = vpop.f32.mrb[0].mxu0
        %v6258 = vadd.f32 0.0, %v6257
        %v6259 = vpop.f32.mrb[0].mxu0
        %6260 = vmatprep.mubr.f32.mxu0 0.0
        %6261 = vmatmul.mubr.f32.gmra.mrb[0].mxu0 %v6069
        %v6262 = vpop.f32.mrb[0].mxu0
        %v6263 = vadd.f32 0.0, %v6262
        %v6264 = vpop.f32.mrb[0].mxu0
        %6265 = vmatprep.mubr.f32.mxu0 0.0
        %6266 = vmatmul.mubr.f32.gmra.mrb[0].mxu0 %v6072
        %v6267 = vpop.f32.mrb[0].mxu0
        %v6268 = vadd.f32 0.0, %v6267
        %v6269 = vpop.f32.mrb[0].mxu0
        %6270 = vmatprep.mubr.f32.mxu0 0.0
        %6271 = vmatmul.mubr.f32.gmra.mrb[0].mxu0 %v6075
        %v6272 = vpop.f32.mrb[0].mxu0
        %v6273 = vadd.f32 0.0, %v6272
        %v6274 = vpop.f32.mrb[0].mxu0
        %6275 = vmatprep.mubr.f32.mxu0 0.0
        %6276 = vmatmul.mubr.f32.gmra.mrb[0].mxu0 %v6078
        %v6277 = vpop.f32.mrb[0].mxu0
        %v6278 = vadd.f32 0.0, %v6277
        %v6279 = vpop.f32.mrb[0].mxu0
        %6280 = vmatprep.mubr.f32.mxu0 0.0
        %6281 = vmatmul.mubr.f32.gmra.mrb[0].mxu0 %v6081
        %v6282 = vpop.f32.mrb[0].mxu0
        %v6283 = vadd.f32 0.0, %v6282
        %v6284 = vpop.f32.mrb[0].mxu0
        %6285 = vmatprep.mubr.f32.mxu0 0.0
        %6286 = vmatmul.mubr.f32.gmra.mrb[0].mxu0 %v6084
        %v6287 = vpop.f32.mrb[0].mxu0
        %v6288 = vadd.f32 0.0, %v6287
        %v6289 = vpop.f32.mrb[0].mxu0
        %6290 = vmatprep.mubr.f32.mxu0 0.0
        %6291 = vmatmul.mubr.f32.gmra.mrb[0].mxu0 %v6087
        %v6292 = vpop.f32.mrb[0].mxu0
        %v6293 = vadd.f32 0.0, %v6292
        %v6294 = vpop.f32.mrb[0].mxu0
        %6295 = vmatprep.mubr.f32.mxu0 0.0
        %6296 = vmatmul.mubr.f32.gmra.mrb[0].mxu0 %v6090
        %v6297 = vpop.f32.mrb[0].mxu0
        %v6298 = vadd.f32 0.0, %v6297
        %v6299 = vpop.f32.mrb[0].mxu0
        %6300 = vmatprep.mubr.f32.mxu0 0.0
        %6301 = vmatmul.mubr.f32.gmra.mrb[0].mxu0 %v6093
        %v6302 = vpop.f32.mrb[0].mxu0
        %v6303 = vadd.f32 0.0, %v6302
        %v6304 = vpop.f32.mrb[0].mxu0
        %6305 = vmatprep.mubr.f32.mxu0 0.0
        %6306 = vmatmul.mubr.f32.gmra.mrb[0].mxu0 %v6096
        %v6307 = vpop.f32.mrb[0].mxu0
        %v6308 = vadd.f32 0.0, %v6307
        %v6309 = vpop.f32.mrb[0].mxu0
        %6310 = vmatprep.mubr.f32.mxu0 0.0
        %6311 = vmatmul.mubr.f32.gmra.mrb[0].mxu0 %v6099
        %v6312 = vpop.f32.mrb[0].mxu0
        %v6313 = vadd.f32 0.0, %v6312
        %v6314 = vpop.f32.mrb[0].mxu0
        %6315 = vmatprep.mubr.f32.mxu0 0.0
        %6316 = vmatmul.mubr.f32.gmra.mrb[0].mxu0 %v6102
        %v6317 = vpop.f32.mrb[0].mxu0
        %v6318 = vadd.f32 0.0, %v6317
        %v6319 = vpop.f32.mrb[0].mxu0
        %6320 = vmatprep.mubr.f32.mxu0 0.0
        %6321 = vmatmul.mubr.f32.gmra.mrb[0].mxu0 %v6105
        %v6322 = vpop.f32.mrb[0].mxu0
        %v6323 = vadd.f32 0.0, %v6322
        %v6324 = vpop.f32.mrb[0].mxu0
        %6325 = vmatprep.mubr.f32.mxu0 0.0
        %6326 = vmatmul.mubr.f32.gmra.mrb[0].mxu0 %v6108
        %v6327 = vpop.f32.mrb[0].mxu0
        %v6328 = vadd.f32 0.0, %v6327
        %v6329 = vpop.f32.mrb[0].mxu0
        %6330 = vmatprep.mubr.f32.mxu0 0.0
        %6331 = vmatmul.mubr.f32.gmra.mrb[0].mxu0 %v6111
        %v6332 = vpop.f32.mrb[0].mxu0
        %v6333 = vadd.f32 0.0, %v6332
        %v6334 = vpop.f32.mrb[0].mxu0
        %6335 = vmatprep.mubr.f32.mxu0 0.0
        %6336 = vmatmul.mubr.f32.gmra.mrb[0].mxu0 %v6114
        %v6337 = vpop.f32.mrb[0].mxu0
        %v6338 = vadd.f32 0.0, %v6337
        %v6339 = vpop.f32.mrb[0].mxu0
        %6340 = vdwg.mxu0
        %v6341 = vadd.f32 %v5956, %v6183
        %v6342 = vadd.f32 %v5957, %v6188
        %v6343 = vadd.f32 %v5958, %v6193
        %v6344 = vadd.f32 %v5959, %v6198
        %v6345 = vadd.f32 %v5960, %v6203
        %v6346 = vadd.f32 %v5961, %v6208
        %v6347 = vadd.f32 %v5962, %v6213
        %v6348 = vadd.f32 %v5963, %v6218
        %v6349 = vadd.f32 %v5964, %v6223
        %v6350 = vadd.f32 %v5965, %v6228
        %v6351 = vadd.f32 %v5966, %v6233
        %v6352 = vadd.f32 %v5967, %v6238
        %v6353 = vadd.f32 %v5968, %v6243
        %v6354 = vadd.f32 %v5969, %v6248
        %v6355 = vadd.f32 %v5970, %v6253
        %v6356 = vadd.f32 %v5971, %v6258
        %v6357 = vadd.f32 %v5972, %v6263
        %v6358 = vadd.f32 %v5973, %v6268
        %v6359 = vadd.f32 %v5974, %v6273
        %v6360 = vadd.f32 %v5975, %v6278
        %v6361 = vadd.f32 %v5976, %v6283
        %v6362 = vadd.f32 %v5977, %v6288
        %v6363 = vadd.f32 %v5978, %v6293
        %v6364 = vadd.f32 %v5979, %v6298
        %v6365 = vadd.f32 %v5980, %v6303
        %v6366 = vadd.f32 %v5981, %v6308
        %v6367 = vadd.f32 %v5982, %v6313
        %v6368 = vadd.f32 %v5983, %v6318
        %v6369 = vadd.f32 %v5984, %v6323
        %v6370 = vadd.f32 %v5985, %v6328
        %v6371 = vadd.f32 %v5986, %v6333
        %v6372 = vadd.f32 %v5987, %v6338
        %s6373 = scalar_lea.vmem [#allocation2], 48
        %v6374 = vld [vmem:[%s6373] sm:$0xff]
        %v6375 = vld [vmem:[%s6373 + $0x8] sm:$0xff]
        %v6376 = vld [vmem:[%s6373 + $0x18] sm:$0xff]
        %v6377 = vld [vmem:[%s6373 + $0x20] sm:$0xff]
        %v6378 = vld [vmem:[%s6373 + $0x30] sm:$0xff]
        %v6379 = vld [vmem:[%s6373 + $0x38] sm:$0xff]
        %v6380 = vld [vmem:[%s6373 + $0x48] sm:$0xff]
        %v6381 = vld [vmem:[%s6373 + $0x50] sm:$0xff]
        %v6382 = vld [vmem:[%s6373 + $0x60] sm:$0xff]
        %v6383 = vld [vmem:[%s6373 + $0x68] sm:$0xff]
        %v6384 = vld [vmem:[%s6373 + $0x78] sm:$0xff]
        %v6385 = vld [vmem:[%s6373 + $0x80] sm:$0xff]
        %v6386 = vld [vmem:[%s6373 + $0x90] sm:$0xff]
        %v6387 = vld [vmem:[%s6373 + $0x98] sm:$0xff]
        %v6388 = vld [vmem:[%s6373 + $0xa8] sm:$0xff]
        %v6389 = vld [vmem:[%s6373 + $0xb0] sm:$0xff]
        %v6390 = vld [vmem:[%s6373 + $0xc0] sm:$0xff]
        %v6391 = vld [vmem:[%s6373 + $0xc8] sm:$0xff]
        %v6392 = vld [vmem:[%s6373 + $0xd8] sm:$0xff]
        %v6393 = vld [vmem:[%s6373 + $0xe0] sm:$0xff]
        %v6394 = vld [vmem:[%s6373 + $0xf0] sm:$0xff]
        %v6395 = vld [vmem:[%s6373 + $0xf8] sm:$0xff]
        %v6396 = vld [vmem:[%s6373 + $0x108] sm:$0xff]
        %v6397 = vld [vmem:[%s6373 + $0x110] sm:$0xff]
        %v6398 = vld [vmem:[%s6373 + $0x120] sm:$0xff]
        %v6399 = vld [vmem:[%s6373 + $0x128] sm:$0xff]
        %v6400 = vld [vmem:[%s6373 + $0x138] sm:$0xff]
        %v6401 = vld [vmem:[%s6373 + $0x140] sm:$0xff]
        %v6402 = vld [vmem:[%s6373 + $0x150] sm:$0xff]
        %v6403 = vld [vmem:[%s6373 + $0x158] sm:$0xff]
        %v6404 = vld [vmem:[%s6373 + $0x168] sm:$0xff]
        %v6405 = vld [vmem:[%s6373 + $0x170] sm:$0xff]
        %v6407 = vsel %vm243, %v6374, 0
        %v6410 = vsel %vm243, %v6375, 0
        %v6413 = vsel %vm243, %v6376, 0
        %v6416 = vsel %vm243, %v6377, 0
        %v6419 = vsel %vm243, %v6378, 0
        %v6422 = vsel %vm243, %v6379, 0
        %v6425 = vsel %vm243, %v6380, 0
        %v6428 = vsel %vm243, %v6381, 0
        %v6431 = vsel %vm243, %v6382, 0
        %v6434 = vsel %vm243, %v6383, 0
        %v6437 = vsel %vm243, %v6384, 0
        %v6440 = vsel %vm243, %v6385, 0
        %v6443 = vsel %vm243, %v6386, 0
        %v6446 = vsel %vm243, %v6387, 0
        %v6449 = vsel %vm243, %v6388, 0
        %v6452 = vsel %vm243, %v6389, 0
        %v6455 = vsel %vm243, %v6390, 0
        %v6458 = vsel %vm243, %v6391, 0
        %v6461 = vsel %vm243, %v6392, 0
        %v6464 = vsel %vm243, %v6393, 0
        %v6467 = vsel %vm243, %v6394, 0
        %v6470 = vsel %vm243, %v6395, 0
        %v6473 = vsel %vm243, %v6396, 0
        %v6476 = vsel %vm243, %v6397, 0
        %v6479 = vsel %vm243, %v6398, 0
        %v6482 = vsel %vm243, %v6399, 0
        %v6485 = vsel %vm243, %v6400, 0
        %v6488 = vsel %vm243, %v6401, 0
        %v6491 = vsel %vm243, %v6402, 0
        %v6494 = vsel %vm243, %v6403, 0
        %v6497 = vsel %vm243, %v6404, 0
        %v6500 = vsel %vm243, %v6405, 0
        %6502 = vmatprep.subr.mxu0 0.0
        %6503 = vmatpush1.msra.mxu0 %v238
        %6504 = vmatprep.subr.mxu0 0.0
        %6505 = vmatpush1.msra.mxu0 0.0
        %6506 = vmatprep.subr.mxu0 0.0
        %6507 = vmatpush1.msra.mxu0 0.0
        %6508 = vmatprep.subr.mxu0 0.0
        %6509 = vmatpush1.msra.mxu0 0.0
        %6510 = vmatprep.subr.mxu0 0.0
        %6511 = vmatpush1.msra.mxu0 0.0
        %6512 = vmatprep.subr.mxu0 0.0
        %6513 = vmatpush1.msra.mxu0 0.0
        %6514 = vmatprep.subr.mxu0 0.0
        %6515 = vmatpush1.msra.mxu0 0.0
        %6516 = vmatprep.subr.mxu0 0.0
        %6517 = vmatpush1.msra.mxu0 0.0
        %6518 = vmatprep.subr.mxu0 0.0
        %6519 = vmatpush1.msra.mxu0 0.0
        %6520 = vmatprep.subr.mxu0 0.0
        %6521 = vmatpush1.msra.mxu0 0.0
        %6522 = vmatprep.subr.mxu0 0.0
        %6523 = vmatpush1.msra.mxu0 0.0
        %6524 = vmatprep.subr.mxu0 0.0
        %6525 = vmatpush1.msra.mxu0 0.0
        %6526 = vmatprep.subr.mxu0 0.0
        %6527 = vmatpush1.msra.mxu0 0.0
        %6528 = vmatprep.subr.mxu0 0.0
        %6529 = vmatpush1.msra.mxu0 0.0
        %6530 = vmatprep.subr.mxu0 0.0
        %6531 = vmatpush1.msra.mxu0 0.0
        %6532 = vmatprep.subr.mxu0 0.0
        %6533 = vmatpush1.msra.mxu0 0.0
        %6534 = vmatprep.subr.mxu0 0.0
        %6535 = vmatpush1.msra.mxu0 0.0
        %6536 = vmatprep.subr.mxu0 0.0
        %6537 = vmatpush1.msra.mxu0 0.0
        %6538 = vmatprep.subr.mxu0 0.0
        %6539 = vmatpush1.msra.mxu0 0.0
        %6540 = vmatprep.subr.mxu0 0.0
        %6541 = vmatpush1.msra.mxu0 0.0
        %6542 = vmatprep.subr.mxu0 0.0
        %6543 = vmatpush1.msra.mxu0 0.0
        %6544 = vmatprep.subr.mxu0 0.0
        %6545 = vmatpush1.msra.mxu0 0.0
        %6546 = vmatprep.subr.mxu0 0.0
        %6547 = vmatpush1.msra.mxu0 0.0
        %6548 = vmatprep.subr.mxu0 0.0
        %6549 = vmatpush1.msra.mxu0 0.0
        %6550 = vmatprep.subr.mxu0 0.0
        %6551 = vmatpush1.msra.mxu0 0.0
        %6552 = vmatprep.subr.mxu0 0.0
        %6553 = vmatpush1.msra.mxu0 0.0
        %6554 = vmatprep.subr.mxu0 0.0
        %6555 = vmatpush1.msra.mxu0 0.0
        %6556 = vmatprep.subr.mxu0 0.0
        %6557 = vmatpush1.msra.mxu0 0.0
        %6558 = vmatprep.subr.mxu0 0.0
        %6559 = vmatpush1.msra.mxu0 0.0
        %6560 = vmatprep.subr.mxu0 0.0
        %6561 = vmatpush1.msra.mxu0 0.0
        %6562 = vmatprep.subr.mxu0 0.0
        %6563 = vmatpush1.msra.mxu0 0.0
        %6564 = vmatprep.subr.mxu0 0.0
        %6565 = vmatpush1.msra.mxu0 0.0
        %6566 = vmatprep.mubr.f32.mxu0 0.0
        %6567 = vmatmul.mubr.f32.gmra.mrb[0].mxu0 %v6407
        %v6568 = vpop.f32.mrb[0].mxu0
        %v6569 = vadd.f32 0.0, %v6568
        %v6570 = vpop.f32.mrb[0].mxu0
        %6571 = vmatprep.mubr.f32.mxu0 0.0
        %6572 = vmatmul.mubr.f32.gmra.mrb[0].mxu0 %v6410
        %v6573 = vpop.f32.mrb[0].mxu0
        %v6574 = vadd.f32 0.0, %v6573
        %v6575 = vpop.f32.mrb[0].mxu0
        %6576 = vmatprep.mubr.f32.mxu0 0.0
        %6577 = vmatmul.mubr.f32.gmra.mrb[0].mxu0 %v6413
        %v6578 = vpop.f32.mrb[0].mxu0
        %v6579 = vadd.f32 0.0, %v6578
        %v6580 = vpop.f32.mrb[0].mxu0
        %6581 = vmatprep.mubr.f32.mxu0 0.0
        %6582 = vmatmul.mubr.f32.gmra.mrb[0].mxu0 %v6416
        %v6583 = vpop.f32.mrb[0].mxu0
        %v6584 = vadd.f32 0.0, %v6583
        %v6585 = vpop.f32.mrb[0].mxu0
        %6586 = vmatprep.mubr.f32.mxu0 0.0
        %6587 = vmatmul.mubr.f32.gmra.mrb[0].mxu0 %v6419
        %v6588 = vpop.f32.mrb[0].mxu0
        %v6589 = vadd.f32 0.0, %v6588
        %v6590 = vpop.f32.mrb[0].mxu0
        %6591 = vmatprep.mubr.f32.mxu0 0.0
        %6592 = vmatmul.mubr.f32.gmra.mrb[0].mxu0 %v6422
        %v6593 = vpop.f32.mrb[0].mxu0
        %v6594 = vadd.f32 0.0, %v6593
        %v6595 = vpop.f32.mrb[0].mxu0
        %6596 = vmatprep.mubr.f32.mxu0 0.0
        %6597 = vmatmul.mubr.f32.gmra.mrb[0].mxu0 %v6425
        %v6598 = vpop.f32.mrb[0].mxu0
        %v6599 = vadd.f32 0.0, %v6598
        %v6600 = vpop.f32.mrb[0].mxu0
        %6601 = vmatprep.mubr.f32.mxu0 0.0
        %6602 = vmatmul.mubr.f32.gmra.mrb[0].mxu0 %v6428
        %v6603 = vpop.f32.mrb[0].mxu0
        %v6604 = vadd.f32 0.0, %v6603
        %v6605 = vpop.f32.mrb[0].mxu0
        %6606 = vmatprep.mubr.f32.mxu0 0.0
        %6607 = vmatmul.mubr.f32.gmra.mrb[0].mxu0 %v6431
        %v6608 = vpop.f32.mrb[0].mxu0
        %v6609 = vadd.f32 0.0, %v6608
        %v6610 = vpop.f32.mrb[0].mxu0
        %6611 = vmatprep.mubr.f32.mxu0 0.0
        %6612 = vmatmul.mubr.f32.gmra.mrb[0].mxu0 %v6434
        %v6613 = vpop.f32.mrb[0].mxu0
        %v6614 = vadd.f32 0.0, %v6613
        %v6615 = vpop.f32.mrb[0].mxu0
        %6616 = vmatprep.mubr.f32.mxu0 0.0
        %6617 = vmatmul.mubr.f32.gmra.mrb[0].mxu0 %v6437
        %v6618 = vpop.f32.mrb[0].mxu0
        %v6619 = vadd.f32 0.0, %v6618
        %v6620 = vpop.f32.mrb[0].mxu0
        %6621 = vmatprep.mubr.f32.mxu0 0.0
        %6622 = vmatmul.mubr.f32.gmra.mrb[0].mxu0 %v6440
        %v6623 = vpop.f32.mrb[0].mxu0
        %v6624 = vadd.f32 0.0, %v6623
        %v6625 = vpop.f32.mrb[0].mxu0
        %6626 = vmatprep.mubr.f32.mxu0 0.0
        %6627 = vmatmul.mubr.f32.gmra.mrb[0].mxu0 %v6443
        %v6628 = vpop.f32.mrb[0].mxu0
        %v6629 = vadd.f32 0.0, %v6628
        %v6630 = vpop.f32.mrb[0].mxu0
        %6631 = vmatprep.mubr.f32.mxu0 0.0
        %6632 = vmatmul.mubr.f32.gmra.mrb[0].mxu0 %v6446
        %v6633 = vpop.f32.mrb[0].mxu0
        %v6634 = vadd.f32 0.0, %v6633
        %v6635 = vpop.f32.mrb[0].mxu0
        %6636 = vmatprep.mubr.f32.mxu0 0.0
        %6637 = vmatmul.mubr.f32.gmra.mrb[0].mxu0 %v6449
        %v6638 = vpop.f32.mrb[0].mxu0
        %v6639 = vadd.f32 0.0, %v6638
        %v6640 = vpop.f32.mrb[0].mxu0
        %6641 = vmatprep.mubr.f32.mxu0 0.0
        %6642 = vmatmul.mubr.f32.gmra.mrb[0].mxu0 %v6452
        %v6643 = vpop.f32.mrb[0].mxu0
        %v6644 = vadd.f32 0.0, %v6643
        %v6645 = vpop.f32.mrb[0].mxu0
        %6646 = vmatprep.mubr.f32.mxu0 0.0
        %6647 = vmatmul.mubr.f32.gmra.mrb[0].mxu0 %v6455
        %v6648 = vpop.f32.mrb[0].mxu0
        %v6649 = vadd.f32 0.0, %v6648
        %v6650 = vpop.f32.mrb[0].mxu0
        %6651 = vmatprep.mubr.f32.mxu0 0.0
        %6652 = vmatmul.mubr.f32.gmra.mrb[0].mxu0 %v6458
        %v6653 = vpop.f32.mrb[0].mxu0
        %v6654 = vadd.f32 0.0, %v6653
        %v6655 = vpop.f32.mrb[0].mxu0
        %6656 = vmatprep.mubr.f32.mxu0 0.0
        %6657 = vmatmul.mubr.f32.gmra.mrb[0].mxu0 %v6461
        %v6658 = vpop.f32.mrb[0].mxu0
        %v6659 = vadd.f32 0.0, %v6658
        %v6660 = vpop.f32.mrb[0].mxu0
        %6661 = vmatprep.mubr.f32.mxu0 0.0
        %6662 = vmatmul.mubr.f32.gmra.mrb[0].mxu0 %v6464
        %v6663 = vpop.f32.mrb[0].mxu0
        %v6664 = vadd.f32 0.0, %v6663
        %v6665 = vpop.f32.mrb[0].mxu0
        %6666 = vmatprep.mubr.f32.mxu0 0.0
        %6667 = vmatmul.mubr.f32.gmra.mrb[0].mxu0 %v6467
        %v6668 = vpop.f32.mrb[0].mxu0
        %v6669 = vadd.f32 0.0, %v6668
        %v6670 = vpop.f32.mrb[0].mxu0
        %6671 = vmatprep.mubr.f32.mxu0 0.0
        %6672 = vmatmul.mubr.f32.gmra.mrb[0].mxu0 %v6470
        %v6673 = vpop.f32.mrb[0].mxu0
        %v6674 = vadd.f32 0.0, %v6673
        %v6675 = vpop.f32.mrb[0].mxu0
        %6676 = vmatprep.mubr.f32.mxu0 0.0
        %6677 = vmatmul.mubr.f32.gmra.mrb[0].mxu0 %v6473
        %v6678 = vpop.f32.mrb[0].mxu0
        %v6679 = vadd.f32 0.0, %v6678
        %v6680 = vpop.f32.mrb[0].mxu0
        %6681 = vmatprep.mubr.f32.mxu0 0.0
        %6682 = vmatmul.mubr.f32.gmra.mrb[0].mxu0 %v6476
        %v6683 = vpop.f32.mrb[0].mxu0
        %v6684 = vadd.f32 0.0, %v6683
        %v6685 = vpop.f32.mrb[0].mxu0
        %6686 = vmatprep.mubr.f32.mxu0 0.0
        %6687 = vmatmul.mubr.f32.gmra.mrb[0].mxu0 %v6479
        %v6688 = vpop.f32.mrb[0].mxu0
        %v6689 = vadd.f32 0.0, %v6688
        %v6690 = vpop.f32.mrb[0].mxu0
        %6691 = vmatprep.mubr.f32.mxu0 0.0
        %6692 = vmatmul.mubr.f32.gmra.mrb[0].mxu0 %v6482
        %v6693 = vpop.f32.mrb[0].mxu0
        %v6694 = vadd.f32 0.0, %v6693
        %v6695 = vpop.f32.mrb[0].mxu0
        %6696 = vmatprep.mubr.f32.mxu0 0.0
        %6697 = vmatmul.mubr.f32.gmra.mrb[0].mxu0 %v6485
        %v6698 = vpop.f32.mrb[0].mxu0
        %v6699 = vadd.f32 0.0, %v6698
        %v6700 = vpop.f32.mrb[0].mxu0
        %6701 = vmatprep.mubr.f32.mxu0 0.0
        %6702 = vmatmul.mubr.f32.gmra.mrb[0].mxu0 %v6488
        %v6703 = vpop.f32.mrb[0].mxu0
        %v6704 = vadd.f32 0.0, %v6703
        %v6705 = vpop.f32.mrb[0].mxu0
        %6706 = vmatprep.mubr.f32.mxu0 0.0
        %6707 = vmatmul.mubr.f32.gmra.mrb[0].mxu0 %v6491
        %v6708 = vpop.f32.mrb[0].mxu0
        %v6709 = vadd.f32 0.0, %v6708
        %v6710 = vpop.f32.mrb[0].mxu0
        %6711 = vmatprep.mubr.f32.mxu0 0.0
        %6712 = vmatmul.mubr.f32.gmra.mrb[0].mxu0 %v6494
        %v6713 = vpop.f32.mrb[0].mxu0
        %v6714 = vadd.f32 0.0, %v6713
        %v6715 = vpop.f32.mrb[0].mxu0
        %6716 = vmatprep.mubr.f32.mxu0 0.0
        %6717 = vmatmul.mubr.f32.gmra.mrb[0].mxu0 %v6497
        %v6718 = vpop.f32.mrb[0].mxu0
        %v6719 = vadd.f32 0.0, %v6718
        %v6720 = vpop.f32.mrb[0].mxu0
        %6721 = vmatprep.mubr.f32.mxu0 0.0
        %6722 = vmatmul.mubr.f32.gmra.mrb[0].mxu0 %v6500
        %v6723 = vpop.f32.mrb[0].mxu0
        %v6724 = vadd.f32 0.0, %v6723
        %v6725 = vpop.f32.mrb[0].mxu0
        %6726 = vdwg.mxu0
        %v6727 = vadd.f32 %v6341, %v6569
        %v6728 = vadd.f32 %v6342, %v6574
        %v6729 = vadd.f32 %v6343, %v6579
        %v6730 = vadd.f32 %v6344, %v6584
        %v6731 = vadd.f32 %v6345, %v6589
        %v6732 = vadd.f32 %v6346, %v6594
        %v6733 = vadd.f32 %v6347, %v6599
        %v6734 = vadd.f32 %v6348, %v6604
        %v6735 = vadd.f32 %v6349, %v6609
        %v6736 = vadd.f32 %v6350, %v6614
        %v6737 = vadd.f32 %v6351, %v6619
        %v6738 = vadd.f32 %v6352, %v6624
        %v6739 = vadd.f32 %v6353, %v6629
        %v6740 = vadd.f32 %v6354, %v6634
        %v6741 = vadd.f32 %v6355, %v6639
        %v6742 = vadd.f32 %v6356, %v6644
        %v6743 = vadd.f32 %v6357, %v6649
        %v6744 = vadd.f32 %v6358, %v6654
        %v6745 = vadd.f32 %v6359, %v6659
        %v6746 = vadd.f32 %v6360, %v6664
        %v6747 = vadd.f32 %v6361, %v6669
        %v6748 = vadd.f32 %v6362, %v6674
        %v6749 = vadd.f32 %v6363, %v6679
        %v6750 = vadd.f32 %v6364, %v6684
        %v6751 = vadd.f32 %v6365, %v6689
        %v6752 = vadd.f32 %v6366, %v6694
        %v6753 = vadd.f32 %v6367, %v6699
        %v6754 = vadd.f32 %v6368, %v6704
        %v6755 = vadd.f32 %v6369, %v6709
        %v6756 = vadd.f32 %v6370, %v6714
        %v6757 = vadd.f32 %v6371, %v6719
        %v6758 = vadd.f32 %v6372, %v6724
        %v6759 = vld [vmem:[%s6373 + $0x1] sm:$0xff]
        %v6760 = vld [vmem:[%s6373 + $0x9] sm:$0xff]
        %v6761 = vld [vmem:[%s6373 + $0x19] sm:$0xff]
        %v6762 = vld [vmem:[%s6373 + $0x21] sm:$0xff]
        %v6763 = vld [vmem:[%s6373 + $0x31] sm:$0xff]
        %v6764 = vld [vmem:[%s6373 + $0x39] sm:$0xff]
        %v6765 = vld [vmem:[%s6373 + $0x49] sm:$0xff]
        %v6766 = vld [vmem:[%s6373 + $0x51] sm:$0xff]
        %v6767 = vld [vmem:[%s6373 + $0x61] sm:$0xff]
        %v6768 = vld [vmem:[%s6373 + $0x69] sm:$0xff]
        %v6769 = vld [vmem:[%s6373 + $0x79] sm:$0xff]
        %v6770 = vld [vmem:[%s6373 + $0x81] sm:$0xff]
        %v6771 = vld [vmem:[%s6373 + $0x91] sm:$0xff]
        %v6772 = vld [vmem:[%s6373 + $0x99] sm:$0xff]
        %v6773 = vld [vmem:[%s6373 + $0xa9] sm:$0xff]
        %v6774 = vld [vmem:[%s6373 + $0xb1] sm:$0xff]
        %v6775 = vld [vmem:[%s6373 + $0xc1] sm:$0xff]
        %v6776 = vld [vmem:[%s6373 + $0xc9] sm:$0xff]
        %v6777 = vld [vmem:[%s6373 + $0xd9] sm:$0xff]
        %v6778 = vld [vmem:[%s6373 + $0xe1] sm:$0xff]
        %v6779 = vld [vmem:[%s6373 + $0xf1] sm:$0xff]
        %v6780 = vld [vmem:[%s6373 + $0xf9] sm:$0xff]
        %v6781 = vld [vmem:[%s6373 + $0x109] sm:$0xff]
        %v6782 = vld [vmem:[%s6373 + $0x111] sm:$0xff]
        %v6783 = vld [vmem:[%s6373 + $0x121] sm:$0xff]
        %v6784 = vld [vmem:[%s6373 + $0x129] sm:$0xff]
        %v6785 = vld [vmem:[%s6373 + $0x139] sm:$0xff]
        %v6786 = vld [vmem:[%s6373 + $0x141] sm:$0xff]
        %v6787 = vld [vmem:[%s6373 + $0x151] sm:$0xff]
        %v6788 = vld [vmem:[%s6373 + $0x159] sm:$0xff]
        %v6789 = vld [vmem:[%s6373 + $0x169] sm:$0xff]
        %v6790 = vld [vmem:[%s6373 + $0x171] sm:$0xff]
        %v6792 = vsel %vm243, %v6759, 0
        %v6795 = vsel %vm243, %v6760, 0
        %v6798 = vsel %vm243, %v6761, 0
        %v6801 = vsel %vm243, %v6762, 0
        %v6804 = vsel %vm243, %v6763, 0
        %v6807 = vsel %vm243, %v6764, 0
        %v6810 = vsel %vm243, %v6765, 0
        %v6813 = vsel %vm243, %v6766, 0
        %v6816 = vsel %vm243, %v6767, 0
        %v6819 = vsel %vm243, %v6768, 0
        %v6822 = vsel %vm243, %v6769, 0
        %v6825 = vsel %vm243, %v6770, 0
        %v6828 = vsel %vm243, %v6771, 0
        %v6831 = vsel %vm243, %v6772, 0
        %v6834 = vsel %vm243, %v6773, 0
        %v6837 = vsel %vm243, %v6774, 0
        %v6840 = vsel %vm243, %v6775, 0
        %v6843 = vsel %vm243, %v6776, 0
        %v6846 = vsel %vm243, %v6777, 0
        %v6849 = vsel %vm243, %v6778, 0
        %v6852 = vsel %vm243, %v6779, 0
        %v6855 = vsel %vm243, %v6780, 0
        %v6858 = vsel %vm243, %v6781, 0
        %v6861 = vsel %vm243, %v6782, 0
        %v6864 = vsel %vm243, %v6783, 0
        %v6867 = vsel %vm243, %v6784, 0
        %v6870 = vsel %vm243, %v6785, 0
        %v6873 = vsel %vm243, %v6786, 0
        %v6876 = vsel %vm243, %v6787, 0
        %v6879 = vsel %vm243, %v6788, 0
        %v6882 = vsel %vm243, %v6789, 0
        %v6885 = vsel %vm243, %v6790, 0
        %6887 = vmatprep.subr.mxu0 0.0
        %6888 = vmatpush1.msra.mxu0 %v239
        %6889 = vmatprep.subr.mxu0 0.0
        %6890 = vmatpush1.msra.mxu0 0.0
        %6891 = vmatprep.subr.mxu0 0.0
        %6892 = vmatpush1.msra.mxu0 0.0
        %6893 = vmatprep.subr.mxu0 0.0
        %6894 = vmatpush1.msra.mxu0 0.0
        %6895 = vmatprep.subr.mxu0 0.0
        %6896 = vmatpush1.msra.mxu0 0.0
        %6897 = vmatprep.subr.mxu0 0.0
        %6898 = vmatpush1.msra.mxu0 0.0
        %6899 = vmatprep.subr.mxu0 0.0
        %6900 = vmatpush1.msra.mxu0 0.0
        %6901 = vmatprep.subr.mxu0 0.0
        %6902 = vmatpush1.msra.mxu0 0.0
        %6903 = vmatprep.subr.mxu0 0.0
        %6904 = vmatpush1.msra.mxu0 0.0
        %6905 = vmatprep.subr.mxu0 0.0
        %6906 = vmatpush1.msra.mxu0 0.0
        %6907 = vmatprep.subr.mxu0 0.0
        %6908 = vmatpush1.msra.mxu0 0.0
        %6909 = vmatprep.subr.mxu0 0.0
        %6910 = vmatpush1.msra.mxu0 0.0
        %6911 = vmatprep.subr.mxu0 0.0
        %6912 = vmatpush1.msra.mxu0 0.0
        %6913 = vmatprep.subr.mxu0 0.0
        %6914 = vmatpush1.msra.mxu0 0.0
        %6915 = vmatprep.subr.mxu0 0.0
        %6916 = vmatpush1.msra.mxu0 0.0
        %6917 = vmatprep.subr.mxu0 0.0
        %6918 = vmatpush1.msra.mxu0 0.0
        %6919 = vmatprep.subr.mxu0 0.0
        %6920 = vmatpush1.msra.mxu0 0.0
        %6921 = vmatprep.subr.mxu0 0.0
        %6922 = vmatpush1.msra.mxu0 0.0
        %6923 = vmatprep.subr.mxu0 0.0
        %6924 = vmatpush1.msra.mxu0 0.0
        %6925 = vmatprep.subr.mxu0 0.0
        %6926 = vmatpush1.msra.mxu0 0.0
        %6927 = vmatprep.subr.mxu0 0.0
        %6928 = vmatpush1.msra.mxu0 0.0
        %6929 = vmatprep.subr.mxu0 0.0
        %6930 = vmatpush1.msra.mxu0 0.0
        %6931 = vmatprep.subr.mxu0 0.0
        %6932 = vmatpush1.msra.mxu0 0.0
        %6933 = vmatprep.subr.mxu0 0.0
        %6934 = vmatpush1.msra.mxu0 0.0
        %6935 = vmatprep.subr.mxu0 0.0
        %6936 = vmatpush1.msra.mxu0 0.0
        %6937 = vmatprep.subr.mxu0 0.0
        %6938 = vmatpush1.msra.mxu0 0.0
        %6939 = vmatprep.subr.mxu0 0.0
        %6940 = vmatpush1.msra.mxu0 0.0
        %6941 = vmatprep.subr.mxu0 0.0
        %6942 = vmatpush1.msra.mxu0 0.0
        %6943 = vmatprep.subr.mxu0 0.0
        %6944 = vmatpush1.msra.mxu0 0.0
        %6945 = vmatprep.subr.mxu0 0.0
        %6946 = vmatpush1.msra.mxu0 0.0
        %6947 = vmatprep.subr.mxu0 0.0
        %6948 = vmatpush1.msra.mxu0 0.0
        %6949 = vmatprep.subr.mxu0 0.0
        %6950 = vmatpush1.msra.mxu0 0.0
        %6951 = vmatprep.mubr.f32.mxu0 0.0
        %6952 = vmatmul.mubr.f32.gmra.mrb[0].mxu0 %v6792
        %v6953 = vpop.f32.mrb[0].mxu0
        %v6954 = vadd.f32 0.0, %v6953
        %v6955 = vpop.f32.mrb[0].mxu0
        %6956 = vmatprep.mubr.f32.mxu0 0.0
        %6957 = vmatmul.mubr.f32.gmra.mrb[0].mxu0 %v6795
        %v6958 = vpop.f32.mrb[0].mxu0
        %v6959 = vadd.f32 0.0, %v6958
        %v6960 = vpop.f32.mrb[0].mxu0
        %6961 = vmatprep.mubr.f32.mxu0 0.0
        %6962 = vmatmul.mubr.f32.gmra.mrb[0].mxu0 %v6798
        %v6963 = vpop.f32.mrb[0].mxu0
        %v6964 = vadd.f32 0.0, %v6963
        %v6965 = vpop.f32.mrb[0].mxu0
        %6966 = vmatprep.mubr.f32.mxu0 0.0
        %6967 = vmatmul.mubr.f32.gmra.mrb[0].mxu0 %v6801
        %v6968 = vpop.f32.mrb[0].mxu0
        %v6969 = vadd.f32 0.0, %v6968
        %v6970 = vpop.f32.mrb[0].mxu0
        %6971 = vmatprep.mubr.f32.mxu0 0.0
        %6972 = vmatmul.mubr.f32.gmra.mrb[0].mxu0 %v6804
        %v6973 = vpop.f32.mrb[0].mxu0
        %v6974 = vadd.f32 0.0, %v6973
        %v6975 = vpop.f32.mrb[0].mxu0
        %6976 = vmatprep.mubr.f32.mxu0 0.0
        %6977 = vmatmul.mubr.f32.gmra.mrb[0].mxu0 %v6807
        %v6978 = vpop.f32.mrb[0].mxu0
        %v6979 = vadd.f32 0.0, %v6978
        %v6980 = vpop.f32.mrb[0].mxu0
        %6981 = vmatprep.mubr.f32.mxu0 0.0
        %6982 = vmatmul.mubr.f32.gmra.mrb[0].mxu0 %v6810
        %v6983 = vpop.f32.mrb[0].mxu0
        %v6984 = vadd.f32 0.0, %v6983
        %v6985 = vpop.f32.mrb[0].mxu0
        %6986 = vmatprep.mubr.f32.mxu0 0.0
        %6987 = vmatmul.mubr.f32.gmra.mrb[0].mxu0 %v6813
        %v6988 = vpop.f32.mrb[0].mxu0
        %v6989 = vadd.f32 0.0, %v6988
        %v6990 = vpop.f32.mrb[0].mxu0
        %6991 = vmatprep.mubr.f32.mxu0 0.0
        %6992 = vmatmul.mubr.f32.gmra.mrb[0].mxu0 %v6816
        %v6993 = vpop.f32.mrb[0].mxu0
        %v6994 = vadd.f32 0.0, %v6993
        %v6995 = vpop.f32.mrb[0].mxu0
        %6996 = vmatprep.mubr.f32.mxu0 0.0
        %6997 = vmatmul.mubr.f32.gmra.mrb[0].mxu0 %v6819
        %v6998 = vpop.f32.mrb[0].mxu0
        %v6999 = vadd.f32 0.0, %v6998
        %v7000 = vpop.f32.mrb[0].mxu0
        %7001 = vmatprep.mubr.f32.mxu0 0.0
        %7002 = vmatmul.mubr.f32.gmra.mrb[0].mxu0 %v6822
        %v7003 = vpop.f32.mrb[0].mxu0
        %v7004 = vadd.f32 0.0, %v7003
        %v7005 = vpop.f32.mrb[0].mxu0
        %7006 = vmatprep.mubr.f32.mxu0 0.0
        %7007 = vmatmul.mubr.f32.gmra.mrb[0].mxu0 %v6825
        %v7008 = vpop.f32.mrb[0].mxu0
        %v7009 = vadd.f32 0.0, %v7008
        %v7010 = vpop.f32.mrb[0].mxu0
        %7011 = vmatprep.mubr.f32.mxu0 0.0
        %7012 = vmatmul.mubr.f32.gmra.mrb[0].mxu0 %v6828
        %v7013 = vpop.f32.mrb[0].mxu0
        %v7014 = vadd.f32 0.0, %v7013
        %v7015 = vpop.f32.mrb[0].mxu0
        %7016 = vmatprep.mubr.f32.mxu0 0.0
        %7017 = vmatmul.mubr.f32.gmra.mrb[0].mxu0 %v6831
        %v7018 = vpop.f32.mrb[0].mxu0
        %v7019 = vadd.f32 0.0, %v7018
        %v7020 = vpop.f32.mrb[0].mxu0
        %7021 = vmatprep.mubr.f32.mxu0 0.0
        %7022 = vmatmul.mubr.f32.gmra.mrb[0].mxu0 %v6834
        %v7023 = vpop.f32.mrb[0].mxu0
        %v7024 = vadd.f32 0.0, %v7023
        %v7025 = vpop.f32.mrb[0].mxu0
        %7026 = vmatprep.mubr.f32.mxu0 0.0
        %7027 = vmatmul.mubr.f32.gmra.mrb[0].mxu0 %v6837
        %v7028 = vpop.f32.mrb[0].mxu0
        %v7029 = vadd.f32 0.0, %v7028
        %v7030 = vpop.f32.mrb[0].mxu0
        %7031 = vmatprep.mubr.f32.mxu0 0.0
        %7032 = vmatmul.mubr.f32.gmra.mrb[0].mxu0 %v6840
        %v7033 = vpop.f32.mrb[0].mxu0
        %v7034 = vadd.f32 0.0, %v7033
        %v7035 = vpop.f32.mrb[0].mxu0
        %7036 = vmatprep.mubr.f32.mxu0 0.0
        %7037 = vmatmul.mubr.f32.gmra.mrb[0].mxu0 %v6843
        %v7038 = vpop.f32.mrb[0].mxu0
        %v7039 = vadd.f32 0.0, %v7038
        %v7040 = vpop.f32.mrb[0].mxu0
        %7041 = vmatprep.mubr.f32.mxu0 0.0
        %7042 = vmatmul.mubr.f32.gmra.mrb[0].mxu0 %v6846
        %v7043 = vpop.f32.mrb[0].mxu0
        %v7044 = vadd.f32 0.0, %v7043
        %v7045 = vpop.f32.mrb[0].mxu0
        %7046 = vmatprep.mubr.f32.mxu0 0.0
        %7047 = vmatmul.mubr.f32.gmra.mrb[0].mxu0 %v6849
        %v7048 = vpop.f32.mrb[0].mxu0
        %v7049 = vadd.f32 0.0, %v7048
        %v7050 = vpop.f32.mrb[0].mxu0
        %7051 = vmatprep.mubr.f32.mxu0 0.0
        %7052 = vmatmul.mubr.f32.gmra.mrb[0].mxu0 %v6852
        %v7053 = vpop.f32.mrb[0].mxu0
        %v7054 = vadd.f32 0.0, %v7053
        %v7055 = vpop.f32.mrb[0].mxu0
        %7056 = vmatprep.mubr.f32.mxu0 0.0
        %7057 = vmatmul.mubr.f32.gmra.mrb[0].mxu0 %v6855
        %v7058 = vpop.f32.mrb[0].mxu0
        %v7059 = vadd.f32 0.0, %v7058
        %v7060 = vpop.f32.mrb[0].mxu0
        %7061 = vmatprep.mubr.f32.mxu0 0.0
        %7062 = vmatmul.mubr.f32.gmra.mrb[0].mxu0 %v6858
        %v7063 = vpop.f32.mrb[0].mxu0
        %v7064 = vadd.f32 0.0, %v7063
        %v7065 = vpop.f32.mrb[0].mxu0
        %7066 = vmatprep.mubr.f32.mxu0 0.0
        %7067 = vmatmul.mubr.f32.gmra.mrb[0].mxu0 %v6861
        %v7068 = vpop.f32.mrb[0].mxu0
        %v7069 = vadd.f32 0.0, %v7068
        %v7070 = vpop.f32.mrb[0].mxu0
        %7071 = vmatprep.mubr.f32.mxu0 0.0
        %7072 = vmatmul.mubr.f32.gmra.mrb[0].mxu0 %v6864
        %v7073 = vpop.f32.mrb[0].mxu0
        %v7074 = vadd.f32 0.0, %v7073
        %v7075 = vpop.f32.mrb[0].mxu0
        %7076 = vmatprep.mubr.f32.mxu0 0.0
        %7077 = vmatmul.mubr.f32.gmra.mrb[0].mxu0 %v6867
        %v7078 = vpop.f32.mrb[0].mxu0
        %v7079 = vadd.f32 0.0, %v7078
        %v7080 = vpop.f32.mrb[0].mxu0
        %7081 = vmatprep.mubr.f32.mxu0 0.0
        %7082 = vmatmul.mubr.f32.gmra.mrb[0].mxu0 %v6870
        %v7083 = vpop.f32.mrb[0].mxu0
        %v7084 = vadd.f32 0.0, %v7083
        %v7085 = vpop.f32.mrb[0].mxu0
        %7086 = vmatprep.mubr.f32.mxu0 0.0
        %7087 = vmatmul.mubr.f32.gmra.mrb[0].mxu0 %v6873
        %v7088 = vpop.f32.mrb[0].mxu0
        %v7089 = vadd.f32 0.0, %v7088
        %v7090 = vpop.f32.mrb[0].mxu0
        %7091 = vmatprep.mubr.f32.mxu0 0.0
        %7092 = vmatmul.mubr.f32.gmra.mrb[0].mxu0 %v6876
        %v7093 = vpop.f32.mrb[0].mxu0
        %v7094 = vadd.f32 0.0, %v7093
        %v7095 = vpop.f32.mrb[0].mxu0
        %7096 = vmatprep.mubr.f32.mxu0 0.0
        %7097 = vmatmul.mubr.f32.gmra.mrb[0].mxu0 %v6879
        %v7098 = vpop.f32.mrb[0].mxu0
        %v7099 = vadd.f32 0.0, %v7098
        %v7100 = vpop.f32.mrb[0].mxu0
        %7101 = vmatprep.mubr.f32.mxu0 0.0
        %7102 = vmatmul.mubr.f32.gmra.mrb[0].mxu0 %v6882
        %v7103 = vpop.f32.mrb[0].mxu0
        %v7104 = vadd.f32 0.0, %v7103
        %v7105 = vpop.f32.mrb[0].mxu0
        %7106 = vmatprep.mubr.f32.mxu0 0.0
        %7107 = vmatmul.mubr.f32.gmra.mrb[0].mxu0 %v6885
        %v7108 = vpop.f32.mrb[0].mxu0
        %v7109 = vadd.f32 0.0, %v7108
        %v7110 = vpop.f32.mrb[0].mxu0
        %7111 = vdwg.mxu0
        %v7112 = vadd.f32 %v6727, %v6954
        %v7113 = vadd.f32 %v6728, %v6959
        %v7114 = vadd.f32 %v6729, %v6964
        %v7115 = vadd.f32 %v6730, %v6969
        %v7116 = vadd.f32 %v6731, %v6974
        %v7117 = vadd.f32 %v6732, %v6979
        %v7118 = vadd.f32 %v6733, %v6984
        %v7119 = vadd.f32 %v6734, %v6989
        %v7120 = vadd.f32 %v6735, %v6994
        %v7121 = vadd.f32 %v6736, %v6999
        %v7122 = vadd.f32 %v6737, %v7004
        %v7123 = vadd.f32 %v6738, %v7009
        %v7124 = vadd.f32 %v6739, %v7014
        %v7125 = vadd.f32 %v6740, %v7019
        %v7126 = vadd.f32 %v6741, %v7024
        %v7127 = vadd.f32 %v6742, %v7029
        %v7128 = vadd.f32 %v6743, %v7034
        %v7129 = vadd.f32 %v6744, %v7039
        %v7130 = vadd.f32 %v6745, %v7044
        %v7131 = vadd.f32 %v6746, %v7049
        %v7132 = vadd.f32 %v6747, %v7054
        %v7133 = vadd.f32 %v6748, %v7059
        %v7134 = vadd.f32 %v6749, %v7064
        %v7135 = vadd.f32 %v6750, %v7069
        %v7136 = vadd.f32 %v6751, %v7074
        %v7137 = vadd.f32 %v6752, %v7079
        %v7138 = vadd.f32 %v6753, %v7084
        %v7139 = vadd.f32 %v6754, %v7089
        %v7140 = vadd.f32 %v6755, %v7094
        %v7141 = vadd.f32 %v6756, %v7099
        %v7142 = vadd.f32 %v6757, %v7104
        %v7143 = vadd.f32 %v6758, %v7109
        %v7144 = vld [vmem:[%s6373 + $0x2] sm:$0xff]
        %v7145 = vld [vmem:[%s6373 + $0xa] sm:$0xff]
        %v7146 = vld [vmem:[%s6373 + $0x1a] sm:$0xff]
        %v7147 = vld [vmem:[%s6373 + $0x22] sm:$0xff]
        %v7148 = vld [vmem:[%s6373 + $0x32] sm:$0xff]
        %v7149 = vld [vmem:[%s6373 + $0x3a] sm:$0xff]
        %v7150 = vld [vmem:[%s6373 + $0x4a] sm:$0xff]
        %v7151 = vld [vmem:[%s6373 + $0x52] sm:$0xff]
        %v7152 = vld [vmem:[%s6373 + $0x62] sm:$0xff]
        %v7153 = vld [vmem:[%s6373 + $0x6a] sm:$0xff]
        %v7154 = vld [vmem:[%s6373 + $0x7a] sm:$0xff]
        %v7155 = vld [vmem:[%s6373 + $0x82] sm:$0xff]
        %v7156 = vld [vmem:[%s6373 + $0x92] sm:$0xff]
        %v7157 = vld [vmem:[%s6373 + $0x9a] sm:$0xff]
        %v7158 = vld [vmem:[%s6373 + $0xaa] sm:$0xff]
        %v7159 = vld [vmem:[%s6373 + $0xb2] sm:$0xff]
        %v7160 = vld [vmem:[%s6373 + $0xc2] sm:$0xff]
        %v7161 = vld [vmem:[%s6373 + $0xca] sm:$0xff]
        %v7162 = vld [vmem:[%s6373 + $0xda] sm:$0xff]
        %v7163 = vld [vmem:[%s6373 + $0xe2] sm:$0xff]
        %v7164 = vld [vmem:[%s6373 + $0xf2] sm:$0xff]
        %v7165 = vld [vmem:[%s6373 + $0xfa] sm:$0xff]
        %v7166 = vld [vmem:[%s6373 + $0x10a] sm:$0xff]
        %v7167 = vld [vmem:[%s6373 + $0x112] sm:$0xff]
        %v7168 = vld [vmem:[%s6373 + $0x122] sm:$0xff]
        %v7169 = vld [vmem:[%s6373 + $0x12a] sm:$0xff]
        %v7170 = vld [vmem:[%s6373 + $0x13a] sm:$0xff]
        %v7171 = vld [vmem:[%s6373 + $0x142] sm:$0xff]
        %v7172 = vld [vmem:[%s6373 + $0x152] sm:$0xff]
        %v7173 = vld [vmem:[%s6373 + $0x15a] sm:$0xff]
        %v7174 = vld [vmem:[%s6373 + $0x16a] sm:$0xff]
        %v7175 = vld [vmem:[%s6373 + $0x172] sm:$0xff]
        %v7177 = vsel %vm243, %v7144, 0
        %v7180 = vsel %vm243, %v7145, 0
        %v7183 = vsel %vm243, %v7146, 0
        %v7186 = vsel %vm243, %v7147, 0
        %v7189 = vsel %vm243, %v7148, 0
        %v7192 = vsel %vm243, %v7149, 0
        %v7195 = vsel %vm243, %v7150, 0
        %v7198 = vsel %vm243, %v7151, 0
        %v7201 = vsel %vm243, %v7152, 0
        %v7204 = vsel %vm243, %v7153, 0
        %v7207 = vsel %vm243, %v7154, 0
        %v7210 = vsel %vm243, %v7155, 0
        %v7213 = vsel %vm243, %v7156, 0
        %v7216 = vsel %vm243, %v7157, 0
        %v7219 = vsel %vm243, %v7158, 0
        %v7222 = vsel %vm243, %v7159, 0
        %v7225 = vsel %vm243, %v7160, 0
        %v7228 = vsel %vm243, %v7161, 0
        %v7231 = vsel %vm243, %v7162, 0
        %v7234 = vsel %vm243, %v7163, 0
        %v7237 = vsel %vm243, %v7164, 0
        %v7240 = vsel %vm243, %v7165, 0
        %v7243 = vsel %vm243, %v7166, 0
        %v7246 = vsel %vm243, %v7167, 0
        %v7249 = vsel %vm243, %v7168, 0
        %v7252 = vsel %vm243, %v7169, 0
        %v7255 = vsel %vm243, %v7170, 0
        %v7258 = vsel %vm243, %v7171, 0
        %v7261 = vsel %vm243, %v7172, 0
        %v7264 = vsel %vm243, %v7173, 0
        %v7267 = vsel %vm243, %v7174, 0
        %v7270 = vsel %vm243, %v7175, 0
        %7272 = vmatprep.subr.mxu0 0.0
        %7273 = vmatpush1.msra.mxu0 %v240
        %7274 = vmatprep.subr.mxu0 0.0
        %7275 = vmatpush1.msra.mxu0 0.0
        %7276 = vmatprep.subr.mxu0 0.0
        %7277 = vmatpush1.msra.mxu0 0.0
        %7278 = vmatprep.subr.mxu0 0.0
        %7279 = vmatpush1.msra.mxu0 0.0
        %7280 = vmatprep.subr.mxu0 0.0
        %7281 = vmatpush1.msra.mxu0 0.0
        %7282 = vmatprep.subr.mxu0 0.0
        %7283 = vmatpush1.msra.mxu0 0.0
        %7284 = vmatprep.subr.mxu0 0.0
        %7285 = vmatpush1.msra.mxu0 0.0
        %7286 = vmatprep.subr.mxu0 0.0
        %7287 = vmatpush1.msra.mxu0 0.0
        %7288 = vmatprep.subr.mxu0 0.0
        %7289 = vmatpush1.msra.mxu0 0.0
        %7290 = vmatprep.subr.mxu0 0.0
        %7291 = vmatpush1.msra.mxu0 0.0
        %7292 = vmatprep.subr.mxu0 0.0
        %7293 = vmatpush1.msra.mxu0 0.0
        %7294 = vmatprep.subr.mxu0 0.0
        %7295 = vmatpush1.msra.mxu0 0.0
        %7296 = vmatprep.subr.mxu0 0.0
        %7297 = vmatpush1.msra.mxu0 0.0
        %7298 = vmatprep.subr.mxu0 0.0
        %7299 = vmatpush1.msra.mxu0 0.0
        %7300 = vmatprep.subr.mxu0 0.0
        %7301 = vmatpush1.msra.mxu0 0.0
        %7302 = vmatprep.subr.mxu0 0.0
        %7303 = vmatpush1.msra.mxu0 0.0
        %7304 = vmatprep.subr.mxu0 0.0
        %7305 = vmatpush1.msra.mxu0 0.0
        %7306 = vmatprep.subr.mxu0 0.0
        %7307 = vmatpush1.msra.mxu0 0.0
        %7308 = vmatprep.subr.mxu0 0.0
        %7309 = vmatpush1.msra.mxu0 0.0
        %7310 = vmatprep.subr.mxu0 0.0
        %7311 = vmatpush1.msra.mxu0 0.0
        %7312 = vmatprep.subr.mxu0 0.0
        %7313 = vmatpush1.msra.mxu0 0.0
        %7314 = vmatprep.subr.mxu0 0.0
        %7315 = vmatpush1.msra.mxu0 0.0
        %7316 = vmatprep.subr.mxu0 0.0
        %7317 = vmatpush1.msra.mxu0 0.0
        %7318 = vmatprep.subr.mxu0 0.0
        %7319 = vmatpush1.msra.mxu0 0.0
        %7320 = vmatprep.subr.mxu0 0.0
        %7321 = vmatpush1.msra.mxu0 0.0
        %7322 = vmatprep.subr.mxu0 0.0
        %7323 = vmatpush1.msra.mxu0 0.0
        %7324 = vmatprep.subr.mxu0 0.0
        %7325 = vmatpush1.msra.mxu0 0.0
        %7326 = vmatprep.subr.mxu0 0.0
        %7327 = vmatpush1.msra.mxu0 0.0
        %7328 = vmatprep.subr.mxu0 0.0
        %7329 = vmatpush1.msra.mxu0 0.0
        %7330 = vmatprep.subr.mxu0 0.0
        %7331 = vmatpush1.msra.mxu0 0.0
        %7332 = vmatprep.subr.mxu0 0.0
        %7333 = vmatpush1.msra.mxu0 0.0
        %7334 = vmatprep.subr.mxu0 0.0
        %7335 = vmatpush1.msra.mxu0 0.0
        %7336 = vmatprep.mubr.f32.mxu0 0.0
        %7337 = vmatmul.mubr.f32.gmra.mrb[0].mxu0 %v7177
        %v7338 = vpop.f32.mrb[0].mxu0
        %v7339 = vadd.f32 0.0, %v7338
        %v7340 = vpop.f32.mrb[0].mxu0
        %7341 = vmatprep.mubr.f32.mxu0 0.0
        %7342 = vmatmul.mubr.f32.gmra.mrb[0].mxu0 %v7180
        %v7343 = vpop.f32.mrb[0].mxu0
        %v7344 = vadd.f32 0.0, %v7343
        %v7345 = vpop.f32.mrb[0].mxu0
        %7346 = vmatprep.mubr.f32.mxu0 0.0
        %7347 = vmatmul.mubr.f32.gmra.mrb[0].mxu0 %v7183
        %v7348 = vpop.f32.mrb[0].mxu0
        %v7349 = vadd.f32 0.0, %v7348
        %v7350 = vpop.f32.mrb[0].mxu0
        %7351 = vmatprep.mubr.f32.mxu0 0.0
        %7352 = vmatmul.mubr.f32.gmra.mrb[0].mxu0 %v7186
        %v7353 = vpop.f32.mrb[0].mxu0
        %v7354 = vadd.f32 0.0, %v7353
        %v7355 = vpop.f32.mrb[0].mxu0
        %7356 = vmatprep.mubr.f32.mxu0 0.0
        %7357 = vmatmul.mubr.f32.gmra.mrb[0].mxu0 %v7189
        %v7358 = vpop.f32.mrb[0].mxu0
        %v7359 = vadd.f32 0.0, %v7358
        %v7360 = vpop.f32.mrb[0].mxu0
        %7361 = vmatprep.mubr.f32.mxu0 0.0
        %7362 = vmatmul.mubr.f32.gmra.mrb[0].mxu0 %v7192
        %v7363 = vpop.f32.mrb[0].mxu0
        %v7364 = vadd.f32 0.0, %v7363
        %v7365 = vpop.f32.mrb[0].mxu0
        %7366 = vmatprep.mubr.f32.mxu0 0.0
        %7367 = vmatmul.mubr.f32.gmra.mrb[0].mxu0 %v7195
        %v7368 = vpop.f32.mrb[0].mxu0
        %v7369 = vadd.f32 0.0, %v7368
        %v7370 = vpop.f32.mrb[0].mxu0
        %7371 = vmatprep.mubr.f32.mxu0 0.0
        %7372 = vmatmul.mubr.f32.gmra.mrb[0].mxu0 %v7198
        %v7373 = vpop.f32.mrb[0].mxu0
        %v7374 = vadd.f32 0.0, %v7373
        %v7375 = vpop.f32.mrb[0].mxu0
        %7376 = vmatprep.mubr.f32.mxu0 0.0
        %7377 = vmatmul.mubr.f32.gmra.mrb[0].mxu0 %v7201
        %v7378 = vpop.f32.mrb[0].mxu0
        %v7379 = vadd.f32 0.0, %v7378
        %v7380 = vpop.f32.mrb[0].mxu0
        %7381 = vmatprep.mubr.f32.mxu0 0.0
        %7382 = vmatmul.mubr.f32.gmra.mrb[0].mxu0 %v7204
        %v7383 = vpop.f32.mrb[0].mxu0
        %v7384 = vadd.f32 0.0, %v7383
        %v7385 = vpop.f32.mrb[0].mxu0
        %7386 = vmatprep.mubr.f32.mxu0 0.0
        %7387 = vmatmul.mubr.f32.gmra.mrb[0].mxu0 %v7207
        %v7388 = vpop.f32.mrb[0].mxu0
        %v7389 = vadd.f32 0.0, %v7388
        %v7390 = vpop.f32.mrb[0].mxu0
        %7391 = vmatprep.mubr.f32.mxu0 0.0
        %7392 = vmatmul.mubr.f32.gmra.mrb[0].mxu0 %v7210
        %v7393 = vpop.f32.mrb[0].mxu0
        %v7394 = vadd.f32 0.0, %v7393
        %v7395 = vpop.f32.mrb[0].mxu0
        %7396 = vmatprep.mubr.f32.mxu0 0.0
        %7397 = vmatmul.mubr.f32.gmra.mrb[0].mxu0 %v7213
        %v7398 = vpop.f32.mrb[0].mxu0
        %v7399 = vadd.f32 0.0, %v7398
        %v7400 = vpop.f32.mrb[0].mxu0
        %7401 = vmatprep.mubr.f32.mxu0 0.0
        %7402 = vmatmul.mubr.f32.gmra.mrb[0].mxu0 %v7216
        %v7403 = vpop.f32.mrb[0].mxu0
        %v7404 = vadd.f32 0.0, %v7403
        %v7405 = vpop.f32.mrb[0].mxu0
        %7406 = vmatprep.mubr.f32.mxu0 0.0
        %7407 = vmatmul.mubr.f32.gmra.mrb[0].mxu0 %v7219
        %v7408 = vpop.f32.mrb[0].mxu0
        %v7409 = vadd.f32 0.0, %v7408
        %v7410 = vpop.f32.mrb[0].mxu0
        %7411 = vmatprep.mubr.f32.mxu0 0.0
        %7412 = vmatmul.mubr.f32.gmra.mrb[0].mxu0 %v7222
        %v7413 = vpop.f32.mrb[0].mxu0
        %v7414 = vadd.f32 0.0, %v7413
        %v7415 = vpop.f32.mrb[0].mxu0
        %7416 = vmatprep.mubr.f32.mxu0 0.0
        %7417 = vmatmul.mubr.f32.gmra.mrb[0].mxu0 %v7225
        %v7418 = vpop.f32.mrb[0].mxu0
        %v7419 = vadd.f32 0.0, %v7418
        %v7420 = vpop.f32.mrb[0].mxu0
        %7421 = vmatprep.mubr.f32.mxu0 0.0
        %7422 = vmatmul.mubr.f32.gmra.mrb[0].mxu0 %v7228
        %v7423 = vpop.f32.mrb[0].mxu0
        %v7424 = vadd.f32 0.0, %v7423
        %v7425 = vpop.f32.mrb[0].mxu0
        %7426 = vmatprep.mubr.f32.mxu0 0.0
        %7427 = vmatmul.mubr.f32.gmra.mrb[0].mxu0 %v7231
        %v7428 = vpop.f32.mrb[0].mxu0
        %v7429 = vadd.f32 0.0, %v7428
        %v7430 = vpop.f32.mrb[0].mxu0
        %7431 = vmatprep.mubr.f32.mxu0 0.0
        %7432 = vmatmul.mubr.f32.gmra.mrb[0].mxu0 %v7234
        %v7433 = vpop.f32.mrb[0].mxu0
        %v7434 = vadd.f32 0.0, %v7433
        %v7435 = vpop.f32.mrb[0].mxu0
        %7436 = vmatprep.mubr.f32.mxu0 0.0
        %7437 = vmatmul.mubr.f32.gmra.mrb[0].mxu0 %v7237
        %v7438 = vpop.f32.mrb[0].mxu0
        %v7439 = vadd.f32 0.0, %v7438
        %v7440 = vpop.f32.mrb[0].mxu0
        %7441 = vmatprep.mubr.f32.mxu0 0.0
        %7442 = vmatmul.mubr.f32.gmra.mrb[0].mxu0 %v7240
        %v7443 = vpop.f32.mrb[0].mxu0
        %v7444 = vadd.f32 0.0, %v7443
        %v7445 = vpop.f32.mrb[0].mxu0
        %7446 = vmatprep.mubr.f32.mxu0 0.0
        %7447 = vmatmul.mubr.f32.gmra.mrb[0].mxu0 %v7243
        %v7448 = vpop.f32.mrb[0].mxu0
        %v7449 = vadd.f32 0.0, %v7448
        %v7450 = vpop.f32.mrb[0].mxu0
        %7451 = vmatprep.mubr.f32.mxu0 0.0
        %7452 = vmatmul.mubr.f32.gmra.mrb[0].mxu0 %v7246
        %v7453 = vpop.f32.mrb[0].mxu0
        %v7454 = vadd.f32 0.0, %v7453
        %v7455 = vpop.f32.mrb[0].mxu0
        %7456 = vmatprep.mubr.f32.mxu0 0.0
        %7457 = vmatmul.mubr.f32.gmra.mrb[0].mxu0 %v7249
        %v7458 = vpop.f32.mrb[0].mxu0
        %v7459 = vadd.f32 0.0, %v7458
        %v7460 = vpop.f32.mrb[0].mxu0
        %7461 = vmatprep.mubr.f32.mxu0 0.0
        %7462 = vmatmul.mubr.f32.gmra.mrb[0].mxu0 %v7252
        %v7463 = vpop.f32.mrb[0].mxu0
        %v7464 = vadd.f32 0.0, %v7463
        %v7465 = vpop.f32.mrb[0].mxu0
        %7466 = vmatprep.mubr.f32.mxu0 0.0
        %7467 = vmatmul.mubr.f32.gmra.mrb[0].mxu0 %v7255
        %v7468 = vpop.f32.mrb[0].mxu0
        %v7469 = vadd.f32 0.0, %v7468
        %v7470 = vpop.f32.mrb[0].mxu0
        %7471 = vmatprep.mubr.f32.mxu0 0.0
        %7472 = vmatmul.mubr.f32.gmra.mrb[0].mxu0 %v7258
        %v7473 = vpop.f32.mrb[0].mxu0
        %v7474 = vadd.f32 0.0, %v7473
        %v7475 = vpop.f32.mrb[0].mxu0
        %7476 = vmatprep.mubr.f32.mxu0 0.0
        %7477 = vmatmul.mubr.f32.gmra.mrb[0].mxu0 %v7261
        %v7478 = vpop.f32.mrb[0].mxu0
        %v7479 = vadd.f32 0.0, %v7478
        %v7480 = vpop.f32.mrb[0].mxu0
        %7481 = vmatprep.mubr.f32.mxu0 0.0
        %7482 = vmatmul.mubr.f32.gmra.mrb[0].mxu0 %v7264
        %v7483 = vpop.f32.mrb[0].mxu0
        %v7484 = vadd.f32 0.0, %v7483
        %v7485 = vpop.f32.mrb[0].mxu0
        %7486 = vmatprep.mubr.f32.mxu0 0.0
        %7487 = vmatmul.mubr.f32.gmra.mrb[0].mxu0 %v7267
        %v7488 = vpop.f32.mrb[0].mxu0
        %v7489 = vadd.f32 0.0, %v7488
        %v7490 = vpop.f32.mrb[0].mxu0
        %7491 = vmatprep.mubr.f32.mxu0 0.0
        %7492 = vmatmul.mubr.f32.gmra.mrb[0].mxu0 %v7270
        %v7493 = vpop.f32.mrb[0].mxu0
        %v7494 = vadd.f32 0.0, %v7493
        %v7495 = vpop.f32.mrb[0].mxu0
        %7496 = vdwg.mxu0
        %v7497 = vadd.f32 %v7112, %v7339
        %v7498 = vadd.f32 %v7113, %v7344
        %v7499 = vadd.f32 %v7114, %v7349
        %v7500 = vadd.f32 %v7115, %v7354
        %v7501 = vadd.f32 %v7116, %v7359
        %v7502 = vadd.f32 %v7117, %v7364
        %v7503 = vadd.f32 %v7118, %v7369
        %v7504 = vadd.f32 %v7119, %v7374
        %v7505 = vadd.f32 %v7120, %v7379
        %v7506 = vadd.f32 %v7121, %v7384
        %v7507 = vadd.f32 %v7122, %v7389
        %v7508 = vadd.f32 %v7123, %v7394
        %v7509 = vadd.f32 %v7124, %v7399
        %v7510 = vadd.f32 %v7125, %v7404
        %v7511 = vadd.f32 %v7126, %v7409
        %v7512 = vadd.f32 %v7127, %v7414
        %v7513 = vadd.f32 %v7128, %v7419
        %v7514 = vadd.f32 %v7129, %v7424
        %v7515 = vadd.f32 %v7130, %v7429
        %v7516 = vadd.f32 %v7131, %v7434
        %v7517 = vadd.f32 %v7132, %v7439
        %v7518 = vadd.f32 %v7133, %v7444
        %v7519 = vadd.f32 %v7134, %v7449
        %v7520 = vadd.f32 %v7135, %v7454
        %v7521 = vadd.f32 %v7136, %v7459
        %v7522 = vadd.f32 %v7137, %v7464
        %v7523 = vadd.f32 %v7138, %v7469
        %v7524 = vadd.f32 %v7139, %v7474
        %v7525 = vadd.f32 %v7140, %v7479
        %v7526 = vadd.f32 %v7141, %v7484
        %v7527 = vadd.f32 %v7142, %v7489
        %v7528 = vadd.f32 %v7143, %v7494
        %v7530 = vlaneseq
        %v7531 = vshrl.u32 %v7530, 7
        %v7532 = vsub.s32 0, %v7531
        %v7533 = vrot.slane %v242, %v7532
        %v7535 = vadd.f32 %v7497, %v7533
        %v7536 = vadd.f32 %v7498, %v7533
        %v7537 = vadd.f32 %v7499, %v7533
        %v7538 = vadd.f32 %v7500, %v7533
        %v7539 = vadd.f32 %v7501, %v7533
        %v7540 = vadd.f32 %v7502, %v7533
        %v7541 = vadd.f32 %v7503, %v7533
        %v7542 = vadd.f32 %v7504, %v7533
        %v7543 = vadd.f32 %v7505, %v7533
        %v7544 = vadd.f32 %v7506, %v7533
        %v7545 = vadd.f32 %v7507, %v7533
        %v7546 = vadd.f32 %v7508, %v7533
        %v7547 = vadd.f32 %v7509, %v7533
        %v7548 = vadd.f32 %v7510, %v7533
        %v7549 = vadd.f32 %v7511, %v7533
        %v7550 = vadd.f32 %v7512, %v7533
        %v7551 = vadd.f32 %v7513, %v7533
        %v7552 = vadd.f32 %v7514, %v7533
        %v7553 = vadd.f32 %v7515, %v7533
        %v7554 = vadd.f32 %v7516, %v7533
        %v7555 = vadd.f32 %v7517, %v7533
        %v7556 = vadd.f32 %v7518, %v7533
        %v7557 = vadd.f32 %v7519, %v7533
        %v7558 = vadd.f32 %v7520, %v7533
        %v7559 = vadd.f32 %v7521, %v7533
        %v7560 = vadd.f32 %v7522, %v7533
        %v7561 = vadd.f32 %v7523, %v7533
        %v7562 = vadd.f32 %v7524, %v7533
        %v7563 = vadd.f32 %v7525, %v7533
        %v7564 = vadd.f32 %v7526, %v7533
        %v7565 = vadd.f32 %v7527, %v7533
        %v7566 = vadd.f32 %v7528, %v7533
        %v7567 = vsel %vm243, %v7535, 0.0
        %v7568 = vsel %vm243, %v7536, 0.0
        %v7569 = vadd.f32 %v7567, %v7568
        %v7570 = vsel %vm243, %v7537, 0.0
        %v7571 = vadd.f32 %v7569, %v7570
        %v7572 = vsel %vm243, %v7538, 0.0
        %v7573 = vadd.f32 %v7571, %v7572
        %v7574 = vsel %vm243, %v7539, 0.0
        %v7575 = vadd.f32 %v7573, %v7574
        %v7576 = vsel %vm243, %v7540, 0.0
        %v7577 = vadd.f32 %v7575, %v7576
        %v7578 = vsel %vm243, %v7541, 0.0
        %v7579 = vadd.f32 %v7577, %v7578
        %v7580 = vsel %vm243, %v7542, 0.0
        %v7581 = vadd.f32 %v7579, %v7580
        %v7582 = vsel %vm243, %v7543, 0.0
        %v7583 = vadd.f32 %v7581, %v7582
        %v7584 = vsel %vm243, %v7544, 0.0
        %v7585 = vadd.f32 %v7583, %v7584
        %v7586 = vsel %vm243, %v7545, 0.0
        %v7587 = vadd.f32 %v7585, %v7586
        %v7588 = vsel %vm243, %v7546, 0.0
        %v7589 = vadd.f32 %v7587, %v7588
        %v7590 = vsel %vm243, %v7547, 0.0
        %v7591 = vadd.f32 %v7589, %v7590
        %v7592 = vsel %vm243, %v7548, 0.0
        %v7593 = vadd.f32 %v7591, %v7592
        %v7594 = vsel %vm243, %v7549, 0.0
        %v7595 = vadd.f32 %v7593, %v7594
        %v7596 = vsel %vm243, %v7550, 0.0
        %v7597 = vadd.f32 %v7595, %v7596
        %v7598 = vsel %vm243, %v7551, 0.0
        %v7599 = vadd.f32 %v7597, %v7598
        %v7600 = vsel %vm243, %v7552, 0.0
        %v7601 = vadd.f32 %v7599, %v7600
        %v7602 = vsel %vm243, %v7553, 0.0
        %v7603 = vadd.f32 %v7601, %v7602
        %v7604 = vsel %vm243, %v7554, 0.0
        %v7605 = vadd.f32 %v7603, %v7604
        %v7606 = vsel %vm243, %v7555, 0.0
        %v7607 = vadd.f32 %v7605, %v7606
        %v7608 = vsel %vm243, %v7556, 0.0
        %v7609 = vadd.f32 %v7607, %v7608
        %v7610 = vsel %vm243, %v7557, 0.0
        %v7611 = vadd.f32 %v7609, %v7610
        %v7612 = vsel %vm243, %v7558, 0.0
        %v7613 = vadd.f32 %v7611, %v7612
        %v7614 = vsel %vm243, %v7559, 0.0
        %v7615 = vadd.f32 %v7613, %v7614
        %v7616 = vsel %vm243, %v7560, 0.0
        %v7617 = vadd.f32 %v7615, %v7616
        %v7618 = vsel %vm243, %v7561, 0.0
        %v7619 = vadd.f32 %v7617, %v7618
        %v7620 = vsel %vm243, %v7562, 0.0
        %v7621 = vadd.f32 %v7619, %v7620
        %v7622 = vsel %vm243, %v7563, 0.0
        %v7623 = vadd.f32 %v7621, %v7622
        %v7624 = vsel %vm243, %v7564, 0.0
        %v7625 = vadd.f32 %v7623, %v7624
        %v7626 = vsel %vm243, %v7565, 0.0
        %v7627 = vadd.f32 %v7625, %v7626
        %v7628 = vsel %vm243, %v7566, 0.0
        %v7629 = vadd.f32 %v7627, %v7628
        %v7630 = vrot.slane %v7629, 4
        %v7631 = vadd.f32 %v7629, %v7630
        %v7632 = vrot.slane %v7631, 2
        %v7633 = vadd.f32 %v7631, %v7632
        %v7634 = vrot.slane %v7633, 1
        %v7635 = vadd.f32 %v7633, %v7634
        %v7636 = vmul.f32 %v7635, %v3828
        %v7637 = vsub.f32 %v7535, %v7636
        %v7638 = vsub.f32 %v7536, %v7636
        %v7639 = vsub.f32 %v7537, %v7636
        %v7640 = vsub.f32 %v7538, %v7636
        %v7641 = vsub.f32 %v7539, %v7636
        %v7642 = vsub.f32 %v7540, %v7636
        %v7643 = vsub.f32 %v7541, %v7636
        %v7644 = vsub.f32 %v7542, %v7636
        %v7645 = vsub.f32 %v7543, %v7636
        %v7646 = vsub.f32 %v7544, %v7636
        %v7647 = vsub.f32 %v7545, %v7636
        %v7648 = vsub.f32 %v7546, %v7636
        %v7649 = vsub.f32 %v7547, %v7636
        %v7650 = vsub.f32 %v7548, %v7636
        %v7651 = vsub.f32 %v7549, %v7636
        %v7652 = vsub.f32 %v7550, %v7636
        %v7653 = vsub.f32 %v7551, %v7636
        %v7654 = vsub.f32 %v7552, %v7636
        %v7655 = vsub.f32 %v7553, %v7636
        %v7656 = vsub.f32 %v7554, %v7636
        %v7657 = vsub.f32 %v7555, %v7636
        %v7658 = vsub.f32 %v7556, %v7636
        %v7659 = vsub.f32 %v7557, %v7636
        %v7660 = vsub.f32 %v7558, %v7636
        %v7661 = vsub.f32 %v7559, %v7636
        %v7662 = vsub.f32 %v7560, %v7636
        %v7663 = vsub.f32 %v7561, %v7636
        %v7664 = vsub.f32 %v7562, %v7636
        %v7665 = vsub.f32 %v7563, %v7636
        %v7666 = vsub.f32 %v7564, %v7636
        %v7667 = vsub.f32 %v7565, %v7636
        %v7668 = vsub.f32 %v7566, %v7636
        %v7669 = vmul.f32 %v7637, %v7637
        %v7670 = vmul.f32 %v7638, %v7638
        %v7671 = vmul.f32 %v7639, %v7639
        %v7672 = vmul.f32 %v7640, %v7640
        %v7673 = vmul.f32 %v7641, %v7641
        %v7674 = vmul.f32 %v7642, %v7642
        %v7675 = vmul.f32 %v7643, %v7643
        %v7676 = vmul.f32 %v7644, %v7644
        %v7677 = vmul.f32 %v7645, %v7645
        %v7678 = vmul.f32 %v7646, %v7646
        %v7679 = vmul.f32 %v7647, %v7647
        %v7680 = vmul.f32 %v7648, %v7648
        %v7681 = vmul.f32 %v7649, %v7649
        %v7682 = vmul.f32 %v7650, %v7650
        %v7683 = vmul.f32 %v7651, %v7651
        %v7684 = vmul.f32 %v7652, %v7652
        %v7685 = vmul.f32 %v7653, %v7653
        %v7686 = vmul.f32 %v7654, %v7654
        %v7687 = vmul.f32 %v7655, %v7655
        %v7688 = vmul.f32 %v7656, %v7656
        %v7689 = vmul.f32 %v7657, %v7657
        %v7690 = vmul.f32 %v7658, %v7658
        %v7691 = vmul.f32 %v7659, %v7659
        %v7692 = vmul.f32 %v7660, %v7660
        %v7693 = vmul.f32 %v7661, %v7661
        %v7694 = vmul.f32 %v7662, %v7662
        %v7695 = vmul.f32 %v7663, %v7663
        %v7696 = vmul.f32 %v7664, %v7664
        %v7697 = vmul.f32 %v7665, %v7665
        %v7698 = vmul.f32 %v7666, %v7666
        %v7699 = vmul.f32 %v7667, %v7667
        %v7700 = vmul.f32 %v7668, %v7668
        %v7701 = vsel %vm243, %v7669, 0.0
        %v7702 = vsel %vm243, %v7670, 0.0
        %v7703 = vadd.f32 %v7701, %v7702
        %v7704 = vsel %vm243, %v7671, 0.0
        %v7705 = vadd.f32 %v7703, %v7704
        %v7706 = vsel %vm243, %v7672, 0.0
        %v7707 = vadd.f32 %v7705, %v7706
        %v7708 = vsel %vm243, %v7673, 0.0
        %v7709 = vadd.f32 %v7707, %v7708
        %v7710 = vsel %vm243, %v7674, 0.0
        %v7711 = vadd.f32 %v7709, %v7710
        %v7712 = vsel %vm243, %v7675, 0.0
        %v7713 = vadd.f32 %v7711, %v7712
        %v7714 = vsel %vm243, %v7676, 0.0
        %v7715 = vadd.f32 %v7713, %v7714
        %v7716 = vsel %vm243, %v7677, 0.0
        %v7717 = vadd.f32 %v7715, %v7716
        %v7718 = vsel %vm243, %v7678, 0.0
        %v7719 = vadd.f32 %v7717, %v7718
        %v7720 = vsel %vm243, %v7679, 0.0
        %v7721 = vadd.f32 %v7719, %v7720
        %v7722 = vsel %vm243, %v7680, 0.0
        %v7723 = vadd.f32 %v7721, %v7722
        %v7724 = vsel %vm243, %v7681, 0.0
        %v7725 = vadd.f32 %v7723, %v7724
        %v7726 = vsel %vm243, %v7682, 0.0
        %v7727 = vadd.f32 %v7725, %v7726
        %v7728 = vsel %vm243, %v7683, 0.0
        %v7729 = vadd.f32 %v7727, %v7728
        %v7730 = vsel %vm243, %v7684, 0.0
        %v7731 = vadd.f32 %v7729, %v7730
        %v7732 = vsel %vm243, %v7685, 0.0
        %v7733 = vadd.f32 %v7731, %v7732
        %v7734 = vsel %vm243, %v7686, 0.0
        %v7735 = vadd.f32 %v7733, %v7734
        %v7736 = vsel %vm243, %v7687, 0.0
        %v7737 = vadd.f32 %v7735, %v7736
        %v7738 = vsel %vm243, %v7688, 0.0
        %v7739 = vadd.f32 %v7737, %v7738
        %v7740 = vsel %vm243, %v7689, 0.0
        %v7741 = vadd.f32 %v7739, %v7740
        %v7742 = vsel %vm243, %v7690, 0.0
        %v7743 = vadd.f32 %v7741, %v7742
        %v7744 = vsel %vm243, %v7691, 0.0
        %v7745 = vadd.f32 %v7743, %v7744
        %v7746 = vsel %vm243, %v7692, 0.0
        %v7747 = vadd.f32 %v7745, %v7746
        %v7748 = vsel %vm243, %v7693, 0.0
        %v7749 = vadd.f32 %v7747, %v7748
        %v7750 = vsel %vm243, %v7694, 0.0
        %v7751 = vadd.f32 %v7749, %v7750
        %v7752 = vsel %vm243, %v7695, 0.0
        %v7753 = vadd.f32 %v7751, %v7752
        %v7754 = vsel %vm243, %v7696, 0.0
        %v7755 = vadd.f32 %v7753, %v7754
        %v7756 = vsel %vm243, %v7697, 0.0
        %v7757 = vadd.f32 %v7755, %v7756
        %v7758 = vsel %vm243, %v7698, 0.0
        %v7759 = vadd.f32 %v7757, %v7758
        %v7760 = vsel %vm243, %v7699, 0.0
        %v7761 = vadd.f32 %v7759, %v7760
        %v7762 = vsel %vm243, %v7700, 0.0
        %v7763 = vadd.f32 %v7761, %v7762
        %v7764 = vrot.slane %v7763, 4
        %v7765 = vadd.f32 %v7763, %v7764
        %v7766 = vrot.slane %v7765, 2
        %v7767 = vadd.f32 %v7765, %v7766
        %v7768 = vrot.slane %v7767, 1
        %v7769 = vadd.f32 %v7767, %v7768
        %v7770 = vmul.f32 %v7769, %v3828
        %v7771 = vadd.f32 %v7770, 1e-05
        %v7772 = vrsqrt.pop %v7771
        %v7773 = vmul.f32 %v7637, %v7772
        %v7774 = vmul.f32 %v7638, %v7772
        %v7775 = vmul.f32 %v7639, %v7772
        %v7776 = vmul.f32 %v7640, %v7772
        %v7777 = vmul.f32 %v7641, %v7772
        %v7778 = vmul.f32 %v7642, %v7772
        %v7779 = vmul.f32 %v7643, %v7772
        %v7780 = vmul.f32 %v7644, %v7772
        %v7781 = vmul.f32 %v7645, %v7772
        %v7782 = vmul.f32 %v7646, %v7772
        %v7783 = vmul.f32 %v7647, %v7772
        %v7784 = vmul.f32 %v7648, %v7772
        %v7785 = vmul.f32 %v7649, %v7772
        %v7786 = vmul.f32 %v7650, %v7772
        %v7787 = vmul.f32 %v7651, %v7772
        %v7788 = vmul.f32 %v7652, %v7772
        %v7789 = vmul.f32 %v7653, %v7772
        %v7790 = vmul.f32 %v7654, %v7772
        %v7791 = vmul.f32 %v7655, %v7772
        %v7792 = vmul.f32 %v7656, %v7772
        %v7793 = vmul.f32 %v7657, %v7772
        %v7794 = vmul.f32 %v7658, %v7772
        %v7795 = vmul.f32 %v7659, %v7772
        %v7796 = vmul.f32 %v7660, %v7772
        %v7797 = vmul.f32 %v7661, %v7772
        %v7798 = vmul.f32 %v7662, %v7772
        %v7799 = vmul.f32 %v7663, %v7772
        %v7800 = vmul.f32 %v7664, %v7772
        %v7801 = vmul.f32 %v7665, %v7772
        %v7802 = vmul.f32 %v7666, %v7772
        %v7803 = vmul.f32 %v7667, %v7772
        %v7804 = vmul.f32 %v7668, %v7772
        %vm7805 = vcmp.ge.f32.partialorder %v7773, 0.0
        %vm7806 = vcmp.ge.f32.partialorder %v7774, 0.0
        %vm7807 = vcmp.ge.f32.partialorder %v7775, 0.0
        %vm7808 = vcmp.ge.f32.partialorder %v7776, 0.0
        %vm7809 = vcmp.ge.f32.partialorder %v7777, 0.0
        %vm7810 = vcmp.ge.f32.partialorder %v7778, 0.0
        %vm7811 = vcmp.ge.f32.partialorder %v7779, 0.0
        %vm7812 = vcmp.ge.f32.partialorder %v7780, 0.0
        %vm7813 = vcmp.ge.f32.partialorder %v7781, 0.0
        %vm7814 = vcmp.ge.f32.partialorder %v7782, 0.0
        %vm7815 = vcmp.ge.f32.partialorder %v7783, 0.0
        %vm7816 = vcmp.ge.f32.partialorder %v7784, 0.0
        %vm7817 = vcmp.ge.f32.partialorder %v7785, 0.0
        %vm7818 = vcmp.ge.f32.partialorder %v7786, 0.0
        %vm7819 = vcmp.ge.f32.partialorder %v7787, 0.0
        %vm7820 = vcmp.ge.f32.partialorder %v7788, 0.0
        %vm7821 = vcmp.ge.f32.partialorder %v7789, 0.0
        %vm7822 = vcmp.ge.f32.partialorder %v7790, 0.0
        %vm7823 = vcmp.ge.f32.partialorder %v7791, 0.0
        %vm7824 = vcmp.ge.f32.partialorder %v7792, 0.0
        %vm7825 = vcmp.ge.f32.partialorder %v7793, 0.0
        %vm7826 = vcmp.ge.f32.partialorder %v7794, 0.0
        %vm7827 = vcmp.ge.f32.partialorder %v7795, 0.0
        %vm7828 = vcmp.ge.f32.partialorder %v7796, 0.0
        %vm7829 = vcmp.ge.f32.partialorder %v7797, 0.0
        %vm7830 = vcmp.ge.f32.partialorder %v7798, 0.0
        %vm7831 = vcmp.ge.f32.partialorder %v7799, 0.0
        %vm7832 = vcmp.ge.f32.partialorder %v7800, 0.0
        %vm7833 = vcmp.ge.f32.partialorder %v7801, 0.0
        %vm7834 = vcmp.ge.f32.partialorder %v7802, 0.0
        %vm7835 = vcmp.ge.f32.partialorder %v7803, 0.0
        %vm7836 = vcmp.ge.f32.partialorder %v7804, 0.0
        %v7837 = vmul.f32 %v7773, 0.01
        %v7838 = vmul.f32 %v7774, 0.01
        %v7839 = vmul.f32 %v7775, 0.01
        %v7840 = vmul.f32 %v7776, 0.01
        %v7841 = vmul.f32 %v7777, 0.01
        %v7842 = vmul.f32 %v7778, 0.01
        %v7843 = vmul.f32 %v7779, 0.01
        %v7844 = vmul.f32 %v7780, 0.01
        %v7845 = vmul.f32 %v7781, 0.01
        %v7846 = vmul.f32 %v7782, 0.01
        %v7847 = vmul.f32 %v7783, 0.01
        %v7848 = vmul.f32 %v7784, 0.01
        %v7849 = vmul.f32 %v7785, 0.01
        %v7850 = vmul.f32 %v7786, 0.01
        %v7851 = vmul.f32 %v7787, 0.01
        %v7852 = vmul.f32 %v7788, 0.01
        %v7853 = vmul.f32 %v7789, 0.01
        %v7854 = vmul.f32 %v7790, 0.01
        %v7855 = vmul.f32 %v7791, 0.01
        %v7856 = vmul.f32 %v7792, 0.01
        %v7857 = vmul.f32 %v7793, 0.01
        %v7858 = vmul.f32 %v7794, 0.01
        %v7859 = vmul.f32 %v7795, 0.01
        %v7860 = vmul.f32 %v7796, 0.01
        %v7861 = vmul.f32 %v7797, 0.01
        %v7862 = vmul.f32 %v7798, 0.01
        %v7863 = vmul.f32 %v7799, 0.01
        %v7864 = vmul.f32 %v7800, 0.01
        %v7865 = vmul.f32 %v7801, 0.01
        %v7866 = vmul.f32 %v7802, 0.01
        %v7867 = vmul.f32 %v7803, 0.01
        %v7868 = vmul.f32 %v7804, 0.01
        %v7869 = vsel %vm7805, %v7773, %v7837
        %v7870 = vsel %vm7806, %v7774, %v7838
        %v7871 = vsel %vm7807, %v7775, %v7839
        %v7872 = vsel %vm7808, %v7776, %v7840
        %v7873 = vsel %vm7809, %v7777, %v7841
        %v7874 = vsel %vm7810, %v7778, %v7842
        %v7875 = vsel %vm7811, %v7779, %v7843
        %v7876 = vsel %vm7812, %v7780, %v7844
        %v7877 = vsel %vm7813, %v7781, %v7845
        %v7878 = vsel %vm7814, %v7782, %v7846
        %v7879 = vsel %vm7815, %v7783, %v7847
        %v7880 = vsel %vm7816, %v7784, %v7848
        %v7881 = vsel %vm7817, %v7785, %v7849
        %v7882 = vsel %vm7818, %v7786, %v7850
        %v7883 = vsel %vm7819, %v7787, %v7851
        %v7884 = vsel %vm7820, %v7788, %v7852
        %v7885 = vsel %vm7821, %v7789, %v7853
        %v7886 = vsel %vm7822, %v7790, %v7854
        %v7887 = vsel %vm7823, %v7791, %v7855
        %v7888 = vsel %vm7824, %v7792, %v7856
        %v7889 = vsel %vm7825, %v7793, %v7857
        %v7890 = vsel %vm7826, %v7794, %v7858
        %v7891 = vsel %vm7827, %v7795, %v7859
        %v7892 = vsel %vm7828, %v7796, %v7860
        %v7893 = vsel %vm7829, %v7797, %v7861
        %v7894 = vsel %vm7830, %v7798, %v7862
        %v7895 = vsel %vm7831, %v7799, %v7863
        %v7896 = vsel %vm7832, %v7800, %v7864
        %v7897 = vsel %vm7833, %v7801, %v7865
        %v7898 = vsel %vm7834, %v7802, %v7866
        %v7899 = vsel %vm7835, %v7803, %v7867
        %v7900 = vsel %vm7836, %v7804, %v7868
        %7901 = vxpose.xlu0.b32.start [1/16] %v7869, 128
        %7902 = vxpose.xlu0.b32.cont [2/16] %v7870, 128
        %7903 = vxpose.xlu0.b32.cont [3/16] %v7871, 128
        %7904 = vxpose.xlu0.b32.cont [4/16] %v7872, 128
        %7905 = vxpose.xlu0.b32.cont [5/16] %v7873, 128
        %7906 = vxpose.xlu0.b32.cont [6/16] %v7874, 128
        %7907 = vxpose.xlu0.b32.cont [7/16] %v7875, 128
        %7908 = vxpose.xlu0.b32.cont [8/16] %v7876, 128
        %7909 = vxpose.xlu0.b32.cont [9/16] %v7877, 128
        %7910 = vxpose.xlu0.b32.cont [10/16] %v7878, 128
        %7911 = vxpose.xlu0.b32.cont [11/16] %v7879, 128
        %7912 = vxpose.xlu0.b32.cont [12/16] %v7880, 128
        %7913 = vxpose.xlu0.b32.cont [13/16] %v7881, 128
        %7914 = vxpose.xlu0.b32.cont [14/16] %v7882, 128
        %7915 = vxpose.xlu0.b32.cont [15/16] %v7883, 128
        %7916 = vxpose.xlu0.b32.end [16/16] %v7884, 128
        %v7917 = vpop.trf.xlu0
        %v7918 = vpop.trf.xlu0
        %v7919 = vpop.trf.xlu0
        %v7920 = vpop.trf.xlu0
        %v7921 = vpop.trf.xlu0
        %v7922 = vpop.trf.xlu0
        %v7923 = vpop.trf.xlu0
        %v7924 = vpop.trf.xlu0
        %v7925 = vpop.trf.xlu0
        %v7926 = vpop.trf.xlu0
        %v7927 = vpop.trf.xlu0
        %v7928 = vpop.trf.xlu0
        %v7929 = vpop.trf.xlu0
        %v7930 = vpop.trf.xlu0
        %v7931 = vpop.trf.xlu0
        %v7932 = vpop.trf.xlu0
        %7933 = vxpose.xlu0.b32.start [1/16] %v7885, 128
        %7934 = vxpose.xlu0.b32.cont [2/16] %v7886, 128
        %7935 = vxpose.xlu0.b32.cont [3/16] %v7887, 128
        %7936 = vxpose.xlu0.b32.cont [4/16] %v7888, 128
        %7937 = vxpose.xlu0.b32.cont [5/16] %v7889, 128
        %7938 = vxpose.xlu0.b32.cont [6/16] %v7890, 128
        %7939 = vxpose.xlu0.b32.cont [7/16] %v7891, 128
        %7940 = vxpose.xlu0.b32.cont [8/16] %v7892, 128
        %7941 = vxpose.xlu0.b32.cont [9/16] %v7893, 128
        %7942 = vxpose.xlu0.b32.cont [10/16] %v7894, 128
        %7943 = vxpose.xlu0.b32.cont [11/16] %v7895, 128
        %7944 = vxpose.xlu0.b32.cont [12/16] %v7896, 128
        %7945 = vxpose.xlu0.b32.cont [13/16] %v7897, 128
        %7946 = vxpose.xlu0.b32.cont [14/16] %v7898, 128
        %7947 = vxpose.xlu0.b32.cont [15/16] %v7899, 128
        %7948 = vxpose.xlu0.b32.end [16/16] %v7900, 128
        %v7949 = vpop.trf.xlu0
        %v7950 = vpop.trf.xlu0
        %v7951 = vpop.trf.xlu0
        %v7952 = vpop.trf.xlu0
        %v7953 = vpop.trf.xlu0
        %v7954 = vpop.trf.xlu0
        %v7955 = vpop.trf.xlu0
        %v7956 = vpop.trf.xlu0
        %v7957 = vpop.trf.xlu0
        %v7958 = vpop.trf.xlu0
        %v7959 = vpop.trf.xlu0
        %v7960 = vpop.trf.xlu0
        %v7961 = vpop.trf.xlu0
        %v7962 = vpop.trf.xlu0
        %v7963 = vpop.trf.xlu0
        %v7964 = vpop.trf.xlu0
        %7965 = vst [vmem:[%s217] sm:$0xff] %v7917
        %7966 = vst [vmem:[%s217 + $0x8] sm:$0xff] %v7949
        %s7967 = sand.u32 %s137, 1
        %s7968 = scalar_lea.sflag [#allocation4], %s7967
        %s7969 = sand.u32 %s137, 1
        %s7970 = smul.addr %s7969, 16
        %s7971 = scalar_lea.vmem [#allocation3], %s7970
        // Predicated region
        $region41: #{tpu_custom_call.1} parent=39 // pred_check
          %p7972 = pneg %p147
        $region42: #{tpu_custom_call.1} parent=39 // pred_check_branch
          %7974 = sbr.rel (%p7972) target = $region44
        $region43: #{tpu_custom_call.1} parent=39 // pred_region
          %s7976 = ssub.s32 256, 256
          %7977 = vsyncadd %s7968, %s7976
          %s7978 = smul.addr %s19, 2
          %s7979 = smul.addr %s7978, 128
          %s7980 = scalar_lea.hbm %s5, %s7979
          %s7982 = sshll.u32 %s7971, 4
          %s7983 = int_to_ptr.vmem [resolvable:$true] %s7982
          %7985 = dma.vmem_to_hbm [thread:$0]  %s7983, 256, %s7980, %s7968
        $region44: #{tpu_custom_call.1} parent=39 // pred_fallthru
          _
      $region40: #{tpu_custom_call.1} parent=5 // pred_fallthru
        _
      %p7986 = scmp.le.s32.totalorder 2, %s14
      // Predicated region
      $region45: #{tpu_custom_call.1} parent=5 // pred_check
        %p7987 = pneg %p7986
      $region46: #{tpu_custom_call.1} parent=5 // pred_check_branch
        %7989 = sbr.rel (%p7987) target = $region48
      $region47: #{tpu_custom_call.1} parent=5 // pred_region
        %s7990 = ssub.s32 %s14, 2
        // Predicated region
        $region49: #{tpu_custom_call.1} parent=47 // pred_check
          %p7991 = pneg %p153
        $region50: #{tpu_custom_call.1} parent=47 // pred_check_branch
          %7993 = sbr.rel (%p7991) target = $region52
        $region51: #{tpu_custom_call.1} parent=47 // pred_region
          %s7994 = sand.u32 %s138, 1
          %s7995 = scalar_lea.sflag [#allocation4], %s7994
          %s7996 = sand.u32 %s138, 1
          %s7997 = smul.addr %s7996, 16
          %s7998 = scalar_lea.vmem [#allocation3], %s7997
          %7999 = dma.done %s7995, 256
        $region52: #{tpu_custom_call.1} parent=47 // pred_fallthru
          _
      $region48: #{tpu_custom_call.1} parent=5 // pred_fallthru
        _
    $region6: #{tpu_custom_call.1} parent=1 // loop_footer
      %s18 = sadd.s32 1, %s14
    $region7: #{tpu_custom_call.1} parent=1 // loop_footer_branch
      %13 = sbr.rel target = $region3
    $region8: #{tpu_custom_call.1} parent=1 // loop_exit
      _
    %8000 = vsyncpa [#allocation4], 1
    %s8001 = scalar_lea.sflag [#allocation4], 1
    %8002 = vsyncpa %s8001, 1

</llo_original>
